<compile_context>
chip_gen: v7x
topology: tpu7x:2x2x1
jax: 0.10.0
libtpu: 0.0.40
codegen_flags: <defaults>
</compile_context>

<pallas_src>
import functools

import jax
import jax.numpy as jnp
from jax.experimental import pallas as pl
from jax.experimental.pallas import tpu as pltpu

BN_EPS = 1e-5
# bf16 on the wire (activations, weights, matmul intermediates); accumulation
# and BN statistics stay f32.  Set to jnp.float32 for a bit-faithful f32 run.
WIRE_DTYPE = jnp.bfloat16
_WSZ = jnp.dtype(WIRE_DTYPE).itemsize
VMEM_LIMIT = 64 * 1024 * 1024  # <= physical VMEM on v5e/v6e/v7x
TILE_LANES = 1024              # max lane-dim row tile (85%+ of HBM roofline)


def _round_up(x, m):
    return ((x + m - 1) // m) * m


def _choose_tile(rows):
    """Lane-dim row tile (TM) and padded row count (RP) for `rows` columns."""
    r = _round_up(rows, 128)
    if r <= TILE_LANES:
        return r, r
    return TILE_LANES, _round_up(r, TILE_LANES)


# ----------------------------------------------------------------------------
# Pallas kernels
# ----------------------------------------------------------------------------
def _matmul_stats_kernel(x_ref, w_ref, y_ref, sum_ref, sq_ref):
    # x: (K, TM) wire   w: (Cout, K) wire   y: (Cout, TM) wire
    # sum/sq: (1, Cout, 1) f32  -- per-tile partials (grid axis is "parallel")
    y = jnp.dot(w_ref[...], x_ref[...], preferred_element_type=jnp.float32)
    y_ref[...] = y.astype(y_ref.dtype)
    # Zero-padded row columns contribute exactly zero (no conv bias), so the
    # stats stay correct as long as the apply kernel divides by the true count.
    sum_ref[0] = jnp.sum(y, axis=1, keepdims=True)
    sq_ref[0] = jnp.sum(y * y, axis=1, keepdims=True)


def _make_bn_relu_kernel(inv_count, eps, has_res):
    def kernel(*refs):
        if has_res:
            y_ref, sum_ref, sq_ref, res_ref, o_ref = refs
        else:
            y_ref, sum_ref, sq_ref, o_ref = refs
        mean = sum_ref[...] * inv_count                     # (Cout, 1) f32
        var = jnp.maximum(sq_ref[...] * inv_count - mean * mean, 0.0)
        inv = jax.lax.rsqrt(var + eps)
        z = jnp.maximum((y_ref[...].astype(jnp.float32) - mean) * inv, 0.0)
        if has_res:
            # Residual added AFTER ReLU (matches PyTorch `xx + x`).
            z = z + res_ref[...].astype(jnp.float32)
        # NOTE: padded row columns hold relu(-mean*inv); wrapper slices them off.
        o_ref[...] = z.astype(o_ref.dtype)
    return kernel


def _matmul_bias_softmax_kernel(x_ref, w_ref, b_ref, o_ref):
    y = jnp.dot(w_ref[...], x_ref[...], preferred_element_type=jnp.float32)
    y = y + b_ref[...]
    m = jnp.max(y, axis=0, keepdims=True)                   # softmax over channels
    e = jnp.exp(y - m)
    o_ref[...] = e / jnp.sum(e, axis=0, keepdims=True)      # exact denominator


# ----------------------------------------------------------------------------
# Cached pallas_call builders (one Mosaic compile per unique shape)
# ----------------------------------------------------------------------------
@functools.lru_cache(maxsize=None)
def _matmul_stats_fn(k, cout, rp, tm):
    nt = rp // tm
    ce = pl.CostEstimate(
        flops=2 * cout * k * rp,
        transcendentals=0,
        bytes_accessed=(k * rp + cout * k + cout * rp) * _WSZ + 2 * nt * cout * 4)
    return pl.pallas_call(
        _matmul_stats_kernel,
        out_shape=(jax.ShapeDtypeStruct((cout, rp), WIRE_DTYPE),
                   jax.ShapeDtypeStruct((nt, cout, 1), jnp.float32),
                   jax.ShapeDtypeStruct((nt, cout, 1), jnp.float32)),
        grid=(nt,),
        in_specs=[pl.BlockSpec((k, tm), lambda s: (0, s)),
                  pl.BlockSpec((cout, k), lambda s: (0, 0))],
        out_specs=(pl.BlockSpec((cout, tm), lambda s: (0, s)),
                   pl.BlockSpec((1, cout, 1), lambda s: (s, 0, 0)),
                   pl.BlockSpec((1, cout, 1), lambda s: (s, 0, 0))),
        compiler_params=pltpu.CompilerParams(
            dimension_semantics=("parallel",),
            vmem_limit_bytes=VMEM_LIMIT),
        cost_estimate=ce,
    )


@functools.lru_cache(maxsize=None)
def _bn_relu_fn(cout, rp, tm, count, has_res):
    nt = rp // tm
    n_big = 3 if has_res else 2
    ce = pl.CostEstimate(
        flops=6 * cout * rp,
        transcendentals=cout,
        bytes_accessed=n_big * cout * rp * _WSZ + 2 * cout * 4)
    in_specs = [pl.BlockSpec((cout, tm), lambda s: (0, s)),
                pl.BlockSpec((cout, 1), lambda s: (0, 0)),
                pl.BlockSpec((cout, 1), lambda s: (0, 0))]
    if has_res:
        in_specs.append(pl.BlockSpec((cout, tm), lambda s: (0, s)))
    return pl.pallas_call(
        _make_bn_relu_kernel(1.0 / float(count), BN_EPS, has_res),
        out_shape=jax.ShapeDtypeStruct((cout, rp), WIRE_DTYPE),
        grid=(nt,),
        in_specs=in_specs,
        out_specs=pl.BlockSpec((cout, tm), lambda s: (0, s)),
        compiler_params=pltpu.CompilerParams(
            dimension_semantics=("parallel",),
            vmem_limit_bytes=VMEM_LIMIT),
        cost_estimate=ce,
    )


@functools.lru_cache(maxsize=None)
def _matmul_softmax_fn(k, cout, rp, tm):
    nt = rp // tm
    ce = pl.CostEstimate(
        flops=2 * cout * k * rp + 4 * cout * rp,
        transcendentals=cout * rp,
        bytes_accessed=(k * rp + cout * k) * _WSZ + cout * rp * 4 + cout * 4)
    return pl.pallas_call(
        _matmul_bias_softmax_kernel,
        out_shape=jax.ShapeDtypeStruct((cout, rp), jnp.float32),
        grid=(nt,),
        in_specs=[pl.BlockSpec((k, tm), lambda s: (0, s)),
                  pl.BlockSpec((cout, k), lambda s: (0, 0)),
                  pl.BlockSpec((cout, 1), lambda s: (0, 0))],
        out_specs=pl.BlockSpec((cout, tm), lambda s: (0, s)),
        compiler_params=pltpu.CompilerParams(
            dimension_semantics=("parallel",),
            vmem_limit_bytes=VMEM_LIMIT),
        cost_estimate=ce,
    )


# ----------------------------------------------------------------------------
# Convolution glue (im2col in plain JAX; matmul / BN / ReLU / softmax in Pallas)
# Activations live channel-first: (C, N, D, H, W), lane-dense when flattened.
# ----------------------------------------------------------------------------
def _im2col_cf(x, ksize, stride, padding):
    """(C,N,D,H,W) -> (C*kd*kh*kw, N*OD*OH*OW); K ordered (C, kd, kh, kw)."""
    c, n, d, h, w = x.shape
    kd, kh, kw = ksize
    sd, sh, sw = stride
    pd, ph, pw = padding
    if ksize == (1, 1, 1) and stride == (1, 1, 1) and padding == (0, 0, 0):
        return x.reshape(c, n * d * h * w), (d, h, w)
    xp = jnp.pad(x, ((0, 0), (0, 0), (pd, pd), (ph, ph), (pw, pw)))
    od = (d + 2 * pd - kd) // sd + 1
    oh = (h + 2 * ph - kh) // sh + 1
    ow = (w + 2 * pw - kw) // sw + 1
    cols = []
    for i in range(kd):
        for j in range(kh):
            for l in range(kw):
                cols.append(
                    xp[:, :, i:i + sd * od:sd, j:j + sh * oh:sh, l:l + sw * ow:sw])
    patches = jnp.stack(cols, axis=1)                  # (C, KT, N, OD, OH, OW)
    # TODO(synk): this gather still round-trips HBM; a tap-axis in-kernel gather
    # (or allow_input_fusion on this operand) would remove the Kx expansion pass.
    return patches.reshape(c * kd * kh * kw, n * od * oh * ow), (od, oh, ow)


def _run_conv_core(patches, wmat, stat_groups=1, residual=None):
    """Fused (matmul + partial BN stats) + (BN apply + ReLU [+ residual])."""
    k, rows = patches.shape
    cout = wmat.shape[0]
    tm, rp = _choose_tile(rows)
    if rp != rows:
        patches = jnp.pad(patches, ((0, 0), (0, rp - rows)))
    y, psum, psq = _matmul_stats_fn(k, cout, rp, tm)(patches, wmat)
    ssum = jnp.sum(psum, axis=0)                       # (Cout, 1) f32
    ssq = jnp.sum(psq, axis=0)
    if stat_groups > 1:
        # Packed transpose-conv: the 8 parity groups share BN channels.
        cb = cout // stat_groups
        ssum = jnp.tile(ssum.reshape(stat_groups, cb, 1).sum(0), (stat_groups, 1))
        ssq = jnp.tile(ssq.reshape(stat_groups, cb, 1).sum(0), (stat_groups, 1))
    count = rows * stat_groups
    if residual is not None:
        if rp != rows:
            residual = jnp.pad(residual, ((0, 0), (0, rp - rows)))
        z = _bn_relu_fn(cout, rp, tm, count, True)(y, ssum, ssq, residual)
    else:
        z = _bn_relu_fn(cout, rp, tm, count, False)(y, ssum, ssq)
    return z[:, :rows] if rp != rows else z


def conv_bn_relu(x, wmat, ksize, stride=(1, 1, 1), padding=(0, 0, 0),
                 residual=None):
    patches, (od, oh, ow) = _im2col_cf(x, ksize, stride, padding)
    cout = wmat.shape[0]
    n = x.shape[1]
    res2d = None if residual is None else residual.reshape(cout, -1)
    z = _run_conv_core(patches, wmat, residual=res2d)
    return z.reshape(cout, n, od, oh, ow)


def conv_transpose_bn_relu(x, wpacked):
    # ConvTranspose3d(k=3, s=2, p=1, output_padding=1) via sub-pixel decomposition:
    #   out[2m]   (per dim) = in[m] * w[1]
    #   out[2m+1] (per dim) = in[m] * w[2] + in[m+1] * w[0]
    # All 8 parity combos packed into one matmul on a 2x2x2 neighbour gather.
    c, n, d, h, w = x.shape
    cout = wpacked.shape[0] // 8
    xp = jnp.pad(x, ((0, 0), (0, 0), (0, 1), (0, 1), (0, 1)))
    cols = []
    for od_ in (0, 1):
        for oh_ in (0, 1):
            for ow_ in (0, 1):
                cols.append(xp[:, :, od_:od_ + d, oh_:oh_ + h, ow_:ow_ + w])
    patches = jnp.stack(cols, axis=1).reshape(c * 8, n * d * h * w)
    z = _run_conv_core(patches, wpacked, stat_groups=8)    # (8*Cout, rows)
    z = z.reshape(2, 2, 2, cout, n, d, h, w)
    # TODO(synk): parity interleave is still an XLA transpose; strided output
    # BlockSpecs in the apply kernel would eliminate this extra HBM pass.
    z = z.transpose(3, 4, 5, 0, 6, 1, 7, 2)                # (Cout,N,D,2,H,2,W,2)
    return z.reshape(cout, n, 2 * d, 2 * h, 2 * w)


def out_conv_softmax(x, wmat, bias):
    c, n, d, h, w = x.shape
    rows = n * d * h * w
    patches = x.reshape(c, rows)
    tm, rp = _choose_tile(rows)
    if rp != rows:
        patches = jnp.pad(patches, ((0, 0), (0, rp - rows)))
    cout = wmat.shape[0]
    y = _matmul_softmax_fn(c, cout, rp, tm)(patches, wmat, bias.reshape(cout, 1))
    y = y[:, :rows].reshape(cout, n, d, h, w)
    return y.transpose(1, 0, 2, 3, 4)                       # back to NCDHW, f32


# ----------------------------------------------------------------------------
# Parameter init (deterministic; Kaiming-normal conv weights; BN gamma=1, beta=0).
# Weights are stored pre-reshaped / pre-packed (and in WIRE_DTYPE) as the
# matrices the kernels consume.  Conv biases feeding train-mode BN are omitted
# (exactly cancelled by BN normalization).
# ----------------------------------------------------------------------------
class KeyGen:
    def __init__(self, key):
        self.key = key

    def next(self):
        self.key, sub = jax.random.split(self.key)
        return sub


def conv_w(kg, cin, cout, ksize):
    kd, kh, kw = ksize
    fan_in = cin * kd * kh * kw
    std = (2.0 / fan_in) ** 0.5
    w = jax.random.normal(kg.next(), (cout, cin, kd, kh, kw), jnp.float32) * std
    return w.reshape(cout, fan_in).astype(WIRE_DTYPE)        # (Cout, K)


def _pack_deconv_weight(w):
    """(Cin, Cout, 3,3,3) ConvTranspose3d weight -> packed (8*Cout, 8*Cin) matrix.

    Row = parity_combo * Cout + co  (combo = (rd*2+rh)*2+rw)
    Col = ci * 8 + offset           (offset = (od*2+oh)*2+ow, offsets in {0,1})
    Even output parity uses kernel tap 1 at offset 0; odd parity uses tap 2 at
    offset 0 and tap 0 at offset 1 (stride=2, padding=1, output_padding=1).
    """
    cin, cout = w.shape[0], w.shape[1]
    tap = {(0, 0): 1, (1, 0): -1, (0, 1): 2, (1, 1): 0}      # (offset, parity) -> k
    zeros = jnp.zeros((cin, cout), w.dtype)
    rows = []
    for rd in (0, 1):
        for rh in (0, 1):
            for rw in (0, 1):
                blocks = []
                for od in (0, 1):
                    for oh in (0, 1):
                        for ow in (0, 1):
                            kd, kh, kw = tap[(od, rd)], tap[(oh, rh)], tap[(ow, rw)]
                            blk = zeros if min(kd, kh, kw) < 0 else w[:, :, kd, kh, kw]
                            blocks.append(blk)
                sub = jnp.stack(blocks, axis=1)              # (Cin, 8, Cout)
                rows.append(sub.transpose(2, 0, 1).reshape(cout, cin * 8))
    return jnp.concatenate(rows, axis=0).astype(WIRE_DTYPE)  # (8*Cout, 8*Cin)


def deconv_w(kg, cin, cout):
    fan_in = cin * 27
    std = (1.0 / fan_in) ** 0.5
    w = jax.random.normal(kg.next(), (cin, cout, 3, 3, 3), jnp.float32) * std
    return _pack_deconv_weight(w)


def hdc_params(kg, in_dim, out_dim):
    oi = out_dim // 4
    p = {
        "left": conv_w(kg, in_dim, out_dim, (1, 1, 1)),
        "c331L": conv_w(kg, oi, oi, (3, 3, 1)),
        "c133L": conv_w(kg, oi, oi, (1, 3, 3)),
        "c313L": conv_w(kg, oi, oi, (3, 1, 3)),
        "c331R": conv_w(kg, oi, oi, (3, 3, 1)),
        "c133R": conv_w(kg, oi, oi, (1, 3, 3)),
        "c313R": conv_w(kg, oi, oi, (3, 1, 3)),
        "topL": conv_w(kg, out_dim, out_dim, (1, 1, 1)),
        "right": conv_w(kg, out_dim, out_dim, (1, 1, 1)),
    }
    if in_dim > out_dim:
        p["proj"] = conv_w(kg, in_dim, out_dim, (1, 1, 1))
    return p


def hdc_net_init(key, in_dim, out_dim, n_f):
    kg = KeyGen(key)
    return {
        "down": conv_w(kg, in_dim, n_f, (3, 3, 3)),
        "conv_1": hdc_params(kg, n_f, n_f),
        "down_1": conv_w(kg, n_f, n_f, (3, 3, 3)),
        "conv_2": hdc_params(kg, n_f, n_f),
        "down_2": conv_w(kg, n_f, n_f, (3, 3, 3)),
        "conv_3": hdc_params(kg, n_f, n_f),
        "down_3": conv_w(kg, n_f, n_f, (3, 3, 3)),
        "bridge": hdc_params(kg, n_f, n_f),
        "up_1": deconv_w(kg, n_f, n_f),
        "conv_4": hdc_params(kg, 2 * n_f, n_f),
        "up_2": deconv_w(kg, n_f, n_f),
        "conv_5": hdc_params(kg, 2 * n_f, n_f),
        "up_3": deconv_w(kg, n_f, n_f),
        "conv_6": hdc_params(kg, 2 * n_f, n_f),
        "up": deconv_w(kg, n_f, n_f),
        "out": {"w": conv_w(kg, n_f, out_dim, (1, 1, 1)),
                "b": jnp.zeros((out_dim,), jnp.float32)},
    }


# ----------------------------------------------------------------------------
# Network forward (channel-first (C,N,D,H,W) internally; concats / pre-conv
# adds are XLA glue and fuse into the im2col materialization).
# ----------------------------------------------------------------------------
def hdc_block_forward(x, p, in_dim, out_dim):
    oi = out_dim // 4
    x_1 = conv_bn_relu(x, p["left"], (1, 1, 1))
    x1 = x_1[0:oi]
    x2 = x_1[oi:2 * oi]
    x3 = x_1[2 * oi:3 * oi]
    x4 = x_1[3 * oi:4 * oi]
    x2 = conv_bn_relu(x2, p["c331L"], (3, 3, 1), padding=(1, 1, 0))
    x3 = conv_bn_relu(x2 + x3, p["c133L"], (1, 3, 3), padding=(0, 1, 1))
    x4 = conv_bn_relu(x3 + x4, p["c313L"], (3, 1, 3), padding=(1, 0, 1))
    x_top = jnp.concatenate([x1, x2, x3, x4], axis=0)
    x_top = conv_bn_relu(x_top, p["topL"], (1, 1, 1))
    x1_2 = x_top[0:oi]
    x2_2 = x_top[oi:2 * oi]
    x3_2 = x_top[2 * oi:3 * oi]
    x4_2 = x_top[3 * oi:4 * oi]
    x11 = x1 + x1_2
    x22 = conv_bn_relu(x2 + x2_2, p["c331R"], (3, 3, 1), padding=(1, 1, 0))
    x33 = conv_bn_relu(x3 + x3_2, p["c133R"], (1, 3, 3), padding=(0, 1, 1))
    x44 = conv_bn_relu(x4 + x4_2, p["c313R"], (3, 1, 3), padding=(1, 0, 1))
    xx = jnp.concatenate([x11, x22, x33, x44], axis=0)
    res = conv_bn_relu(x, p["proj"], (1, 1, 1)) if in_dim > out_dim else x
    # Block residual (xx + x) fused into the BN+ReLU apply of the final 1x1 conv.
    return conv_bn_relu(xx, p["right"], (1, 1, 1), residual=res)


def hdc_net_forward(x, P, in_dim, out_dim, n_f):
    # NCDHW -> channel-first (C, N, D, H, W), bf16 on the wire.
    x = jnp.transpose(x, (1, 0, 2, 3, 4)).astype(WIRE_DTYPE)

    x = conv_bn_relu(x, P["down"], (3, 3, 3), stride=(2, 2, 2), padding=(1, 1, 1))
    x1 = hdc_block_forward(x, P["conv_1"], n_f, n_f)
    x = conv_bn_relu(x1, P["down_1"], (3, 3, 3), stride=(2, 2, 2), padding=(1, 1, 1))
    x2 = hdc_block_forward(x, P["conv_2"], n_f, n_f)
    x = conv_bn_relu(x2, P["down_2"], (3, 3, 3), stride=(2, 2, 2), padding=(1, 1, 1))
    x3 = hdc_block_forward(x, P["conv_3"], n_f, n_f)
    x = conv_bn_relu(x3, P["down_3"], (3, 3, 3), stride=(2, 2, 2), padding=(1, 1, 1))
    x = hdc_block_forward(x, P["bridge"], n_f, n_f)

    x = conv_transpose_bn_relu(x, P["up_1"])
    x = jnp.concatenate([x, x3], axis=0)
    x = hdc_block_forward(x, P["conv_4"], 2 * n_f, n_f)
    x = conv_transpose_bn_relu(x, P["up_2"])
    x = jnp.concatenate([x, x2], axis=0)
    x = hdc_block_forward(x, P["conv_5"], 2 * n_f, n_f)
    x = conv_transpose_bn_relu(x, P["up_3"])
    x = jnp.concatenate([x, x1], axis=0)
    x = hdc_block_forward(x, P["conv_6"], 2 * n_f, n_f)
    x = conv_transpose_bn_relu(x, P["up"])

    # Final 1x1x1 conv (with bias, no BN) + channel softmax, fused in one kernel.
    return out_conv_softmax(x, P["out"]["w"], P["out"]["b"])


# ----------------------------------------------------------------------------
if __name__ == "__main__":
    in_dim, out_dim, n_f = 4, 4, 8
    key = jax.random.PRNGKey(0)
    pkey, xkey = jax.random.split(key)
    params = hdc_net_init(pkey, in_dim, out_dim, n_f)
    x = jax.random.normal(xkey, (2, in_dim, 16, 16, 16), jnp.float32)

    fwd = jax.jit(functools.partial(
        hdc_net_forward, in_dim=in_dim, out_dim=out_dim, n_f=n_f))
    y = jax.block_until_ready(fwd(x, params))

    assert y.shape == (2, out_dim, 16, 16, 16), y.shape
    assert bool(jnp.all(jnp.isfinite(y)))
    print("KERNEL_OK")
</pallas_src>

<mosaic_0001>
module attributes {stable_mosaic.version = 11 : i64} {
  func.func @_matmul_stats_kernel(%arg0: i32, %arg1: memref<108x1024xbf16, #tpu.memory_space<vmem>>, %arg2: memref<8x108xbf16, #tpu.memory_space<vmem>>, %arg3: memref<8x1024xbf16, #tpu.memory_space<vmem>>, %arg4: memref<1x8x1xf32, #tpu.memory_space<vmem>>, %arg5: memref<1x8x1xf32, #tpu.memory_space<vmem>>) attributes {dimension_semantics = [#tpu.dimension_semantics<parallel>], iteration_bounds = array<i64: 1>, scalar_prefetch = 0 : i64, scratch_operands = 0 : i64, tpu.core_type = #tpu.core_type<tc>, window_params = [{transform_indices = @transform_0, window_bounds = array<i64: 108, 1024>}, {pipeline_mode = #tpu.pipeline_mode<synchronous>, transform_indices = @transform_1, window_bounds = array<i64: 8, 108>}, {transform_indices = @transform_2, window_bounds = array<i64: 8, 1024>}, {transform_indices = @transform_3, window_bounds = array<i64: 1, 8, 1>}, {transform_indices = @transform_4, window_bounds = array<i64: 1, 8, 1>}]} {
    %c0 = arith.constant 0 : index
    %c0_0 = arith.constant 0 : index
    %0 = vector.load %arg2[%c0, %c0_0] : memref<8x108xbf16, #tpu.memory_space<vmem>>, vector<8x108xbf16>
    %c0_1 = arith.constant 0 : index
    %c0_2 = arith.constant 0 : index
    %1 = vector.load %arg1[%c0_1, %c0_2] : memref<108x1024xbf16, #tpu.memory_space<vmem>>, vector<108x1024xbf16>
    %cst = arith.constant dense<0.000000e+00> : vector<8x1024xf32>
    %2 = tpu.matmul %0, %1, %cst {dimension_numbers = #tpu.dot_dimension_numbers<[1], [0], [0], [1], [0, 0, 1, 1], [], []>} : vector<8x108xbf16>, vector<108x1024xbf16>, vector<8x1024xf32> -> vector<8x1024xf32>
    %3 = arith.truncf %2 : vector<8x1024xf32> to vector<8x1024xbf16>
    %c0_3 = arith.constant 0 : index
    %c0_4 = arith.constant 0 : index
    %4 = vector.load %arg3[%c0_3, %c0_4] : memref<8x1024xbf16, #tpu.memory_space<vmem>>, vector<8x1024xbf16>
    tpu.vector_store %arg3[%c0_3, %c0_4], %3 {strides = array<i32>} : memref<8x1024xbf16, #tpu.memory_space<vmem>>, vector<8x1024xbf16>,
    %cst_5 = arith.constant dense<0.000000e+00> : vector<8xf32>
    %5 = vector.multi_reduction <add>, %2, %cst_5 [1] : vector<8x1024xf32> to vector<8xf32>
    %6 = vector.shape_cast %5 : vector<8xf32> to vector<8x1xf32>
    %c0_6 = arith.constant 0 : index
    %c0_7 = arith.constant 0 : index
    %c0_8 = arith.constant 0 : index
    %7 = vector.load %arg4[%c0_6, %c0_7, %c0_8] : memref<1x8x1xf32, #tpu.memory_space<vmem>>, vector<1x8x1xf32>
    %8 = vector.shape_cast %7 : vector<1x8x1xf32> to vector<8x1xf32>
    %9 = vector.shape_cast %6 : vector<8x1xf32> to vector<1x8x1xf32>
    tpu.vector_store %arg4[%c0_6, %c0_7, %c0_8], %9 {strides = array<i32>} : memref<1x8x1xf32, #tpu.memory_space<vmem>>, vector<1x8x1xf32>,
    %10 = arith.mulf %2, %2 : vector<8x1024xf32>
    %cst_9 = arith.constant dense<0.000000e+00> : vector<8xf32>
    %11 = vector.multi_reduction <add>, %10, %cst_9 [1] : vector<8x1024xf32> to vector<8xf32>
    %12 = vector.shape_cast %11 : vector<8xf32> to vector<8x1xf32>
    %c0_10 = arith.constant 0 : index
    %c0_11 = arith.constant 0 : index
    %c0_12 = arith.constant 0 : index
    %13 = vector.load %arg5[%c0_10, %c0_11, %c0_12] : memref<1x8x1xf32, #tpu.memory_space<vmem>>, vector<1x8x1xf32>
    %14 = vector.shape_cast %13 : vector<1x8x1xf32> to vector<8x1xf32>
    %15 = vector.shape_cast %12 : vector<8x1xf32> to vector<1x8x1xf32>
    tpu.vector_store %arg5[%c0_10, %c0_11, %c0_12], %15 {strides = array<i32>} : memref<1x8x1xf32, #tpu.memory_space<vmem>>, vector<1x8x1xf32>,
    return
  }
  func.func @transform_0(%arg0: i32) -> (i32, i32) {
    %c0_i32 = arith.constant 0 : i32
    %c0_i32_0 = arith.constant 0 : i32
    return %c0_i32, %arg0 : i32, i32
  }
  func.func @transform_1(%arg0: i32) -> (i32, i32) {
    %c0_i32 = arith.constant 0 : i32
    %c0_i32_0 = arith.constant 0 : i32
    %c0_i32_1 = arith.constant 0 : i32
    return %c0_i32, %c0_i32_0 : i32, i32
  }
  func.func @transform_2(%arg0: i32) -> (i32, i32) {
    %c0_i32 = arith.constant 0 : i32
    %c0_i32_0 = arith.constant 0 : i32
    return %c0_i32, %arg0 : i32, i32
  }
  func.func @transform_3(%arg0: i32) -> (i32, i32, i32) {
    %c0_i32 = arith.constant 0 : i32
    %c0_i32_0 = arith.constant 0 : i32
    %c0_i32_1 = arith.constant 0 : i32
    return %arg0, %c0_i32, %c0_i32_0 : i32, i32, i32
  }
  func.func @transform_4(%arg0: i32) -> (i32, i32, i32) {
    %c0_i32 = arith.constant 0 : i32
    %c0_i32_0 = arith.constant 0 : i32
    %c0_i32_1 = arith.constant 0 : i32
    return %arg0, %c0_i32, %c0_i32_0 : i32, i32, i32
  }
}

module attributes {stable_mosaic.version = 11 : i64} {
  func.func @kernel(%arg0: i32, %arg1: memref<8x1024xbf16, #tpu.memory_space<vmem>>, %arg2: memref<8x1xf32, #tpu.memory_space<vmem>>, %arg3: memref<8x1xf32, #tpu.memory_space<vmem>>, %arg4: memref<8x1024xbf16, #tpu.memory_space<vmem>>) attributes {dimension_semantics = [#tpu.dimension_semantics<parallel>], iteration_bounds = array<i64: 1>, scalar_prefetch = 0 : i64, scratch_operands = 0 : i64, tpu.core_type = #tpu.core_type<tc>, window_params = [{transform_indices = @transform_0, window_bounds = array<i64: 8, 1024>}, {pipeline_mode = #tpu.pipeline_mode<synchronous>, transform_indices = @transform_1, window_bounds = array<i64: 8, 1>}, {pipeline_mode = #tpu.pipeline_mode<synchronous>, transform_indices = @transform_2, window_bounds = array<i64: 8, 1>}, {transform_indices = @transform_3, window_bounds = array<i64: 8, 1024>}]} {
    %c0 = arith.constant 0 : index
    %c0_0 = arith.constant 0 : index
    %0 = vector.load %arg2[%c0, %c0_0] : memref<8x1xf32, #tpu.memory_space<vmem>>, vector<8x1xf32>
    %cst = arith.constant 9.765625E-4 : f32
    %1 = vector.broadcast %cst : f32 to vector<8x1xf32>
    %2 = arith.mulf %0, %1 : vector<8x1xf32>
    %c0_1 = arith.constant 0 : index
    %c0_2 = arith.constant 0 : index
    %3 = vector.load %arg3[%c0_1, %c0_2] : memref<8x1xf32, #tpu.memory_space<vmem>>, vector<8x1xf32>
    %cst_3 = arith.constant 9.765625E-4 : f32
    %4 = vector.broadcast %cst_3 : f32 to vector<8x1xf32>
    %5 = arith.mulf %3, %4 : vector<8x1xf32>
    %6 = arith.mulf %2, %2 : vector<8x1xf32>
    %7 = arith.subf %5, %6 : vector<8x1xf32>
    %cst_4 = arith.constant 0.000000e+00 : f32
    %8 = vector.broadcast %cst_4 : f32 to vector<8x1xf32>
    %9 = arith.maximumf %7, %8 : vector<8x1xf32>
    %cst_5 = arith.constant 9.99999974E-6 : f32
    %10 = vector.broadcast %cst_5 : f32 to vector<8x1xf32>
    %11 = arith.addf %9, %10 : vector<8x1xf32>
    %12 = math.rsqrt %11 : vector<8x1xf32>
    %c0_6 = arith.constant 0 : index
    %c0_7 = arith.constant 0 : index
    %13 = vector.load %arg1[%c0_6, %c0_7] : memref<8x1024xbf16, #tpu.memory_space<vmem>>, vector<8x1024xbf16>
    %14 = arith.extf %13 : vector<8x1024xbf16> to vector<8x1024xf32>
    %15 = vector.broadcast %2 : vector<8x1xf32> to vector<8x1024xf32>
    %16 = arith.subf %14, %15 : vector<8x1024xf32>
    %17 = vector.broadcast %12 : vector<8x1xf32> to vector<8x1024xf32>
    %18 = arith.mulf %16, %17 : vector<8x1024xf32>
    %cst_8 = arith.constant 0.000000e+00 : f32
    %19 = vector.broadcast %cst_8 : f32 to vector<8x1024xf32>
    %20 = arith.maximumf %18, %19 : vector<8x1024xf32>
    %21 = arith.truncf %20 : vector<8x1024xf32> to vector<8x1024xbf16>
    %c0_9 = arith.constant 0 : index
    %c0_10 = arith.constant 0 : index
    %22 = vector.load %arg4[%c0_9, %c0_10] : memref<8x1024xbf16, #tpu.memory_space<vmem>>, vector<8x1024xbf16>
    tpu.vector_store %arg4[%c0_9, %c0_10], %21 {strides = array<i32>} : memref<8x1024xbf16, #tpu.memory_space<vmem>>, vector<8x1024xbf16>,
    return
  }
  func.func @transform_0(%arg0: i32) -> (i32, i32) {
    %c0_i32 = arith.constant 0 : i32
    %c0_i32_0 = arith.constant 0 : i32
    return %c0_i32, %arg0 : i32, i32
  }
  func.func @transform_1(%arg0: i32) -> (i32, i32) {
    %c0_i32 = arith.constant 0 : i32
    %c0_i32_0 = arith.constant 0 : i32
    %c0_i32_1 = arith.constant 0 : i32
    return %c0_i32, %c0_i32_0 : i32, i32
  }
  func.func @transform_2(%arg0: i32) -> (i32, i32) {
    %c0_i32 = arith.constant 0 : i32
    %c0_i32_0 = arith.constant 0 : i32
    %c0_i32_1 = arith.constant 0 : i32
    return %c0_i32, %c0_i32_0 : i32, i32
  }
  func.func @transform_3(%arg0: i32) -> (i32, i32) {
    %c0_i32 = arith.constant 0 : i32
    %c0_i32_0 = arith.constant 0 : i32
    return %c0_i32, %arg0 : i32, i32
  }
}

module attributes {stable_mosaic.version = 11 : i64} {
  func.func @_matmul_stats_kernel(%arg0: i32, %arg1: memref<8x1024xbf16, #tpu.memory_space<vmem>>, %arg2: memref<8x8xbf16, #tpu.memory_space<vmem>>, %arg3: memref<8x1024xbf16, #tpu.memory_space<vmem>>, %arg4: memref<1x8x1xf32, #tpu.memory_space<vmem>>, %arg5: memref<1x8x1xf32, #tpu.memory_space<vmem>>) attributes {dimension_semantics = [#tpu.dimension_semantics<parallel>], iteration_bounds = array<i64: 1>, scalar_prefetch = 0 : i64, scratch_operands = 0 : i64, tpu.core_type = #tpu.core_type<tc>, window_params = [{transform_indices = @transform_0, window_bounds = array<i64: 8, 1024>}, {pipeline_mode = #tpu.pipeline_mode<synchronous>, transform_indices = @transform_1, window_bounds = array<i64: 8, 8>}, {transform_indices = @transform_2, window_bounds = array<i64: 8, 1024>}, {transform_indices = @transform_3, window_bounds = array<i64: 1, 8, 1>}, {transform_indices = @transform_4, window_bounds = array<i64: 1, 8, 1>}]} {
    %c0 = arith.constant 0 : index
    %c0_0 = arith.constant 0 : index
    %0 = vector.load %arg2[%c0, %c0_0] : memref<8x8xbf16, #tpu.memory_space<vmem>>, vector<8x8xbf16>
    %c0_1 = arith.constant 0 : index
    %c0_2 = arith.constant 0 : index
    %1 = vector.load %arg1[%c0_1, %c0_2] : memref<8x1024xbf16, #tpu.memory_space<vmem>>, vector<8x1024xbf16>
    %cst = arith.constant dense<0.000000e+00> : vector<8x1024xf32>
    %2 = tpu.matmul %0, %1, %cst {dimension_numbers = #tpu.dot_dimension_numbers<[1], [0], [0], [1], [0, 0, 1, 1], [], []>} : vector<8x8xbf16>, vector<8x1024xbf16>, vector<8x1024xf32> -> vector<8x1024xf32>
    %3 = arith.truncf %2 : vector<8x1024xf32> to vector<8x1024xbf16>
    %c0_3 = arith.constant 0 : index
    %c0_4 = arith.constant 0 : index
    %4 = vector.load %arg3[%c0_3, %c0_4] : memref<8x1024xbf16, #tpu.memory_space<vmem>>, vector<8x1024xbf16>
    tpu.vector_store %arg3[%c0_3, %c0_4], %3 {strides = array<i32>} : memref<8x1024xbf16, #tpu.memory_space<vmem>>, vector<8x1024xbf16>,
    %cst_5 = arith.constant dense<0.000000e+00> : vector<8xf32>
    %5 = vector.multi_reduction <add>, %2, %cst_5 [1] : vector<8x1024xf32> to vector<8xf32>
    %6 = vector.shape_cast %5 : vector<8xf32> to vector<8x1xf32>
    %c0_6 = arith.constant 0 : index
    %c0_7 = arith.constant 0 : index
    %c0_8 = arith.constant 0 : index
    %7 = vector.load %arg4[%c0_6, %c0_7, %c0_8] : memref<1x8x1xf32, #tpu.memory_space<vmem>>, vector<1x8x1xf32>
    %8 = vector.shape_cast %7 : vector<1x8x1xf32> to vector<8x1xf32>
    %9 = vector.shape_cast %6 : vector<8x1xf32> to vector<1x8x1xf32>
    tpu.vector_store %arg4[%c0_6, %c0_7, %c0_8], %9 {strides = array<i32>} : memref<1x8x1xf32, #tpu.memory_space<vmem>>, vector<1x8x1xf32>,
    %10 = arith.mulf %2, %2 : vector<8x1024xf32>
    %cst_9 = arith.constant dense<0.000000e+00> : vector<8xf32>
    %11 = vector.multi_reduction <add>, %10, %cst_9 [1] : vector<8x1024xf32> to vector<8xf32>
    %12 = vector.shape_cast %11 : vector<8xf32> to vector<8x1xf32>
    %c0_10 = arith.constant 0 : index
    %c0_11 = arith.constant 0 : index
    %c0_12 = arith.constant 0 : index
    %13 = vector.load %arg5[%c0_10, %c0_11, %c0_12] : memref<1x8x1xf32, #tpu.memory_space<vmem>>, vector<1x8x1xf32>
    %14 = vector.shape_cast %13 : vector<1x8x1xf32> to vector<8x1xf32>
    %15 = vector.shape_cast %12 : vector<8x1xf32> to vector<1x8x1xf32>
    tpu.vector_store %arg5[%c0_10, %c0_11, %c0_12], %15 {strides = array<i32>} : memref<1x8x1xf32, #tpu.memory_space<vmem>>, vector<1x8x1xf32>,
    return
  }
  func.func @transform_0(%arg0: i32) -> (i32, i32) {
    %c0_i32 = arith.constant 0 : i32
    %c0_i32_0 = arith.constant 0 : i32
    return %c0_i32, %arg0 : i32, i32
  }
  func.func @transform_1(%arg0: i32) -> (i32, i32) {
    %c0_i32 = arith.constant 0 : i32
    %c0_i32_0 = arith.constant 0 : i32
    %c0_i32_1 = arith.constant 0 : i32
    return %c0_i32, %c0_i32_0 : i32, i32
  }
  func.func @transform_2(%arg0: i32) -> (i32, i32) {
    %c0_i32 = arith.constant 0 : i32
    %c0_i32_0 = arith.constant 0 : i32
    return %c0_i32, %arg0 : i32, i32
  }
  func.func @transform_3(%arg0: i32) -> (i32, i32, i32) {
    %c0_i32 = arith.constant 0 : i32
    %c0_i32_0 = arith.constant 0 : i32
    %c0_i32_1 = arith.constant 0 : i32
    return %arg0, %c0_i32, %c0_i32_0 : i32, i32, i32
  }
  func.func @transform_4(%arg0: i32) -> (i32, i32, i32) {
    %c0_i32 = arith.constant 0 : i32
    %c0_i32_0 = arith.constant 0 : i32
    %c0_i32_1 = arith.constant 0 : i32
    return %arg0, %c0_i32, %c0_i32_0 : i32, i32, i32
  }
}

module attributes {stable_mosaic.version = 11 : i64} {
  func.func @_matmul_stats_kernel(%arg0: i32, %arg1: memref<18x1024xbf16, #tpu.memory_space<vmem>>, %arg2: memref<2x18xbf16, #tpu.memory_space<vmem>>, %arg3: memref<2x1024xbf16, #tpu.memory_space<vmem>>, %arg4: memref<1x2x1xf32, #tpu.memory_space<vmem>>, %arg5: memref<1x2x1xf32, #tpu.memory_space<vmem>>) attributes {dimension_semantics = [#tpu.dimension_semantics<parallel>], iteration_bounds = array<i64: 1>, scalar_prefetch = 0 : i64, scratch_operands = 0 : i64, tpu.core_type = #tpu.core_type<tc>, window_params = [{transform_indices = @transform_0, window_bounds = array<i64: 18, 1024>}, {pipeline_mode = #tpu.pipeline_mode<synchronous>, transform_indices = @transform_1, window_bounds = array<i64: 2, 18>}, {transform_indices = @transform_2, window_bounds = array<i64: 2, 1024>}, {transform_indices = @transform_3, window_bounds = array<i64: 1, 2, 1>}, {transform_indices = @transform_4, window_bounds = array<i64: 1, 2, 1>}]} {
    %c0 = arith.constant 0 : index
    %c0_0 = arith.constant 0 : index
    %0 = vector.load %arg2[%c0, %c0_0] : memref<2x18xbf16, #tpu.memory_space<vmem>>, vector<2x18xbf16>
    %c0_1 = arith.constant 0 : index
    %c0_2 = arith.constant 0 : index
    %1 = vector.load %arg1[%c0_1, %c0_2] : memref<18x1024xbf16, #tpu.memory_space<vmem>>, vector<18x1024xbf16>
    %cst = arith.constant dense<0.000000e+00> : vector<2x1024xf32>
    %2 = tpu.matmul %0, %1, %cst {dimension_numbers = #tpu.dot_dimension_numbers<[1], [0], [0], [1], [0, 0, 1, 1], [], []>} : vector<2x18xbf16>, vector<18x1024xbf16>, vector<2x1024xf32> -> vector<2x1024xf32>
    %3 = arith.truncf %2 : vector<2x1024xf32> to vector<2x1024xbf16>
    %c0_3 = arith.constant 0 : index
    %c0_4 = arith.constant 0 : index
    %4 = vector.load %arg3[%c0_3, %c0_4] : memref<2x1024xbf16, #tpu.memory_space<vmem>>, vector<2x1024xbf16>
    tpu.vector_store %arg3[%c0_3, %c0_4], %3 {strides = array<i32>} : memref<2x1024xbf16, #tpu.memory_space<vmem>>, vector<2x1024xbf16>,
    %cst_5 = arith.constant dense<0.000000e+00> : vector<2xf32>
    %5 = vector.multi_reduction <add>, %2, %cst_5 [1] : vector<2x1024xf32> to vector<2xf32>
    %6 = vector.shape_cast %5 : vector<2xf32> to vector<2x1xf32>
    %c0_6 = arith.constant 0 : index
    %c0_7 = arith.constant 0 : index
    %c0_8 = arith.constant 0 : index
    %7 = vector.load %arg4[%c0_6, %c0_7, %c0_8] : memref<1x2x1xf32, #tpu.memory_space<vmem>>, vector<1x2x1xf32>
    %8 = vector.shape_cast %7 : vector<1x2x1xf32> to vector<2x1xf32>
    %9 = vector.shape_cast %6 : vector<2x1xf32> to vector<1x2x1xf32>
    tpu.vector_store %arg4[%c0_6, %c0_7, %c0_8], %9 {strides = array<i32>} : memref<1x2x1xf32, #tpu.memory_space<vmem>>, vector<1x2x1xf32>,
    %10 = arith.mulf %2, %2 : vector<2x1024xf32>
    %cst_9 = arith.constant dense<0.000000e+00> : vector<2xf32>
    %11 = vector.multi_reduction <add>, %10, %cst_9 [1] : vector<2x1024xf32> to vector<2xf32>
    %12 = vector.shape_cast %11 : vector<2xf32> to vector<2x1xf32>
    %c0_10 = arith.constant 0 : index
    %c0_11 = arith.constant 0 : index
    %c0_12 = arith.constant 0 : index
    %13 = vector.load %arg5[%c0_10, %c0_11, %c0_12] : memref<1x2x1xf32, #tpu.memory_space<vmem>>, vector<1x2x1xf32>
    %14 = vector.shape_cast %13 : vector<1x2x1xf32> to vector<2x1xf32>
    %15 = vector.shape_cast %12 : vector<2x1xf32> to vector<1x2x1xf32>
    tpu.vector_store %arg5[%c0_10, %c0_11, %c0_12], %15 {strides = array<i32>} : memref<1x2x1xf32, #tpu.memory_space<vmem>>, vector<1x2x1xf32>,
    return
  }
  func.func @transform_0(%arg0: i32) -> (i32, i32) {
    %c0_i32 = arith.constant 0 : i32
    %c0_i32_0 = arith.constant 0 : i32
    return %c0_i32, %arg0 : i32, i32
  }
  func.func @transform_1(%arg0: i32) -> (i32, i32) {
    %c0_i32 = arith.constant 0 : i32
    %c0_i32_0 = arith.constant 0 : i32
    %c0_i32_1 = arith.constant 0 : i32
    return %c0_i32, %c0_i32_0 : i32, i32
  }
  func.func @transform_2(%arg0: i32) -> (i32, i32) {
    %c0_i32 = arith.constant 0 : i32
    %c0_i32_0 = arith.constant 0 : i32
    return %c0_i32, %arg0 : i32, i32
  }
  func.func @transform_3(%arg0: i32) -> (i32, i32, i32) {
    %c0_i32 = arith.constant 0 : i32
    %c0_i32_0 = arith.constant 0 : i32
    %c0_i32_1 = arith.constant 0 : i32
    return %arg0, %c0_i32, %c0_i32_0 : i32, i32, i32
  }
  func.func @transform_4(%arg0: i32) -> (i32, i32, i32) {
    %c0_i32 = arith.constant 0 : i32
    %c0_i32_0 = arith.constant 0 : i32
    %c0_i32_1 = arith.constant 0 : i32
    return %arg0, %c0_i32, %c0_i32_0 : i32, i32, i32
  }
}

module attributes {stable_mosaic.version = 11 : i64} {
  func.func @kernel(%arg0: i32, %arg1: memref<2x1024xbf16, #tpu.memory_space<vmem>>, %arg2: memref<2x1xf32, #tpu.memory_space<vmem>>, %arg3: memref<2x1xf32, #tpu.memory_space<vmem>>, %arg4: memref<2x1024xbf16, #tpu.memory_space<vmem>>) attributes {dimension_semantics = [#tpu.dimension_semantics<parallel>], iteration_bounds = array<i64: 1>, scalar_prefetch = 0 : i64, scratch_operands = 0 : i64, tpu.core_type = #tpu.core_type<tc>, window_params = [{transform_indices = @transform_0, window_bounds = array<i64: 2, 1024>}, {pipeline_mode = #tpu.pipeline_mode<synchronous>, transform_indices = @transform_1, window_bounds = array<i64: 2, 1>}, {pipeline_mode = #tpu.pipeline_mode<synchronous>, transform_indices = @transform_2, window_bounds = array<i64: 2, 1>}, {transform_indices = @transform_3, window_bounds = array<i64: 2, 1024>}]} {
    %c0 = arith.constant 0 : index
    %c0_0 = arith.constant 0 : index
    %0 = vector.load %arg2[%c0, %c0_0] : memref<2x1xf32, #tpu.memory_space<vmem>>, vector<2x1xf32>
    %cst = arith.constant 9.765625E-4 : f32
    %1 = vector.broadcast %cst : f32 to vector<2x1xf32>
    %2 = arith.mulf %0, %1 : vector<2x1xf32>
    %c0_1 = arith.constant 0 : index
    %c0_2 = arith.constant 0 : index
    %3 = vector.load %arg3[%c0_1, %c0_2] : memref<2x1xf32, #tpu.memory_space<vmem>>, vector<2x1xf32>
    %cst_3 = arith.constant 9.765625E-4 : f32
    %4 = vector.broadcast %cst_3 : f32 to vector<2x1xf32>
    %5 = arith.mulf %3, %4 : vector<2x1xf32>
    %6 = arith.mulf %2, %2 : vector<2x1xf32>
    %7 = arith.subf %5, %6 : vector<2x1xf32>
    %cst_4 = arith.constant 0.000000e+00 : f32
    %8 = vector.broadcast %cst_4 : f32 to vector<2x1xf32>
    %9 = arith.maximumf %7, %8 : vector<2x1xf32>
    %cst_5 = arith.constant 9.99999974E-6 : f32
    %10 = vector.broadcast %cst_5 : f32 to vector<2x1xf32>
    %11 = arith.addf %9, %10 : vector<2x1xf32>
    %12 = math.rsqrt %11 : vector<2x1xf32>
    %c0_6 = arith.constant 0 : index
    %c0_7 = arith.constant 0 : index
    %13 = vector.load %arg1[%c0_6, %c0_7] : memref<2x1024xbf16, #tpu.memory_space<vmem>>, vector<2x1024xbf16>
    %14 = arith.extf %13 : vector<2x1024xbf16> to vector<2x1024xf32>
    %15 = vector.broadcast %2 : vector<2x1xf32> to vector<2x1024xf32>
    %16 = arith.subf %14, %15 : vector<2x1024xf32>
    %17 = vector.broadcast %12 : vector<2x1xf32> to vector<2x1024xf32>
    %18 = arith.mulf %16, %17 : vector<2x1024xf32>
    %cst_8 = arith.constant 0.000000e+00 : f32
    %19 = vector.broadcast %cst_8 : f32 to vector<2x1024xf32>
    %20 = arith.maximumf %18, %19 : vector<2x1024xf32>
    %21 = arith.truncf %20 : vector<2x1024xf32> to vector<2x1024xbf16>
    %c0_9 = arith.constant 0 : index
    %c0_10 = arith.constant 0 : index
    %22 = vector.load %arg4[%c0_9, %c0_10] : memref<2x1024xbf16, #tpu.memory_space<vmem>>, vector<2x1024xbf16>
    tpu.vector_store %arg4[%c0_9, %c0_10], %21 {strides = array<i32>} : memref<2x1024xbf16, #tpu.memory_space<vmem>>, vector<2x1024xbf16>,
    return
  }
  func.func @transform_0(%arg0: i32) -> (i32, i32) {
    %c0_i32 = arith.constant 0 : i32
    %c0_i32_0 = arith.constant 0 : i32
    return %c0_i32, %arg0 : i32, i32
  }
  func.func @transform_1(%arg0: i32) -> (i32, i32) {
    %c0_i32 = arith.constant 0 : i32
    %c0_i32_0 = arith.constant 0 : i32
    %c0_i32_1 = arith.constant 0 : i32
    return %c0_i32, %c0_i32_0 : i32, i32
  }
  func.func @transform_2(%arg0: i32) -> (i32, i32) {
    %c0_i32 = arith.constant 0 : i32
    %c0_i32_0 = arith.constant 0 : i32
    %c0_i32_1 = arith.constant 0 : i32
    return %c0_i32, %c0_i32_0 : i32, i32
  }
  func.func @transform_3(%arg0: i32) -> (i32, i32) {
    %c0_i32 = arith.constant 0 : i32
    %c0_i32_0 = arith.constant 0 : i32
    return %c0_i32, %arg0 : i32, i32
  }
}

module attributes {stable_mosaic.version = 11 : i64} {
  func.func @kernel(%arg0: i32, %arg1: memref<8x1024xbf16, #tpu.memory_space<vmem>>, %arg2: memref<8x1xf32, #tpu.memory_space<vmem>>, %arg3: memref<8x1xf32, #tpu.memory_space<vmem>>, %arg4: memref<8x1024xbf16, #tpu.memory_space<vmem>>, %arg5: memref<8x1024xbf16, #tpu.memory_space<vmem>>) attributes {dimension_semantics = [#tpu.dimension_semantics<parallel>], iteration_bounds = array<i64: 1>, scalar_prefetch = 0 : i64, scratch_operands = 0 : i64, tpu.core_type = #tpu.core_type<tc>, window_params = [{transform_indices = @transform_0, window_bounds = array<i64: 8, 1024>}, {pipeline_mode = #tpu.pipeline_mode<synchronous>, transform_indices = @transform_1, window_bounds = array<i64: 8, 1>}, {pipeline_mode = #tpu.pipeline_mode<synchronous>, transform_indices = @transform_2, window_bounds = array<i64: 8, 1>}, {transform_indices = @transform_3, window_bounds = array<i64: 8, 1024>}, {transform_indices = @transform_4, window_bounds = array<i64: 8, 1024>}]} {
    %c0 = arith.constant 0 : index
    %c0_0 = arith.constant 0 : index
    %0 = vector.load %arg2[%c0, %c0_0] : memref<8x1xf32, #tpu.memory_space<vmem>>, vector<8x1xf32>
    %cst = arith.constant 9.765625E-4 : f32
    %1 = vector.broadcast %cst : f32 to vector<8x1xf32>
    %2 = arith.mulf %0, %1 : vector<8x1xf32>
    %c0_1 = arith.constant 0 : index
    %c0_2 = arith.constant 0 : index
    %3 = vector.load %arg3[%c0_1, %c0_2] : memref<8x1xf32, #tpu.memory_space<vmem>>, vector<8x1xf32>
    %cst_3 = arith.constant 9.765625E-4 : f32
    %4 = vector.broadcast %cst_3 : f32 to vector<8x1xf32>
    %5 = arith.mulf %3, %4 : vector<8x1xf32>
    %6 = arith.mulf %2, %2 : vector<8x1xf32>
    %7 = arith.subf %5, %6 : vector<8x1xf32>
    %cst_4 = arith.constant 0.000000e+00 : f32
    %8 = vector.broadcast %cst_4 : f32 to vector<8x1xf32>
    %9 = arith.maximumf %7, %8 : vector<8x1xf32>
    %cst_5 = arith.constant 9.99999974E-6 : f32
    %10 = vector.broadcast %cst_5 : f32 to vector<8x1xf32>
    %11 = arith.addf %9, %10 : vector<8x1xf32>
    %12 = math.rsqrt %11 : vector<8x1xf32>
    %c0_6 = arith.constant 0 : index
    %c0_7 = arith.constant 0 : index
    %13 = vector.load %arg1[%c0_6, %c0_7] : memref<8x1024xbf16, #tpu.memory_space<vmem>>, vector<8x1024xbf16>
    %14 = arith.extf %13 : vector<8x1024xbf16> to vector<8x1024xf32>
    %15 = vector.broadcast %2 : vector<8x1xf32> to vector<8x1024xf32>
    %16 = arith.subf %14, %15 : vector<8x1024xf32>
    %17 = vector.broadcast %12 : vector<8x1xf32> to vector<8x1024xf32>
    %18 = arith.mulf %16, %17 : vector<8x1024xf32>
    %cst_8 = arith.constant 0.000000e+00 : f32
    %19 = vector.broadcast %cst_8 : f32 to vector<8x1024xf32>
    %20 = arith.maximumf %18, %19 : vector<8x1024xf32>
    %c0_9 = arith.constant 0 : index
    %c0_10 = arith.constant 0 : index
    %21 = vector.load %arg4[%c0_9, %c0_10] : memref<8x1024xbf16, #tpu.memory_space<vmem>>, vector<8x1024xbf16>
    %22 = arith.extf %21 : vector<8x1024xbf16> to vector<8x1024xf32>
    %23 = arith.addf %20, %22 : vector<8x1024xf32>
    %24 = arith.truncf %23 : vector<8x1024xf32> to vector<8x1024xbf16>
    %c0_11 = arith.constant 0 : index
    %c0_12 = arith.constant 0 : index
    %25 = vector.load %arg5[%c0_11, %c0_12] : memref<8x1024xbf16, #tpu.memory_space<vmem>>, vector<8x1024xbf16>
    tpu.vector_store %arg5[%c0_11, %c0_12], %24 {strides = array<i32>} : memref<8x1024xbf16, #tpu.memory_space<vmem>>, vector<8x1024xbf16>,
    return
  }
  func.func @transform_0(%arg0: i32) -> (i32, i32) {
    %c0_i32 = arith.constant 0 : i32
    %c0_i32_0 = arith.constant 0 : i32
    return %c0_i32, %arg0 : i32, i32
  }
  func.func @transform_1(%arg0: i32) -> (i32, i32) {
    %c0_i32 = arith.constant 0 : i32
    %c0_i32_0 = arith.constant 0 : i32
    %c0_i32_1 = arith.constant 0 : i32
    return %c0_i32, %c0_i32_0 : i32, i32
  }
  func.func @transform_2(%arg0: i32) -> (i32, i32) {
    %c0_i32 = arith.constant 0 : i32
    %c0_i32_0 = arith.constant 0 : i32
    %c0_i32_1 = arith.constant 0 : i32
    return %c0_i32, %c0_i32_0 : i32, i32
  }
  func.func @transform_3(%arg0: i32) -> (i32, i32) {
    %c0_i32 = arith.constant 0 : i32
    %c0_i32_0 = arith.constant 0 : i32
    return %c0_i32, %arg0 : i32, i32
  }
  func.func @transform_4(%arg0: i32) -> (i32, i32) {
    %c0_i32 = arith.constant 0 : i32
    %c0_i32_0 = arith.constant 0 : i32
    return %c0_i32, %arg0 : i32, i32
  }
}

module attributes {stable_mosaic.version = 11 : i64} {
  func.func @_matmul_stats_kernel(%arg0: i32, %arg1: memref<216x128xbf16, #tpu.memory_space<vmem>>, %arg2: memref<8x216xbf16, #tpu.memory_space<vmem>>, %arg3: memref<8x128xbf16, #tpu.memory_space<vmem>>, %arg4: memref<1x8x1xf32, #tpu.memory_space<vmem>>, %arg5: memref<1x8x1xf32, #tpu.memory_space<vmem>>) attributes {dimension_semantics = [#tpu.dimension_semantics<parallel>], iteration_bounds = array<i64: 1>, scalar_prefetch = 0 : i64, scratch_operands = 0 : i64, tpu.core_type = #tpu.core_type<tc>, window_params = [{transform_indices = @transform_0, window_bounds = array<i64: 216, 128>}, {pipeline_mode = #tpu.pipeline_mode<synchronous>, transform_indices = @transform_1, window_bounds = array<i64: 8, 216>}, {transform_indices = @transform_2, window_bounds = array<i64: 8, 128>}, {transform_indices = @transform_3, window_bounds = array<i64: 1, 8, 1>}, {transform_indices = @transform_4, window_bounds = array<i64: 1, 8, 1>}]} {
    %c0 = arith.constant 0 : index
    %c0_0 = arith.constant 0 : index
    %0 = vector.load %arg2[%c0, %c0_0] : memref<8x216xbf16, #tpu.memory_space<vmem>>, vector<8x216xbf16>
    %c0_1 = arith.constant 0 : index
    %c0_2 = arith.constant 0 : index
    %1 = vector.load %arg1[%c0_1, %c0_2] : memref<216x128xbf16, #tpu.memory_space<vmem>>, vector<216x128xbf16>
    %cst = arith.constant dense<0.000000e+00> : vector<8x128xf32>
    %2 = tpu.matmul %0, %1, %cst {dimension_numbers = #tpu.dot_dimension_numbers<[1], [0], [0], [1], [0, 0, 1, 1], [], []>} : vector<8x216xbf16>, vector<216x128xbf16>, vector<8x128xf32> -> vector<8x128xf32>
    %3 = arith.truncf %2 : vector<8x128xf32> to vector<8x128xbf16>
    %c0_3 = arith.constant 0 : index
    %c0_4 = arith.constant 0 : index
    %4 = vector.load %arg3[%c0_3, %c0_4] : memref<8x128xbf16, #tpu.memory_space<vmem>>, vector<8x128xbf16>
    tpu.vector_store %arg3[%c0_3, %c0_4], %3 {strides = array<i32>} : memref<8x128xbf16, #tpu.memory_space<vmem>>, vector<8x128xbf16>,
    %cst_5 = arith.constant dense<0.000000e+00> : vector<8xf32>
    %5 = vector.multi_reduction <add>, %2, %cst_5 [1] : vector<8x128xf32> to vector<8xf32>
    %6 = vector.shape_cast %5 : vector<8xf32> to vector<8x1xf32>
    %c0_6 = arith.constant 0 : index
    %c0_7 = arith.constant 0 : index
    %c0_8 = arith.constant 0 : index
    %7 = vector.load %arg4[%c0_6, %c0_7, %c0_8] : memref<1x8x1xf32, #tpu.memory_space<vmem>>, vector<1x8x1xf32>
    %8 = vector.shape_cast %7 : vector<1x8x1xf32> to vector<8x1xf32>
    %9 = vector.shape_cast %6 : vector<8x1xf32> to vector<1x8x1xf32>
    tpu.vector_store %arg4[%c0_6, %c0_7, %c0_8], %9 {strides = array<i32>} : memref<1x8x1xf32, #tpu.memory_space<vmem>>, vector<1x8x1xf32>,
    %10 = arith.mulf %2, %2 : vector<8x128xf32>
    %cst_9 = arith.constant dense<0.000000e+00> : vector<8xf32>
    %11 = vector.multi_reduction <add>, %10, %cst_9 [1] : vector<8x128xf32> to vector<8xf32>
    %12 = vector.shape_cast %11 : vector<8xf32> to vector<8x1xf32>
    %c0_10 = arith.constant 0 : index
    %c0_11 = arith.constant 0 : index
    %c0_12 = arith.constant 0 : index
    %13 = vector.load %arg5[%c0_10, %c0_11, %c0_12] : memref<1x8x1xf32, #tpu.memory_space<vmem>>, vector<1x8x1xf32>
    %14 = vector.shape_cast %13 : vector<1x8x1xf32> to vector<8x1xf32>
    %15 = vector.shape_cast %12 : vector<8x1xf32> to vector<1x8x1xf32>
    tpu.vector_store %arg5[%c0_10, %c0_11, %c0_12], %15 {strides = array<i32>} : memref<1x8x1xf32, #tpu.memory_space<vmem>>, vector<1x8x1xf32>,
    return
  }
  func.func @transform_0(%arg0: i32) -> (i32, i32) {
    %c0_i32 = arith.constant 0 : i32
    %c0_i32_0 = arith.constant 0 : i32
    return %c0_i32, %arg0 : i32, i32
  }
  func.func @transform_1(%arg0: i32) -> (i32, i32) {
    %c0_i32 = arith.constant 0 : i32
    %c0_i32_0 = arith.constant 0 : i32
    %c0_i32_1 = arith.constant 0 : i32
    return %c0_i32, %c0_i32_0 : i32, i32
  }
  func.func @transform_2(%arg0: i32) -> (i32, i32) {
    %c0_i32 = arith.constant 0 : i32
    %c0_i32_0 = arith.constant 0 : i32
    return %c0_i32, %arg0 : i32, i32
  }
  func.func @transform_3(%arg0: i32) -> (i32, i32, i32) {
    %c0_i32 = arith.constant 0 : i32
    %c0_i32_0 = arith.constant 0 : i32
    %c0_i32_1 = arith.constant 0 : i32
    return %arg0, %c0_i32, %c0_i32_0 : i32, i32, i32
  }
  func.func @transform_4(%arg0: i32) -> (i32, i32, i32) {
    %c0_i32 = arith.constant 0 : i32
    %c0_i32_0 = arith.constant 0 : i32
    %c0_i32_1 = arith.constant 0 : i32
    return %arg0, %c0_i32, %c0_i32_0 : i32, i32, i32
  }
}

module attributes {stable_mosaic.version = 11 : i64} {
  func.func @kernel(%arg0: i32, %arg1: memref<8x128xbf16, #tpu.memory_space<vmem>>, %arg2: memref<8x1xf32, #tpu.memory_space<vmem>>, %arg3: memref<8x1xf32, #tpu.memory_space<vmem>>, %arg4: memref<8x128xbf16, #tpu.memory_space<vmem>>) attributes {dimension_semantics = [#tpu.dimension_semantics<parallel>], iteration_bounds = array<i64: 1>, scalar_prefetch = 0 : i64, scratch_operands = 0 : i64, tpu.core_type = #tpu.core_type<tc>, window_params = [{transform_indices = @transform_0, window_bounds = array<i64: 8, 128>}, {pipeline_mode = #tpu.pipeline_mode<synchronous>, transform_indices = @transform_1, window_bounds = array<i64: 8, 1>}, {pipeline_mode = #tpu.pipeline_mode<synchronous>, transform_indices = @transform_2, window_bounds = array<i64: 8, 1>}, {transform_indices = @transform_3, window_bounds = array<i64: 8, 128>}]} {
    %c0 = arith.constant 0 : index
    %c0_0 = arith.constant 0 : index
    %0 = vector.load %arg2[%c0, %c0_0] : memref<8x1xf32, #tpu.memory_space<vmem>>, vector<8x1xf32>
    %cst = arith.constant 7.812500e-03 : f32
    %1 = vector.broadcast %cst : f32 to vector<8x1xf32>
    %2 = arith.mulf %0, %1 : vector<8x1xf32>
    %c0_1 = arith.constant 0 : index
    %c0_2 = arith.constant 0 : index
    %3 = vector.load %arg3[%c0_1, %c0_2] : memref<8x1xf32, #tpu.memory_space<vmem>>, vector<8x1xf32>
    %cst_3 = arith.constant 7.812500e-03 : f32
    %4 = vector.broadcast %cst_3 : f32 to vector<8x1xf32>
    %5 = arith.mulf %3, %4 : vector<8x1xf32>
    %6 = arith.mulf %2, %2 : vector<8x1xf32>
    %7 = arith.subf %5, %6 : vector<8x1xf32>
    %cst_4 = arith.constant 0.000000e+00 : f32
    %8 = vector.broadcast %cst_4 : f32 to vector<8x1xf32>
    %9 = arith.maximumf %7, %8 : vector<8x1xf32>
    %cst_5 = arith.constant 9.99999974E-6 : f32
    %10 = vector.broadcast %cst_5 : f32 to vector<8x1xf32>
    %11 = arith.addf %9, %10 : vector<8x1xf32>
    %12 = math.rsqrt %11 : vector<8x1xf32>
    %c0_6 = arith.constant 0 : index
    %c0_7 = arith.constant 0 : index
    %13 = vector.load %arg1[%c0_6, %c0_7] : memref<8x128xbf16, #tpu.memory_space<vmem>>, vector<8x128xbf16>
    %14 = arith.extf %13 : vector<8x128xbf16> to vector<8x128xf32>
    %15 = vector.broadcast %2 : vector<8x1xf32> to vector<8x128xf32>
    %16 = arith.subf %14, %15 : vector<8x128xf32>
    %17 = vector.broadcast %12 : vector<8x1xf32> to vector<8x128xf32>
    %18 = arith.mulf %16, %17 : vector<8x128xf32>
    %cst_8 = arith.constant 0.000000e+00 : f32
    %19 = vector.broadcast %cst_8 : f32 to vector<8x128xf32>
    %20 = arith.maximumf %18, %19 : vector<8x128xf32>
    %21 = arith.truncf %20 : vector<8x128xf32> to vector<8x128xbf16>
    %c0_9 = arith.constant 0 : index
    %c0_10 = arith.constant 0 : index
    %22 = vector.load %arg4[%c0_9, %c0_10] : memref<8x128xbf16, #tpu.memory_space<vmem>>, vector<8x128xbf16>
    tpu.vector_store %arg4[%c0_9, %c0_10], %21 {strides = array<i32>} : memref<8x128xbf16, #tpu.memory_space<vmem>>, vector<8x128xbf16>,
    return
  }
  func.func @transform_0(%arg0: i32) -> (i32, i32) {
    %c0_i32 = arith.constant 0 : i32
    %c0_i32_0 = arith.constant 0 : i32
    return %c0_i32, %arg0 : i32, i32
  }
  func.func @transform_1(%arg0: i32) -> (i32, i32) {
    %c0_i32 = arith.constant 0 : i32
    %c0_i32_0 = arith.constant 0 : i32
    %c0_i32_1 = arith.constant 0 : i32
    return %c0_i32, %c0_i32_0 : i32, i32
  }
  func.func @transform_2(%arg0: i32) -> (i32, i32) {
    %c0_i32 = arith.constant 0 : i32
    %c0_i32_0 = arith.constant 0 : i32
    %c0_i32_1 = arith.constant 0 : i32
    return %c0_i32, %c0_i32_0 : i32, i32
  }
  func.func @transform_3(%arg0: i32) -> (i32, i32) {
    %c0_i32 = arith.constant 0 : i32
    %c0_i32_0 = arith.constant 0 : i32
    return %c0_i32, %arg0 : i32, i32
  }
}

module attributes {stable_mosaic.version = 11 : i64} {
  func.func @_matmul_stats_kernel(%arg0: i32, %arg1: memref<8x128xbf16, #tpu.memory_space<vmem>>, %arg2: memref<8x8xbf16, #tpu.memory_space<vmem>>, %arg3: memref<8x128xbf16, #tpu.memory_space<vmem>>, %arg4: memref<1x8x1xf32, #tpu.memory_space<vmem>>, %arg5: memref<1x8x1xf32, #tpu.memory_space<vmem>>) attributes {dimension_semantics = [#tpu.dimension_semantics<parallel>], iteration_bounds = array<i64: 1>, scalar_prefetch = 0 : i64, scratch_operands = 0 : i64, tpu.core_type = #tpu.core_type<tc>, window_params = [{transform_indices = @transform_0, window_bounds = array<i64: 8, 128>}, {pipeline_mode = #tpu.pipeline_mode<synchronous>, transform_indices = @transform_1, window_bounds = array<i64: 8, 8>}, {transform_indices = @transform_2, window_bounds = array<i64: 8, 128>}, {transform_indices = @transform_3, window_bounds = array<i64: 1, 8, 1>}, {transform_indices = @transform_4, window_bounds = array<i64: 1, 8, 1>}]} {
    %c0 = arith.constant 0 : index
    %c0_0 = arith.constant 0 : index
    %0 = vector.load %arg2[%c0, %c0_0] : memref<8x8xbf16, #tpu.memory_space<vmem>>, vector<8x8xbf16>
    %c0_1 = arith.constant 0 : index
    %c0_2 = arith.constant 0 : index
    %1 = vector.load %arg1[%c0_1, %c0_2] : memref<8x128xbf16, #tpu.memory_space<vmem>>, vector<8x128xbf16>
    %cst = arith.constant dense<0.000000e+00> : vector<8x128xf32>
    %2 = tpu.matmul %0, %1, %cst {dimension_numbers = #tpu.dot_dimension_numbers<[1], [0], [0], [1], [0, 0, 1, 1], [], []>} : vector<8x8xbf16>, vector<8x128xbf16>, vector<8x128xf32> -> vector<8x128xf32>
    %3 = arith.truncf %2 : vector<8x128xf32> to vector<8x128xbf16>
    %c0_3 = arith.constant 0 : index
    %c0_4 = arith.constant 0 : index
    %4 = vector.load %arg3[%c0_3, %c0_4] : memref<8x128xbf16, #tpu.memory_space<vmem>>, vector<8x128xbf16>
    tpu.vector_store %arg3[%c0_3, %c0_4], %3 {strides = array<i32>} : memref<8x128xbf16, #tpu.memory_space<vmem>>, vector<8x128xbf16>,
    %cst_5 = arith.constant dense<0.000000e+00> : vector<8xf32>
    %5 = vector.multi_reduction <add>, %2, %cst_5 [1] : vector<8x128xf32> to vector<8xf32>
    %6 = vector.shape_cast %5 : vector<8xf32> to vector<8x1xf32>
    %c0_6 = arith.constant 0 : index
    %c0_7 = arith.constant 0 : index
    %c0_8 = arith.constant 0 : index
    %7 = vector.load %arg4[%c0_6, %c0_7, %c0_8] : memref<1x8x1xf32, #tpu.memory_space<vmem>>, vector<1x8x1xf32>
    %8 = vector.shape_cast %7 : vector<1x8x1xf32> to vector<8x1xf32>
    %9 = vector.shape_cast %6 : vector<8x1xf32> to vector<1x8x1xf32>
    tpu.vector_store %arg4[%c0_6, %c0_7, %c0_8], %9 {strides = array<i32>} : memref<1x8x1xf32, #tpu.memory_space<vmem>>, vector<1x8x1xf32>,
    %10 = arith.mulf %2, %2 : vector<8x128xf32>
    %cst_9 = arith.constant dense<0.000000e+00> : vector<8xf32>
    %11 = vector.multi_reduction <add>, %10, %cst_9 [1] : vector<8x128xf32> to vector<8xf32>
    %12 = vector.shape_cast %11 : vector<8xf32> to vector<8x1xf32>
    %c0_10 = arith.constant 0 : index
    %c0_11 = arith.constant 0 : index
    %c0_12 = arith.constant 0 : index
    %13 = vector.load %arg5[%c0_10, %c0_11, %c0_12] : memref<1x8x1xf32, #tpu.memory_space<vmem>>, vector<1x8x1xf32>
    %14 = vector.shape_cast %13 : vector<1x8x1xf32> to vector<8x1xf32>
    %15 = vector.shape_cast %12 : vector<8x1xf32> to vector<1x8x1xf32>
    tpu.vector_store %arg5[%c0_10, %c0_11, %c0_12], %15 {strides = array<i32>} : memref<1x8x1xf32, #tpu.memory_space<vmem>>, vector<1x8x1xf32>,
    return
  }
  func.func @transform_0(%arg0: i32) -> (i32, i32) {
    %c0_i32 = arith.constant 0 : i32
    %c0_i32_0 = arith.constant 0 : i32
    return %c0_i32, %arg0 : i32, i32
  }
  func.func @transform_1(%arg0: i32) -> (i32, i32) {
    %c0_i32 = arith.constant 0 : i32
    %c0_i32_0 = arith.constant 0 : i32
    %c0_i32_1 = arith.constant 0 : i32
    return %c0_i32, %c0_i32_0 : i32, i32
  }
  func.func @transform_2(%arg0: i32) -> (i32, i32) {
    %c0_i32 = arith.constant 0 : i32
    %c0_i32_0 = arith.constant 0 : i32
    return %c0_i32, %arg0 : i32, i32
  }
  func.func @transform_3(%arg0: i32) -> (i32, i32, i32) {
    %c0_i32 = arith.constant 0 : i32
    %c0_i32_0 = arith.constant 0 : i32
    %c0_i32_1 = arith.constant 0 : i32
    return %arg0, %c0_i32, %c0_i32_0 : i32, i32, i32
  }
  func.func @transform_4(%arg0: i32) -> (i32, i32, i32) {
    %c0_i32 = arith.constant 0 : i32
    %c0_i32_0 = arith.constant 0 : i32
    %c0_i32_1 = arith.constant 0 : i32
    return %arg0, %c0_i32, %c0_i32_0 : i32, i32, i32
  }
}

module attributes {stable_mosaic.version = 11 : i64} {
  func.func @_matmul_stats_kernel(%arg0: i32, %arg1: memref<18x128xbf16, #tpu.memory_space<vmem>>, %arg2: memref<2x18xbf16, #tpu.memory_space<vmem>>, %arg3: memref<2x128xbf16, #tpu.memory_space<vmem>>, %arg4: memref<1x2x1xf32, #tpu.memory_space<vmem>>, %arg5: memref<1x2x1xf32, #tpu.memory_space<vmem>>) attributes {dimension_semantics = [#tpu.dimension_semantics<parallel>], iteration_bounds = array<i64: 1>, scalar_prefetch = 0 : i64, scratch_operands = 0 : i64, tpu.core_type = #tpu.core_type<tc>, window_params = [{transform_indices = @transform_0, window_bounds = array<i64: 18, 128>}, {pipeline_mode = #tpu.pipeline_mode<synchronous>, transform_indices = @transform_1, window_bounds = array<i64: 2, 18>}, {transform_indices = @transform_2, window_bounds = array<i64: 2, 128>}, {transform_indices = @transform_3, window_bounds = array<i64: 1, 2, 1>}, {transform_indices = @transform_4, window_bounds = array<i64: 1, 2, 1>}]} {
    %c0 = arith.constant 0 : index
    %c0_0 = arith.constant 0 : index
    %0 = vector.load %arg2[%c0, %c0_0] : memref<2x18xbf16, #tpu.memory_space<vmem>>, vector<2x18xbf16>
    %c0_1 = arith.constant 0 : index
    %c0_2 = arith.constant 0 : index
    %1 = vector.load %arg1[%c0_1, %c0_2] : memref<18x128xbf16, #tpu.memory_space<vmem>>, vector<18x128xbf16>
    %cst = arith.constant dense<0.000000e+00> : vector<2x128xf32>
    %2 = tpu.matmul %0, %1, %cst {dimension_numbers = #tpu.dot_dimension_numbers<[1], [0], [0], [1], [0, 0, 1, 1], [], []>} : vector<2x18xbf16>, vector<18x128xbf16>, vector<2x128xf32> -> vector<2x128xf32>
    %3 = arith.truncf %2 : vector<2x128xf32> to vector<2x128xbf16>
    %c0_3 = arith.constant 0 : index
    %c0_4 = arith.constant 0 : index
    %4 = vector.load %arg3[%c0_3, %c0_4] : memref<2x128xbf16, #tpu.memory_space<vmem>>, vector<2x128xbf16>
    tpu.vector_store %arg3[%c0_3, %c0_4], %3 {strides = array<i32>} : memref<2x128xbf16, #tpu.memory_space<vmem>>, vector<2x128xbf16>,
    %cst_5 = arith.constant dense<0.000000e+00> : vector<2xf32>
    %5 = vector.multi_reduction <add>, %2, %cst_5 [1] : vector<2x128xf32> to vector<2xf32>
    %6 = vector.shape_cast %5 : vector<2xf32> to vector<2x1xf32>
    %c0_6 = arith.constant 0 : index
    %c0_7 = arith.constant 0 : index
    %c0_8 = arith.constant 0 : index
    %7 = vector.load %arg4[%c0_6, %c0_7, %c0_8] : memref<1x2x1xf32, #tpu.memory_space<vmem>>, vector<1x2x1xf32>
    %8 = vector.shape_cast %7 : vector<1x2x1xf32> to vector<2x1xf32>
    %9 = vector.shape_cast %6 : vector<2x1xf32> to vector<1x2x1xf32>
    tpu.vector_store %arg4[%c0_6, %c0_7, %c0_8], %9 {strides = array<i32>} : memref<1x2x1xf32, #tpu.memory_space<vmem>>, vector<1x2x1xf32>,
    %10 = arith.mulf %2, %2 : vector<2x128xf32>
    %cst_9 = arith.constant dense<0.000000e+00> : vector<2xf32>
    %11 = vector.multi_reduction <add>, %10, %cst_9 [1] : vector<2x128xf32> to vector<2xf32>
    %12 = vector.shape_cast %11 : vector<2xf32> to vector<2x1xf32>
    %c0_10 = arith.constant 0 : index
    %c0_11 = arith.constant 0 : index
    %c0_12 = arith.constant 0 : index
    %13 = vector.load %arg5[%c0_10, %c0_11, %c0_12] : memref<1x2x1xf32, #tpu.memory_space<vmem>>, vector<1x2x1xf32>
    %14 = vector.shape_cast %13 : vector<1x2x1xf32> to vector<2x1xf32>
    %15 = vector.shape_cast %12 : vector<2x1xf32> to vector<1x2x1xf32>
    tpu.vector_store %arg5[%c0_10, %c0_11, %c0_12], %15 {strides = array<i32>} : memref<1x2x1xf32, #tpu.memory_space<vmem>>, vector<1x2x1xf32>,
    return
  }
  func.func @transform_0(%arg0: i32) -> (i32, i32) {
    %c0_i32 = arith.constant 0 : i32
    %c0_i32_0 = arith.constant 0 : i32
    return %c0_i32, %arg0 : i32, i32
  }
  func.func @transform_1(%arg0: i32) -> (i32, i32) {
    %c0_i32 = arith.constant 0 : i32
    %c0_i32_0 = arith.constant 0 : i32
    %c0_i32_1 = arith.constant 0 : i32
    return %c0_i32, %c0_i32_0 : i32, i32
  }
  func.func @transform_2(%arg0: i32) -> (i32, i32) {
    %c0_i32 = arith.constant 0 : i32
    %c0_i32_0 = arith.constant 0 : i32
    return %c0_i32, %arg0 : i32, i32
  }
  func.func @transform_3(%arg0: i32) -> (i32, i32, i32) {
    %c0_i32 = arith.constant 0 : i32
    %c0_i32_0 = arith.constant 0 : i32
    %c0_i32_1 = arith.constant 0 : i32
    return %arg0, %c0_i32, %c0_i32_0 : i32, i32, i32
  }
  func.func @transform_4(%arg0: i32) -> (i32, i32, i32) {
    %c0_i32 = arith.constant 0 : i32
    %c0_i32_0 = arith.constant 0 : i32
    %c0_i32_1 = arith.constant 0 : i32
    return %arg0, %c0_i32, %c0_i32_0 : i32, i32, i32
  }
}

module attributes {stable_mosaic.version = 11 : i64} {
  func.func @kernel(%arg0: i32, %arg1: memref<2x128xbf16, #tpu.memory_space<vmem>>, %arg2: memref<2x1xf32, #tpu.memory_space<vmem>>, %arg3: memref<2x1xf32, #tpu.memory_space<vmem>>, %arg4: memref<2x128xbf16, #tpu.memory_space<vmem>>) attributes {dimension_semantics = [#tpu.dimension_semantics<parallel>], iteration_bounds = array<i64: 1>, scalar_prefetch = 0 : i64, scratch_operands = 0 : i64, tpu.core_type = #tpu.core_type<tc>, window_params = [{transform_indices = @transform_0, window_bounds = array<i64: 2, 128>}, {pipeline_mode = #tpu.pipeline_mode<synchronous>, transform_indices = @transform_1, window_bounds = array<i64: 2, 1>}, {pipeline_mode = #tpu.pipeline_mode<synchronous>, transform_indices = @transform_2, window_bounds = array<i64: 2, 1>}, {transform_indices = @transform_3, window_bounds = array<i64: 2, 128>}]} {
    %c0 = arith.constant 0 : index
    %c0_0 = arith.constant 0 : index
    %0 = vector.load %arg2[%c0, %c0_0] : memref<2x1xf32, #tpu.memory_space<vmem>>, vector<2x1xf32>
    %cst = arith.constant 7.812500e-03 : f32
    %1 = vector.broadcast %cst : f32 to vector<2x1xf32>
    %2 = arith.mulf %0, %1 : vector<2x1xf32>
    %c0_1 = arith.constant 0 : index
    %c0_2 = arith.constant 0 : index
    %3 = vector.load %arg3[%c0_1, %c0_2] : memref<2x1xf32, #tpu.memory_space<vmem>>, vector<2x1xf32>
    %cst_3 = arith.constant 7.812500e-03 : f32
    %4 = vector.broadcast %cst_3 : f32 to vector<2x1xf32>
    %5 = arith.mulf %3, %4 : vector<2x1xf32>
    %6 = arith.mulf %2, %2 : vector<2x1xf32>
    %7 = arith.subf %5, %6 : vector<2x1xf32>
    %cst_4 = arith.constant 0.000000e+00 : f32
    %8 = vector.broadcast %cst_4 : f32 to vector<2x1xf32>
    %9 = arith.maximumf %7, %8 : vector<2x1xf32>
    %cst_5 = arith.constant 9.99999974E-6 : f32
    %10 = vector.broadcast %cst_5 : f32 to vector<2x1xf32>
    %11 = arith.addf %9, %10 : vector<2x1xf32>
    %12 = math.rsqrt %11 : vector<2x1xf32>
    %c0_6 = arith.constant 0 : index
    %c0_7 = arith.constant 0 : index
    %13 = vector.load %arg1[%c0_6, %c0_7] : memref<2x128xbf16, #tpu.memory_space<vmem>>, vector<2x128xbf16>
    %14 = arith.extf %13 : vector<2x128xbf16> to vector<2x128xf32>
    %15 = vector.broadcast %2 : vector<2x1xf32> to vector<2x128xf32>
    %16 = arith.subf %14, %15 : vector<2x128xf32>
    %17 = vector.broadcast %12 : vector<2x1xf32> to vector<2x128xf32>
    %18 = arith.mulf %16, %17 : vector<2x128xf32>
    %cst_8 = arith.constant 0.000000e+00 : f32
    %19 = vector.broadcast %cst_8 : f32 to vector<2x128xf32>
    %20 = arith.maximumf %18, %19 : vector<2x128xf32>
    %21 = arith.truncf %20 : vector<2x128xf32> to vector<2x128xbf16>
    %c0_9 = arith.constant 0 : index
    %c0_10 = arith.constant 0 : index
    %22 = vector.load %arg4[%c0_9, %c0_10] : memref<2x128xbf16, #tpu.memory_space<vmem>>, vector<2x128xbf16>
    tpu.vector_store %arg4[%c0_9, %c0_10], %21 {strides = array<i32>} : memref<2x128xbf16, #tpu.memory_space<vmem>>, vector<2x128xbf16>,
    return
  }
  func.func @transform_0(%arg0: i32) -> (i32, i32) {
    %c0_i32 = arith.constant 0 : i32
    %c0_i32_0 = arith.constant 0 : i32
    return %c0_i32, %arg0 : i32, i32
  }
  func.func @transform_1(%arg0: i32) -> (i32, i32) {
    %c0_i32 = arith.constant 0 : i32
    %c0_i32_0 = arith.constant 0 : i32
    %c0_i32_1 = arith.constant 0 : i32
    return %c0_i32, %c0_i32_0 : i32, i32
  }
  func.func @transform_2(%arg0: i32) -> (i32, i32) {
    %c0_i32 = arith.constant 0 : i32
    %c0_i32_0 = arith.constant 0 : i32
    %c0_i32_1 = arith.constant 0 : i32
    return %c0_i32, %c0_i32_0 : i32, i32
  }
  func.func @transform_3(%arg0: i32) -> (i32, i32) {
    %c0_i32 = arith.constant 0 : i32
    %c0_i32_0 = arith.constant 0 : i32
    return %c0_i32, %arg0 : i32, i32
  }
}

module attributes {stable_mosaic.version = 11 : i64} {
  func.func @kernel(%arg0: i32, %arg1: memref<8x128xbf16, #tpu.memory_space<vmem>>, %arg2: memref<8x1xf32, #tpu.memory_space<vmem>>, %arg3: memref<8x1xf32, #tpu.memory_space<vmem>>, %arg4: memref<8x128xbf16, #tpu.memory_space<vmem>>, %arg5: memref<8x128xbf16, #tpu.memory_space<vmem>>) attributes {dimension_semantics = [#tpu.dimension_semantics<parallel>], iteration_bounds = array<i64: 1>, scalar_prefetch = 0 : i64, scratch_operands = 0 : i64, tpu.core_type = #tpu.core_type<tc>, window_params = [{transform_indices = @transform_0, window_bounds = array<i64: 8, 128>}, {pipeline_mode = #tpu.pipeline_mode<synchronous>, transform_indices = @transform_1, window_bounds = array<i64: 8, 1>}, {pipeline_mode = #tpu.pipeline_mode<synchronous>, transform_indices = @transform_2, window_bounds = array<i64: 8, 1>}, {transform_indices = @transform_3, window_bounds = array<i64: 8, 128>}, {transform_indices = @transform_4, window_bounds = array<i64: 8, 128>}]} {
    %c0 = arith.constant 0 : index
    %c0_0 = arith.constant 0 : index
    %0 = vector.load %arg2[%c0, %c0_0] : memref<8x1xf32, #tpu.memory_space<vmem>>, vector<8x1xf32>
    %cst = arith.constant 7.812500e-03 : f32
    %1 = vector.broadcast %cst : f32 to vector<8x1xf32>
    %2 = arith.mulf %0, %1 : vector<8x1xf32>
    %c0_1 = arith.constant 0 : index
    %c0_2 = arith.constant 0 : index
    %3 = vector.load %arg3[%c0_1, %c0_2] : memref<8x1xf32, #tpu.memory_space<vmem>>, vector<8x1xf32>
    %cst_3 = arith.constant 7.812500e-03 : f32
    %4 = vector.broadcast %cst_3 : f32 to vector<8x1xf32>
    %5 = arith.mulf %3, %4 : vector<8x1xf32>
    %6 = arith.mulf %2, %2 : vector<8x1xf32>
    %7 = arith.subf %5, %6 : vector<8x1xf32>
    %cst_4 = arith.constant 0.000000e+00 : f32
    %8 = vector.broadcast %cst_4 : f32 to vector<8x1xf32>
    %9 = arith.maximumf %7, %8 : vector<8x1xf32>
    %cst_5 = arith.constant 9.99999974E-6 : f32
    %10 = vector.broadcast %cst_5 : f32 to vector<8x1xf32>
    %11 = arith.addf %9, %10 : vector<8x1xf32>
    %12 = math.rsqrt %11 : vector<8x1xf32>
    %c0_6 = arith.constant 0 : index
    %c0_7 = arith.constant 0 : index
    %13 = vector.load %arg1[%c0_6, %c0_7] : memref<8x128xbf16, #tpu.memory_space<vmem>>, vector<8x128xbf16>
    %14 = arith.extf %13 : vector<8x128xbf16> to vector<8x128xf32>
    %15 = vector.broadcast %2 : vector<8x1xf32> to vector<8x128xf32>
    %16 = arith.subf %14, %15 : vector<8x128xf32>
    %17 = vector.broadcast %12 : vector<8x1xf32> to vector<8x128xf32>
    %18 = arith.mulf %16, %17 : vector<8x128xf32>
    %cst_8 = arith.constant 0.000000e+00 : f32
    %19 = vector.broadcast %cst_8 : f32 to vector<8x128xf32>
    %20 = arith.maximumf %18, %19 : vector<8x128xf32>
    %c0_9 = arith.constant 0 : index
    %c0_10 = arith.constant 0 : index
    %21 = vector.load %arg4[%c0_9, %c0_10] : memref<8x128xbf16, #tpu.memory_space<vmem>>, vector<8x128xbf16>
    %22 = arith.extf %21 : vector<8x128xbf16> to vector<8x128xf32>
    %23 = arith.addf %20, %22 : vector<8x128xf32>
    %24 = arith.truncf %23 : vector<8x128xf32> to vector<8x128xbf16>
    %c0_11 = arith.constant 0 : index
    %c0_12 = arith.constant 0 : index
    %25 = vector.load %arg5[%c0_11, %c0_12] : memref<8x128xbf16, #tpu.memory_space<vmem>>, vector<8x128xbf16>
    tpu.vector_store %arg5[%c0_11, %c0_12], %24 {strides = array<i32>} : memref<8x128xbf16, #tpu.memory_space<vmem>>, vector<8x128xbf16>,
    return
  }
  func.func @transform_0(%arg0: i32) -> (i32, i32) {
    %c0_i32 = arith.constant 0 : i32
    %c0_i32_0 = arith.constant 0 : i32
    return %c0_i32, %arg0 : i32, i32
  }
  func.func @transform_1(%arg0: i32) -> (i32, i32) {
    %c0_i32 = arith.constant 0 : i32
    %c0_i32_0 = arith.constant 0 : i32
    %c0_i32_1 = arith.constant 0 : i32
    return %c0_i32, %c0_i32_0 : i32, i32
  }
  func.func @transform_2(%arg0: i32) -> (i32, i32) {
    %c0_i32 = arith.constant 0 : i32
    %c0_i32_0 = arith.constant 0 : i32
    %c0_i32_1 = arith.constant 0 : i32
    return %c0_i32, %c0_i32_0 : i32, i32
  }
  func.func @transform_3(%arg0: i32) -> (i32, i32) {
    %c0_i32 = arith.constant 0 : i32
    %c0_i32_0 = arith.constant 0 : i32
    return %c0_i32, %arg0 : i32, i32
  }
  func.func @transform_4(%arg0: i32) -> (i32, i32) {
    %c0_i32 = arith.constant 0 : i32
    %c0_i32_0 = arith.constant 0 : i32
    return %c0_i32, %arg0 : i32, i32
  }
}

module attributes {stable_mosaic.version = 11 : i64} {
  func.func @kernel(%arg0: i32, %arg1: memref<8x128xbf16, #tpu.memory_space<vmem>>, %arg2: memref<8x1xf32, #tpu.memory_space<vmem>>, %arg3: memref<8x1xf32, #tpu.memory_space<vmem>>, %arg4: memref<8x128xbf16, #tpu.memory_space<vmem>>) attributes {dimension_semantics = [#tpu.dimension_semantics<parallel>], iteration_bounds = array<i64: 1>, scalar_prefetch = 0 : i64, scratch_operands = 0 : i64, tpu.core_type = #tpu.core_type<tc>, window_params = [{transform_indices = @transform_0, window_bounds = array<i64: 8, 128>}, {pipeline_mode = #tpu.pipeline_mode<synchronous>, transform_indices = @transform_1, window_bounds = array<i64: 8, 1>}, {pipeline_mode = #tpu.pipeline_mode<synchronous>, transform_indices = @transform_2, window_bounds = array<i64: 8, 1>}, {transform_indices = @transform_3, window_bounds = array<i64: 8, 128>}]} {
    %c0 = arith.constant 0 : index
    %c0_0 = arith.constant 0 : index
    %0 = vector.load %arg2[%c0, %c0_0] : memref<8x1xf32, #tpu.memory_space<vmem>>, vector<8x1xf32>
    %cst = arith.constant 6.250000e-02 : f32
    %1 = vector.broadcast %cst : f32 to vector<8x1xf32>
    %2 = arith.mulf %0, %1 : vector<8x1xf32>
    %c0_1 = arith.constant 0 : index
    %c0_2 = arith.constant 0 : index
    %3 = vector.load %arg3[%c0_1, %c0_2] : memref<8x1xf32, #tpu.memory_space<vmem>>, vector<8x1xf32>
    %cst_3 = arith.constant 6.250000e-02 : f32
    %4 = vector.broadcast %cst_3 : f32 to vector<8x1xf32>
    %5 = arith.mulf %3, %4 : vector<8x1xf32>
    %6 = arith.mulf %2, %2 : vector<8x1xf32>
    %7 = arith.subf %5, %6 : vector<8x1xf32>
    %cst_4 = arith.constant 0.000000e+00 : f32
    %8 = vector.broadcast %cst_4 : f32 to vector<8x1xf32>
    %9 = arith.maximumf %7, %8 : vector<8x1xf32>
    %cst_5 = arith.constant 9.99999974E-6 : f32
    %10 = vector.broadcast %cst_5 : f32 to vector<8x1xf32>
    %11 = arith.addf %9, %10 : vector<8x1xf32>
    %12 = math.rsqrt %11 : vector<8x1xf32>
    %c0_6 = arith.constant 0 : index
    %c0_7 = arith.constant 0 : index
    %13 = vector.load %arg1[%c0_6, %c0_7] : memref<8x128xbf16, #tpu.memory_space<vmem>>, vector<8x128xbf16>
    %14 = arith.extf %13 : vector<8x128xbf16> to vector<8x128xf32>
    %15 = vector.broadcast %2 : vector<8x1xf32> to vector<8x128xf32>
    %16 = arith.subf %14, %15 : vector<8x128xf32>
    %17 = vector.broadcast %12 : vector<8x1xf32> to vector<8x128xf32>
    %18 = arith.mulf %16, %17 : vector<8x128xf32>
    %cst_8 = arith.constant 0.000000e+00 : f32
    %19 = vector.broadcast %cst_8 : f32 to vector<8x128xf32>
    %20 = arith.maximumf %18, %19 : vector<8x128xf32>
    %21 = arith.truncf %20 : vector<8x128xf32> to vector<8x128xbf16>
    %c0_9 = arith.constant 0 : index
    %c0_10 = arith.constant 0 : index
    %22 = vector.load %arg4[%c0_9, %c0_10] : memref<8x128xbf16, #tpu.memory_space<vmem>>, vector<8x128xbf16>
    tpu.vector_store %arg4[%c0_9, %c0_10], %21 {strides = array<i32>} : memref<8x128xbf16, #tpu.memory_space<vmem>>, vector<8x128xbf16>,
    return
  }
  func.func @transform_0(%arg0: i32) -> (i32, i32) {
    %c0_i32 = arith.constant 0 : i32
    %c0_i32_0 = arith.constant 0 : i32
    return %c0_i32, %arg0 : i32, i32
  }
  func.func @transform_1(%arg0: i32) -> (i32, i32) {
    %c0_i32 = arith.constant 0 : i32
    %c0_i32_0 = arith.constant 0 : i32
    %c0_i32_1 = arith.constant 0 : i32
    return %c0_i32, %c0_i32_0 : i32, i32
  }
  func.func @transform_2(%arg0: i32) -> (i32, i32) {
    %c0_i32 = arith.constant 0 : i32
    %c0_i32_0 = arith.constant 0 : i32
    %c0_i32_1 = arith.constant 0 : i32
    return %c0_i32, %c0_i32_0 : i32, i32
  }
  func.func @transform_3(%arg0: i32) -> (i32, i32) {
    %c0_i32 = arith.constant 0 : i32
    %c0_i32_0 = arith.constant 0 : i32
    return %c0_i32, %arg0 : i32, i32
  }
}

module attributes {stable_mosaic.version = 11 : i64} {
  func.func @kernel(%arg0: i32, %arg1: memref<2x128xbf16, #tpu.memory_space<vmem>>, %arg2: memref<2x1xf32, #tpu.memory_space<vmem>>, %arg3: memref<2x1xf32, #tpu.memory_space<vmem>>, %arg4: memref<2x128xbf16, #tpu.memory_space<vmem>>) attributes {dimension_semantics = [#tpu.dimension_semantics<parallel>], iteration_bounds = array<i64: 1>, scalar_prefetch = 0 : i64, scratch_operands = 0 : i64, tpu.core_type = #tpu.core_type<tc>, window_params = [{transform_indices = @transform_0, window_bounds = array<i64: 2, 128>}, {pipeline_mode = #tpu.pipeline_mode<synchronous>, transform_indices = @transform_1, window_bounds = array<i64: 2, 1>}, {pipeline_mode = #tpu.pipeline_mode<synchronous>, transform_indices = @transform_2, window_bounds = array<i64: 2, 1>}, {transform_indices = @transform_3, window_bounds = array<i64: 2, 128>}]} {
    %c0 = arith.constant 0 : index
    %c0_0 = arith.constant 0 : index
    %0 = vector.load %arg2[%c0, %c0_0] : memref<2x1xf32, #tpu.memory_space<vmem>>, vector<2x1xf32>
    %cst = arith.constant 6.250000e-02 : f32
    %1 = vector.broadcast %cst : f32 to vector<2x1xf32>
    %2 = arith.mulf %0, %1 : vector<2x1xf32>
    %c0_1 = arith.constant 0 : index
    %c0_2 = arith.constant 0 : index
    %3 = vector.load %arg3[%c0_1, %c0_2] : memref<2x1xf32, #tpu.memory_space<vmem>>, vector<2x1xf32>
    %cst_3 = arith.constant 6.250000e-02 : f32
    %4 = vector.broadcast %cst_3 : f32 to vector<2x1xf32>
    %5 = arith.mulf %3, %4 : vector<2x1xf32>
    %6 = arith.mulf %2, %2 : vector<2x1xf32>
    %7 = arith.subf %5, %6 : vector<2x1xf32>
    %cst_4 = arith.constant 0.000000e+00 : f32
    %8 = vector.broadcast %cst_4 : f32 to vector<2x1xf32>
    %9 = arith.maximumf %7, %8 : vector<2x1xf32>
    %cst_5 = arith.constant 9.99999974E-6 : f32
    %10 = vector.broadcast %cst_5 : f32 to vector<2x1xf32>
    %11 = arith.addf %9, %10 : vector<2x1xf32>
    %12 = math.rsqrt %11 : vector<2x1xf32>
    %c0_6 = arith.constant 0 : index
    %c0_7 = arith.constant 0 : index
    %13 = vector.load %arg1[%c0_6, %c0_7] : memref<2x128xbf16, #tpu.memory_space<vmem>>, vector<2x128xbf16>
    %14 = arith.extf %13 : vector<2x128xbf16> to vector<2x128xf32>
    %15 = vector.broadcast %2 : vector<2x1xf32> to vector<2x128xf32>
    %16 = arith.subf %14, %15 : vector<2x128xf32>
    %17 = vector.broadcast %12 : vector<2x1xf32> to vector<2x128xf32>
    %18 = arith.mulf %16, %17 : vector<2x128xf32>
    %cst_8 = arith.constant 0.000000e+00 : f32
    %19 = vector.broadcast %cst_8 : f32 to vector<2x128xf32>
    %20 = arith.maximumf %18, %19 : vector<2x128xf32>
    %21 = arith.truncf %20 : vector<2x128xf32> to vector<2x128xbf16>
    %c0_9 = arith.constant 0 : index
    %c0_10 = arith.constant 0 : index
    %22 = vector.load %arg4[%c0_9, %c0_10] : memref<2x128xbf16, #tpu.memory_space<vmem>>, vector<2x128xbf16>
    tpu.vector_store %arg4[%c0_9, %c0_10], %21 {strides = array<i32>} : memref<2x128xbf16, #tpu.memory_space<vmem>>, vector<2x128xbf16>,
    return
  }
  func.func @transform_0(%arg0: i32) -> (i32, i32) {
    %c0_i32 = arith.constant 0 : i32
    %c0_i32_0 = arith.constant 0 : i32
    return %c0_i32, %arg0 : i32, i32
  }
  func.func @transform_1(%arg0: i32) -> (i32, i32) {
    %c0_i32 = arith.constant 0 : i32
    %c0_i32_0 = arith.constant 0 : i32
    %c0_i32_1 = arith.constant 0 : i32
    return %c0_i32, %c0_i32_0 : i32, i32
  }
  func.func @transform_2(%arg0: i32) -> (i32, i32) {
    %c0_i32 = arith.constant 0 : i32
    %c0_i32_0 = arith.constant 0 : i32
    %c0_i32_1 = arith.constant 0 : i32
    return %c0_i32, %c0_i32_0 : i32, i32
  }
  func.func @transform_3(%arg0: i32) -> (i32, i32) {
    %c0_i32 = arith.constant 0 : i32
    %c0_i32_0 = arith.constant 0 : i32
    return %c0_i32, %arg0 : i32, i32
  }
}

module attributes {stable_mosaic.version = 11 : i64} {
  func.func @kernel(%arg0: i32, %arg1: memref<8x128xbf16, #tpu.memory_space<vmem>>, %arg2: memref<8x1xf32, #tpu.memory_space<vmem>>, %arg3: memref<8x1xf32, #tpu.memory_space<vmem>>, %arg4: memref<8x128xbf16, #tpu.memory_space<vmem>>, %arg5: memref<8x128xbf16, #tpu.memory_space<vmem>>) attributes {dimension_semantics = [#tpu.dimension_semantics<parallel>], iteration_bounds = array<i64: 1>, scalar_prefetch = 0 : i64, scratch_operands = 0 : i64, tpu.core_type = #tpu.core_type<tc>, window_params = [{transform_indices = @transform_0, window_bounds = array<i64: 8, 128>}, {pipeline_mode = #tpu.pipeline_mode<synchronous>, transform_indices = @transform_1, window_bounds = array<i64: 8, 1>}, {pipeline_mode = #tpu.pipeline_mode<synchronous>, transform_indices = @transform_2, window_bounds = array<i64: 8, 1>}, {transform_indices = @transform_3, window_bounds = array<i64: 8, 128>}, {transform_indices = @transform_4, window_bounds = array<i64: 8, 128>}]} {
    %c0 = arith.constant 0 : index
    %c0_0 = arith.constant 0 : index
    %0 = vector.load %arg2[%c0, %c0_0] : memref<8x1xf32, #tpu.memory_space<vmem>>, vector<8x1xf32>
    %cst = arith.constant 6.250000e-02 : f32
    %1 = vector.broadcast %cst : f32 to vector<8x1xf32>
    %2 = arith.mulf %0, %1 : vector<8x1xf32>
    %c0_1 = arith.constant 0 : index
    %c0_2 = arith.constant 0 : index
    %3 = vector.load %arg3[%c0_1, %c0_2] : memref<8x1xf32, #tpu.memory_space<vmem>>, vector<8x1xf32>
    %cst_3 = arith.constant 6.250000e-02 : f32
    %4 = vector.broadcast %cst_3 : f32 to vector<8x1xf32>
    %5 = arith.mulf %3, %4 : vector<8x1xf32>
    %6 = arith.mulf %2, %2 : vector<8x1xf32>
    %7 = arith.subf %5, %6 : vector<8x1xf32>
    %cst_4 = arith.constant 0.000000e+00 : f32
    %8 = vector.broadcast %cst_4 : f32 to vector<8x1xf32>
    %9 = arith.maximumf %7, %8 : vector<8x1xf32>
    %cst_5 = arith.constant 9.99999974E-6 : f32
    %10 = vector.broadcast %cst_5 : f32 to vector<8x1xf32>
    %11 = arith.addf %9, %10 : vector<8x1xf32>
    %12 = math.rsqrt %11 : vector<8x1xf32>
    %c0_6 = arith.constant 0 : index
    %c0_7 = arith.constant 0 : index
    %13 = vector.load %arg1[%c0_6, %c0_7] : memref<8x128xbf16, #tpu.memory_space<vmem>>, vector<8x128xbf16>
    %14 = arith.extf %13 : vector<8x128xbf16> to vector<8x128xf32>
    %15 = vector.broadcast %2 : vector<8x1xf32> to vector<8x128xf32>
    %16 = arith.subf %14, %15 : vector<8x128xf32>
    %17 = vector.broadcast %12 : vector<8x1xf32> to vector<8x128xf32>
    %18 = arith.mulf %16, %17 : vector<8x128xf32>
    %cst_8 = arith.constant 0.000000e+00 : f32
    %19 = vector.broadcast %cst_8 : f32 to vector<8x128xf32>
    %20 = arith.maximumf %18, %19 : vector<8x128xf32>
    %c0_9 = arith.constant 0 : index
    %c0_10 = arith.constant 0 : index
    %21 = vector.load %arg4[%c0_9, %c0_10] : memref<8x128xbf16, #tpu.memory_space<vmem>>, vector<8x128xbf16>
    %22 = arith.extf %21 : vector<8x128xbf16> to vector<8x128xf32>
    %23 = arith.addf %20, %22 : vector<8x128xf32>
    %24 = arith.truncf %23 : vector<8x128xf32> to vector<8x128xbf16>
    %c0_11 = arith.constant 0 : index
    %c0_12 = arith.constant 0 : index
    %25 = vector.load %arg5[%c0_11, %c0_12] : memref<8x128xbf16, #tpu.memory_space<vmem>>, vector<8x128xbf16>
    tpu.vector_store %arg5[%c0_11, %c0_12], %24 {strides = array<i32>} : memref<8x128xbf16, #tpu.memory_space<vmem>>, vector<8x128xbf16>,
    return
  }
  func.func @transform_0(%arg0: i32) -> (i32, i32) {
    %c0_i32 = arith.constant 0 : i32
    %c0_i32_0 = arith.constant 0 : i32
    return %c0_i32, %arg0 : i32, i32
  }
  func.func @transform_1(%arg0: i32) -> (i32, i32) {
    %c0_i32 = arith.constant 0 : i32
    %c0_i32_0 = arith.constant 0 : i32
    %c0_i32_1 = arith.constant 0 : i32
    return %c0_i32, %c0_i32_0 : i32, i32
  }
  func.func @transform_2(%arg0: i32) -> (i32, i32) {
    %c0_i32 = arith.constant 0 : i32
    %c0_i32_0 = arith.constant 0 : i32
    %c0_i32_1 = arith.constant 0 : i32
    return %c0_i32, %c0_i32_0 : i32, i32
  }
  func.func @transform_3(%arg0: i32) -> (i32, i32) {
    %c0_i32 = arith.constant 0 : i32
    %c0_i32_0 = arith.constant 0 : i32
    return %c0_i32, %arg0 : i32, i32
  }
  func.func @transform_4(%arg0: i32) -> (i32, i32) {
    %c0_i32 = arith.constant 0 : i32
    %c0_i32_0 = arith.constant 0 : i32
    return %c0_i32, %arg0 : i32, i32
  }
}

module attributes {stable_mosaic.version = 11 : i64} {
  func.func @kernel(%arg0: i32, %arg1: memref<8x128xbf16, #tpu.memory_space<vmem>>, %arg2: memref<8x1xf32, #tpu.memory_space<vmem>>, %arg3: memref<8x1xf32, #tpu.memory_space<vmem>>, %arg4: memref<8x128xbf16, #tpu.memory_space<vmem>>) attributes {dimension_semantics = [#tpu.dimension_semantics<parallel>], iteration_bounds = array<i64: 1>, scalar_prefetch = 0 : i64, scratch_operands = 0 : i64, tpu.core_type = #tpu.core_type<tc>, window_params = [{transform_indices = @transform_0, window_bounds = array<i64: 8, 128>}, {pipeline_mode = #tpu.pipeline_mode<synchronous>, transform_indices = @transform_1, window_bounds = array<i64: 8, 1>}, {pipeline_mode = #tpu.pipeline_mode<synchronous>, transform_indices = @transform_2, window_bounds = array<i64: 8, 1>}, {transform_indices = @transform_3, window_bounds = array<i64: 8, 128>}]} {
    %c0 = arith.constant 0 : index
    %c0_0 = arith.constant 0 : index
    %0 = vector.load %arg2[%c0, %c0_0] : memref<8x1xf32, #tpu.memory_space<vmem>>, vector<8x1xf32>
    %cst = arith.constant 5.000000e-01 : f32
    %1 = vector.broadcast %cst : f32 to vector<8x1xf32>
    %2 = arith.mulf %0, %1 : vector<8x1xf32>
    %c0_1 = arith.constant 0 : index
    %c0_2 = arith.constant 0 : index
    %3 = vector.load %arg3[%c0_1, %c0_2] : memref<8x1xf32, #tpu.memory_space<vmem>>, vector<8x1xf32>
    %cst_3 = arith.constant 5.000000e-01 : f32
    %4 = vector.broadcast %cst_3 : f32 to vector<8x1xf32>
    %5 = arith.mulf %3, %4 : vector<8x1xf32>
    %6 = arith.mulf %2, %2 : vector<8x1xf32>
    %7 = arith.subf %5, %6 : vector<8x1xf32>
    %cst_4 = arith.constant 0.000000e+00 : f32
    %8 = vector.broadcast %cst_4 : f32 to vector<8x1xf32>
    %9 = arith.maximumf %7, %8 : vector<8x1xf32>
    %cst_5 = arith.constant 9.99999974E-6 : f32
    %10 = vector.broadcast %cst_5 : f32 to vector<8x1xf32>
    %11 = arith.addf %9, %10 : vector<8x1xf32>
    %12 = math.rsqrt %11 : vector<8x1xf32>
    %c0_6 = arith.constant 0 : index
    %c0_7 = arith.constant 0 : index
    %13 = vector.load %arg1[%c0_6, %c0_7] : memref<8x128xbf16, #tpu.memory_space<vmem>>, vector<8x128xbf16>
    %14 = arith.extf %13 : vector<8x128xbf16> to vector<8x128xf32>
    %15 = vector.broadcast %2 : vector<8x1xf32> to vector<8x128xf32>
    %16 = arith.subf %14, %15 : vector<8x128xf32>
    %17 = vector.broadcast %12 : vector<8x1xf32> to vector<8x128xf32>
    %18 = arith.mulf %16, %17 : vector<8x128xf32>
    %cst_8 = arith.constant 0.000000e+00 : f32
    %19 = vector.broadcast %cst_8 : f32 to vector<8x128xf32>
    %20 = arith.maximumf %18, %19 : vector<8x128xf32>
    %21 = arith.truncf %20 : vector<8x128xf32> to vector<8x128xbf16>
    %c0_9 = arith.constant 0 : index
    %c0_10 = arith.constant 0 : index
    %22 = vector.load %arg4[%c0_9, %c0_10] : memref<8x128xbf16, #tpu.memory_space<vmem>>, vector<8x128xbf16>
    tpu.vector_store %arg4[%c0_9, %c0_10], %21 {strides = array<i32>} : memref<8x128xbf16, #tpu.memory_space<vmem>>, vector<8x128xbf16>,
    return
  }
  func.func @transform_0(%arg0: i32) -> (i32, i32) {
    %c0_i32 = arith.constant 0 : i32
    %c0_i32_0 = arith.constant 0 : i32
    return %c0_i32, %arg0 : i32, i32
  }
  func.func @transform_1(%arg0: i32) -> (i32, i32) {
    %c0_i32 = arith.constant 0 : i32
    %c0_i32_0 = arith.constant 0 : i32
    %c0_i32_1 = arith.constant 0 : i32
    return %c0_i32, %c0_i32_0 : i32, i32
  }
  func.func @transform_2(%arg0: i32) -> (i32, i32) {
    %c0_i32 = arith.constant 0 : i32
    %c0_i32_0 = arith.constant 0 : i32
    %c0_i32_1 = arith.constant 0 : i32
    return %c0_i32, %c0_i32_0 : i32, i32
  }
  func.func @transform_3(%arg0: i32) -> (i32, i32) {
    %c0_i32 = arith.constant 0 : i32
    %c0_i32_0 = arith.constant 0 : i32
    return %c0_i32, %arg0 : i32, i32
  }
}

module attributes {stable_mosaic.version = 11 : i64} {
  func.func @kernel(%arg0: i32, %arg1: memref<2x128xbf16, #tpu.memory_space<vmem>>, %arg2: memref<2x1xf32, #tpu.memory_space<vmem>>, %arg3: memref<2x1xf32, #tpu.memory_space<vmem>>, %arg4: memref<2x128xbf16, #tpu.memory_space<vmem>>) attributes {dimension_semantics = [#tpu.dimension_semantics<parallel>], iteration_bounds = array<i64: 1>, scalar_prefetch = 0 : i64, scratch_operands = 0 : i64, tpu.core_type = #tpu.core_type<tc>, window_params = [{transform_indices = @transform_0, window_bounds = array<i64: 2, 128>}, {pipeline_mode = #tpu.pipeline_mode<synchronous>, transform_indices = @transform_1, window_bounds = array<i64: 2, 1>}, {pipeline_mode = #tpu.pipeline_mode<synchronous>, transform_indices = @transform_2, window_bounds = array<i64: 2, 1>}, {transform_indices = @transform_3, window_bounds = array<i64: 2, 128>}]} {
    %c0 = arith.constant 0 : index
    %c0_0 = arith.constant 0 : index
    %0 = vector.load %arg2[%c0, %c0_0] : memref<2x1xf32, #tpu.memory_space<vmem>>, vector<2x1xf32>
    %cst = arith.constant 5.000000e-01 : f32
    %1 = vector.broadcast %cst : f32 to vector<2x1xf32>
    %2 = arith.mulf %0, %1 : vector<2x1xf32>
    %c0_1 = arith.constant 0 : index
    %c0_2 = arith.constant 0 : index
    %3 = vector.load %arg3[%c0_1, %c0_2] : memref<2x1xf32, #tpu.memory_space<vmem>>, vector<2x1xf32>
    %cst_3 = arith.constant 5.000000e-01 : f32
    %4 = vector.broadcast %cst_3 : f32 to vector<2x1xf32>
    %5 = arith.mulf %3, %4 : vector<2x1xf32>
    %6 = arith.mulf %2, %2 : vector<2x1xf32>
    %7 = arith.subf %5, %6 : vector<2x1xf32>
    %cst_4 = arith.constant 0.000000e+00 : f32
    %8 = vector.broadcast %cst_4 : f32 to vector<2x1xf32>
    %9 = arith.maximumf %7, %8 : vector<2x1xf32>
    %cst_5 = arith.constant 9.99999974E-6 : f32
    %10 = vector.broadcast %cst_5 : f32 to vector<2x1xf32>
    %11 = arith.addf %9, %10 : vector<2x1xf32>
    %12 = math.rsqrt %11 : vector<2x1xf32>
    %c0_6 = arith.constant 0 : index
    %c0_7 = arith.constant 0 : index
    %13 = vector.load %arg1[%c0_6, %c0_7] : memref<2x128xbf16, #tpu.memory_space<vmem>>, vector<2x128xbf16>
    %14 = arith.extf %13 : vector<2x128xbf16> to vector<2x128xf32>
    %15 = vector.broadcast %2 : vector<2x1xf32> to vector<2x128xf32>
    %16 = arith.subf %14, %15 : vector<2x128xf32>
    %17 = vector.broadcast %12 : vector<2x1xf32> to vector<2x128xf32>
    %18 = arith.mulf %16, %17 : vector<2x128xf32>
    %cst_8 = arith.constant 0.000000e+00 : f32
    %19 = vector.broadcast %cst_8 : f32 to vector<2x128xf32>
    %20 = arith.maximumf %18, %19 : vector<2x128xf32>
    %21 = arith.truncf %20 : vector<2x128xf32> to vector<2x128xbf16>
    %c0_9 = arith.constant 0 : index
    %c0_10 = arith.constant 0 : index
    %22 = vector.load %arg4[%c0_9, %c0_10] : memref<2x128xbf16, #tpu.memory_space<vmem>>, vector<2x128xbf16>
    tpu.vector_store %arg4[%c0_9, %c0_10], %21 {strides = array<i32>} : memref<2x128xbf16, #tpu.memory_space<vmem>>, vector<2x128xbf16>,
    return
  }
  func.func @transform_0(%arg0: i32) -> (i32, i32) {
    %c0_i32 = arith.constant 0 : i32
    %c0_i32_0 = arith.constant 0 : i32
    return %c0_i32, %arg0 : i32, i32
  }
  func.func @transform_1(%arg0: i32) -> (i32, i32) {
    %c0_i32 = arith.constant 0 : i32
    %c0_i32_0 = arith.constant 0 : i32
    %c0_i32_1 = arith.constant 0 : i32
    return %c0_i32, %c0_i32_0 : i32, i32
  }
  func.func @transform_2(%arg0: i32) -> (i32, i32) {
    %c0_i32 = arith.constant 0 : i32
    %c0_i32_0 = arith.constant 0 : i32
    %c0_i32_1 = arith.constant 0 : i32
    return %c0_i32, %c0_i32_0 : i32, i32
  }
  func.func @transform_3(%arg0: i32) -> (i32, i32) {
    %c0_i32 = arith.constant 0 : i32
    %c0_i32_0 = arith.constant 0 : i32
    return %c0_i32, %arg0 : i32, i32
  }
}

module attributes {stable_mosaic.version = 11 : i64} {
  func.func @kernel(%arg0: i32, %arg1: memref<8x128xbf16, #tpu.memory_space<vmem>>, %arg2: memref<8x1xf32, #tpu.memory_space<vmem>>, %arg3: memref<8x1xf32, #tpu.memory_space<vmem>>, %arg4: memref<8x128xbf16, #tpu.memory_space<vmem>>, %arg5: memref<8x128xbf16, #tpu.memory_space<vmem>>) attributes {dimension_semantics = [#tpu.dimension_semantics<parallel>], iteration_bounds = array<i64: 1>, scalar_prefetch = 0 : i64, scratch_operands = 0 : i64, tpu.core_type = #tpu.core_type<tc>, window_params = [{transform_indices = @transform_0, window_bounds = array<i64: 8, 128>}, {pipeline_mode = #tpu.pipeline_mode<synchronous>, transform_indices = @transform_1, window_bounds = array<i64: 8, 1>}, {pipeline_mode = #tpu.pipeline_mode<synchronous>, transform_indices = @transform_2, window_bounds = array<i64: 8, 1>}, {transform_indices = @transform_3, window_bounds = array<i64: 8, 128>}, {transform_indices = @transform_4, window_bounds = array<i64: 8, 128>}]} {
    %c0 = arith.constant 0 : index
    %c0_0 = arith.constant 0 : index
    %0 = vector.load %arg2[%c0, %c0_0] : memref<8x1xf32, #tpu.memory_space<vmem>>, vector<8x1xf32>
    %cst = arith.constant 5.000000e-01 : f32
    %1 = vector.broadcast %cst : f32 to vector<8x1xf32>
    %2 = arith.mulf %0, %1 : vector<8x1xf32>
    %c0_1 = arith.constant 0 : index
    %c0_2 = arith.constant 0 : index
    %3 = vector.load %arg3[%c0_1, %c0_2] : memref<8x1xf32, #tpu.memory_space<vmem>>, vector<8x1xf32>
    %cst_3 = arith.constant 5.000000e-01 : f32
    %4 = vector.broadcast %cst_3 : f32 to vector<8x1xf32>
    %5 = arith.mulf %3, %4 : vector<8x1xf32>
    %6 = arith.mulf %2, %2 : vector<8x1xf32>
    %7 = arith.subf %5, %6 : vector<8x1xf32>
    %cst_4 = arith.constant 0.000000e+00 : f32
    %8 = vector.broadcast %cst_4 : f32 to vector<8x1xf32>
    %9 = arith.maximumf %7, %8 : vector<8x1xf32>
    %cst_5 = arith.constant 9.99999974E-6 : f32
    %10 = vector.broadcast %cst_5 : f32 to vector<8x1xf32>
    %11 = arith.addf %9, %10 : vector<8x1xf32>
    %12 = math.rsqrt %11 : vector<8x1xf32>
    %c0_6 = arith.constant 0 : index
    %c0_7 = arith.constant 0 : index
    %13 = vector.load %arg1[%c0_6, %c0_7] : memref<8x128xbf16, #tpu.memory_space<vmem>>, vector<8x128xbf16>
    %14 = arith.extf %13 : vector<8x128xbf16> to vector<8x128xf32>
    %15 = vector.broadcast %2 : vector<8x1xf32> to vector<8x128xf32>
    %16 = arith.subf %14, %15 : vector<8x128xf32>
    %17 = vector.broadcast %12 : vector<8x1xf32> to vector<8x128xf32>
    %18 = arith.mulf %16, %17 : vector<8x128xf32>
    %cst_8 = arith.constant 0.000000e+00 : f32
    %19 = vector.broadcast %cst_8 : f32 to vector<8x128xf32>
    %20 = arith.maximumf %18, %19 : vector<8x128xf32>
    %c0_9 = arith.constant 0 : index
    %c0_10 = arith.constant 0 : index
    %21 = vector.load %arg4[%c0_9, %c0_10] : memref<8x128xbf16, #tpu.memory_space<vmem>>, vector<8x128xbf16>
    %22 = arith.extf %21 : vector<8x128xbf16> to vector<8x128xf32>
    %23 = arith.addf %20, %22 : vector<8x128xf32>
    %24 = arith.truncf %23 : vector<8x128xf32> to vector<8x128xbf16>
    %c0_11 = arith.constant 0 : index
    %c0_12 = arith.constant 0 : index
    %25 = vector.load %arg5[%c0_11, %c0_12] : memref<8x128xbf16, #tpu.memory_space<vmem>>, vector<8x128xbf16>
    tpu.vector_store %arg5[%c0_11, %c0_12], %24 {strides = array<i32>} : memref<8x128xbf16, #tpu.memory_space<vmem>>, vector<8x128xbf16>,
    return
  }
  func.func @transform_0(%arg0: i32) -> (i32, i32) {
    %c0_i32 = arith.constant 0 : i32
    %c0_i32_0 = arith.constant 0 : i32
    return %c0_i32, %arg0 : i32, i32
  }
  func.func @transform_1(%arg0: i32) -> (i32, i32) {
    %c0_i32 = arith.constant 0 : i32
    %c0_i32_0 = arith.constant 0 : i32
    %c0_i32_1 = arith.constant 0 : i32
    return %c0_i32, %c0_i32_0 : i32, i32
  }
  func.func @transform_2(%arg0: i32) -> (i32, i32) {
    %c0_i32 = arith.constant 0 : i32
    %c0_i32_0 = arith.constant 0 : i32
    %c0_i32_1 = arith.constant 0 : i32
    return %c0_i32, %c0_i32_0 : i32, i32
  }
  func.func @transform_3(%arg0: i32) -> (i32, i32) {
    %c0_i32 = arith.constant 0 : i32
    %c0_i32_0 = arith.constant 0 : i32
    return %c0_i32, %arg0 : i32, i32
  }
  func.func @transform_4(%arg0: i32) -> (i32, i32) {
    %c0_i32 = arith.constant 0 : i32
    %c0_i32_0 = arith.constant 0 : i32
    return %c0_i32, %arg0 : i32, i32
  }
}

module attributes {stable_mosaic.version = 11 : i64} {
  func.func @_matmul_stats_kernel(%arg0: i32, %arg1: memref<64x128xbf16, #tpu.memory_space<vmem>>, %arg2: memref<64x64xbf16, #tpu.memory_space<vmem>>, %arg3: memref<64x128xbf16, #tpu.memory_space<vmem>>, %arg4: memref<1x64x1xf32, #tpu.memory_space<vmem>>, %arg5: memref<1x64x1xf32, #tpu.memory_space<vmem>>) attributes {dimension_semantics = [#tpu.dimension_semantics<parallel>], iteration_bounds = array<i64: 1>, scalar_prefetch = 0 : i64, scratch_operands = 0 : i64, tpu.core_type = #tpu.core_type<tc>, window_params = [{transform_indices = @transform_0, window_bounds = array<i64: 64, 128>}, {pipeline_mode = #tpu.pipeline_mode<synchronous>, transform_indices = @transform_1, window_bounds = array<i64: 64, 64>}, {transform_indices = @transform_2, window_bounds = array<i64: 64, 128>}, {transform_indices = @transform_3, window_bounds = array<i64: 1, 64, 1>}, {transform_indices = @transform_4, window_bounds = array<i64: 1, 64, 1>}]} {
    %c0 = arith.constant 0 : index
    %c0_0 = arith.constant 0 : index
    %0 = vector.load %arg2[%c0, %c0_0] : memref<64x64xbf16, #tpu.memory_space<vmem>>, vector<64x64xbf16>
    %c0_1 = arith.constant 0 : index
    %c0_2 = arith.constant 0 : index
    %1 = vector.load %arg1[%c0_1, %c0_2] : memref<64x128xbf16, #tpu.memory_space<vmem>>, vector<64x128xbf16>
    %cst = arith.constant dense<0.000000e+00> : vector<64x128xf32>
    %2 = tpu.matmul %0, %1, %cst {dimension_numbers = #tpu.dot_dimension_numbers<[1], [0], [0], [1], [0, 0, 1, 1], [], []>} : vector<64x64xbf16>, vector<64x128xbf16>, vector<64x128xf32> -> vector<64x128xf32>
    %3 = arith.truncf %2 : vector<64x128xf32> to vector<64x128xbf16>
    %c0_3 = arith.constant 0 : index
    %c0_4 = arith.constant 0 : index
    %4 = vector.load %arg3[%c0_3, %c0_4] : memref<64x128xbf16, #tpu.memory_space<vmem>>, vector<64x128xbf16>
    tpu.vector_store %arg3[%c0_3, %c0_4], %3 {strides = array<i32>} : memref<64x128xbf16, #tpu.memory_space<vmem>>, vector<64x128xbf16>,
    %cst_5 = arith.constant dense<0.000000e+00> : vector<64xf32>
    %5 = vector.multi_reduction <add>, %2, %cst_5 [1] : vector<64x128xf32> to vector<64xf32>
    %6 = vector.shape_cast %5 : vector<64xf32> to vector<64x1xf32>
    %c0_6 = arith.constant 0 : index
    %c0_7 = arith.constant 0 : index
    %c0_8 = arith.constant 0 : index
    %7 = vector.load %arg4[%c0_6, %c0_7, %c0_8] : memref<1x64x1xf32, #tpu.memory_space<vmem>>, vector<1x64x1xf32>
    %8 = vector.shape_cast %7 : vector<1x64x1xf32> to vector<64x1xf32>
    %9 = vector.shape_cast %6 : vector<64x1xf32> to vector<1x64x1xf32>
    tpu.vector_store %arg4[%c0_6, %c0_7, %c0_8], %9 {strides = array<i32>} : memref<1x64x1xf32, #tpu.memory_space<vmem>>, vector<1x64x1xf32>,
    %10 = arith.mulf %2, %2 : vector<64x128xf32>
    %cst_9 = arith.constant dense<0.000000e+00> : vector<64xf32>
    %11 = vector.multi_reduction <add>, %10, %cst_9 [1] : vector<64x128xf32> to vector<64xf32>
    %12 = vector.shape_cast %11 : vector<64xf32> to vector<64x1xf32>
    %c0_10 = arith.constant 0 : index
    %c0_11 = arith.constant 0 : index
    %c0_12 = arith.constant 0 : index
    %13 = vector.load %arg5[%c0_10, %c0_11, %c0_12] : memref<1x64x1xf32, #tpu.memory_space<vmem>>, vector<1x64x1xf32>
    %14 = vector.shape_cast %13 : vector<1x64x1xf32> to vector<64x1xf32>
    %15 = vector.shape_cast %12 : vector<64x1xf32> to vector<1x64x1xf32>
    tpu.vector_store %arg5[%c0_10, %c0_11, %c0_12], %15 {strides = array<i32>} : memref<1x64x1xf32, #tpu.memory_space<vmem>>, vector<1x64x1xf32>,
    return
  }
  func.func @transform_0(%arg0: i32) -> (i32, i32) {
    %c0_i32 = arith.constant 0 : i32
    %c0_i32_0 = arith.constant 0 : i32
    return %c0_i32, %arg0 : i32, i32
  }
  func.func @transform_1(%arg0: i32) -> (i32, i32) {
    %c0_i32 = arith.constant 0 : i32
    %c0_i32_0 = arith.constant 0 : i32
    %c0_i32_1 = arith.constant 0 : i32
    return %c0_i32, %c0_i32_0 : i32, i32
  }
  func.func @transform_2(%arg0: i32) -> (i32, i32) {
    %c0_i32 = arith.constant 0 : i32
    %c0_i32_0 = arith.constant 0 : i32
    return %c0_i32, %arg0 : i32, i32
  }
  func.func @transform_3(%arg0: i32) -> (i32, i32, i32) {
    %c0_i32 = arith.constant 0 : i32
    %c0_i32_0 = arith.constant 0 : i32
    %c0_i32_1 = arith.constant 0 : i32
    return %arg0, %c0_i32, %c0_i32_0 : i32, i32, i32
  }
  func.func @transform_4(%arg0: i32) -> (i32, i32, i32) {
    %c0_i32 = arith.constant 0 : i32
    %c0_i32_0 = arith.constant 0 : i32
    %c0_i32_1 = arith.constant 0 : i32
    return %arg0, %c0_i32, %c0_i32_0 : i32, i32, i32
  }
}

module attributes {stable_mosaic.version = 11 : i64} {
  func.func @kernel(%arg0: i32, %arg1: memref<64x128xbf16, #tpu.memory_space<vmem>>, %arg2: memref<64x1xf32, #tpu.memory_space<vmem>>, %arg3: memref<64x1xf32, #tpu.memory_space<vmem>>, %arg4: memref<64x128xbf16, #tpu.memory_space<vmem>>) attributes {dimension_semantics = [#tpu.dimension_semantics<parallel>], iteration_bounds = array<i64: 1>, scalar_prefetch = 0 : i64, scratch_operands = 0 : i64, tpu.core_type = #tpu.core_type<tc>, window_params = [{transform_indices = @transform_0, window_bounds = array<i64: 64, 128>}, {pipeline_mode = #tpu.pipeline_mode<synchronous>, transform_indices = @transform_1, window_bounds = array<i64: 64, 1>}, {pipeline_mode = #tpu.pipeline_mode<synchronous>, transform_indices = @transform_2, window_bounds = array<i64: 64, 1>}, {transform_indices = @transform_3, window_bounds = array<i64: 64, 128>}]} {
    %c0 = arith.constant 0 : index
    %c0_0 = arith.constant 0 : index
    %0 = vector.load %arg2[%c0, %c0_0] : memref<64x1xf32, #tpu.memory_space<vmem>>, vector<64x1xf32>
    %cst = arith.constant 6.250000e-02 : f32
    %1 = vector.broadcast %cst : f32 to vector<64x1xf32>
    %2 = arith.mulf %0, %1 : vector<64x1xf32>
    %c0_1 = arith.constant 0 : index
    %c0_2 = arith.constant 0 : index
    %3 = vector.load %arg3[%c0_1, %c0_2] : memref<64x1xf32, #tpu.memory_space<vmem>>, vector<64x1xf32>
    %cst_3 = arith.constant 6.250000e-02 : f32
    %4 = vector.broadcast %cst_3 : f32 to vector<64x1xf32>
    %5 = arith.mulf %3, %4 : vector<64x1xf32>
    %6 = arith.mulf %2, %2 : vector<64x1xf32>
    %7 = arith.subf %5, %6 : vector<64x1xf32>
    %cst_4 = arith.constant 0.000000e+00 : f32
    %8 = vector.broadcast %cst_4 : f32 to vector<64x1xf32>
    %9 = arith.maximumf %7, %8 : vector<64x1xf32>
    %cst_5 = arith.constant 9.99999974E-6 : f32
    %10 = vector.broadcast %cst_5 : f32 to vector<64x1xf32>
    %11 = arith.addf %9, %10 : vector<64x1xf32>
    %12 = math.rsqrt %11 : vector<64x1xf32>
    %c0_6 = arith.constant 0 : index
    %c0_7 = arith.constant 0 : index
    %13 = vector.load %arg1[%c0_6, %c0_7] : memref<64x128xbf16, #tpu.memory_space<vmem>>, vector<64x128xbf16>
    %14 = arith.extf %13 : vector<64x128xbf16> to vector<64x128xf32>
    %15 = vector.broadcast %2 : vector<64x1xf32> to vector<64x128xf32>
    %16 = arith.subf %14, %15 : vector<64x128xf32>
    %17 = vector.broadcast %12 : vector<64x1xf32> to vector<64x128xf32>
    %18 = arith.mulf %16, %17 : vector<64x128xf32>
    %cst_8 = arith.constant 0.000000e+00 : f32
    %19 = vector.broadcast %cst_8 : f32 to vector<64x128xf32>
    %20 = arith.maximumf %18, %19 : vector<64x128xf32>
    %21 = arith.truncf %20 : vector<64x128xf32> to vector<64x128xbf16>
    %c0_9 = arith.constant 0 : index
    %c0_10 = arith.constant 0 : index
    %22 = vector.load %arg4[%c0_9, %c0_10] : memref<64x128xbf16, #tpu.memory_space<vmem>>, vector<64x128xbf16>
    tpu.vector_store %arg4[%c0_9, %c0_10], %21 {strides = array<i32>} : memref<64x128xbf16, #tpu.memory_space<vmem>>, vector<64x128xbf16>,
    return
  }
  func.func @transform_0(%arg0: i32) -> (i32, i32) {
    %c0_i32 = arith.constant 0 : i32
    %c0_i32_0 = arith.constant 0 : i32
    return %c0_i32, %arg0 : i32, i32
  }
  func.func @transform_1(%arg0: i32) -> (i32, i32) {
    %c0_i32 = arith.constant 0 : i32
    %c0_i32_0 = arith.constant 0 : i32
    %c0_i32_1 = arith.constant 0 : i32
    return %c0_i32, %c0_i32_0 : i32, i32
  }
  func.func @transform_2(%arg0: i32) -> (i32, i32) {
    %c0_i32 = arith.constant 0 : i32
    %c0_i32_0 = arith.constant 0 : i32
    %c0_i32_1 = arith.constant 0 : i32
    return %c0_i32, %c0_i32_0 : i32, i32
  }
  func.func @transform_3(%arg0: i32) -> (i32, i32) {
    %c0_i32 = arith.constant 0 : i32
    %c0_i32_0 = arith.constant 0 : i32
    return %c0_i32, %arg0 : i32, i32
  }
}

module attributes {stable_mosaic.version = 11 : i64} {
  func.func @_matmul_stats_kernel(%arg0: i32, %arg1: memref<16x128xbf16, #tpu.memory_space<vmem>>, %arg2: memref<8x16xbf16, #tpu.memory_space<vmem>>, %arg3: memref<8x128xbf16, #tpu.memory_space<vmem>>, %arg4: memref<1x8x1xf32, #tpu.memory_space<vmem>>, %arg5: memref<1x8x1xf32, #tpu.memory_space<vmem>>) attributes {dimension_semantics = [#tpu.dimension_semantics<parallel>], iteration_bounds = array<i64: 1>, scalar_prefetch = 0 : i64, scratch_operands = 0 : i64, tpu.core_type = #tpu.core_type<tc>, window_params = [{transform_indices = @transform_0, window_bounds = array<i64: 16, 128>}, {pipeline_mode = #tpu.pipeline_mode<synchronous>, transform_indices = @transform_1, window_bounds = array<i64: 8, 16>}, {transform_indices = @transform_2, window_bounds = array<i64: 8, 128>}, {transform_indices = @transform_3, window_bounds = array<i64: 1, 8, 1>}, {transform_indices = @transform_4, window_bounds = array<i64: 1, 8, 1>}]} {
    %c0 = arith.constant 0 : index
    %c0_0 = arith.constant 0 : index
    %0 = vector.load %arg2[%c0, %c0_0] : memref<8x16xbf16, #tpu.memory_space<vmem>>, vector<8x16xbf16>
    %c0_1 = arith.constant 0 : index
    %c0_2 = arith.constant 0 : index
    %1 = vector.load %arg1[%c0_1, %c0_2] : memref<16x128xbf16, #tpu.memory_space<vmem>>, vector<16x128xbf16>
    %cst = arith.constant dense<0.000000e+00> : vector<8x128xf32>
    %2 = tpu.matmul %0, %1, %cst {dimension_numbers = #tpu.dot_dimension_numbers<[1], [0], [0], [1], [0, 0, 1, 1], [], []>} : vector<8x16xbf16>, vector<16x128xbf16>, vector<8x128xf32> -> vector<8x128xf32>
    %3 = arith.truncf %2 : vector<8x128xf32> to vector<8x128xbf16>
    %c0_3 = arith.constant 0 : index
    %c0_4 = arith.constant 0 : index
    %4 = vector.load %arg3[%c0_3, %c0_4] : memref<8x128xbf16, #tpu.memory_space<vmem>>, vector<8x128xbf16>
    tpu.vector_store %arg3[%c0_3, %c0_4], %3 {strides = array<i32>} : memref<8x128xbf16, #tpu.memory_space<vmem>>, vector<8x128xbf16>,
    %cst_5 = arith.constant dense<0.000000e+00> : vector<8xf32>
    %5 = vector.multi_reduction <add>, %2, %cst_5 [1] : vector<8x128xf32> to vector<8xf32>
    %6 = vector.shape_cast %5 : vector<8xf32> to vector<8x1xf32>
    %c0_6 = arith.constant 0 : index
    %c0_7 = arith.constant 0 : index
    %c0_8 = arith.constant 0 : index
    %7 = vector.load %arg4[%c0_6, %c0_7, %c0_8] : memref<1x8x1xf32, #tpu.memory_space<vmem>>, vector<1x8x1xf32>
    %8 = vector.shape_cast %7 : vector<1x8x1xf32> to vector<8x1xf32>
    %9 = vector.shape_cast %6 : vector<8x1xf32> to vector<1x8x1xf32>
    tpu.vector_store %arg4[%c0_6, %c0_7, %c0_8], %9 {strides = array<i32>} : memref<1x8x1xf32, #tpu.memory_space<vmem>>, vector<1x8x1xf32>,
    %10 = arith.mulf %2, %2 : vector<8x128xf32>
    %cst_9 = arith.constant dense<0.000000e+00> : vector<8xf32>
    %11 = vector.multi_reduction <add>, %10, %cst_9 [1] : vector<8x128xf32> to vector<8xf32>
    %12 = vector.shape_cast %11 : vector<8xf32> to vector<8x1xf32>
    %c0_10 = arith.constant 0 : index
    %c0_11 = arith.constant 0 : index
    %c0_12 = arith.constant 0 : index
    %13 = vector.load %arg5[%c0_10, %c0_11, %c0_12] : memref<1x8x1xf32, #tpu.memory_space<vmem>>, vector<1x8x1xf32>
    %14 = vector.shape_cast %13 : vector<1x8x1xf32> to vector<8x1xf32>
    %15 = vector.shape_cast %12 : vector<8x1xf32> to vector<1x8x1xf32>
    tpu.vector_store %arg5[%c0_10, %c0_11, %c0_12], %15 {strides = array<i32>} : memref<1x8x1xf32, #tpu.memory_space<vmem>>, vector<1x8x1xf32>,
    return
  }
  func.func @transform_0(%arg0: i32) -> (i32, i32) {
    %c0_i32 = arith.constant 0 : i32
    %c0_i32_0 = arith.constant 0 : i32
    return %c0_i32, %arg0 : i32, i32
  }
  func.func @transform_1(%arg0: i32) -> (i32, i32) {
    %c0_i32 = arith.constant 0 : i32
    %c0_i32_0 = arith.constant 0 : i32
    %c0_i32_1 = arith.constant 0 : i32
    return %c0_i32, %c0_i32_0 : i32, i32
  }
  func.func @transform_2(%arg0: i32) -> (i32, i32) {
    %c0_i32 = arith.constant 0 : i32
    %c0_i32_0 = arith.constant 0 : i32
    return %c0_i32, %arg0 : i32, i32
  }
  func.func @transform_3(%arg0: i32) -> (i32, i32, i32) {
    %c0_i32 = arith.constant 0 : i32
    %c0_i32_0 = arith.constant 0 : i32
    %c0_i32_1 = arith.constant 0 : i32
    return %arg0, %c0_i32, %c0_i32_0 : i32, i32, i32
  }
  func.func @transform_4(%arg0: i32) -> (i32, i32, i32) {
    %c0_i32 = arith.constant 0 : i32
    %c0_i32_0 = arith.constant 0 : i32
    %c0_i32_1 = arith.constant 0 : i32
    return %arg0, %c0_i32, %c0_i32_0 : i32, i32, i32
  }
}

module attributes {stable_mosaic.version = 11 : i64} {
  func.func @kernel(%arg0: i32, %arg1: memref<64x128xbf16, #tpu.memory_space<vmem>>, %arg2: memref<64x1xf32, #tpu.memory_space<vmem>>, %arg3: memref<64x1xf32, #tpu.memory_space<vmem>>, %arg4: memref<64x128xbf16, #tpu.memory_space<vmem>>) attributes {dimension_semantics = [#tpu.dimension_semantics<parallel>], iteration_bounds = array<i64: 1>, scalar_prefetch = 0 : i64, scratch_operands = 0 : i64, tpu.core_type = #tpu.core_type<tc>, window_params = [{transform_indices = @transform_0, window_bounds = array<i64: 64, 128>}, {pipeline_mode = #tpu.pipeline_mode<synchronous>, transform_indices = @transform_1, window_bounds = array<i64: 64, 1>}, {pipeline_mode = #tpu.pipeline_mode<synchronous>, transform_indices = @transform_2, window_bounds = array<i64: 64, 1>}, {transform_indices = @transform_3, window_bounds = array<i64: 64, 128>}]} {
    %c0 = arith.constant 0 : index
    %c0_0 = arith.constant 0 : index
    %0 = vector.load %arg2[%c0, %c0_0] : memref<64x1xf32, #tpu.memory_space<vmem>>, vector<64x1xf32>
    %cst = arith.constant 7.812500e-03 : f32
    %1 = vector.broadcast %cst : f32 to vector<64x1xf32>
    %2 = arith.mulf %0, %1 : vector<64x1xf32>
    %c0_1 = arith.constant 0 : index
    %c0_2 = arith.constant 0 : index
    %3 = vector.load %arg3[%c0_1, %c0_2] : memref<64x1xf32, #tpu.memory_space<vmem>>, vector<64x1xf32>
    %cst_3 = arith.constant 7.812500e-03 : f32
    %4 = vector.broadcast %cst_3 : f32 to vector<64x1xf32>
    %5 = arith.mulf %3, %4 : vector<64x1xf32>
    %6 = arith.mulf %2, %2 : vector<64x1xf32>
    %7 = arith.subf %5, %6 : vector<64x1xf32>
    %cst_4 = arith.constant 0.000000e+00 : f32
    %8 = vector.broadcast %cst_4 : f32 to vector<64x1xf32>
    %9 = arith.maximumf %7, %8 : vector<64x1xf32>
    %cst_5 = arith.constant 9.99999974E-6 : f32
    %10 = vector.broadcast %cst_5 : f32 to vector<64x1xf32>
    %11 = arith.addf %9, %10 : vector<64x1xf32>
    %12 = math.rsqrt %11 : vector<64x1xf32>
    %c0_6 = arith.constant 0 : index
    %c0_7 = arith.constant 0 : index
    %13 = vector.load %arg1[%c0_6, %c0_7] : memref<64x128xbf16, #tpu.memory_space<vmem>>, vector<64x128xbf16>
    %14 = arith.extf %13 : vector<64x128xbf16> to vector<64x128xf32>
    %15 = vector.broadcast %2 : vector<64x1xf32> to vector<64x128xf32>
    %16 = arith.subf %14, %15 : vector<64x128xf32>
    %17 = vector.broadcast %12 : vector<64x1xf32> to vector<64x128xf32>
    %18 = arith.mulf %16, %17 : vector<64x128xf32>
    %cst_8 = arith.constant 0.000000e+00 : f32
    %19 = vector.broadcast %cst_8 : f32 to vector<64x128xf32>
    %20 = arith.maximumf %18, %19 : vector<64x128xf32>
    %21 = arith.truncf %20 : vector<64x128xf32> to vector<64x128xbf16>
    %c0_9 = arith.constant 0 : index
    %c0_10 = arith.constant 0 : index
    %22 = vector.load %arg4[%c0_9, %c0_10] : memref<64x128xbf16, #tpu.memory_space<vmem>>, vector<64x128xbf16>
    tpu.vector_store %arg4[%c0_9, %c0_10], %21 {strides = array<i32>} : memref<64x128xbf16, #tpu.memory_space<vmem>>, vector<64x128xbf16>,
    return
  }
  func.func @transform_0(%arg0: i32) -> (i32, i32) {
    %c0_i32 = arith.constant 0 : i32
    %c0_i32_0 = arith.constant 0 : i32
    return %c0_i32, %arg0 : i32, i32
  }
  func.func @transform_1(%arg0: i32) -> (i32, i32) {
    %c0_i32 = arith.constant 0 : i32
    %c0_i32_0 = arith.constant 0 : i32
    %c0_i32_1 = arith.constant 0 : i32
    return %c0_i32, %c0_i32_0 : i32, i32
  }
  func.func @transform_2(%arg0: i32) -> (i32, i32) {
    %c0_i32 = arith.constant 0 : i32
    %c0_i32_0 = arith.constant 0 : i32
    %c0_i32_1 = arith.constant 0 : i32
    return %c0_i32, %c0_i32_0 : i32, i32
  }
  func.func @transform_3(%arg0: i32) -> (i32, i32) {
    %c0_i32 = arith.constant 0 : i32
    %c0_i32_0 = arith.constant 0 : i32
    return %c0_i32, %arg0 : i32, i32
  }
}

module attributes {stable_mosaic.version = 11 : i64} {
  func.func @kernel(%arg0: i32, %arg1: memref<64x128xbf16, #tpu.memory_space<vmem>>, %arg2: memref<64x1xf32, #tpu.memory_space<vmem>>, %arg3: memref<64x1xf32, #tpu.memory_space<vmem>>, %arg4: memref<64x128xbf16, #tpu.memory_space<vmem>>) attributes {dimension_semantics = [#tpu.dimension_semantics<parallel>], iteration_bounds = array<i64: 1>, scalar_prefetch = 0 : i64, scratch_operands = 0 : i64, tpu.core_type = #tpu.core_type<tc>, window_params = [{transform_indices = @transform_0, window_bounds = array<i64: 64, 128>}, {pipeline_mode = #tpu.pipeline_mode<synchronous>, transform_indices = @transform_1, window_bounds = array<i64: 64, 1>}, {pipeline_mode = #tpu.pipeline_mode<synchronous>, transform_indices = @transform_2, window_bounds = array<i64: 64, 1>}, {transform_indices = @transform_3, window_bounds = array<i64: 64, 128>}]} {
    %c0 = arith.constant 0 : index
    %c0_0 = arith.constant 0 : index
    %0 = vector.load %arg2[%c0, %c0_0] : memref<64x1xf32, #tpu.memory_space<vmem>>, vector<64x1xf32>
    %cst = arith.constant 9.765625E-4 : f32
    %1 = vector.broadcast %cst : f32 to vector<64x1xf32>
    %2 = arith.mulf %0, %1 : vector<64x1xf32>
    %c0_1 = arith.constant 0 : index
    %c0_2 = arith.constant 0 : index
    %3 = vector.load %arg3[%c0_1, %c0_2] : memref<64x1xf32, #tpu.memory_space<vmem>>, vector<64x1xf32>
    %cst_3 = arith.constant 9.765625E-4 : f32
    %4 = vector.broadcast %cst_3 : f32 to vector<64x1xf32>
    %5 = arith.mulf %3, %4 : vector<64x1xf32>
    %6 = arith.mulf %2, %2 : vector<64x1xf32>
    %7 = arith.subf %5, %6 : vector<64x1xf32>
    %cst_4 = arith.constant 0.000000e+00 : f32
    %8 = vector.broadcast %cst_4 : f32 to vector<64x1xf32>
    %9 = arith.maximumf %7, %8 : vector<64x1xf32>
    %cst_5 = arith.constant 9.99999974E-6 : f32
    %10 = vector.broadcast %cst_5 : f32 to vector<64x1xf32>
    %11 = arith.addf %9, %10 : vector<64x1xf32>
    %12 = math.rsqrt %11 : vector<64x1xf32>
    %c0_6 = arith.constant 0 : index
    %c0_7 = arith.constant 0 : index
    %13 = vector.load %arg1[%c0_6, %c0_7] : memref<64x128xbf16, #tpu.memory_space<vmem>>, vector<64x128xbf16>
    %14 = arith.extf %13 : vector<64x128xbf16> to vector<64x128xf32>
    %15 = vector.broadcast %2 : vector<64x1xf32> to vector<64x128xf32>
    %16 = arith.subf %14, %15 : vector<64x128xf32>
    %17 = vector.broadcast %12 : vector<64x1xf32> to vector<64x128xf32>
    %18 = arith.mulf %16, %17 : vector<64x128xf32>
    %cst_8 = arith.constant 0.000000e+00 : f32
    %19 = vector.broadcast %cst_8 : f32 to vector<64x128xf32>
    %20 = arith.maximumf %18, %19 : vector<64x128xf32>
    %21 = arith.truncf %20 : vector<64x128xf32> to vector<64x128xbf16>
    %c0_9 = arith.constant 0 : index
    %c0_10 = arith.constant 0 : index
    %22 = vector.load %arg4[%c0_9, %c0_10] : memref<64x128xbf16, #tpu.memory_space<vmem>>, vector<64x128xbf16>
    tpu.vector_store %arg4[%c0_9, %c0_10], %21 {strides = array<i32>} : memref<64x128xbf16, #tpu.memory_space<vmem>>, vector<64x128xbf16>,
    return
  }
  func.func @transform_0(%arg0: i32) -> (i32, i32) {
    %c0_i32 = arith.constant 0 : i32
    %c0_i32_0 = arith.constant 0 : i32
    return %c0_i32, %arg0 : i32, i32
  }
  func.func @transform_1(%arg0: i32) -> (i32, i32) {
    %c0_i32 = arith.constant 0 : i32
    %c0_i32_0 = arith.constant 0 : i32
    %c0_i32_1 = arith.constant 0 : i32
    return %c0_i32, %c0_i32_0 : i32, i32
  }
  func.func @transform_2(%arg0: i32) -> (i32, i32) {
    %c0_i32 = arith.constant 0 : i32
    %c0_i32_0 = arith.constant 0 : i32
    %c0_i32_1 = arith.constant 0 : i32
    return %c0_i32, %c0_i32_0 : i32, i32
  }
  func.func @transform_3(%arg0: i32) -> (i32, i32) {
    %c0_i32 = arith.constant 0 : i32
    %c0_i32_0 = arith.constant 0 : i32
    return %c0_i32, %arg0 : i32, i32
  }
}

module attributes {stable_mosaic.version = 11 : i64} {
  func.func @_matmul_stats_kernel(%arg0: i32, %arg1: memref<16x1024xbf16, #tpu.memory_space<vmem>>, %arg2: memref<8x16xbf16, #tpu.memory_space<vmem>>, %arg3: memref<8x1024xbf16, #tpu.memory_space<vmem>>, %arg4: memref<1x8x1xf32, #tpu.memory_space<vmem>>, %arg5: memref<1x8x1xf32, #tpu.memory_space<vmem>>) attributes {dimension_semantics = [#tpu.dimension_semantics<parallel>], iteration_bounds = array<i64: 1>, scalar_prefetch = 0 : i64, scratch_operands = 0 : i64, tpu.core_type = #tpu.core_type<tc>, window_params = [{transform_indices = @transform_0, window_bounds = array<i64: 16, 1024>}, {pipeline_mode = #tpu.pipeline_mode<synchronous>, transform_indices = @transform_1, window_bounds = array<i64: 8, 16>}, {transform_indices = @transform_2, window_bounds = array<i64: 8, 1024>}, {transform_indices = @transform_3, window_bounds = array<i64: 1, 8, 1>}, {transform_indices = @transform_4, window_bounds = array<i64: 1, 8, 1>}]} {
    %c0 = arith.constant 0 : index
    %c0_0 = arith.constant 0 : index
    %0 = vector.load %arg2[%c0, %c0_0] : memref<8x16xbf16, #tpu.memory_space<vmem>>, vector<8x16xbf16>
    %c0_1 = arith.constant 0 : index
    %c0_2 = arith.constant 0 : index
    %1 = vector.load %arg1[%c0_1, %c0_2] : memref<16x1024xbf16, #tpu.memory_space<vmem>>, vector<16x1024xbf16>
    %cst = arith.constant dense<0.000000e+00> : vector<8x1024xf32>
    %2 = tpu.matmul %0, %1, %cst {dimension_numbers = #tpu.dot_dimension_numbers<[1], [0], [0], [1], [0, 0, 1, 1], [], []>} : vector<8x16xbf16>, vector<16x1024xbf16>, vector<8x1024xf32> -> vector<8x1024xf32>
    %3 = arith.truncf %2 : vector<8x1024xf32> to vector<8x1024xbf16>
    %c0_3 = arith.constant 0 : index
    %c0_4 = arith.constant 0 : index
    %4 = vector.load %arg3[%c0_3, %c0_4] : memref<8x1024xbf16, #tpu.memory_space<vmem>>, vector<8x1024xbf16>
    tpu.vector_store %arg3[%c0_3, %c0_4], %3 {strides = array<i32>} : memref<8x1024xbf16, #tpu.memory_space<vmem>>, vector<8x1024xbf16>,
    %cst_5 = arith.constant dense<0.000000e+00> : vector<8xf32>
    %5 = vector.multi_reduction <add>, %2, %cst_5 [1] : vector<8x1024xf32> to vector<8xf32>
    %6 = vector.shape_cast %5 : vector<8xf32> to vector<8x1xf32>
    %c0_6 = arith.constant 0 : index
    %c0_7 = arith.constant 0 : index
    %c0_8 = arith.constant 0 : index
    %7 = vector.load %arg4[%c0_6, %c0_7, %c0_8] : memref<1x8x1xf32, #tpu.memory_space<vmem>>, vector<1x8x1xf32>
    %8 = vector.shape_cast %7 : vector<1x8x1xf32> to vector<8x1xf32>
    %9 = vector.shape_cast %6 : vector<8x1xf32> to vector<1x8x1xf32>
    tpu.vector_store %arg4[%c0_6, %c0_7, %c0_8], %9 {strides = array<i32>} : memref<1x8x1xf32, #tpu.memory_space<vmem>>, vector<1x8x1xf32>,
    %10 = arith.mulf %2, %2 : vector<8x1024xf32>
    %cst_9 = arith.constant dense<0.000000e+00> : vector<8xf32>
    %11 = vector.multi_reduction <add>, %10, %cst_9 [1] : vector<8x1024xf32> to vector<8xf32>
    %12 = vector.shape_cast %11 : vector<8xf32> to vector<8x1xf32>
    %c0_10 = arith.constant 0 : index
    %c0_11 = arith.constant 0 : index
    %c0_12 = arith.constant 0 : index
    %13 = vector.load %arg5[%c0_10, %c0_11, %c0_12] : memref<1x8x1xf32, #tpu.memory_space<vmem>>, vector<1x8x1xf32>
    %14 = vector.shape_cast %13 : vector<1x8x1xf32> to vector<8x1xf32>
    %15 = vector.shape_cast %12 : vector<8x1xf32> to vector<1x8x1xf32>
    tpu.vector_store %arg5[%c0_10, %c0_11, %c0_12], %15 {strides = array<i32>} : memref<1x8x1xf32, #tpu.memory_space<vmem>>, vector<1x8x1xf32>,
    return
  }
  func.func @transform_0(%arg0: i32) -> (i32, i32) {
    %c0_i32 = arith.constant 0 : i32
    %c0_i32_0 = arith.constant 0 : i32
    return %c0_i32, %arg0 : i32, i32
  }
  func.func @transform_1(%arg0: i32) -> (i32, i32) {
    %c0_i32 = arith.constant 0 : i32
    %c0_i32_0 = arith.constant 0 : i32
    %c0_i32_1 = arith.constant 0 : i32
    return %c0_i32, %c0_i32_0 : i32, i32
  }
  func.func @transform_2(%arg0: i32) -> (i32, i32) {
    %c0_i32 = arith.constant 0 : i32
    %c0_i32_0 = arith.constant 0 : i32
    return %c0_i32, %arg0 : i32, i32
  }
  func.func @transform_3(%arg0: i32) -> (i32, i32, i32) {
    %c0_i32 = arith.constant 0 : i32
    %c0_i32_0 = arith.constant 0 : i32
    %c0_i32_1 = arith.constant 0 : i32
    return %arg0, %c0_i32, %c0_i32_0 : i32, i32, i32
  }
  func.func @transform_4(%arg0: i32) -> (i32, i32, i32) {
    %c0_i32 = arith.constant 0 : i32
    %c0_i32_0 = arith.constant 0 : i32
    %c0_i32_1 = arith.constant 0 : i32
    return %arg0, %c0_i32, %c0_i32_0 : i32, i32, i32
  }
}

module attributes {stable_mosaic.version = 11 : i64} {
  func.func @_matmul_stats_kernel(%arg0: i32, %arg1: memref<64x1024xbf16, #tpu.memory_space<vmem>>, %arg2: memref<64x64xbf16, #tpu.memory_space<vmem>>, %arg3: memref<64x1024xbf16, #tpu.memory_space<vmem>>, %arg4: memref<1x64x1xf32, #tpu.memory_space<vmem>>, %arg5: memref<1x64x1xf32, #tpu.memory_space<vmem>>) attributes {dimension_semantics = [#tpu.dimension_semantics<parallel>], iteration_bounds = array<i64: 1>, scalar_prefetch = 0 : i64, scratch_operands = 0 : i64, tpu.core_type = #tpu.core_type<tc>, window_params = [{transform_indices = @transform_0, window_bounds = array<i64: 64, 1024>}, {pipeline_mode = #tpu.pipeline_mode<synchronous>, transform_indices = @transform_1, window_bounds = array<i64: 64, 64>}, {transform_indices = @transform_2, window_bounds = array<i64: 64, 1024>}, {transform_indices = @transform_3, window_bounds = array<i64: 1, 64, 1>}, {transform_indices = @transform_4, window_bounds = array<i64: 1, 64, 1>}]} {
    %c0 = arith.constant 0 : index
    %c0_0 = arith.constant 0 : index
    %0 = vector.load %arg2[%c0, %c0_0] : memref<64x64xbf16, #tpu.memory_space<vmem>>, vector<64x64xbf16>
    %c0_1 = arith.constant 0 : index
    %c0_2 = arith.constant 0 : index
    %1 = vector.load %arg1[%c0_1, %c0_2] : memref<64x1024xbf16, #tpu.memory_space<vmem>>, vector<64x1024xbf16>
    %cst = arith.constant dense<0.000000e+00> : vector<64x1024xf32>
    %2 = tpu.matmul %0, %1, %cst {dimension_numbers = #tpu.dot_dimension_numbers<[1], [0], [0], [1], [0, 0, 1, 1], [], []>} : vector<64x64xbf16>, vector<64x1024xbf16>, vector<64x1024xf32> -> vector<64x1024xf32>
    %3 = arith.truncf %2 : vector<64x1024xf32> to vector<64x1024xbf16>
    %c0_3 = arith.constant 0 : index
    %c0_4 = arith.constant 0 : index
    %4 = vector.load %arg3[%c0_3, %c0_4] : memref<64x1024xbf16, #tpu.memory_space<vmem>>, vector<64x1024xbf16>
    tpu.vector_store %arg3[%c0_3, %c0_4], %3 {strides = array<i32>} : memref<64x1024xbf16, #tpu.memory_space<vmem>>, vector<64x1024xbf16>,
    %cst_5 = arith.constant dense<0.000000e+00> : vector<64xf32>
    %5 = vector.multi_reduction <add>, %2, %cst_5 [1] : vector<64x1024xf32> to vector<64xf32>
    %6 = vector.shape_cast %5 : vector<64xf32> to vector<64x1xf32>
    %c0_6 = arith.constant 0 : index
    %c0_7 = arith.constant 0 : index
    %c0_8 = arith.constant 0 : index
    %7 = vector.load %arg4[%c0_6, %c0_7, %c0_8] : memref<1x64x1xf32, #tpu.memory_space<vmem>>, vector<1x64x1xf32>
    %8 = vector.shape_cast %7 : vector<1x64x1xf32> to vector<64x1xf32>
    %9 = vector.shape_cast %6 : vector<64x1xf32> to vector<1x64x1xf32>
    tpu.vector_store %arg4[%c0_6, %c0_7, %c0_8], %9 {strides = array<i32>} : memref<1x64x1xf32, #tpu.memory_space<vmem>>, vector<1x64x1xf32>,
    %10 = arith.mulf %2, %2 : vector<64x1024xf32>
    %cst_9 = arith.constant dense<0.000000e+00> : vector<64xf32>
    %11 = vector.multi_reduction <add>, %10, %cst_9 [1] : vector<64x1024xf32> to vector<64xf32>
    %12 = vector.shape_cast %11 : vector<64xf32> to vector<64x1xf32>
    %c0_10 = arith.constant 0 : index
    %c0_11 = arith.constant 0 : index
    %c0_12 = arith.constant 0 : index
    %13 = vector.load %arg5[%c0_10, %c0_11, %c0_12] : memref<1x64x1xf32, #tpu.memory_space<vmem>>, vector<1x64x1xf32>
    %14 = vector.shape_cast %13 : vector<1x64x1xf32> to vector<64x1xf32>
    %15 = vector.shape_cast %12 : vector<64x1xf32> to vector<1x64x1xf32>
    tpu.vector_store %arg5[%c0_10, %c0_11, %c0_12], %15 {strides = array<i32>} : memref<1x64x1xf32, #tpu.memory_space<vmem>>, vector<1x64x1xf32>,
    return
  }
  func.func @transform_0(%arg0: i32) -> (i32, i32) {
    %c0_i32 = arith.constant 0 : i32
    %c0_i32_0 = arith.constant 0 : i32
    return %c0_i32, %arg0 : i32, i32
  }
  func.func @transform_1(%arg0: i32) -> (i32, i32) {
    %c0_i32 = arith.constant 0 : i32
    %c0_i32_0 = arith.constant 0 : i32
    %c0_i32_1 = arith.constant 0 : i32
    return %c0_i32, %c0_i32_0 : i32, i32
  }
  func.func @transform_2(%arg0: i32) -> (i32, i32) {
    %c0_i32 = arith.constant 0 : i32
    %c0_i32_0 = arith.constant 0 : i32
    return %c0_i32, %arg0 : i32, i32
  }
  func.func @transform_3(%arg0: i32) -> (i32, i32, i32) {
    %c0_i32 = arith.constant 0 : i32
    %c0_i32_0 = arith.constant 0 : i32
    %c0_i32_1 = arith.constant 0 : i32
    return %arg0, %c0_i32, %c0_i32_0 : i32, i32, i32
  }
  func.func @transform_4(%arg0: i32) -> (i32, i32, i32) {
    %c0_i32 = arith.constant 0 : i32
    %c0_i32_0 = arith.constant 0 : i32
    %c0_i32_1 = arith.constant 0 : i32
    return %arg0, %c0_i32, %c0_i32_0 : i32, i32, i32
  }
}

module attributes {stable_mosaic.version = 11 : i64} {
  func.func @kernel(%arg0: i32, %arg1: memref<64x1024xbf16, #tpu.memory_space<vmem>>, %arg2: memref<64x1xf32, #tpu.memory_space<vmem>>, %arg3: memref<64x1xf32, #tpu.memory_space<vmem>>, %arg4: memref<64x1024xbf16, #tpu.memory_space<vmem>>) attributes {dimension_semantics = [#tpu.dimension_semantics<parallel>], iteration_bounds = array<i64: 1>, scalar_prefetch = 0 : i64, scratch_operands = 0 : i64, tpu.core_type = #tpu.core_type<tc>, window_params = [{transform_indices = @transform_0, window_bounds = array<i64: 64, 1024>}, {pipeline_mode = #tpu.pipeline_mode<synchronous>, transform_indices = @transform_1, window_bounds = array<i64: 64, 1>}, {pipeline_mode = #tpu.pipeline_mode<synchronous>, transform_indices = @transform_2, window_bounds = array<i64: 64, 1>}, {transform_indices = @transform_3, window_bounds = array<i64: 64, 1024>}]} {
    %c0 = arith.constant 0 : index
    %c0_0 = arith.constant 0 : index
    %0 = vector.load %arg2[%c0, %c0_0] : memref<64x1xf32, #tpu.memory_space<vmem>>, vector<64x1xf32>
    %cst = arith.constant 1.22070313E-4 : f32
    %1 = vector.broadcast %cst : f32 to vector<64x1xf32>
    %2 = arith.mulf %0, %1 : vector<64x1xf32>
    %c0_1 = arith.constant 0 : index
    %c0_2 = arith.constant 0 : index
    %3 = vector.load %arg3[%c0_1, %c0_2] : memref<64x1xf32, #tpu.memory_space<vmem>>, vector<64x1xf32>
    %cst_3 = arith.constant 1.22070313E-4 : f32
    %4 = vector.broadcast %cst_3 : f32 to vector<64x1xf32>
    %5 = arith.mulf %3, %4 : vector<64x1xf32>
    %6 = arith.mulf %2, %2 : vector<64x1xf32>
    %7 = arith.subf %5, %6 : vector<64x1xf32>
    %cst_4 = arith.constant 0.000000e+00 : f32
    %8 = vector.broadcast %cst_4 : f32 to vector<64x1xf32>
    %9 = arith.maximumf %7, %8 : vector<64x1xf32>
    %cst_5 = arith.constant 9.99999974E-6 : f32
    %10 = vector.broadcast %cst_5 : f32 to vector<64x1xf32>
    %11 = arith.addf %9, %10 : vector<64x1xf32>
    %12 = math.rsqrt %11 : vector<64x1xf32>
    %c0_6 = arith.constant 0 : index
    %c0_7 = arith.constant 0 : index
    %13 = vector.load %arg1[%c0_6, %c0_7] : memref<64x1024xbf16, #tpu.memory_space<vmem>>, vector<64x1024xbf16>
    %14 = arith.extf %13 : vector<64x1024xbf16> to vector<64x1024xf32>
    %15 = vector.broadcast %2 : vector<64x1xf32> to vector<64x1024xf32>
    %16 = arith.subf %14, %15 : vector<64x1024xf32>
    %17 = vector.broadcast %12 : vector<64x1xf32> to vector<64x1024xf32>
    %18 = arith.mulf %16, %17 : vector<64x1024xf32>
    %cst_8 = arith.constant 0.000000e+00 : f32
    %19 = vector.broadcast %cst_8 : f32 to vector<64x1024xf32>
    %20 = arith.maximumf %18, %19 : vector<64x1024xf32>
    %21 = arith.truncf %20 : vector<64x1024xf32> to vector<64x1024xbf16>
    %c0_9 = arith.constant 0 : index
    %c0_10 = arith.constant 0 : index
    %22 = vector.load %arg4[%c0_9, %c0_10] : memref<64x1024xbf16, #tpu.memory_space<vmem>>, vector<64x1024xbf16>
    tpu.vector_store %arg4[%c0_9, %c0_10], %21 {strides = array<i32>} : memref<64x1024xbf16, #tpu.memory_space<vmem>>, vector<64x1024xbf16>,
    return
  }
  func.func @transform_0(%arg0: i32) -> (i32, i32) {
    %c0_i32 = arith.constant 0 : i32
    %c0_i32_0 = arith.constant 0 : i32
    return %c0_i32, %arg0 : i32, i32
  }
  func.func @transform_1(%arg0: i32) -> (i32, i32) {
    %c0_i32 = arith.constant 0 : i32
    %c0_i32_0 = arith.constant 0 : i32
    %c0_i32_1 = arith.constant 0 : i32
    return %c0_i32, %c0_i32_0 : i32, i32
  }
  func.func @transform_2(%arg0: i32) -> (i32, i32) {
    %c0_i32 = arith.constant 0 : i32
    %c0_i32_0 = arith.constant 0 : i32
    %c0_i32_1 = arith.constant 0 : i32
    return %c0_i32, %c0_i32_0 : i32, i32
  }
  func.func @transform_3(%arg0: i32) -> (i32, i32) {
    %c0_i32 = arith.constant 0 : i32
    %c0_i32_0 = arith.constant 0 : i32
    return %c0_i32, %arg0 : i32, i32
  }
}

module attributes {stable_mosaic.version = 11 : i64} {
  func.func @_matmul_bias_softmax_kernel(%arg0: i32, %arg1: memref<8x1024xbf16, #tpu.memory_space<vmem>>, %arg2: memref<4x8xbf16, #tpu.memory_space<vmem>>, %arg3: memref<4x1xf32, #tpu.memory_space<vmem>>, %arg4: memref<4x1024xf32, #tpu.memory_space<vmem>>) attributes {dimension_semantics = [#tpu.dimension_semantics<parallel>], iteration_bounds = array<i64: 8>, scalar_prefetch = 0 : i64, scratch_operands = 0 : i64, tpu.core_type = #tpu.core_type<tc>, window_params = [{transform_indices = @transform_0, window_bounds = array<i64: 8, 1024>}, {pipeline_mode = #tpu.pipeline_mode<synchronous>, transform_indices = @transform_1, window_bounds = array<i64: 4, 8>}, {pipeline_mode = #tpu.pipeline_mode<synchronous>, transform_indices = @transform_2, window_bounds = array<i64: 4, 1>}, {transform_indices = @transform_3, window_bounds = array<i64: 4, 1024>}]} {
    %c0 = arith.constant 0 : index
    %c0_0 = arith.constant 0 : index
    %0 = vector.load %arg2[%c0, %c0_0] : memref<4x8xbf16, #tpu.memory_space<vmem>>, vector<4x8xbf16>
    %c0_1 = arith.constant 0 : index
    %c0_2 = arith.constant 0 : index
    %1 = vector.load %arg1[%c0_1, %c0_2] : memref<8x1024xbf16, #tpu.memory_space<vmem>>, vector<8x1024xbf16>
    %cst = arith.constant dense<0.000000e+00> : vector<4x1024xf32>
    %2 = tpu.matmul %0, %1, %cst {dimension_numbers = #tpu.dot_dimension_numbers<[1], [0], [0], [1], [0, 0, 1, 1], [], []>} : vector<4x8xbf16>, vector<8x1024xbf16>, vector<4x1024xf32> -> vector<4x1024xf32>
    %c0_3 = arith.constant 0 : index
    %c0_4 = arith.constant 0 : index
    %3 = vector.load %arg3[%c0_3, %c0_4] : memref<4x1xf32, #tpu.memory_space<vmem>>, vector<4x1xf32>
    %4 = vector.broadcast %3 : vector<4x1xf32> to vector<4x1024xf32>
    %5 = arith.addf %2, %4 : vector<4x1024xf32>
    %cst_5 = arith.constant dense<0xFF800000> : vector<1024xf32>
    %6 = vector.multi_reduction <maximumf>, %5, %cst_5 [0] : vector<4x1024xf32> to vector<1024xf32>
    %7 = vector.shape_cast %6 : vector<1024xf32> to vector<1x1024xf32>
    %8 = vector.broadcast %7 : vector<1x1024xf32> to vector<4x1024xf32>
    %9 = arith.subf %5, %8 : vector<4x1024xf32>
    %10 = math.exp %9 : vector<4x1024xf32>
    %cst_6 = arith.constant dense<0.000000e+00> : vector<1024xf32>
    %11 = vector.multi_reduction <add>, %10, %cst_6 [0] : vector<4x1024xf32> to vector<1024xf32>
    %12 = vector.shape_cast %11 : vector<1024xf32> to vector<1x1024xf32>
    %13 = vector.broadcast %12 : vector<1x1024xf32> to vector<4x1024xf32>
    %14 = arith.divf %10, %13 : vector<4x1024xf32>
    %c0_7 = arith.constant 0 : index
    %c0_8 = arith.constant 0 : index
    %15 = vector.load %arg4[%c0_7, %c0_8] : memref<4x1024xf32, #tpu.memory_space<vmem>>, vector<4x1024xf32>
    tpu.vector_store %arg4[%c0_7, %c0_8], %14 {strides = array<i32>} : memref<4x1024xf32, #tpu.memory_space<vmem>>, vector<4x1024xf32>,
    return
  }
  func.func @transform_0(%arg0: i32) -> (i32, i32) {
    %c0_i32 = arith.constant 0 : i32
    %c0_i32_0 = arith.constant 0 : i32
    return %c0_i32, %arg0 : i32, i32
  }
  func.func @transform_1(%arg0: i32) -> (i32, i32) {
    %c0_i32 = arith.constant 0 : i32
    %c0_i32_0 = arith.constant 0 : i32
    %c0_i32_1 = arith.constant 0 : i32
    return %c0_i32, %c0_i32_0 : i32, i32
  }
  func.func @transform_2(%arg0: i32) -> (i32, i32) {
    %c0_i32 = arith.constant 0 : i32
    %c0_i32_0 = arith.constant 0 : i32
    %c0_i32_1 = arith.constant 0 : i32
    return %c0_i32, %c0_i32_0 : i32, i32
  }
  func.func @transform_3(%arg0: i32) -> (i32, i32) {
    %c0_i32 = arith.constant 0 : i32
    %c0_i32_0 = arith.constant 0 : i32
    return %c0_i32, %arg0 : i32, i32
  }
}

</mosaic_0001>

<llo_original>
// kernel: hdc_net_forward.149
$region0: #{hdc_net_forward.149}
  #allocation0 [shape = 'u32[]', space=smem, size = 0x4, offset = 0x4, fixed_abs, tag = 'smem constant byte address 0x4 - core index']
  #allocation1 [shape = 'u32[144,128]{1,0:T(1,128)}', space=vmem, size = 0x12000, scoped, tag = 'internal scratch']
  %s0 = inlined_call_operand.hbm [shape: bf16[108,1024], index: 0, kind: input, shape index: {}]
  %s1 = inlined_call_operand.hbm [shape: bf16[8,108], index: 1, kind: input, shape index: {}]
  %s2 = inlined_call_operand.hbm [shape: bf16[8,1024], index: 2, kind: output, shape index: {0}]
  %s3 = inlined_call_operand.hbm [shape: f32[1,8,1], index: 3, kind: output, shape index: {1}]
  %s4 = inlined_call_operand.hbm [shape: f32[1,8,1], index: 4, kind: output, shape index: {2}]
  %5 = xla_tuple %s2, %s3, %s4
  %s6 = sld [smem:[#allocation0]]
  $region42: #{hdc_net_forward.149} parent=0
    _
  %s8 = ssub.s32 1, %s6
  %s9 = scalar_select 0, %s8, %s6
  $region1: #{hdc_net_forward.149} parent=0
    #allocation2 [shape = 'u8[229376]{0}', space=vmem, size = 0x38000, scoped, tag = 'input window, operand 0, single buffered']
    #allocation3 [shape = 's32[1]{0}', space=sflag, size = 0x4, scoped, tag = 'scoped memory for hdc_net_forward.149']
    #allocation4 [shape = 's32[1]{0}', space=sflag, size = 0x4, scoped, tag = 'scoped memory for hdc_net_forward.149']
    #allocation5 [shape = 'u8[2048]{0}', space=vmem, size = 0x800, scoped, tag = 'input window, operand 1, single buffered']
    #allocation6 [shape = 's32[1]{0}', space=sflag, size = 0x4, scoped, tag = 'scoped memory for hdc_net_forward.149']
    #allocation7 [shape = 'u8[16384]{0}', space=vmem, size = 0x4000, scoped, tag = 'output window, operand 0, single buffered']
    #allocation8 [shape = 'u8[4096]{0}', space=vmem, size = 0x1000, scoped, tag = 'output window, operand 1, single buffered']
    #allocation9 [shape = 's32[1]{0}', space=sflag, size = 0x4, scoped, tag = 'scoped memory for hdc_net_forward.149']
    #allocation10 [shape = 'u8[4096]{0}', space=vmem, size = 0x1000, scoped, tag = 'output window, operand 2, single buffered']
    %10 = vsyncpa [#allocation3], 0
    %11 = vsyncpa [#allocation6], 0
    %12 = vsyncpa [#allocation4], 0
    %13 = vsyncpa [#allocation9], 0
    // Predicated region
    $region2: #{hdc_net_forward.149} parent=1 // pred_check
      _
    $region3: #{hdc_net_forward.149} parent=1 // pred_check_branch
      %15 = sbr.rel (0) target = $region5
    $region4: #{hdc_net_forward.149} parent=1 // pred_region
      %s17 = ssub.s32 7168, 7168
      %18 = vsyncadd [#allocation3], %s17
      %s19 = sshll.u32 [#allocation2], 4
      %s20 = int_to_ptr.vmem [resolvable:$true] %s19
      %25 = dma.hbm_to_vmem [thread:$0]  %s0, 7168, %s20, [#allocation3], 512, 512, 32
    $region5: #{hdc_net_forward.149} parent=1 // pred_fallthru
      _
    // Predicated region
    $region6: #{hdc_net_forward.149} parent=1 // pred_check
      _
    $region7: #{hdc_net_forward.149} parent=1 // pred_check_branch
      %27 = sbr.rel (0) target = $region9
    $region8: #{hdc_net_forward.149} parent=1 // pred_region
      %s29 = ssub.s32 64, 64
      %30 = vsyncadd [#allocation6], %s29
      %s32 = sshll.u32 [#allocation5], 4
      %s33 = int_to_ptr.vmem [resolvable:$true] %s32
      %35 = dma.hbm_to_vmem [thread:$0]  %s1, 64, %s33, [#allocation6]
    $region9: #{hdc_net_forward.149} parent=1 // pred_fallthru
      _
    // Predicated region
    $region10: #{hdc_net_forward.149} parent=1 // pred_check
      _
    $region11: #{hdc_net_forward.149} parent=1 // pred_check_branch
      %37 = sbr.rel (0) target = $region13
    $region12: #{hdc_net_forward.149} parent=1 // pred_region
      %38 = dma.done [#allocation3], 7168
    $region13: #{hdc_net_forward.149} parent=1 // pred_fallthru
      _
    // Predicated region
    $region14: #{hdc_net_forward.149} parent=1 // pred_check
      _
    $region15: #{hdc_net_forward.149} parent=1 // pred_check_branch
      %40 = sbr.rel (0) target = $region17
    $region16: #{hdc_net_forward.149} parent=1 // pred_region
      %41 = dma.done [#allocation6], 64
    $region17: #{hdc_net_forward.149} parent=1 // pred_fallthru
      _
    %v43 = vld [vmem:[#allocation5] sm:$0xf]
    %v44 = vld [vmem:[#allocation2] sm:$0xff]
    %v45 = vld [vmem:[#allocation2 + $0x8] sm:$0xff]
    %v46 = vld [vmem:[#allocation2 + $0x10] sm:$0xff]
    %v47 = vld [vmem:[#allocation2 + $0x18] sm:$0xff]
    %v48 = vld [vmem:[#allocation2 + $0x20] sm:$0xff]
    %v49 = vld [vmem:[#allocation2 + $0x28] sm:$0xff]
    %v50 = vld [vmem:[#allocation2 + $0x30] sm:$0xff]
    %v51 = vld [vmem:[#allocation2 + $0x38] sm:$0xff]
    %v52 = vld [vmem:[#allocation2 + $0x40] sm:$0xff]
    %v53 = vld [vmem:[#allocation2 + $0x48] sm:$0xff]
    %v54 = vld [vmem:[#allocation2 + $0x50] sm:$0xff]
    %v55 = vld [vmem:[#allocation2 + $0x58] sm:$0xff]
    %v56 = vld [vmem:[#allocation2 + $0x60] sm:$0xff]
    %v57 = vld [vmem:[#allocation2 + $0x68] sm:$0xff]
    %v58 = vld [vmem:[#allocation2 + $0x70] sm:$0xff]
    %v59 = vld [vmem:[#allocation2 + $0x78] sm:$0xff]
    %v60 = vld [vmem:[#allocation2 + $0x80] sm:$0xff]
    %v61 = vld [vmem:[#allocation2 + $0x88] sm:$0xff]
    %v62 = vld [vmem:[#allocation2 + $0x90] sm:$0xff]
    %v63 = vld [vmem:[#allocation2 + $0x98] sm:$0xff]
    %v64 = vld [vmem:[#allocation2 + $0xa0] sm:$0xff]
    %v65 = vld [vmem:[#allocation2 + $0xa8] sm:$0xff]
    %v66 = vld [vmem:[#allocation2 + $0xb0] sm:$0xff]
    %v67 = vld [vmem:[#allocation2 + $0xb8] sm:$0xff]
    %v68 = vld [vmem:[#allocation2 + $0xc0] sm:$0xff]
    %v69 = vld [vmem:[#allocation2 + $0xc8] sm:$0xff]
    %v70 = vld [vmem:[#allocation2 + $0xd0] sm:$0xff]
    %v71 = vld [vmem:[#allocation2 + $0xd8] sm:$0xff]
    %v72 = vld [vmem:[#allocation2 + $0xe0] sm:$0xff]
    %v73 = vld [vmem:[#allocation2 + $0xe8] sm:$0xff]
    %v74 = vld [vmem:[#allocation2 + $0xf0] sm:$0xff]
    %v75 = vld [vmem:[#allocation2 + $0xf8] sm:$0xff]
    %v76 = vld [vmem:[#allocation2 + $0x100] sm:$0xff]
    %v77 = vld [vmem:[#allocation2 + $0x108] sm:$0xff]
    %v78 = vld [vmem:[#allocation2 + $0x110] sm:$0xff]
    %v79 = vld [vmem:[#allocation2 + $0x118] sm:$0xff]
    %v80 = vld [vmem:[#allocation2 + $0x120] sm:$0xff]
    %v81 = vld [vmem:[#allocation2 + $0x128] sm:$0xff]
    %v82 = vld [vmem:[#allocation2 + $0x130] sm:$0xff]
    %v83 = vld [vmem:[#allocation2 + $0x138] sm:$0xff]
    %v84 = vld [vmem:[#allocation2 + $0x140] sm:$0xff]
    %v85 = vld [vmem:[#allocation2 + $0x148] sm:$0xff]
    %v86 = vld [vmem:[#allocation2 + $0x150] sm:$0xff]
    %v87 = vld [vmem:[#allocation2 + $0x158] sm:$0xff]
    %v88 = vld [vmem:[#allocation2 + $0x160] sm:$0xff]
    %v89 = vld [vmem:[#allocation2 + $0x168] sm:$0xff]
    %v90 = vld [vmem:[#allocation2 + $0x170] sm:$0xff]
    %v91 = vld [vmem:[#allocation2 + $0x178] sm:$0xff]
    %v92 = vld [vmem:[#allocation2 + $0x180] sm:$0xff]
    %v93 = vld [vmem:[#allocation2 + $0x188] sm:$0xff]
    %v94 = vld [vmem:[#allocation2 + $0x190] sm:$0xff]
    %v95 = vld [vmem:[#allocation2 + $0x198] sm:$0xff]
    %v96 = vld [vmem:[#allocation2 + $0x1a0] sm:$0x33]
    %v97 = vld [vmem:[#allocation2 + $0x1a8] sm:$0x33]
    %v98 = vld [vmem:[#allocation2 + $0x1b0] sm:$0x33]
    %v99 = vld [vmem:[#allocation2 + $0x1b8] sm:$0x33]
    %v156 = vunpack.c.l.b16 %v44
    %v157 = vunpack.c.h.b16 %v44
    %v158 = vunpack.c.l.b16 %v45
    %v159 = vunpack.c.h.b16 %v45
    %v160 = vunpack.c.l.b16 %v46
    %v161 = vunpack.c.h.b16 %v46
    %v162 = vunpack.c.l.b16 %v47
    %v163 = vunpack.c.h.b16 %v47
    %v164 = vunpack.c.l.b16 %v48
    %v165 = vunpack.c.h.b16 %v48
    %v166 = vunpack.c.l.b16 %v49
    %v167 = vunpack.c.h.b16 %v49
    %v168 = vunpack.c.l.b16 %v50
    %v169 = vunpack.c.h.b16 %v50
    %v170 = vunpack.c.l.b16 %v51
    %v171 = vunpack.c.h.b16 %v51
    %v172 = vunpack.c.l.b16 %v52
    %v173 = vunpack.c.h.b16 %v52
    %v174 = vunpack.c.l.b16 %v53
    %v175 = vunpack.c.h.b16 %v53
    %v176 = vunpack.c.l.b16 %v54
    %v177 = vunpack.c.h.b16 %v54
    %v178 = vunpack.c.l.b16 %v55
    %v179 = vunpack.c.h.b16 %v55
    %v180 = vunpack.c.l.b16 %v56
    %v181 = vunpack.c.h.b16 %v56
    %v182 = vunpack.c.l.b16 %v57
    %v183 = vunpack.c.h.b16 %v57
    %v184 = vunpack.c.l.b16 %v58
    %v185 = vunpack.c.h.b16 %v58
    %v186 = vunpack.c.l.b16 %v59
    %v187 = vunpack.c.h.b16 %v59
    %v188 = vunpack.c.l.b16 %v60
    %v189 = vunpack.c.h.b16 %v60
    %v190 = vunpack.c.l.b16 %v61
    %v191 = vunpack.c.h.b16 %v61
    %v192 = vunpack.c.l.b16 %v62
    %v193 = vunpack.c.h.b16 %v62
    %v194 = vunpack.c.l.b16 %v63
    %v195 = vunpack.c.h.b16 %v63
    %v196 = vunpack.c.l.b16 %v64
    %v197 = vunpack.c.h.b16 %v64
    %v198 = vunpack.c.l.b16 %v65
    %v199 = vunpack.c.h.b16 %v65
    %v200 = vunpack.c.l.b16 %v66
    %v201 = vunpack.c.h.b16 %v66
    %v202 = vunpack.c.l.b16 %v67
    %v203 = vunpack.c.h.b16 %v67
    %v204 = vunpack.c.l.b16 %v68
    %v205 = vunpack.c.h.b16 %v68
    %v206 = vunpack.c.l.b16 %v69
    %v207 = vunpack.c.h.b16 %v69
    %v208 = vunpack.c.l.b16 %v70
    %v209 = vunpack.c.h.b16 %v70
    %v210 = vunpack.c.l.b16 %v71
    %v211 = vunpack.c.h.b16 %v71
    %v212 = vunpack.c.l.b16 %v72
    %v213 = vunpack.c.h.b16 %v72
    %v214 = vunpack.c.l.b16 %v73
    %v215 = vunpack.c.h.b16 %v73
    %v216 = vunpack.c.l.b16 %v74
    %v217 = vunpack.c.h.b16 %v74
    %v218 = vunpack.c.l.b16 %v75
    %v219 = vunpack.c.h.b16 %v75
    %v220 = vunpack.c.l.b16 %v76
    %v221 = vunpack.c.h.b16 %v76
    %v222 = vunpack.c.l.b16 %v77
    %v223 = vunpack.c.h.b16 %v77
    %v224 = vunpack.c.l.b16 %v78
    %v225 = vunpack.c.h.b16 %v78
    %v226 = vunpack.c.l.b16 %v79
    %v227 = vunpack.c.h.b16 %v79
    %v228 = vunpack.c.l.b16 %v80
    %v229 = vunpack.c.h.b16 %v80
    %v230 = vunpack.c.l.b16 %v81
    %v231 = vunpack.c.h.b16 %v81
    %v232 = vunpack.c.l.b16 %v82
    %v233 = vunpack.c.h.b16 %v82
    %v234 = vunpack.c.l.b16 %v83
    %v235 = vunpack.c.h.b16 %v83
    %v236 = vunpack.c.l.b16 %v84
    %v237 = vunpack.c.h.b16 %v84
    %v238 = vunpack.c.l.b16 %v85
    %v239 = vunpack.c.h.b16 %v85
    %v240 = vunpack.c.l.b16 %v86
    %v241 = vunpack.c.h.b16 %v86
    %v242 = vunpack.c.l.b16 %v87
    %v243 = vunpack.c.h.b16 %v87
    %v244 = vunpack.c.l.b16 %v88
    %v245 = vunpack.c.h.b16 %v88
    %v246 = vunpack.c.l.b16 %v89
    %v247 = vunpack.c.h.b16 %v89
    %v248 = vunpack.c.l.b16 %v90
    %v249 = vunpack.c.h.b16 %v90
    %v250 = vunpack.c.l.b16 %v91
    %v251 = vunpack.c.h.b16 %v91
    %v252 = vunpack.c.l.b16 %v92
    %v253 = vunpack.c.h.b16 %v92
    %v254 = vunpack.c.l.b16 %v93
    %v255 = vunpack.c.h.b16 %v93
    %v256 = vunpack.c.l.b16 %v94
    %v257 = vunpack.c.h.b16 %v94
    %v258 = vunpack.c.l.b16 %v95
    %v259 = vunpack.c.h.b16 %v95
    %v260 = vunpack.c.l.b16 %v96
    %v261 = vunpack.c.h.b16 %v96
    %v262 = vunpack.c.l.b16 %v97
    %v263 = vunpack.c.h.b16 %v97
    %v264 = vunpack.c.l.b16 %v98
    %v265 = vunpack.c.h.b16 %v98
    %v266 = vunpack.c.l.b16 %v99
    %v267 = vunpack.c.h.b16 %v99
    %v268 = vpack.c.b16 %v164, %v156
    %v269 = vpack.c.b16 %v165, %v157
    %v270 = vpack.c.b16 %v166, %v158
    %v271 = vpack.c.b16 %v167, %v159
    %v272 = vpack.c.b16 %v168, %v160
    %v273 = vpack.c.b16 %v169, %v161
    %v274 = vpack.c.b16 %v170, %v162
    %v275 = vpack.c.b16 %v171, %v163
    %v276 = vpack.c.b16 %v180, %v172
    %v277 = vpack.c.b16 %v181, %v173
    %v278 = vpack.c.b16 %v182, %v174
    %v279 = vpack.c.b16 %v183, %v175
    %v280 = vpack.c.b16 %v184, %v176
    %v281 = vpack.c.b16 %v185, %v177
    %v282 = vpack.c.b16 %v186, %v178
    %v283 = vpack.c.b16 %v187, %v179
    %v284 = vpack.c.b16 %v196, %v188
    %v285 = vpack.c.b16 %v197, %v189
    %v286 = vpack.c.b16 %v198, %v190
    %v287 = vpack.c.b16 %v199, %v191
    %v288 = vpack.c.b16 %v200, %v192
    %v289 = vpack.c.b16 %v201, %v193
    %v290 = vpack.c.b16 %v202, %v194
    %v291 = vpack.c.b16 %v203, %v195
    %v292 = vpack.c.b16 %v212, %v204
    %v293 = vpack.c.b16 %v213, %v205
    %v294 = vpack.c.b16 %v214, %v206
    %v295 = vpack.c.b16 %v215, %v207
    %v296 = vpack.c.b16 %v216, %v208
    %v297 = vpack.c.b16 %v217, %v209
    %v298 = vpack.c.b16 %v218, %v210
    %v299 = vpack.c.b16 %v219, %v211
    %v300 = vpack.c.b16 %v228, %v220
    %v301 = vpack.c.b16 %v229, %v221
    %v302 = vpack.c.b16 %v230, %v222
    %v303 = vpack.c.b16 %v231, %v223
    %v304 = vpack.c.b16 %v232, %v224
    %v305 = vpack.c.b16 %v233, %v225
    %v306 = vpack.c.b16 %v234, %v226
    %v307 = vpack.c.b16 %v235, %v227
    %v308 = vpack.c.b16 %v244, %v236
    %v309 = vpack.c.b16 %v245, %v237
    %v310 = vpack.c.b16 %v246, %v238
    %v311 = vpack.c.b16 %v247, %v239
    %v312 = vpack.c.b16 %v248, %v240
    %v313 = vpack.c.b16 %v249, %v241
    %v314 = vpack.c.b16 %v250, %v242
    %v315 = vpack.c.b16 %v251, %v243
    %v316 = vpack.c.b16 %v260, %v252
    %v317 = vpack.c.b16 %v261, %v253
    %v318 = vpack.c.b16 %v262, %v254
    %v319 = vpack.c.b16 %v263, %v255
    %v320 = vpack.c.b16 %v264, %v256
    %v321 = vpack.c.b16 %v265, %v257
    %v322 = vpack.c.b16 %v266, %v258
    %v323 = vpack.c.b16 %v267, %v259
    %vm372 = vcmask 883712
    %v374 = vsel %vm372, %v43, 0
    %vm376 = vcmask 1045504
    %v378 = vsel %vm376, %v316, 0
    %v381 = vsel %vm376, %v317, 0
    %v384 = vsel %vm376, %v318, 0
    %v387 = vsel %vm376, %v319, 0
    %v390 = vsel %vm376, %v320, 0
    %v393 = vsel %vm376, %v321, 0
    %v396 = vsel %vm376, %v322, 0
    %v399 = vsel %vm376, %v323, 0
    %401 = vmatprep.subr.bf16.mxu0 %v269
    %402 = vmatpush1.bf16.msra.mxu0 %v268
    %403 = vmatprep.subr.bf16.mxu0 %v277
    %404 = vmatpush1.bf16.msra.mxu0 %v276
    %405 = vmatprep.subr.bf16.mxu0 %v285
    %406 = vmatpush1.bf16.msra.mxu0 %v284
    %407 = vmatprep.subr.bf16.mxu0 %v293
    %408 = vmatpush1.bf16.msra.mxu0 %v292
    %409 = vmatprep.subr.bf16.mxu0 %v301
    %410 = vmatpush1.bf16.msra.mxu0 %v300
    %411 = vmatprep.subr.bf16.mxu0 %v309
    %412 = vmatpush1.bf16.msra.mxu0 %v308
    %413 = vmatprep.subr.bf16.mxu0 %v381
    %414 = vmatpush1.bf16.msra.mxu0 %v378
    %415 = vmatprep.subr.bf16.mxu0 0
    %416 = vmatpush1.bf16.msra.mxu0 0
    %417 = vmatprep.subr.bf16.mxu0 0
    %418 = vmatpush1.bf16.msra.mxu0 0
    %419 = vmatprep.subr.bf16.mxu0 0
    %420 = vmatpush1.bf16.msra.mxu0 0
    %421 = vmatprep.subr.bf16.mxu0 0
    %422 = vmatpush1.bf16.msra.mxu0 0
    %423 = vmatprep.subr.bf16.mxu0 0
    %424 = vmatpush1.bf16.msra.mxu0 0
    %425 = vmatprep.subr.bf16.mxu0 0
    %426 = vmatpush1.bf16.msra.mxu0 0
    %427 = vmatprep.subr.bf16.mxu0 0
    %428 = vmatpush1.bf16.msra.mxu0 0
    %429 = vmatprep.subr.bf16.mxu0 0
    %430 = vmatpush1.bf16.msra.mxu0 0
    %431 = vmatprep.subr.bf16.mxu0 0
    %432 = vmatpush1.bf16.msra.mxu0 0
    %433 = vmatprep.mubr.bf16.mxu0 0
    %434 = vmatmul.mubr.bf16.gmra.mrb[0].mxu0 %v374
    %v435 = vpop.f32.mrb[0].mxu0
    %v436 = vadd.f32 0.0, %v435
    %v437 = vpop.f32.mrb[0].mxu0
    %v438 = vadd.f32 0.0, %v437
    %v439 = vpop.f32.mrb[0].mxu0
    %v440 = vpop.f32.mrb[0].mxu0
    %441 = vdwg.mxu0
    %442 = vmatprep.subr.bf16.mxu0 %v271
    %443 = vmatpush1.bf16.msra.mxu0 %v270
    %444 = vmatprep.subr.bf16.mxu0 %v279
    %445 = vmatpush1.bf16.msra.mxu0 %v278
    %446 = vmatprep.subr.bf16.mxu0 %v287
    %447 = vmatpush1.bf16.msra.mxu0 %v286
    %448 = vmatprep.subr.bf16.mxu0 %v295
    %449 = vmatpush1.bf16.msra.mxu0 %v294
    %450 = vmatprep.subr.bf16.mxu0 %v303
    %451 = vmatpush1.bf16.msra.mxu0 %v302
    %452 = vmatprep.subr.bf16.mxu0 %v311
    %453 = vmatpush1.bf16.msra.mxu0 %v310
    %454 = vmatprep.subr.bf16.mxu0 %v387
    %455 = vmatpush1.bf16.msra.mxu0 %v384
    %456 = vmatprep.subr.bf16.mxu0 0
    %457 = vmatpush1.bf16.msra.mxu0 0
    %458 = vmatprep.subr.bf16.mxu0 0
    %459 = vmatpush1.bf16.msra.mxu0 0
    %460 = vmatprep.subr.bf16.mxu0 0
    %461 = vmatpush1.bf16.msra.mxu0 0
    %462 = vmatprep.subr.bf16.mxu0 0
    %463 = vmatpush1.bf16.msra.mxu0 0
    %464 = vmatprep.subr.bf16.mxu0 0
    %465 = vmatpush1.bf16.msra.mxu0 0
    %466 = vmatprep.subr.bf16.mxu0 0
    %467 = vmatpush1.bf16.msra.mxu0 0
    %468 = vmatprep.subr.bf16.mxu0 0
    %469 = vmatpush1.bf16.msra.mxu0 0
    %470 = vmatprep.subr.bf16.mxu0 0
    %471 = vmatpush1.bf16.msra.mxu0 0
    %472 = vmatprep.subr.bf16.mxu0 0
    %473 = vmatpush1.bf16.msra.mxu0 0
    %474 = vmatprep.mubr.bf16.mxu0 0
    %475 = vmatmul.mubr.bf16.gmra.mrb[0].mxu0 %v374
    %v476 = vpop.f32.mrb[0].mxu0
    %v477 = vadd.f32 0.0, %v476
    %v478 = vpop.f32.mrb[0].mxu0
    %v479 = vadd.f32 0.0, %v478
    %v480 = vpop.f32.mrb[0].mxu0
    %v481 = vpop.f32.mrb[0].mxu0
    %482 = vdwg.mxu0
    %483 = vmatprep.subr.bf16.mxu0 %v273
    %484 = vmatpush1.bf16.msra.mxu0 %v272
    %485 = vmatprep.subr.bf16.mxu0 %v281
    %486 = vmatpush1.bf16.msra.mxu0 %v280
    %487 = vmatprep.subr.bf16.mxu0 %v289
    %488 = vmatpush1.bf16.msra.mxu0 %v288
    %489 = vmatprep.subr.bf16.mxu0 %v297
    %490 = vmatpush1.bf16.msra.mxu0 %v296
    %491 = vmatprep.subr.bf16.mxu0 %v305
    %492 = vmatpush1.bf16.msra.mxu0 %v304
    %493 = vmatprep.subr.bf16.mxu0 %v313
    %494 = vmatpush1.bf16.msra.mxu0 %v312
    %495 = vmatprep.subr.bf16.mxu0 %v393
    %496 = vmatpush1.bf16.msra.mxu0 %v390
    %497 = vmatprep.subr.bf16.mxu0 0
    %498 = vmatpush1.bf16.msra.mxu0 0
    %499 = vmatprep.subr.bf16.mxu0 0
    %500 = vmatpush1.bf16.msra.mxu0 0
    %501 = vmatprep.subr.bf16.mxu0 0
    %502 = vmatpush1.bf16.msra.mxu0 0
    %503 = vmatprep.subr.bf16.mxu0 0
    %504 = vmatpush1.bf16.msra.mxu0 0
    %505 = vmatprep.subr.bf16.mxu0 0
    %506 = vmatpush1.bf16.msra.mxu0 0
    %507 = vmatprep.subr.bf16.mxu0 0
    %508 = vmatpush1.bf16.msra.mxu0 0
    %509 = vmatprep.subr.bf16.mxu0 0
    %510 = vmatpush1.bf16.msra.mxu0 0
    %511 = vmatprep.subr.bf16.mxu0 0
    %512 = vmatpush1.bf16.msra.mxu0 0
    %513 = vmatprep.subr.bf16.mxu0 0
    %514 = vmatpush1.bf16.msra.mxu0 0
    %515 = vmatprep.mubr.bf16.mxu0 0
    %516 = vmatmul.mubr.bf16.gmra.mrb[0].mxu0 %v374
    %v517 = vpop.f32.mrb[0].mxu0
    %v518 = vadd.f32 0.0, %v517
    %v519 = vpop.f32.mrb[0].mxu0
    %v520 = vadd.f32 0.0, %v519
    %v521 = vpop.f32.mrb[0].mxu0
    %v522 = vpop.f32.mrb[0].mxu0
    %523 = vdwg.mxu0
    %524 = vmatprep.subr.bf16.mxu0 %v275
    %525 = vmatpush1.bf16.msra.mxu0 %v274
    %526 = vmatprep.subr.bf16.mxu0 %v283
    %527 = vmatpush1.bf16.msra.mxu0 %v282
    %528 = vmatprep.subr.bf16.mxu0 %v291
    %529 = vmatpush1.bf16.msra.mxu0 %v290
    %530 = vmatprep.subr.bf16.mxu0 %v299
    %531 = vmatpush1.bf16.msra.mxu0 %v298
    %532 = vmatprep.subr.bf16.mxu0 %v307
    %533 = vmatpush1.bf16.msra.mxu0 %v306
    %534 = vmatprep.subr.bf16.mxu0 %v315
    %535 = vmatpush1.bf16.msra.mxu0 %v314
    %536 = vmatprep.subr.bf16.mxu0 %v399
    %537 = vmatpush1.bf16.msra.mxu0 %v396
    %538 = vmatprep.subr.bf16.mxu0 0
    %539 = vmatpush1.bf16.msra.mxu0 0
    %540 = vmatprep.subr.bf16.mxu0 0
    %541 = vmatpush1.bf16.msra.mxu0 0
    %542 = vmatprep.subr.bf16.mxu0 0
    %543 = vmatpush1.bf16.msra.mxu0 0
    %544 = vmatprep.subr.bf16.mxu0 0
    %545 = vmatpush1.bf16.msra.mxu0 0
    %546 = vmatprep.subr.bf16.mxu0 0
    %547 = vmatpush1.bf16.msra.mxu0 0
    %548 = vmatprep.subr.bf16.mxu0 0
    %549 = vmatpush1.bf16.msra.mxu0 0
    %550 = vmatprep.subr.bf16.mxu0 0
    %551 = vmatpush1.bf16.msra.mxu0 0
    %552 = vmatprep.subr.bf16.mxu0 0
    %553 = vmatpush1.bf16.msra.mxu0 0
    %554 = vmatprep.subr.bf16.mxu0 0
    %555 = vmatpush1.bf16.msra.mxu0 0
    %556 = vmatprep.mubr.bf16.mxu0 0
    %557 = vmatmul.mubr.bf16.gmra.mrb[0].mxu0 %v374
    %v558 = vpop.f32.mrb[0].mxu0
    %v559 = vadd.f32 0.0, %v558
    %v560 = vpop.f32.mrb[0].mxu0
    %v561 = vadd.f32 0.0, %v560
    %v562 = vpop.f32.mrb[0].mxu0
    %v563 = vpop.f32.mrb[0].mxu0
    %564 = vdwg.mxu0
    %v565 = vpack.c.bf16 %v436, %v436
    %v566 = vpack.c.bf16 %v438, %v438
    %v567 = vpack.c.bf16 %v477, %v477
    %v568 = vpack.c.bf16 %v479, %v479
    %v569 = vpack.c.bf16 %v518, %v518
    %v570 = vpack.c.bf16 %v520, %v520
    %v571 = vpack.c.bf16 %v559, %v559
    %v572 = vpack.c.bf16 %v561, %v561
    %v581 = vunpack.c.l.b16 %v565
    %v582 = vunpack.c.l.b16 %v566
    %v583 = vunpack.c.l.b16 %v567
    %v584 = vunpack.c.l.b16 %v568
    %v585 = vunpack.c.l.b16 %v569
    %v586 = vunpack.c.l.b16 %v570
    %v587 = vunpack.c.l.b16 %v571
    %v588 = vunpack.c.l.b16 %v572
    %v589 = vpack.c.b16 %v582, %v581
    %v590 = vpack.c.b16 %v584, %v583
    %v591 = vpack.c.b16 %v586, %v585
    %v592 = vpack.c.b16 %v588, %v587
    %597 = vst [vmem:[#allocation7] sm:$0xff] %v589
    %598 = vst [vmem:[#allocation7 + $0x8] sm:$0xff] %v590
    %599 = vst [vmem:[#allocation7 + $0x10] sm:$0xff] %v591
    %600 = vst [vmem:[#allocation7 + $0x18] sm:$0xff] %v592
    %v601 = vadd.f32 %v436, %v438
    %v602 = vadd.f32 %v601, %v477
    %v603 = vadd.f32 %v602, %v479
    %v604 = vadd.f32 %v603, %v518
    %v605 = vadd.f32 %v604, %v520
    %v606 = vadd.f32 %v605, %v559
    %v607 = vadd.f32 %v606, %v561
    %608 = vadd.xlane.f32.xlu0 %v607
    %v609 = vpop.xlane.xlu0 %608
    %vm610 = vcmask 7168
    %611 = vst.msk [vmem:[#allocation8] sm:$0xff] %vm610, %v609
    %v612 = vmul.f32 %v436, %v436
    %v613 = vmul.f32 %v438, %v438
    %v614 = vmul.f32 %v477, %v477
    %v615 = vmul.f32 %v479, %v479
    %v616 = vmul.f32 %v518, %v518
    %v617 = vmul.f32 %v520, %v520
    %v618 = vmul.f32 %v559, %v559
    %v619 = vmul.f32 %v561, %v561
    %v620 = vadd.f32 %v612, %v613
    %v621 = vadd.f32 %v620, %v614
    %v622 = vadd.f32 %v621, %v615
    %v623 = vadd.f32 %v622, %v616
    %v624 = vadd.f32 %v623, %v617
    %v625 = vadd.f32 %v624, %v618
    %v626 = vadd.f32 %v625, %v619
    %627 = vadd.xlane.f32.xlu0 %v626
    %v628 = vpop.xlane.xlu0 %627
    %629 = vst.msk [vmem:[#allocation10] sm:$0xff] %vm610, %v628
    // Predicated region
    $region18: #{hdc_net_forward.149} parent=1 // pred_check
      _
    $region19: #{hdc_net_forward.149} parent=1 // pred_check_branch
      %631 = sbr.rel (0) target = $region21
    $region20: #{hdc_net_forward.149} parent=1 // pred_region
      %s633 = ssub.s32 512, 512
      %634 = vsyncadd [#allocation4], %s633
      %s636 = sshll.u32 [#allocation7], 4
      %s637 = int_to_ptr.vmem [resolvable:$true] %s636
      %639 = dma.vmem_to_hbm [thread:$0]  %s637, 512, %s2, [#allocation4]
    $region21: #{hdc_net_forward.149} parent=1 // pred_fallthru
      _
    // Predicated region
    $region22: #{hdc_net_forward.149} parent=1 // pred_check
      _
    $region23: #{hdc_net_forward.149} parent=1 // pred_check_branch
      %641 = sbr.rel (0) target = $region25
    $region24: #{hdc_net_forward.149} parent=1 // pred_region
      %s643 = ssub.s32 128, 128
      %644 = vsyncadd [#allocation9], %s643
      %s646 = sshll.u32 [#allocation8], 4
      %s647 = int_to_ptr.vmem [resolvable:$true] %s646
      %649 = dma.vmem_to_hbm [thread:$0]  %s647, 128, %s3, [#allocation9]
    $region25: #{hdc_net_forward.149} parent=1 // pred_fallthru
      _
    // Predicated region
    $region26: #{hdc_net_forward.149} parent=1 // pred_check
      _
    $region27: #{hdc_net_forward.149} parent=1 // pred_check_branch
      %651 = sbr.rel (0) target = $region29
    $region28: #{hdc_net_forward.149} parent=1 // pred_region
      %s653 = ssub.s32 128, 128
      %654 = vsyncadd [#allocation9], %s653
      %s656 = sshll.u32 [#allocation10], 4
      %s657 = int_to_ptr.vmem [resolvable:$true] %s656
      %659 = dma.vmem_to_hbm [thread:$0]  %s657, 128, %s4, [#allocation9]
    $region29: #{hdc_net_forward.149} parent=1 // pred_fallthru
      _
    // Predicated region
    $region30: #{hdc_net_forward.149} parent=1 // pred_check
      _
    $region31: #{hdc_net_forward.149} parent=1 // pred_check_branch
      %661 = sbr.rel (0) target = $region33
    $region32: #{hdc_net_forward.149} parent=1 // pred_region
      %662 = dma.done [#allocation4], 512
    $region33: #{hdc_net_forward.149} parent=1 // pred_fallthru
      _
    // Predicated region
    $region34: #{hdc_net_forward.149} parent=1 // pred_check
      _
    $region35: #{hdc_net_forward.149} parent=1 // pred_check_branch
      %664 = sbr.rel (0) target = $region37
    $region36: #{hdc_net_forward.149} parent=1 // pred_region
      %665 = dma.done [#allocation9], 128
    $region37: #{hdc_net_forward.149} parent=1 // pred_fallthru
      _
    // Predicated region
    $region38: #{hdc_net_forward.149} parent=1 // pred_check
      _
    $region39: #{hdc_net_forward.149} parent=1 // pred_check_branch
      %667 = sbr.rel (0) target = $region41
    $region40: #{hdc_net_forward.149} parent=1 // pred_region
      %668 = dma.done [#allocation9], 128
    $region41: #{hdc_net_forward.149} parent=1 // pred_fallthru
      _
    %669 = vsyncpa [#allocation3], 1
    %670 = vsyncpa [#allocation6], 1
    %671 = vsyncpa [#allocation4], 1
    %672 = vsyncpa [#allocation9], 1

// kernel: hdc_net_forward.150
$region0: #{hdc_net_forward.150}
  #allocation0 [shape = 'u32[]', space=smem, size = 0x4, offset = 0x4, fixed_abs, tag = 'smem constant byte address 0x4 - core index']
  #allocation1 [shape = 'u32[144,128]{1,0:T(1,128)}', space=vmem, size = 0x12000, scoped, tag = 'internal scratch']
  %s0 = inlined_call_operand.hbm [shape: bf16[8,1024], index: 0, kind: input, shape index: {}]
  %s1 = inlined_call_operand.hbm [shape: f32[8,1], index: 1, kind: input, shape index: {}]
  %s2 = inlined_call_operand.hbm [shape: f32[8,1], index: 2, kind: input, shape index: {}]
  %s3 = inlined_call_operand.hbm [shape: bf16[8,1024], index: 3, kind: output, shape index: {}]
  %s4 = sld [smem:[#allocation0]]
  $region34: #{hdc_net_forward.150} parent=0
    _
  %s6 = ssub.s32 1, %s4
  %s7 = scalar_select 0, %s6, %s4
  $region1: #{hdc_net_forward.150} parent=0
    #allocation2 [shape = 'u8[16384]{0}', space=vmem, size = 0x4000, scoped, tag = 'input window, operand 0, single buffered']
    #allocation3 [shape = 's32[1]{0}', space=sflag, size = 0x4, scoped, tag = 'scoped memory for hdc_net_forward.150']
    #allocation4 [shape = 's32[1]{0}', space=sflag, size = 0x4, scoped, tag = 'scoped memory for hdc_net_forward.150']
    #allocation5 [shape = 'u8[4096]{0}', space=vmem, size = 0x1000, scoped, tag = 'input window, operand 1, single buffered']
    #allocation6 [shape = 's32[1]{0}', space=sflag, size = 0x4, scoped, tag = 'scoped memory for hdc_net_forward.150']
    #allocation7 [shape = 'u8[4096]{0}', space=vmem, size = 0x1000, scoped, tag = 'input window, operand 2, single buffered']
    #allocation8 [shape = 'u8[16384]{0}', space=vmem, size = 0x4000, scoped, tag = 'output window, operand 0, single buffered']
    %8 = vsyncpa [#allocation3], 0
    %9 = vsyncpa [#allocation6], 0
    %10 = vsyncpa [#allocation4], 0
    // Predicated region
    $region2: #{hdc_net_forward.150} parent=1 // pred_check
      _
    $region3: #{hdc_net_forward.150} parent=1 // pred_check_branch
      %12 = sbr.rel (0) target = $region5
    $region4: #{hdc_net_forward.150} parent=1 // pred_region
      %s14 = ssub.s32 512, 512
      %15 = vsyncadd [#allocation3], %s14
      %s17 = sshll.u32 [#allocation2], 4
      %s18 = int_to_ptr.vmem [resolvable:$true] %s17
      %20 = dma.hbm_to_vmem [thread:$0]  %s0, 512, %s18, [#allocation3]
    $region5: #{hdc_net_forward.150} parent=1 // pred_fallthru
      _
    // Predicated region
    $region6: #{hdc_net_forward.150} parent=1 // pred_check
      _
    $region7: #{hdc_net_forward.150} parent=1 // pred_check_branch
      %22 = sbr.rel (0) target = $region9
    $region8: #{hdc_net_forward.150} parent=1 // pred_region
      %s24 = ssub.s32 128, 128
      %25 = vsyncadd [#allocation6], %s24
      %s27 = sshll.u32 [#allocation5], 4
      %s28 = int_to_ptr.vmem [resolvable:$true] %s27
      %30 = dma.hbm_to_vmem [thread:$0]  %s1, 128, %s28, [#allocation6]
    $region9: #{hdc_net_forward.150} parent=1 // pred_fallthru
      _
    // Predicated region
    $region10: #{hdc_net_forward.150} parent=1 // pred_check
      _
    $region11: #{hdc_net_forward.150} parent=1 // pred_check_branch
      %32 = sbr.rel (0) target = $region13
    $region12: #{hdc_net_forward.150} parent=1 // pred_region
      %s34 = ssub.s32 128, 128
      %35 = vsyncadd [#allocation6], %s34
      %s37 = sshll.u32 [#allocation7], 4
      %s38 = int_to_ptr.vmem [resolvable:$true] %s37
      %40 = dma.hbm_to_vmem [thread:$0]  %s2, 128, %s38, [#allocation6]
    $region13: #{hdc_net_forward.150} parent=1 // pred_fallthru
      _
    // Predicated region
    $region14: #{hdc_net_forward.150} parent=1 // pred_check
      _
    $region15: #{hdc_net_forward.150} parent=1 // pred_check_branch
      %42 = sbr.rel (0) target = $region17
    $region16: #{hdc_net_forward.150} parent=1 // pred_region
      %43 = dma.done [#allocation3], 512
    $region17: #{hdc_net_forward.150} parent=1 // pred_fallthru
      _
    // Predicated region
    $region18: #{hdc_net_forward.150} parent=1 // pred_check
      _
    $region19: #{hdc_net_forward.150} parent=1 // pred_check_branch
      %45 = sbr.rel (0) target = $region21
    $region20: #{hdc_net_forward.150} parent=1 // pred_region
      %46 = dma.done [#allocation6], 128
    $region21: #{hdc_net_forward.150} parent=1 // pred_fallthru
      _
    // Predicated region
    $region22: #{hdc_net_forward.150} parent=1 // pred_check
      _
    $region23: #{hdc_net_forward.150} parent=1 // pred_check_branch
      %48 = sbr.rel (0) target = $region25
    $region24: #{hdc_net_forward.150} parent=1 // pred_region
      %49 = dma.done [#allocation6], 128
    $region25: #{hdc_net_forward.150} parent=1 // pred_fallthru
      _
    %v50 = vld [vmem:[#allocation5] sm:$0xff]
    %v51 = vmul.f32 %v50, 0.0009765625
    %v52 = vld [vmem:[#allocation7] sm:$0xff]
    %v53 = vmul.f32 %v52, 0.0009765625
    %v54 = vmul.f32 %v51, %v51
    %v55 = vsub.f32 %v53, %v54
    %v56 = vmax.f32 %v55, 0.0
    %v57 = vadd.f32 %v56, 1e-05
    %v58 = vrsqrt.pop %v57
    %v59 = vld [vmem:[#allocation2] sm:$0xff]
    %v60 = vld [vmem:[#allocation2 + $0x8] sm:$0xff]
    %v61 = vld [vmem:[#allocation2 + $0x10] sm:$0xff]
    %v62 = vld [vmem:[#allocation2 + $0x18] sm:$0xff]
    %v63 = vunpack.c.l.bf16 %v59
    %v64 = vunpack.c.h.bf16 %v59
    %v65 = vunpack.c.l.bf16 %v60
    %v66 = vunpack.c.h.bf16 %v60
    %v67 = vunpack.c.l.bf16 %v61
    %v68 = vunpack.c.h.bf16 %v61
    %v69 = vunpack.c.l.bf16 %v62
    %v70 = vunpack.c.h.bf16 %v62
    %72 = vset.pattern.permute.xlu0 0
    %73 = vperm.xlu0 %72, %v51
    %v74 = vpop.permute.xlu0 %73
    %v76 = vsub.f32 %v63, %v74
    %v77 = vsub.f32 %v64, %v74
    %v78 = vsub.f32 %v65, %v74
    %v79 = vsub.f32 %v66, %v74
    %v80 = vsub.f32 %v67, %v74
    %v81 = vsub.f32 %v68, %v74
    %v82 = vsub.f32 %v69, %v74
    %v83 = vsub.f32 %v70, %v74
    %85 = vset.pattern.permute.xlu0 0
    %86 = vperm.xlu0 %85, %v58
    %v87 = vpop.permute.xlu0 %86
    %v89 = vmul.f32 %v76, %v87
    %v90 = vmul.f32 %v77, %v87
    %v91 = vmul.f32 %v78, %v87
    %v92 = vmul.f32 %v79, %v87
    %v93 = vmul.f32 %v80, %v87
    %v94 = vmul.f32 %v81, %v87
    %v95 = vmul.f32 %v82, %v87
    %v96 = vmul.f32 %v83, %v87
    %v97 = vmax.f32 %v89, 0.0
    %v98 = vmax.f32 %v90, 0.0
    %v99 = vmax.f32 %v91, 0.0
    %v100 = vmax.f32 %v92, 0.0
    %v101 = vmax.f32 %v93, 0.0
    %v102 = vmax.f32 %v94, 0.0
    %v103 = vmax.f32 %v95, 0.0
    %v104 = vmax.f32 %v96, 0.0
    %v105 = vpack.c.bf16 %v97, %v97
    %v106 = vpack.c.bf16 %v98, %v98
    %v107 = vpack.c.bf16 %v99, %v99
    %v108 = vpack.c.bf16 %v100, %v100
    %v109 = vpack.c.bf16 %v101, %v101
    %v110 = vpack.c.bf16 %v102, %v102
    %v111 = vpack.c.bf16 %v103, %v103
    %v112 = vpack.c.bf16 %v104, %v104
    %v121 = vunpack.c.l.b16 %v105
    %v122 = vunpack.c.l.b16 %v106
    %v123 = vunpack.c.l.b16 %v107
    %v124 = vunpack.c.l.b16 %v108
    %v125 = vunpack.c.l.b16 %v109
    %v126 = vunpack.c.l.b16 %v110
    %v127 = vunpack.c.l.b16 %v111
    %v128 = vunpack.c.l.b16 %v112
    %v129 = vpack.c.b16 %v122, %v121
    %v130 = vpack.c.b16 %v124, %v123
    %v131 = vpack.c.b16 %v126, %v125
    %v132 = vpack.c.b16 %v128, %v127
    %137 = vst [vmem:[#allocation8] sm:$0xff] %v129
    %138 = vst [vmem:[#allocation8 + $0x8] sm:$0xff] %v130
    %139 = vst [vmem:[#allocation8 + $0x10] sm:$0xff] %v131
    %140 = vst [vmem:[#allocation8 + $0x18] sm:$0xff] %v132
    // Predicated region
    $region26: #{hdc_net_forward.150} parent=1 // pred_check
      _
    $region27: #{hdc_net_forward.150} parent=1 // pred_check_branch
      %142 = sbr.rel (0) target = $region29
    $region28: #{hdc_net_forward.150} parent=1 // pred_region
      %s144 = ssub.s32 512, 512
      %145 = vsyncadd [#allocation4], %s144
      %s147 = sshll.u32 [#allocation8], 4
      %s148 = int_to_ptr.vmem [resolvable:$true] %s147
      %150 = dma.vmem_to_hbm [thread:$0]  %s148, 512, %s3, [#allocation4]
    $region29: #{hdc_net_forward.150} parent=1 // pred_fallthru
      _
    // Predicated region
    $region30: #{hdc_net_forward.150} parent=1 // pred_check
      _
    $region31: #{hdc_net_forward.150} parent=1 // pred_check_branch
      %152 = sbr.rel (0) target = $region33
    $region32: #{hdc_net_forward.150} parent=1 // pred_region
      %153 = dma.done [#allocation4], 512
    $region33: #{hdc_net_forward.150} parent=1 // pred_fallthru
      _
    %154 = vsyncpa [#allocation3], 1
    %155 = vsyncpa [#allocation6], 1
    %156 = vsyncpa [#allocation4], 1

// kernel: hdc_net_forward.151
$region0: #{hdc_net_forward.151}
  #allocation0 [shape = 'u32[]', space=smem, size = 0x4, offset = 0x4, fixed_abs, tag = 'smem constant byte address 0x4 - core index']
  #allocation1 [shape = 'u32[144,128]{1,0:T(1,128)}', space=vmem, size = 0x12000, scoped, tag = 'internal scratch']
  %s0 = inlined_call_operand.hbm [shape: bf16[8,1024], index: 0, kind: input, shape index: {}]
  %s1 = inlined_call_operand.hbm [shape: bf16[8,8], index: 1, kind: input, shape index: {}]
  %s2 = inlined_call_operand.hbm [shape: bf16[8,1024], index: 2, kind: output, shape index: {0}]
  %s3 = inlined_call_operand.hbm [shape: f32[1,8,1], index: 3, kind: output, shape index: {1}]
  %s4 = inlined_call_operand.hbm [shape: f32[1,8,1], index: 4, kind: output, shape index: {2}]
  %5 = xla_tuple %s2, %s3, %s4
  %s6 = sld [smem:[#allocation0]]
  $region42: #{hdc_net_forward.151} parent=0
    _
  %s8 = ssub.s32 1, %s6
  %s9 = scalar_select 0, %s8, %s6
  $region1: #{hdc_net_forward.151} parent=0
    #allocation2 [shape = 'u8[16384]{0}', space=vmem, size = 0x4000, scoped, tag = 'input window, operand 0, single buffered']
    #allocation3 [shape = 's32[1]{0}', space=sflag, size = 0x4, scoped, tag = 'scoped memory for hdc_net_forward.151']
    #allocation4 [shape = 's32[1]{0}', space=sflag, size = 0x4, scoped, tag = 'scoped memory for hdc_net_forward.151']
    #allocation5 [shape = 'u8[2048]{0}', space=vmem, size = 0x800, scoped, tag = 'input window, operand 1, single buffered']
    #allocation6 [shape = 's32[1]{0}', space=sflag, size = 0x4, scoped, tag = 'scoped memory for hdc_net_forward.151']
    #allocation7 [shape = 'u8[16384]{0}', space=vmem, size = 0x4000, scoped, tag = 'output window, operand 0, single buffered']
    #allocation8 [shape = 'u8[4096]{0}', space=vmem, size = 0x1000, scoped, tag = 'output window, operand 1, single buffered']
    #allocation9 [shape = 's32[1]{0}', space=sflag, size = 0x4, scoped, tag = 'scoped memory for hdc_net_forward.151']
    #allocation10 [shape = 'u8[4096]{0}', space=vmem, size = 0x1000, scoped, tag = 'output window, operand 2, single buffered']
    %10 = vsyncpa [#allocation3], 0
    %11 = vsyncpa [#allocation6], 0
    %12 = vsyncpa [#allocation4], 0
    %13 = vsyncpa [#allocation9], 0
    // Predicated region
    $region2: #{hdc_net_forward.151} parent=1 // pred_check
      _
    $region3: #{hdc_net_forward.151} parent=1 // pred_check_branch
      %15 = sbr.rel (0) target = $region5
    $region4: #{hdc_net_forward.151} parent=1 // pred_region
      %s17 = ssub.s32 512, 512
      %18 = vsyncadd [#allocation3], %s17
      %s20 = sshll.u32 [#allocation2], 4
      %s21 = int_to_ptr.vmem [resolvable:$true] %s20
      %23 = dma.hbm_to_vmem [thread:$0]  %s0, 512, %s21, [#allocation3]
    $region5: #{hdc_net_forward.151} parent=1 // pred_fallthru
      _
    // Predicated region
    $region6: #{hdc_net_forward.151} parent=1 // pred_check
      _
    $region7: #{hdc_net_forward.151} parent=1 // pred_check_branch
      %25 = sbr.rel (0) target = $region9
    $region8: #{hdc_net_forward.151} parent=1 // pred_region
      %s27 = ssub.s32 64, 64
      %28 = vsyncadd [#allocation6], %s27
      %s30 = sshll.u32 [#allocation5], 4
      %s31 = int_to_ptr.vmem [resolvable:$true] %s30
      %33 = dma.hbm_to_vmem [thread:$0]  %s1, 64, %s31, [#allocation6]
    $region9: #{hdc_net_forward.151} parent=1 // pred_fallthru
      _
    // Predicated region
    $region10: #{hdc_net_forward.151} parent=1 // pred_check
      _
    $region11: #{hdc_net_forward.151} parent=1 // pred_check_branch
      %35 = sbr.rel (0) target = $region13
    $region12: #{hdc_net_forward.151} parent=1 // pred_region
      %36 = dma.done [#allocation3], 512
    $region13: #{hdc_net_forward.151} parent=1 // pred_fallthru
      _
    // Predicated region
    $region14: #{hdc_net_forward.151} parent=1 // pred_check
      _
    $region15: #{hdc_net_forward.151} parent=1 // pred_check_branch
      %38 = sbr.rel (0) target = $region17
    $region16: #{hdc_net_forward.151} parent=1 // pred_region
      %39 = dma.done [#allocation6], 64
    $region17: #{hdc_net_forward.151} parent=1 // pred_fallthru
      _
    %v41 = vld [vmem:[#allocation5] sm:$0xf]
    %v42 = vld [vmem:[#allocation2] sm:$0xff]
    %v43 = vld [vmem:[#allocation2 + $0x8] sm:$0xff]
    %v44 = vld [vmem:[#allocation2 + $0x10] sm:$0xff]
    %v45 = vld [vmem:[#allocation2 + $0x18] sm:$0xff]
    %v50 = vunpack.c.l.b16 %v42
    %v51 = vunpack.c.h.b16 %v42
    %v52 = vunpack.c.l.b16 %v43
    %v53 = vunpack.c.h.b16 %v43
    %v54 = vunpack.c.l.b16 %v44
    %v55 = vunpack.c.h.b16 %v44
    %v56 = vunpack.c.l.b16 %v45
    %v57 = vunpack.c.h.b16 %v45
    %v58 = vpack.c.b16 %v50, %v50
    %v59 = vpack.c.b16 %v51, %v51
    %v60 = vpack.c.b16 %v52, %v52
    %v61 = vpack.c.b16 %v53, %v53
    %v62 = vpack.c.b16 %v54, %v54
    %v63 = vpack.c.b16 %v55, %v55
    %v64 = vpack.c.b16 %v56, %v56
    %v65 = vpack.c.b16 %v57, %v57
    %vm66 = vcmask 64512
    %v68 = vsel %vm66, %v41, 0
    %vm70 = vcmask 1043456
    %v72 = vsel %vm70, %v58, 0
    %v75 = vsel %vm70, %v59, 0
    %v78 = vsel %vm70, %v60, 0
    %v81 = vsel %vm70, %v61, 0
    %v84 = vsel %vm70, %v62, 0
    %v87 = vsel %vm70, %v63, 0
    %v90 = vsel %vm70, %v64, 0
    %v93 = vsel %vm70, %v65, 0
    %95 = vmatprep.subr.bf16.mxu0 %v75
    %96 = vmatpush1.bf16.msra.mxu0 %v72
    %97 = vmatprep.subr.bf16.mxu0 0
    %98 = vmatpush1.bf16.msra.mxu0 0
    %99 = vmatprep.subr.bf16.mxu0 0
    %100 = vmatpush1.bf16.msra.mxu0 0
    %101 = vmatprep.subr.bf16.mxu0 0
    %102 = vmatpush1.bf16.msra.mxu0 0
    %103 = vmatprep.subr.bf16.mxu0 0
    %104 = vmatpush1.bf16.msra.mxu0 0
    %105 = vmatprep.subr.bf16.mxu0 0
    %106 = vmatpush1.bf16.msra.mxu0 0
    %107 = vmatprep.subr.bf16.mxu0 0
    %108 = vmatpush1.bf16.msra.mxu0 0
    %109 = vmatprep.subr.bf16.mxu0 0
    %110 = vmatpush1.bf16.msra.mxu0 0
    %111 = vmatprep.subr.bf16.mxu0 0
    %112 = vmatpush1.bf16.msra.mxu0 0
    %113 = vmatprep.subr.bf16.mxu0 0
    %114 = vmatpush1.bf16.msra.mxu0 0
    %115 = vmatprep.subr.bf16.mxu0 0
    %116 = vmatpush1.bf16.msra.mxu0 0
    %117 = vmatprep.subr.bf16.mxu0 0
    %118 = vmatpush1.bf16.msra.mxu0 0
    %119 = vmatprep.subr.bf16.mxu0 0
    %120 = vmatpush1.bf16.msra.mxu0 0
    %121 = vmatprep.subr.bf16.mxu0 0
    %122 = vmatpush1.bf16.msra.mxu0 0
    %123 = vmatprep.subr.bf16.mxu0 0
    %124 = vmatpush1.bf16.msra.mxu0 0
    %125 = vmatprep.subr.bf16.mxu0 0
    %126 = vmatpush1.bf16.msra.mxu0 0
    %127 = vmatprep.mubr.bf16.mxu0 0
    %128 = vmatmul.mubr.bf16.gmra.mrb[0].mxu0 %v68
    %v129 = vpop.f32.mrb[0].mxu0
    %v130 = vadd.f32 0.0, %v129
    %v131 = vpop.f32.mrb[0].mxu0
    %v132 = vadd.f32 0.0, %v131
    %v133 = vpop.f32.mrb[0].mxu0
    %v134 = vpop.f32.mrb[0].mxu0
    %135 = vdwg.mxu0
    %136 = vmatprep.subr.bf16.mxu0 %v81
    %137 = vmatpush1.bf16.msra.mxu0 %v78
    %138 = vmatprep.subr.bf16.mxu0 0
    %139 = vmatpush1.bf16.msra.mxu0 0
    %140 = vmatprep.subr.bf16.mxu0 0
    %141 = vmatpush1.bf16.msra.mxu0 0
    %142 = vmatprep.subr.bf16.mxu0 0
    %143 = vmatpush1.bf16.msra.mxu0 0
    %144 = vmatprep.subr.bf16.mxu0 0
    %145 = vmatpush1.bf16.msra.mxu0 0
    %146 = vmatprep.subr.bf16.mxu0 0
    %147 = vmatpush1.bf16.msra.mxu0 0
    %148 = vmatprep.subr.bf16.mxu0 0
    %149 = vmatpush1.bf16.msra.mxu0 0
    %150 = vmatprep.subr.bf16.mxu0 0
    %151 = vmatpush1.bf16.msra.mxu0 0
    %152 = vmatprep.subr.bf16.mxu0 0
    %153 = vmatpush1.bf16.msra.mxu0 0
    %154 = vmatprep.subr.bf16.mxu0 0
    %155 = vmatpush1.bf16.msra.mxu0 0
    %156 = vmatprep.subr.bf16.mxu0 0
    %157 = vmatpush1.bf16.msra.mxu0 0
    %158 = vmatprep.subr.bf16.mxu0 0
    %159 = vmatpush1.bf16.msra.mxu0 0
    %160 = vmatprep.subr.bf16.mxu0 0
    %161 = vmatpush1.bf16.msra.mxu0 0
    %162 = vmatprep.subr.bf16.mxu0 0
    %163 = vmatpush1.bf16.msra.mxu0 0
    %164 = vmatprep.subr.bf16.mxu0 0
    %165 = vmatpush1.bf16.msra.mxu0 0
    %166 = vmatprep.subr.bf16.mxu0 0
    %167 = vmatpush1.bf16.msra.mxu0 0
    %168 = vmatprep.mubr.bf16.mxu0 0
    %169 = vmatmul.mubr.bf16.gmra.mrb[0].mxu0 %v68
    %v170 = vpop.f32.mrb[0].mxu0
    %v171 = vadd.f32 0.0, %v170
    %v172 = vpop.f32.mrb[0].mxu0
    %v173 = vadd.f32 0.0, %v172
    %v174 = vpop.f32.mrb[0].mxu0
    %v175 = vpop.f32.mrb[0].mxu0
    %176 = vdwg.mxu0
    %177 = vmatprep.subr.bf16.mxu0 %v87
    %178 = vmatpush1.bf16.msra.mxu0 %v84
    %179 = vmatprep.subr.bf16.mxu0 0
    %180 = vmatpush1.bf16.msra.mxu0 0
    %181 = vmatprep.subr.bf16.mxu0 0
    %182 = vmatpush1.bf16.msra.mxu0 0
    %183 = vmatprep.subr.bf16.mxu0 0
    %184 = vmatpush1.bf16.msra.mxu0 0
    %185 = vmatprep.subr.bf16.mxu0 0
    %186 = vmatpush1.bf16.msra.mxu0 0
    %187 = vmatprep.subr.bf16.mxu0 0
    %188 = vmatpush1.bf16.msra.mxu0 0
    %189 = vmatprep.subr.bf16.mxu0 0
    %190 = vmatpush1.bf16.msra.mxu0 0
    %191 = vmatprep.subr.bf16.mxu0 0
    %192 = vmatpush1.bf16.msra.mxu0 0
    %193 = vmatprep.subr.bf16.mxu0 0
    %194 = vmatpush1.bf16.msra.mxu0 0
    %195 = vmatprep.subr.bf16.mxu0 0
    %196 = vmatpush1.bf16.msra.mxu0 0
    %197 = vmatprep.subr.bf16.mxu0 0
    %198 = vmatpush1.bf16.msra.mxu0 0
    %199 = vmatprep.subr.bf16.mxu0 0
    %200 = vmatpush1.bf16.msra.mxu0 0
    %201 = vmatprep.subr.bf16.mxu0 0
    %202 = vmatpush1.bf16.msra.mxu0 0
    %203 = vmatprep.subr.bf16.mxu0 0
    %204 = vmatpush1.bf16.msra.mxu0 0
    %205 = vmatprep.subr.bf16.mxu0 0
    %206 = vmatpush1.bf16.msra.mxu0 0
    %207 = vmatprep.subr.bf16.mxu0 0
    %208 = vmatpush1.bf16.msra.mxu0 0
    %209 = vmatprep.mubr.bf16.mxu0 0
    %210 = vmatmul.mubr.bf16.gmra.mrb[0].mxu0 %v68
    %v211 = vpop.f32.mrb[0].mxu0
    %v212 = vadd.f32 0.0, %v211
    %v213 = vpop.f32.mrb[0].mxu0
    %v214 = vadd.f32 0.0, %v213
    %v215 = vpop.f32.mrb[0].mxu0
    %v216 = vpop.f32.mrb[0].mxu0
    %217 = vdwg.mxu0
    %218 = vmatprep.subr.bf16.mxu0 %v93
    %219 = vmatpush1.bf16.msra.mxu0 %v90
    %220 = vmatprep.subr.bf16.mxu0 0
    %221 = vmatpush1.bf16.msra.mxu0 0
    %222 = vmatprep.subr.bf16.mxu0 0
    %223 = vmatpush1.bf16.msra.mxu0 0
    %224 = vmatprep.subr.bf16.mxu0 0
    %225 = vmatpush1.bf16.msra.mxu0 0
    %226 = vmatprep.subr.bf16.mxu0 0
    %227 = vmatpush1.bf16.msra.mxu0 0
    %228 = vmatprep.subr.bf16.mxu0 0
    %229 = vmatpush1.bf16.msra.mxu0 0
    %230 = vmatprep.subr.bf16.mxu0 0
    %231 = vmatpush1.bf16.msra.mxu0 0
    %232 = vmatprep.subr.bf16.mxu0 0
    %233 = vmatpush1.bf16.msra.mxu0 0
    %234 = vmatprep.subr.bf16.mxu0 0
    %235 = vmatpush1.bf16.msra.mxu0 0
    %236 = vmatprep.subr.bf16.mxu0 0
    %237 = vmatpush1.bf16.msra.mxu0 0
    %238 = vmatprep.subr.bf16.mxu0 0
    %239 = vmatpush1.bf16.msra.mxu0 0
    %240 = vmatprep.subr.bf16.mxu0 0
    %241 = vmatpush1.bf16.msra.mxu0 0
    %242 = vmatprep.subr.bf16.mxu0 0
    %243 = vmatpush1.bf16.msra.mxu0 0
    %244 = vmatprep.subr.bf16.mxu0 0
    %245 = vmatpush1.bf16.msra.mxu0 0
    %246 = vmatprep.subr.bf16.mxu0 0
    %247 = vmatpush1.bf16.msra.mxu0 0
    %248 = vmatprep.subr.bf16.mxu0 0
    %249 = vmatpush1.bf16.msra.mxu0 0
    %250 = vmatprep.mubr.bf16.mxu0 0
    %251 = vmatmul.mubr.bf16.gmra.mrb[0].mxu0 %v68
    %v252 = vpop.f32.mrb[0].mxu0
    %v253 = vadd.f32 0.0, %v252
    %v254 = vpop.f32.mrb[0].mxu0
    %v255 = vadd.f32 0.0, %v254
    %v256 = vpop.f32.mrb[0].mxu0
    %v257 = vpop.f32.mrb[0].mxu0
    %258 = vdwg.mxu0
    %v259 = vpack.c.bf16 %v130, %v130
    %v260 = vpack.c.bf16 %v132, %v132
    %v261 = vpack.c.bf16 %v171, %v171
    %v262 = vpack.c.bf16 %v173, %v173
    %v263 = vpack.c.bf16 %v212, %v212
    %v264 = vpack.c.bf16 %v214, %v214
    %v265 = vpack.c.bf16 %v253, %v253
    %v266 = vpack.c.bf16 %v255, %v255
    %v275 = vunpack.c.l.b16 %v259
    %v276 = vunpack.c.l.b16 %v260
    %v277 = vunpack.c.l.b16 %v261
    %v278 = vunpack.c.l.b16 %v262
    %v279 = vunpack.c.l.b16 %v263
    %v280 = vunpack.c.l.b16 %v264
    %v281 = vunpack.c.l.b16 %v265
    %v282 = vunpack.c.l.b16 %v266
    %v283 = vpack.c.b16 %v276, %v275
    %v284 = vpack.c.b16 %v278, %v277
    %v285 = vpack.c.b16 %v280, %v279
    %v286 = vpack.c.b16 %v282, %v281
    %291 = vst [vmem:[#allocation7] sm:$0xff] %v283
    %292 = vst [vmem:[#allocation7 + $0x8] sm:$0xff] %v284
    %293 = vst [vmem:[#allocation7 + $0x10] sm:$0xff] %v285
    %294 = vst [vmem:[#allocation7 + $0x18] sm:$0xff] %v286
    %v295 = vadd.f32 %v130, %v132
    %v296 = vadd.f32 %v295, %v171
    %v297 = vadd.f32 %v296, %v173
    %v298 = vadd.f32 %v297, %v212
    %v299 = vadd.f32 %v298, %v214
    %v300 = vadd.f32 %v299, %v253
    %v301 = vadd.f32 %v300, %v255
    %302 = vadd.xlane.f32.xlu0 %v301
    %v303 = vpop.xlane.xlu0 %302
    %vm304 = vcmask 7168
    %305 = vst.msk [vmem:[#allocation8] sm:$0xff] %vm304, %v303
    %v306 = vmul.f32 %v130, %v130
    %v307 = vmul.f32 %v132, %v132
    %v308 = vmul.f32 %v171, %v171
    %v309 = vmul.f32 %v173, %v173
    %v310 = vmul.f32 %v212, %v212
    %v311 = vmul.f32 %v214, %v214
    %v312 = vmul.f32 %v253, %v253
    %v313 = vmul.f32 %v255, %v255
    %v314 = vadd.f32 %v306, %v307
    %v315 = vadd.f32 %v314, %v308
    %v316 = vadd.f32 %v315, %v309
    %v317 = vadd.f32 %v316, %v310
    %v318 = vadd.f32 %v317, %v311
    %v319 = vadd.f32 %v318, %v312
    %v320 = vadd.f32 %v319, %v313
    %321 = vadd.xlane.f32.xlu0 %v320
    %v322 = vpop.xlane.xlu0 %321
    %323 = vst.msk [vmem:[#allocation10] sm:$0xff] %vm304, %v322
    // Predicated region
    $region18: #{hdc_net_forward.151} parent=1 // pred_check
      _
    $region19: #{hdc_net_forward.151} parent=1 // pred_check_branch
      %325 = sbr.rel (0) target = $region21
    $region20: #{hdc_net_forward.151} parent=1 // pred_region
      %s327 = ssub.s32 512, 512
      %328 = vsyncadd [#allocation4], %s327
      %s330 = sshll.u32 [#allocation7], 4
      %s331 = int_to_ptr.vmem [resolvable:$true] %s330
      %333 = dma.vmem_to_hbm [thread:$0]  %s331, 512, %s2, [#allocation4]
    $region21: #{hdc_net_forward.151} parent=1 // pred_fallthru
      _
    // Predicated region
    $region22: #{hdc_net_forward.151} parent=1 // pred_check
      _
    $region23: #{hdc_net_forward.151} parent=1 // pred_check_branch
      %335 = sbr.rel (0) target = $region25
    $region24: #{hdc_net_forward.151} parent=1 // pred_region
      %s337 = ssub.s32 128, 128
      %338 = vsyncadd [#allocation9], %s337
      %s340 = sshll.u32 [#allocation8], 4
      %s341 = int_to_ptr.vmem [resolvable:$true] %s340
      %343 = dma.vmem_to_hbm [thread:$0]  %s341, 128, %s3, [#allocation9]
    $region25: #{hdc_net_forward.151} parent=1 // pred_fallthru
      _
    // Predicated region
    $region26: #{hdc_net_forward.151} parent=1 // pred_check
      _
    $region27: #{hdc_net_forward.151} parent=1 // pred_check_branch
      %345 = sbr.rel (0) target = $region29
    $region28: #{hdc_net_forward.151} parent=1 // pred_region
      %s347 = ssub.s32 128, 128
      %348 = vsyncadd [#allocation9], %s347
      %s350 = sshll.u32 [#allocation10], 4
      %s351 = int_to_ptr.vmem [resolvable:$true] %s350
      %353 = dma.vmem_to_hbm [thread:$0]  %s351, 128, %s4, [#allocation9]
    $region29: #{hdc_net_forward.151} parent=1 // pred_fallthru
      _
    // Predicated region
    $region30: #{hdc_net_forward.151} parent=1 // pred_check
      _
    $region31: #{hdc_net_forward.151} parent=1 // pred_check_branch
      %355 = sbr.rel (0) target = $region33
    $region32: #{hdc_net_forward.151} parent=1 // pred_region
      %356 = dma.done [#allocation4], 512
    $region33: #{hdc_net_forward.151} parent=1 // pred_fallthru
      _
    // Predicated region
    $region34: #{hdc_net_forward.151} parent=1 // pred_check
      _
    $region35: #{hdc_net_forward.151} parent=1 // pred_check_branch
      %358 = sbr.rel (0) target = $region37
    $region36: #{hdc_net_forward.151} parent=1 // pred_region
      %359 = dma.done [#allocation9], 128
    $region37: #{hdc_net_forward.151} parent=1 // pred_fallthru
      _
    // Predicated region
    $region38: #{hdc_net_forward.151} parent=1 // pred_check
      _
    $region39: #{hdc_net_forward.151} parent=1 // pred_check_branch
      %361 = sbr.rel (0) target = $region41
    $region40: #{hdc_net_forward.151} parent=1 // pred_region
      %362 = dma.done [#allocation9], 128
    $region41: #{hdc_net_forward.151} parent=1 // pred_fallthru
      _
    %363 = vsyncpa [#allocation3], 1
    %364 = vsyncpa [#allocation6], 1
    %365 = vsyncpa [#allocation4], 1
    %366 = vsyncpa [#allocation9], 1

// kernel: hdc_net_forward.153
$region0: #{hdc_net_forward.153}
  #allocation0 [shape = 'u32[]', space=smem, size = 0x4, offset = 0x4, fixed_abs, tag = 'smem constant byte address 0x4 - core index']
  #allocation1 [shape = 'u32[144,128]{1,0:T(1,128)}', space=vmem, size = 0x12000, scoped, tag = 'internal scratch']
  %s0 = inlined_call_operand.hbm [shape: bf16[18,1024], index: 0, kind: input, shape index: {}]
  %s1 = inlined_call_operand.hbm [shape: bf16[2,18], index: 1, kind: input, shape index: {}]
  %s2 = inlined_call_operand.hbm [shape: bf16[2,1024], index: 2, kind: output, shape index: {0}]
  %s3 = inlined_call_operand.hbm [shape: f32[1,2,1], index: 3, kind: output, shape index: {1}]
  %s4 = inlined_call_operand.hbm [shape: f32[1,2,1], index: 4, kind: output, shape index: {2}]
  %5 = xla_tuple %s2, %s3, %s4
  %s6 = sld [smem:[#allocation0]]
  $region42: #{hdc_net_forward.153} parent=0
    _
  %s8 = ssub.s32 1, %s6
  %s9 = scalar_select 0, %s8, %s6
  $region1: #{hdc_net_forward.153} parent=0
    #allocation2 [shape = 'u8[49152]{0}', space=vmem, size = 0xc000, scoped, tag = 'input window, operand 0, single buffered']
    #allocation3 [shape = 's32[1]{0}', space=sflag, size = 0x4, scoped, tag = 'scoped memory for hdc_net_forward.153']
    #allocation4 [shape = 's32[1]{0}', space=sflag, size = 0x4, scoped, tag = 'scoped memory for hdc_net_forward.153']
    #allocation5 [shape = 'u8[512]{0}', space=vmem, size = 0x400, scoped, tag = 'input window, operand 1, single buffered']
    #allocation6 [shape = 's32[1]{0}', space=sflag, size = 0x4, scoped, tag = 'scoped memory for hdc_net_forward.153']
    #allocation7 [shape = 'u8[4096]{0}', space=vmem, size = 0x1000, scoped, tag = 'output window, operand 0, single buffered']
    #allocation8 [shape = 'u8[1024]{0}', space=vmem, size = 0x400, scoped, tag = 'output window, operand 1, single buffered']
    #allocation9 [shape = 's32[1]{0}', space=sflag, size = 0x4, scoped, tag = 'scoped memory for hdc_net_forward.153']
    #allocation10 [shape = 'u8[1024]{0}', space=vmem, size = 0x400, scoped, tag = 'output window, operand 2, single buffered']
    %10 = vsyncpa [#allocation3], 0
    %11 = vsyncpa [#allocation6], 0
    %12 = vsyncpa [#allocation4], 0
    %13 = vsyncpa [#allocation9], 0
    // Predicated region
    $region2: #{hdc_net_forward.153} parent=1 // pred_check
      _
    $region3: #{hdc_net_forward.153} parent=1 // pred_check_branch
      %15 = sbr.rel (0) target = $region5
    $region4: #{hdc_net_forward.153} parent=1 // pred_region
      %s17 = ssub.s32 1536, 1536
      %18 = vsyncadd [#allocation3], %s17
      %s19 = sshll.u32 [#allocation2], 4
      %s20 = int_to_ptr.vmem [resolvable:$true] %s19
      %25 = dma.hbm_to_vmem [thread:$0]  %s0, 1536, %s20, [#allocation3], 512, 512, 32
    $region5: #{hdc_net_forward.153} parent=1 // pred_fallthru
      _
    // Predicated region
    $region6: #{hdc_net_forward.153} parent=1 // pred_check
      _
    $region7: #{hdc_net_forward.153} parent=1 // pred_check_branch
      %27 = sbr.rel (0) target = $region9
    $region8: #{hdc_net_forward.153} parent=1 // pred_region
      %s29 = ssub.s32 16, 16
      %30 = vsyncadd [#allocation6], %s29
      %s32 = sshll.u32 [#allocation5], 4
      %s33 = int_to_ptr.vmem [resolvable:$true] %s32
      %35 = dma.hbm_to_vmem [thread:$0]  %s1, 16, %s33, [#allocation6]
    $region9: #{hdc_net_forward.153} parent=1 // pred_fallthru
      _
    // Predicated region
    $region10: #{hdc_net_forward.153} parent=1 // pred_check
      _
    $region11: #{hdc_net_forward.153} parent=1 // pred_check_branch
      %37 = sbr.rel (0) target = $region13
    $region12: #{hdc_net_forward.153} parent=1 // pred_region
      %38 = dma.done [#allocation3], 1536
    $region13: #{hdc_net_forward.153} parent=1 // pred_fallthru
      _
    // Predicated region
    $region14: #{hdc_net_forward.153} parent=1 // pred_check
      _
    $region15: #{hdc_net_forward.153} parent=1 // pred_check_branch
      %40 = sbr.rel (0) target = $region17
    $region16: #{hdc_net_forward.153} parent=1 // pred_region
      %41 = dma.done [#allocation6], 16
    $region17: #{hdc_net_forward.153} parent=1 // pred_fallthru
      _
    %v43 = vld [vmem:[#allocation5] sm:$0x1]
    %v44 = vld [vmem:[#allocation2] sm:$0xff]
    %v45 = vld [vmem:[#allocation2 + $0x8] sm:$0xff]
    %v46 = vld [vmem:[#allocation2 + $0x10] sm:$0xff]
    %v47 = vld [vmem:[#allocation2 + $0x18] sm:$0xff]
    %v48 = vld [vmem:[#allocation2 + $0x20] sm:$0xff]
    %v49 = vld [vmem:[#allocation2 + $0x28] sm:$0xff]
    %v50 = vld [vmem:[#allocation2 + $0x30] sm:$0xff]
    %v51 = vld [vmem:[#allocation2 + $0x38] sm:$0xff]
    %v52 = vld [vmem:[#allocation2 + $0x40] sm:$0x11]
    %v53 = vld [vmem:[#allocation2 + $0x48] sm:$0x11]
    %v54 = vld [vmem:[#allocation2 + $0x50] sm:$0x11]
    %v55 = vld [vmem:[#allocation2 + $0x58] sm:$0x11]
    %v68 = vunpack.c.l.b16 %v44
    %v69 = vunpack.c.h.b16 %v44
    %v70 = vunpack.c.l.b16 %v45
    %v71 = vunpack.c.h.b16 %v45
    %v72 = vunpack.c.l.b16 %v46
    %v73 = vunpack.c.h.b16 %v46
    %v74 = vunpack.c.l.b16 %v47
    %v75 = vunpack.c.h.b16 %v47
    %v76 = vunpack.c.l.b16 %v48
    %v77 = vunpack.c.h.b16 %v48
    %v78 = vunpack.c.l.b16 %v49
    %v79 = vunpack.c.h.b16 %v49
    %v80 = vunpack.c.l.b16 %v50
    %v81 = vunpack.c.h.b16 %v50
    %v82 = vunpack.c.l.b16 %v51
    %v83 = vunpack.c.h.b16 %v51
    %v84 = vunpack.c.l.b16 %v52
    %v85 = vunpack.c.h.b16 %v52
    %v86 = vunpack.c.l.b16 %v53
    %v87 = vunpack.c.h.b16 %v53
    %v88 = vunpack.c.l.b16 %v54
    %v89 = vunpack.c.h.b16 %v54
    %v90 = vunpack.c.l.b16 %v55
    %v91 = vunpack.c.h.b16 %v55
    %v92 = vpack.c.b16 %v76, %v68
    %v93 = vpack.c.b16 %v77, %v69
    %v94 = vpack.c.b16 %v78, %v70
    %v95 = vpack.c.b16 %v79, %v71
    %v96 = vpack.c.b16 %v80, %v72
    %v97 = vpack.c.b16 %v81, %v73
    %v98 = vpack.c.b16 %v82, %v74
    %v99 = vpack.c.b16 %v83, %v75
    %v100 = vpack.c.b16 %v84, %v84
    %v101 = vpack.c.b16 %v85, %v85
    %v102 = vpack.c.b16 %v86, %v86
    %v103 = vpack.c.b16 %v87, %v87
    %v104 = vpack.c.b16 %v88, %v88
    %v105 = vpack.c.b16 %v89, %v89
    %v106 = vpack.c.b16 %v90, %v90
    %v107 = vpack.c.b16 %v91, %v91
    %vm116 = vcmask 146432
    %v118 = vsel %vm116, %v43, 0
    %vm120 = vcmask 1040384
    %v122 = vsel %vm120, %v100, 0
    %v125 = vsel %vm120, %v101, 0
    %v128 = vsel %vm120, %v102, 0
    %v131 = vsel %vm120, %v103, 0
    %v134 = vsel %vm120, %v104, 0
    %v137 = vsel %vm120, %v105, 0
    %v140 = vsel %vm120, %v106, 0
    %v143 = vsel %vm120, %v107, 0
    %145 = vmatprep.subr.bf16.mxu0 %v93
    %146 = vmatpush1.bf16.msra.mxu0 %v92
    %147 = vmatprep.subr.bf16.mxu0 %v125
    %148 = vmatpush1.bf16.msra.mxu0 %v122
    %149 = vmatprep.subr.bf16.mxu0 0
    %150 = vmatpush1.bf16.msra.mxu0 0
    %151 = vmatprep.subr.bf16.mxu0 0
    %152 = vmatpush1.bf16.msra.mxu0 0
    %153 = vmatprep.subr.bf16.mxu0 0
    %154 = vmatpush1.bf16.msra.mxu0 0
    %155 = vmatprep.subr.bf16.mxu0 0
    %156 = vmatpush1.bf16.msra.mxu0 0
    %157 = vmatprep.subr.bf16.mxu0 0
    %158 = vmatpush1.bf16.msra.mxu0 0
    %159 = vmatprep.subr.bf16.mxu0 0
    %160 = vmatpush1.bf16.msra.mxu0 0
    %161 = vmatprep.subr.bf16.mxu0 0
    %162 = vmatpush1.bf16.msra.mxu0 0
    %163 = vmatprep.subr.bf16.mxu0 0
    %164 = vmatpush1.bf16.msra.mxu0 0
    %165 = vmatprep.subr.bf16.mxu0 0
    %166 = vmatpush1.bf16.msra.mxu0 0
    %167 = vmatprep.subr.bf16.mxu0 0
    %168 = vmatpush1.bf16.msra.mxu0 0
    %169 = vmatprep.subr.bf16.mxu0 0
    %170 = vmatpush1.bf16.msra.mxu0 0
    %171 = vmatprep.subr.bf16.mxu0 0
    %172 = vmatpush1.bf16.msra.mxu0 0
    %173 = vmatprep.subr.bf16.mxu0 0
    %174 = vmatpush1.bf16.msra.mxu0 0
    %175 = vmatprep.subr.bf16.mxu0 0
    %176 = vmatpush1.bf16.msra.mxu0 0
    %177 = vmatprep.mubr.bf16.mxu0 0
    %178 = vmatmul.mubr.bf16.gmra.mrb[0].mxu0 %v118
    %v179 = vpop.f32.mrb[0].mxu0
    %v180 = vadd.f32 0.0, %v179
    %v181 = vpop.f32.mrb[0].mxu0
    %v182 = vadd.f32 0.0, %v181
    %v183 = vpop.f32.mrb[0].mxu0
    %v184 = vpop.f32.mrb[0].mxu0
    %185 = vdwg.mxu0
    %186 = vmatprep.subr.bf16.mxu0 %v95
    %187 = vmatpush1.bf16.msra.mxu0 %v94
    %188 = vmatprep.subr.bf16.mxu0 %v131
    %189 = vmatpush1.bf16.msra.mxu0 %v128
    %190 = vmatprep.subr.bf16.mxu0 0
    %191 = vmatpush1.bf16.msra.mxu0 0
    %192 = vmatprep.subr.bf16.mxu0 0
    %193 = vmatpush1.bf16.msra.mxu0 0
    %194 = vmatprep.subr.bf16.mxu0 0
    %195 = vmatpush1.bf16.msra.mxu0 0
    %196 = vmatprep.subr.bf16.mxu0 0
    %197 = vmatpush1.bf16.msra.mxu0 0
    %198 = vmatprep.subr.bf16.mxu0 0
    %199 = vmatpush1.bf16.msra.mxu0 0
    %200 = vmatprep.subr.bf16.mxu0 0
    %201 = vmatpush1.bf16.msra.mxu0 0
    %202 = vmatprep.subr.bf16.mxu0 0
    %203 = vmatpush1.bf16.msra.mxu0 0
    %204 = vmatprep.subr.bf16.mxu0 0
    %205 = vmatpush1.bf16.msra.mxu0 0
    %206 = vmatprep.subr.bf16.mxu0 0
    %207 = vmatpush1.bf16.msra.mxu0 0
    %208 = vmatprep.subr.bf16.mxu0 0
    %209 = vmatpush1.bf16.msra.mxu0 0
    %210 = vmatprep.subr.bf16.mxu0 0
    %211 = vmatpush1.bf16.msra.mxu0 0
    %212 = vmatprep.subr.bf16.mxu0 0
    %213 = vmatpush1.bf16.msra.mxu0 0
    %214 = vmatprep.subr.bf16.mxu0 0
    %215 = vmatpush1.bf16.msra.mxu0 0
    %216 = vmatprep.subr.bf16.mxu0 0
    %217 = vmatpush1.bf16.msra.mxu0 0
    %218 = vmatprep.mubr.bf16.mxu0 0
    %219 = vmatmul.mubr.bf16.gmra.mrb[0].mxu0 %v118
    %v220 = vpop.f32.mrb[0].mxu0
    %v221 = vadd.f32 0.0, %v220
    %v222 = vpop.f32.mrb[0].mxu0
    %v223 = vadd.f32 0.0, %v222
    %v224 = vpop.f32.mrb[0].mxu0
    %v225 = vpop.f32.mrb[0].mxu0
    %226 = vdwg.mxu0
    %227 = vmatprep.subr.bf16.mxu0 %v97
    %228 = vmatpush1.bf16.msra.mxu0 %v96
    %229 = vmatprep.subr.bf16.mxu0 %v137
    %230 = vmatpush1.bf16.msra.mxu0 %v134
    %231 = vmatprep.subr.bf16.mxu0 0
    %232 = vmatpush1.bf16.msra.mxu0 0
    %233 = vmatprep.subr.bf16.mxu0 0
    %234 = vmatpush1.bf16.msra.mxu0 0
    %235 = vmatprep.subr.bf16.mxu0 0
    %236 = vmatpush1.bf16.msra.mxu0 0
    %237 = vmatprep.subr.bf16.mxu0 0
    %238 = vmatpush1.bf16.msra.mxu0 0
    %239 = vmatprep.subr.bf16.mxu0 0
    %240 = vmatpush1.bf16.msra.mxu0 0
    %241 = vmatprep.subr.bf16.mxu0 0
    %242 = vmatpush1.bf16.msra.mxu0 0
    %243 = vmatprep.subr.bf16.mxu0 0
    %244 = vmatpush1.bf16.msra.mxu0 0
    %245 = vmatprep.subr.bf16.mxu0 0
    %246 = vmatpush1.bf16.msra.mxu0 0
    %247 = vmatprep.subr.bf16.mxu0 0
    %248 = vmatpush1.bf16.msra.mxu0 0
    %249 = vmatprep.subr.bf16.mxu0 0
    %250 = vmatpush1.bf16.msra.mxu0 0
    %251 = vmatprep.subr.bf16.mxu0 0
    %252 = vmatpush1.bf16.msra.mxu0 0
    %253 = vmatprep.subr.bf16.mxu0 0
    %254 = vmatpush1.bf16.msra.mxu0 0
    %255 = vmatprep.subr.bf16.mxu0 0
    %256 = vmatpush1.bf16.msra.mxu0 0
    %257 = vmatprep.subr.bf16.mxu0 0
    %258 = vmatpush1.bf16.msra.mxu0 0
    %259 = vmatprep.mubr.bf16.mxu0 0
    %260 = vmatmul.mubr.bf16.gmra.mrb[0].mxu0 %v118
    %v261 = vpop.f32.mrb[0].mxu0
    %v262 = vadd.f32 0.0, %v261
    %v263 = vpop.f32.mrb[0].mxu0
    %v264 = vadd.f32 0.0, %v263
    %v265 = vpop.f32.mrb[0].mxu0
    %v266 = vpop.f32.mrb[0].mxu0
    %267 = vdwg.mxu0
    %268 = vmatprep.subr.bf16.mxu0 %v99
    %269 = vmatpush1.bf16.msra.mxu0 %v98
    %270 = vmatprep.subr.bf16.mxu0 %v143
    %271 = vmatpush1.bf16.msra.mxu0 %v140
    %272 = vmatprep.subr.bf16.mxu0 0
    %273 = vmatpush1.bf16.msra.mxu0 0
    %274 = vmatprep.subr.bf16.mxu0 0
    %275 = vmatpush1.bf16.msra.mxu0 0
    %276 = vmatprep.subr.bf16.mxu0 0
    %277 = vmatpush1.bf16.msra.mxu0 0
    %278 = vmatprep.subr.bf16.mxu0 0
    %279 = vmatpush1.bf16.msra.mxu0 0
    %280 = vmatprep.subr.bf16.mxu0 0
    %281 = vmatpush1.bf16.msra.mxu0 0
    %282 = vmatprep.subr.bf16.mxu0 0
    %283 = vmatpush1.bf16.msra.mxu0 0
    %284 = vmatprep.subr.bf16.mxu0 0
    %285 = vmatpush1.bf16.msra.mxu0 0
    %286 = vmatprep.subr.bf16.mxu0 0
    %287 = vmatpush1.bf16.msra.mxu0 0
    %288 = vmatprep.subr.bf16.mxu0 0
    %289 = vmatpush1.bf16.msra.mxu0 0
    %290 = vmatprep.subr.bf16.mxu0 0
    %291 = vmatpush1.bf16.msra.mxu0 0
    %292 = vmatprep.subr.bf16.mxu0 0
    %293 = vmatpush1.bf16.msra.mxu0 0
    %294 = vmatprep.subr.bf16.mxu0 0
    %295 = vmatpush1.bf16.msra.mxu0 0
    %296 = vmatprep.subr.bf16.mxu0 0
    %297 = vmatpush1.bf16.msra.mxu0 0
    %298 = vmatprep.subr.bf16.mxu0 0
    %299 = vmatpush1.bf16.msra.mxu0 0
    %300 = vmatprep.mubr.bf16.mxu0 0
    %301 = vmatmul.mubr.bf16.gmra.mrb[0].mxu0 %v118
    %v302 = vpop.f32.mrb[0].mxu0
    %v303 = vadd.f32 0.0, %v302
    %v304 = vpop.f32.mrb[0].mxu0
    %v305 = vadd.f32 0.0, %v304
    %v306 = vpop.f32.mrb[0].mxu0
    %v307 = vpop.f32.mrb[0].mxu0
    %308 = vdwg.mxu0
    %v309 = vpack.c.bf16 %v180, %v180
    %v310 = vpack.c.bf16 %v182, %v182
    %v311 = vpack.c.bf16 %v221, %v221
    %v312 = vpack.c.bf16 %v223, %v223
    %v313 = vpack.c.bf16 %v262, %v262
    %v314 = vpack.c.bf16 %v264, %v264
    %v315 = vpack.c.bf16 %v303, %v303
    %v316 = vpack.c.bf16 %v305, %v305
    %v325 = vcombine.low %v309, %v310
    %v326 = vcombine.low %v311, %v312
    %v327 = vcombine.low %v313, %v314
    %v328 = vcombine.low %v315, %v316
    %v330 = vunpack.c.l.s4 1966171168
    %v331 = vunpack.c.0.s8 %v330
    %v332 = vlaneseq
    %v333 = vshrl.u32 %v332, 7
    %v334 = vsub.s32 %v331, %v333
    %v335 = vrot.slane %v325, %v334
    %v337 = vunpack.c.l.s4 1966171168
    %v338 = vunpack.c.0.s8 %v337
    %v339 = vlaneseq
    %v340 = vshrl.u32 %v339, 7
    %v341 = vsub.s32 %v338, %v340
    %v342 = vrot.slane %v326, %v341
    %v344 = vunpack.c.l.s4 1966171168
    %v345 = vunpack.c.0.s8 %v344
    %v346 = vlaneseq
    %v347 = vshrl.u32 %v346, 7
    %v348 = vsub.s32 %v345, %v347
    %v349 = vrot.slane %v327, %v348
    %v351 = vunpack.c.l.s4 1966171168
    %v352 = vunpack.c.0.s8 %v351
    %v353 = vlaneseq
    %v354 = vshrl.u32 %v353, 7
    %v355 = vsub.s32 %v352, %v354
    %v356 = vrot.slane %v328, %v355
    %v357 = vcombine.low %v335, %v342
    %v358 = vcombine.low %v349, %v356
    %v360 = vunpack.c.l.s4 1966171168
    %v361 = vunpack.c.0.s8 %v360
    %v362 = vlaneseq
    %v363 = vshrl.u32 %v362, 7
    %v364 = vsub.s32 %v361, %v363
    %v365 = vrot.slane %v357, %v364
    %v367 = vunpack.c.l.s4 1966171168
    %v368 = vunpack.c.0.s8 %v367
    %v369 = vlaneseq
    %v370 = vshrl.u32 %v369, 7
    %v371 = vsub.s32 %v368, %v370
    %v372 = vrot.slane %v358, %v371
    %v373 = vcombine.low %v365, %v372
    %375 = vst [vmem:[#allocation7] sm:$0xff] %v373
    %vm376 = vcmask 1041408
    %v377 = vsel %vm376, %v180, 0.0
    %v378 = vsel %vm376, %v182, 0.0
    %v379 = vadd.f32 %v377, %v378
    %v380 = vsel %vm376, %v221, 0.0
    %v381 = vadd.f32 %v379, %v380
    %v382 = vsel %vm376, %v223, 0.0
    %v383 = vadd.f32 %v381, %v382
    %v384 = vsel %vm376, %v262, 0.0
    %v385 = vadd.f32 %v383, %v384
    %v386 = vsel %vm376, %v264, 0.0
    %v387 = vadd.f32 %v385, %v386
    %v388 = vsel %vm376, %v303, 0.0
    %v389 = vadd.f32 %v387, %v388
    %v390 = vsel %vm376, %v305, 0.0
    %v391 = vadd.f32 %v389, %v390
    %392 = vadd.xlane.f32.xlu0 %v391
    %v393 = vpop.xlane.xlu0 %392
    %vm394 = vcmask 1024
    %395 = vst.msk [vmem:[#allocation8] sm:$0x3] %vm394, %v393
    %v396 = vmul.f32 %v180, %v180
    %v397 = vmul.f32 %v182, %v182
    %v398 = vmul.f32 %v221, %v221
    %v399 = vmul.f32 %v223, %v223
    %v400 = vmul.f32 %v262, %v262
    %v401 = vmul.f32 %v264, %v264
    %v402 = vmul.f32 %v303, %v303
    %v403 = vmul.f32 %v305, %v305
    %v404 = vsel %vm376, %v396, 0.0
    %v405 = vsel %vm376, %v397, 0.0
    %v406 = vadd.f32 %v404, %v405
    %v407 = vsel %vm376, %v398, 0.0
    %v408 = vadd.f32 %v406, %v407
    %v409 = vsel %vm376, %v399, 0.0
    %v410 = vadd.f32 %v408, %v409
    %v411 = vsel %vm376, %v400, 0.0
    %v412 = vadd.f32 %v410, %v411
    %v413 = vsel %vm376, %v401, 0.0
    %v414 = vadd.f32 %v412, %v413
    %v415 = vsel %vm376, %v402, 0.0
    %v416 = vadd.f32 %v414, %v415
    %v417 = vsel %vm376, %v403, 0.0
    %v418 = vadd.f32 %v416, %v417
    %419 = vadd.xlane.f32.xlu0 %v418
    %v420 = vpop.xlane.xlu0 %419
    %421 = vst.msk [vmem:[#allocation10] sm:$0x3] %vm394, %v420
    // Predicated region
    $region18: #{hdc_net_forward.153} parent=1 // pred_check
      _
    $region19: #{hdc_net_forward.153} parent=1 // pred_check_branch
      %423 = sbr.rel (0) target = $region21
    $region20: #{hdc_net_forward.153} parent=1 // pred_region
      %s425 = ssub.s32 128, 128
      %426 = vsyncadd [#allocation4], %s425
      %s428 = sshll.u32 [#allocation7], 4
      %s429 = int_to_ptr.vmem [resolvable:$true] %s428
      %431 = dma.vmem_to_hbm [thread:$0]  %s429, 128, %s2, [#allocation4]
    $region21: #{hdc_net_forward.153} parent=1 // pred_fallthru
      _
    // Predicated region
    $region22: #{hdc_net_forward.153} parent=1 // pred_check
      _
    $region23: #{hdc_net_forward.153} parent=1 // pred_check_branch
      %433 = sbr.rel (0) target = $region25
    $region24: #{hdc_net_forward.153} parent=1 // pred_region
      %s435 = ssub.s32 32, 32
      %436 = vsyncadd [#allocation9], %s435
      %s438 = sshll.u32 [#allocation8], 4
      %s439 = int_to_ptr.vmem [resolvable:$true] %s438
      %441 = dma.vmem_to_hbm [thread:$0]  %s439, 32, %s3, [#allocation9]
    $region25: #{hdc_net_forward.153} parent=1 // pred_fallthru
      _
    // Predicated region
    $region26: #{hdc_net_forward.153} parent=1 // pred_check
      _
    $region27: #{hdc_net_forward.153} parent=1 // pred_check_branch
      %443 = sbr.rel (0) target = $region29
    $region28: #{hdc_net_forward.153} parent=1 // pred_region
      %s445 = ssub.s32 32, 32
      %446 = vsyncadd [#allocation9], %s445
      %s448 = sshll.u32 [#allocation10], 4
      %s449 = int_to_ptr.vmem [resolvable:$true] %s448
      %451 = dma.vmem_to_hbm [thread:$0]  %s449, 32, %s4, [#allocation9]
    $region29: #{hdc_net_forward.153} parent=1 // pred_fallthru
      _
    // Predicated region
    $region30: #{hdc_net_forward.153} parent=1 // pred_check
      _
    $region31: #{hdc_net_forward.153} parent=1 // pred_check_branch
      %453 = sbr.rel (0) target = $region33
    $region32: #{hdc_net_forward.153} parent=1 // pred_region
      %454 = dma.done [#allocation4], 128
    $region33: #{hdc_net_forward.153} parent=1 // pred_fallthru
      _
    // Predicated region
    $region34: #{hdc_net_forward.153} parent=1 // pred_check
      _
    $region35: #{hdc_net_forward.153} parent=1 // pred_check_branch
      %456 = sbr.rel (0) target = $region37
    $region36: #{hdc_net_forward.153} parent=1 // pred_region
      %457 = dma.done [#allocation9], 32
    $region37: #{hdc_net_forward.153} parent=1 // pred_fallthru
      _
    // Predicated region
    $region38: #{hdc_net_forward.153} parent=1 // pred_check
      _
    $region39: #{hdc_net_forward.153} parent=1 // pred_check_branch
      %459 = sbr.rel (0) target = $region41
    $region40: #{hdc_net_forward.153} parent=1 // pred_region
      %460 = dma.done [#allocation9], 32
    $region41: #{hdc_net_forward.153} parent=1 // pred_fallthru
      _
    %461 = vsyncpa [#allocation3], 1
    %462 = vsyncpa [#allocation6], 1
    %463 = vsyncpa [#allocation4], 1
    %464 = vsyncpa [#allocation9], 1

// kernel: hdc_net_forward.154
$region0: #{hdc_net_forward.154}
  #allocation0 [shape = 'u32[]', space=smem, size = 0x4, offset = 0x4, fixed_abs, tag = 'smem constant byte address 0x4 - core index']
  #allocation1 [shape = 'u32[144,128]{1,0:T(1,128)}', space=vmem, size = 0x12000, scoped, tag = 'internal scratch']
  %s0 = inlined_call_operand.hbm [shape: bf16[2,1024], index: 0, kind: input, shape index: {}]
  %s1 = inlined_call_operand.hbm [shape: f32[2,1], index: 1, kind: input, shape index: {}]
  %s2 = inlined_call_operand.hbm [shape: f32[2,1], index: 2, kind: input, shape index: {}]
  %s3 = inlined_call_operand.hbm [shape: bf16[2,1024], index: 3, kind: output, shape index: {}]
  %s4 = sld [smem:[#allocation0]]
  $region34: #{hdc_net_forward.154} parent=0
    _
  %s6 = ssub.s32 1, %s4
  %s7 = scalar_select 0, %s6, %s4
  $region1: #{hdc_net_forward.154} parent=0
    #allocation2 [shape = 'u8[4096]{0}', space=vmem, size = 0x1000, scoped, tag = 'input window, operand 0, single buffered']
    #allocation3 [shape = 's32[1]{0}', space=sflag, size = 0x4, scoped, tag = 'scoped memory for hdc_net_forward.154']
    #allocation4 [shape = 's32[1]{0}', space=sflag, size = 0x4, scoped, tag = 'scoped memory for hdc_net_forward.154']
    #allocation5 [shape = 'u8[1024]{0}', space=vmem, size = 0x400, scoped, tag = 'input window, operand 1, single buffered']
    #allocation6 [shape = 's32[1]{0}', space=sflag, size = 0x4, scoped, tag = 'scoped memory for hdc_net_forward.154']
    #allocation7 [shape = 'u8[1024]{0}', space=vmem, size = 0x400, scoped, tag = 'input window, operand 2, single buffered']
    #allocation8 [shape = 'u8[4096]{0}', space=vmem, size = 0x1000, scoped, tag = 'output window, operand 0, single buffered']
    %8 = vsyncpa [#allocation3], 0
    %9 = vsyncpa [#allocation6], 0
    %10 = vsyncpa [#allocation4], 0
    // Predicated region
    $region2: #{hdc_net_forward.154} parent=1 // pred_check
      _
    $region3: #{hdc_net_forward.154} parent=1 // pred_check_branch
      %12 = sbr.rel (0) target = $region5
    $region4: #{hdc_net_forward.154} parent=1 // pred_region
      %s14 = ssub.s32 128, 128
      %15 = vsyncadd [#allocation3], %s14
      %s17 = sshll.u32 [#allocation2], 4
      %s18 = int_to_ptr.vmem [resolvable:$true] %s17
      %20 = dma.hbm_to_vmem [thread:$0]  %s0, 128, %s18, [#allocation3]
    $region5: #{hdc_net_forward.154} parent=1 // pred_fallthru
      _
    // Predicated region
    $region6: #{hdc_net_forward.154} parent=1 // pred_check
      _
    $region7: #{hdc_net_forward.154} parent=1 // pred_check_branch
      %22 = sbr.rel (0) target = $region9
    $region8: #{hdc_net_forward.154} parent=1 // pred_region
      %s24 = ssub.s32 32, 32
      %25 = vsyncadd [#allocation6], %s24
      %s27 = sshll.u32 [#allocation5], 4
      %s28 = int_to_ptr.vmem [resolvable:$true] %s27
      %30 = dma.hbm_to_vmem [thread:$0]  %s1, 32, %s28, [#allocation6]
    $region9: #{hdc_net_forward.154} parent=1 // pred_fallthru
      _
    // Predicated region
    $region10: #{hdc_net_forward.154} parent=1 // pred_check
      _
    $region11: #{hdc_net_forward.154} parent=1 // pred_check_branch
      %32 = sbr.rel (0) target = $region13
    $region12: #{hdc_net_forward.154} parent=1 // pred_region
      %s34 = ssub.s32 32, 32
      %35 = vsyncadd [#allocation6], %s34
      %s37 = sshll.u32 [#allocation7], 4
      %s38 = int_to_ptr.vmem [resolvable:$true] %s37
      %40 = dma.hbm_to_vmem [thread:$0]  %s2, 32, %s38, [#allocation6]
    $region13: #{hdc_net_forward.154} parent=1 // pred_fallthru
      _
    // Predicated region
    $region14: #{hdc_net_forward.154} parent=1 // pred_check
      _
    $region15: #{hdc_net_forward.154} parent=1 // pred_check_branch
      %42 = sbr.rel (0) target = $region17
    $region16: #{hdc_net_forward.154} parent=1 // pred_region
      %43 = dma.done [#allocation3], 128
    $region17: #{hdc_net_forward.154} parent=1 // pred_fallthru
      _
    // Predicated region
    $region18: #{hdc_net_forward.154} parent=1 // pred_check
      _
    $region19: #{hdc_net_forward.154} parent=1 // pred_check_branch
      %45 = sbr.rel (0) target = $region21
    $region20: #{hdc_net_forward.154} parent=1 // pred_region
      %46 = dma.done [#allocation6], 32
    $region21: #{hdc_net_forward.154} parent=1 // pred_fallthru
      _
    // Predicated region
    $region22: #{hdc_net_forward.154} parent=1 // pred_check
      _
    $region23: #{hdc_net_forward.154} parent=1 // pred_check_branch
      %48 = sbr.rel (0) target = $region25
    $region24: #{hdc_net_forward.154} parent=1 // pred_region
      %49 = dma.done [#allocation6], 32
    $region25: #{hdc_net_forward.154} parent=1 // pred_fallthru
      _
    %v50 = vld [vmem:[#allocation5] sm:$0x3]
    %v51 = vmul.f32 %v50, 0.0009765625
    %v52 = vld [vmem:[#allocation7] sm:$0x3]
    %v53 = vmul.f32 %v52, 0.0009765625
    %v54 = vmul.f32 %v51, %v51
    %v55 = vsub.f32 %v53, %v54
    %v56 = vmax.f32 %v55, 0.0
    %v57 = vadd.f32 %v56, 1e-05
    %v58 = vrsqrt.pop %v57
    %v59 = vld [vmem:[#allocation2] sm:$0xff]
    %v60 = vunpack.c.l.bf16 %v59
    %v61 = vunpack.c.h.bf16 %v59
    %63 = vset.pattern.permute.xlu0 0
    %64 = vperm.xlu0 %63, %v51
    %v65 = vpop.permute.xlu0 %64
    %v67 = vunpack.c.l.s4 269488144
    %v68 = vunpack.c.0.s8 %v67
    %v69 = vlaneseq
    %v70 = vshrl.u32 %v69, 7
    %v71 = vsub.s32 %v68, %v70
    %v72 = vrot.slane %v65, %v71
    %v74 = vsub.f32 %v60, %v72
    %v75 = vsub.f32 %v61, %v72
    %77 = vset.pattern.permute.xlu0 0
    %78 = vperm.xlu0 %77, %v58
    %v79 = vpop.permute.xlu0 %78
    %v81 = vunpack.c.l.s4 269488144
    %v82 = vunpack.c.0.s8 %v81
    %v83 = vlaneseq
    %v84 = vshrl.u32 %v83, 7
    %v85 = vsub.s32 %v82, %v84
    %v86 = vrot.slane %v79, %v85
    %v88 = vmul.f32 %v74, %v86
    %v89 = vmul.f32 %v75, %v86
    %v90 = vmax.f32 %v88, 0.0
    %v91 = vmax.f32 %v89, 0.0
    %v94 = vcombine.high %v90, %v90
    %v96 = vunpack.c.l.s4 1983009808
    %v97 = vunpack.c.0.s8 %v96
    %v98 = vlaneseq
    %v99 = vshrl.u32 %v98, 7
    %v100 = vsub.s32 %v97, %v99
    %v101 = vrot.slane %v90, %v100
    %v103 = vunpack.c.l.s4 1983009808
    %v104 = vunpack.c.0.s8 %v103
    %v105 = vlaneseq
    %v106 = vshrl.u32 %v105, 7
    %v107 = vsub.s32 %v104, %v106
    %v108 = vrot.slane %v94, %v107
    %v109 = vcombine.high %v101, %v101
    %v110 = vcombine.high %v108, %v108
    %v111 = vcombine.high %v91, %v91
    %v113 = vunpack.c.l.s4 1983009808
    %v114 = vunpack.c.0.s8 %v113
    %v115 = vlaneseq
    %v116 = vshrl.u32 %v115, 7
    %v117 = vsub.s32 %v114, %v116
    %v118 = vrot.slane %v91, %v117
    %v120 = vunpack.c.l.s4 1983009808
    %v121 = vunpack.c.0.s8 %v120
    %v122 = vlaneseq
    %v123 = vshrl.u32 %v122, 7
    %v124 = vsub.s32 %v121, %v123
    %v125 = vrot.slane %v111, %v124
    %v126 = vcombine.high %v118, %v118
    %v127 = vcombine.high %v125, %v125
    %v136 = vpack.c.bf16 %v101, %v101
    %v137 = vpack.c.bf16 %v109, %v109
    %v138 = vpack.c.bf16 %v108, %v108
    %v139 = vpack.c.bf16 %v110, %v110
    %v140 = vpack.c.bf16 %v118, %v118
    %v141 = vpack.c.bf16 %v126, %v126
    %v142 = vpack.c.bf16 %v125, %v125
    %v143 = vpack.c.bf16 %v127, %v127
    %v152 = vcombine.low %v136, %v137
    %v153 = vcombine.low %v138, %v139
    %v154 = vcombine.low %v140, %v141
    %v155 = vcombine.low %v142, %v143
    %v157 = vunpack.c.l.s4 1966171168
    %v158 = vunpack.c.0.s8 %v157
    %v159 = vlaneseq
    %v160 = vshrl.u32 %v159, 7
    %v161 = vsub.s32 %v158, %v160
    %v162 = vrot.slane %v152, %v161
    %v164 = vunpack.c.l.s4 1966171168
    %v165 = vunpack.c.0.s8 %v164
    %v166 = vlaneseq
    %v167 = vshrl.u32 %v166, 7
    %v168 = vsub.s32 %v165, %v167
    %v169 = vrot.slane %v153, %v168
    %v171 = vunpack.c.l.s4 1966171168
    %v172 = vunpack.c.0.s8 %v171
    %v173 = vlaneseq
    %v174 = vshrl.u32 %v173, 7
    %v175 = vsub.s32 %v172, %v174
    %v176 = vrot.slane %v154, %v175
    %v178 = vunpack.c.l.s4 1966171168
    %v179 = vunpack.c.0.s8 %v178
    %v180 = vlaneseq
    %v181 = vshrl.u32 %v180, 7
    %v182 = vsub.s32 %v179, %v181
    %v183 = vrot.slane %v155, %v182
    %v184 = vcombine.low %v162, %v169
    %v185 = vcombine.low %v176, %v183
    %v187 = vunpack.c.l.s4 1966171168
    %v188 = vunpack.c.0.s8 %v187
    %v189 = vlaneseq
    %v190 = vshrl.u32 %v189, 7
    %v191 = vsub.s32 %v188, %v190
    %v192 = vrot.slane %v184, %v191
    %v194 = vunpack.c.l.s4 1966171168
    %v195 = vunpack.c.0.s8 %v194
    %v196 = vlaneseq
    %v197 = vshrl.u32 %v196, 7
    %v198 = vsub.s32 %v195, %v197
    %v199 = vrot.slane %v185, %v198
    %v200 = vcombine.low %v192, %v199
    %202 = vst [vmem:[#allocation8] sm:$0xff] %v200
    // Predicated region
    $region26: #{hdc_net_forward.154} parent=1 // pred_check
      _
    $region27: #{hdc_net_forward.154} parent=1 // pred_check_branch
      %204 = sbr.rel (0) target = $region29
    $region28: #{hdc_net_forward.154} parent=1 // pred_region
      %s206 = ssub.s32 128, 128
      %207 = vsyncadd [#allocation4], %s206
      %s209 = sshll.u32 [#allocation8], 4
      %s210 = int_to_ptr.vmem [resolvable:$true] %s209
      %212 = dma.vmem_to_hbm [thread:$0]  %s210, 128, %s3, [#allocation4]
    $region29: #{hdc_net_forward.154} parent=1 // pred_fallthru
      _
    // Predicated region
    $region30: #{hdc_net_forward.154} parent=1 // pred_check
      _
    $region31: #{hdc_net_forward.154} parent=1 // pred_check_branch
      %214 = sbr.rel (0) target = $region33
    $region32: #{hdc_net_forward.154} parent=1 // pred_region
      %215 = dma.done [#allocation4], 128
    $region33: #{hdc_net_forward.154} parent=1 // pred_fallthru
      _
    %216 = vsyncpa [#allocation3], 1
    %217 = vsyncpa [#allocation6], 1
    %218 = vsyncpa [#allocation4], 1

// kernel: hdc_net_forward.168
$region0: #{hdc_net_forward.168}
  #allocation0 [shape = 'u32[]', space=smem, size = 0x4, offset = 0x4, fixed_abs, tag = 'smem constant byte address 0x4 - core index']
  #allocation1 [shape = 'u32[144,128]{1,0:T(1,128)}', space=vmem, size = 0x12000, scoped, tag = 'internal scratch']
  %s0 = inlined_call_operand.hbm [shape: bf16[8,1024], index: 0, kind: input, shape index: {}]
  %s1 = inlined_call_operand.hbm [shape: f32[8,1], index: 1, kind: input, shape index: {}]
  %s2 = inlined_call_operand.hbm [shape: f32[8,1], index: 2, kind: input, shape index: {}]
  %s3 = inlined_call_operand.hbm [shape: bf16[8,1024], index: 3, kind: input, shape index: {}]
  %s4 = inlined_call_operand.hbm [shape: bf16[8,1024], index: 4, kind: output, shape index: {}]
  %s5 = sld [smem:[#allocation0]]
  $region42: #{hdc_net_forward.168} parent=0
    _
  %s7 = ssub.s32 1, %s5
  %s8 = scalar_select 0, %s7, %s5
  $region1: #{hdc_net_forward.168} parent=0
    #allocation2 [shape = 'u8[16384]{0}', space=vmem, size = 0x4000, scoped, tag = 'input window, operand 0, single buffered']
    #allocation3 [shape = 's32[1]{0}', space=sflag, size = 0x4, scoped, tag = 'scoped memory for hdc_net_forward.168']
    #allocation4 [shape = 's32[1]{0}', space=sflag, size = 0x4, scoped, tag = 'scoped memory for hdc_net_forward.168']
    #allocation5 [shape = 'u8[4096]{0}', space=vmem, size = 0x1000, scoped, tag = 'input window, operand 1, single buffered']
    #allocation6 [shape = 's32[1]{0}', space=sflag, size = 0x4, scoped, tag = 'scoped memory for hdc_net_forward.168']
    #allocation7 [shape = 'u8[4096]{0}', space=vmem, size = 0x1000, scoped, tag = 'input window, operand 2, single buffered']
    #allocation8 [shape = 'u8[16384]{0}', space=vmem, size = 0x4000, scoped, tag = 'input window, operand 3, single buffered']
    #allocation9 [shape = 's32[1]{0}', space=sflag, size = 0x4, scoped, tag = 'scoped memory for hdc_net_forward.168']
    #allocation10 [shape = 'u8[16384]{0}', space=vmem, size = 0x4000, scoped, tag = 'output window, operand 0, single buffered']
    %9 = vsyncpa [#allocation3], 0
    %10 = vsyncpa [#allocation6], 0
    %11 = vsyncpa [#allocation9], 0
    %12 = vsyncpa [#allocation4], 0
    // Predicated region
    $region2: #{hdc_net_forward.168} parent=1 // pred_check
      _
    $region3: #{hdc_net_forward.168} parent=1 // pred_check_branch
      %14 = sbr.rel (0) target = $region5
    $region4: #{hdc_net_forward.168} parent=1 // pred_region
      %s16 = ssub.s32 512, 512
      %17 = vsyncadd [#allocation3], %s16
      %s19 = sshll.u32 [#allocation2], 4
      %s20 = int_to_ptr.vmem [resolvable:$true] %s19
      %22 = dma.hbm_to_vmem [thread:$0]  %s0, 512, %s20, [#allocation3]
    $region5: #{hdc_net_forward.168} parent=1 // pred_fallthru
      _
    // Predicated region
    $region6: #{hdc_net_forward.168} parent=1 // pred_check
      _
    $region7: #{hdc_net_forward.168} parent=1 // pred_check_branch
      %24 = sbr.rel (0) target = $region9
    $region8: #{hdc_net_forward.168} parent=1 // pred_region
      %s26 = ssub.s32 128, 128
      %27 = vsyncadd [#allocation6], %s26
      %s29 = sshll.u32 [#allocation5], 4
      %s30 = int_to_ptr.vmem [resolvable:$true] %s29
      %32 = dma.hbm_to_vmem [thread:$0]  %s1, 128, %s30, [#allocation6]
    $region9: #{hdc_net_forward.168} parent=1 // pred_fallthru
      _
    // Predicated region
    $region10: #{hdc_net_forward.168} parent=1 // pred_check
      _
    $region11: #{hdc_net_forward.168} parent=1 // pred_check_branch
      %34 = sbr.rel (0) target = $region13
    $region12: #{hdc_net_forward.168} parent=1 // pred_region
      %s36 = ssub.s32 128, 128
      %37 = vsyncadd [#allocation6], %s36
      %s39 = sshll.u32 [#allocation7], 4
      %s40 = int_to_ptr.vmem [resolvable:$true] %s39
      %42 = dma.hbm_to_vmem [thread:$0]  %s2, 128, %s40, [#allocation6]
    $region13: #{hdc_net_forward.168} parent=1 // pred_fallthru
      _
    // Predicated region
    $region14: #{hdc_net_forward.168} parent=1 // pred_check
      _
    $region15: #{hdc_net_forward.168} parent=1 // pred_check_branch
      %44 = sbr.rel (0) target = $region17
    $region16: #{hdc_net_forward.168} parent=1 // pred_region
      %s46 = ssub.s32 512, 512
      %47 = vsyncadd [#allocation9], %s46
      %s49 = sshll.u32 [#allocation8], 4
      %s50 = int_to_ptr.vmem [resolvable:$true] %s49
      %52 = dma.hbm_to_vmem [thread:$0]  %s3, 512, %s50, [#allocation9]
    $region17: #{hdc_net_forward.168} parent=1 // pred_fallthru
      _
    // Predicated region
    $region18: #{hdc_net_forward.168} parent=1 // pred_check
      _
    $region19: #{hdc_net_forward.168} parent=1 // pred_check_branch
      %54 = sbr.rel (0) target = $region21
    $region20: #{hdc_net_forward.168} parent=1 // pred_region
      %55 = dma.done [#allocation3], 512
    $region21: #{hdc_net_forward.168} parent=1 // pred_fallthru
      _
    // Predicated region
    $region22: #{hdc_net_forward.168} parent=1 // pred_check
      _
    $region23: #{hdc_net_forward.168} parent=1 // pred_check_branch
      %57 = sbr.rel (0) target = $region25
    $region24: #{hdc_net_forward.168} parent=1 // pred_region
      %58 = dma.done [#allocation6], 128
    $region25: #{hdc_net_forward.168} parent=1 // pred_fallthru
      _
    // Predicated region
    $region26: #{hdc_net_forward.168} parent=1 // pred_check
      _
    $region27: #{hdc_net_forward.168} parent=1 // pred_check_branch
      %60 = sbr.rel (0) target = $region29
    $region28: #{hdc_net_forward.168} parent=1 // pred_region
      %61 = dma.done [#allocation6], 128
    $region29: #{hdc_net_forward.168} parent=1 // pred_fallthru
      _
    // Predicated region
    $region30: #{hdc_net_forward.168} parent=1 // pred_check
      _
    $region31: #{hdc_net_forward.168} parent=1 // pred_check_branch
      %63 = sbr.rel (0) target = $region33
    $region32: #{hdc_net_forward.168} parent=1 // pred_region
      %64 = dma.done [#allocation9], 512
    $region33: #{hdc_net_forward.168} parent=1 // pred_fallthru
      _
    %v65 = vld [vmem:[#allocation5] sm:$0xff]
    %v66 = vmul.f32 %v65, 0.0009765625
    %v67 = vld [vmem:[#allocation7] sm:$0xff]
    %v68 = vmul.f32 %v67, 0.0009765625
    %v69 = vmul.f32 %v66, %v66
    %v70 = vsub.f32 %v68, %v69
    %v71 = vmax.f32 %v70, 0.0
    %v72 = vadd.f32 %v71, 1e-05
    %v73 = vrsqrt.pop %v72
    %v74 = vld [vmem:[#allocation2] sm:$0xff]
    %v75 = vld [vmem:[#allocation2 + $0x8] sm:$0xff]
    %v76 = vld [vmem:[#allocation2 + $0x10] sm:$0xff]
    %v77 = vld [vmem:[#allocation2 + $0x18] sm:$0xff]
    %v78 = vunpack.c.l.bf16 %v74
    %v79 = vunpack.c.h.bf16 %v74
    %v80 = vunpack.c.l.bf16 %v75
    %v81 = vunpack.c.h.bf16 %v75
    %v82 = vunpack.c.l.bf16 %v76
    %v83 = vunpack.c.h.bf16 %v76
    %v84 = vunpack.c.l.bf16 %v77
    %v85 = vunpack.c.h.bf16 %v77
    %87 = vset.pattern.permute.xlu0 0
    %88 = vperm.xlu0 %87, %v66
    %v89 = vpop.permute.xlu0 %88
    %v91 = vsub.f32 %v78, %v89
    %v92 = vsub.f32 %v79, %v89
    %v93 = vsub.f32 %v80, %v89
    %v94 = vsub.f32 %v81, %v89
    %v95 = vsub.f32 %v82, %v89
    %v96 = vsub.f32 %v83, %v89
    %v97 = vsub.f32 %v84, %v89
    %v98 = vsub.f32 %v85, %v89
    %100 = vset.pattern.permute.xlu0 0
    %101 = vperm.xlu0 %100, %v73
    %v102 = vpop.permute.xlu0 %101
    %v104 = vmul.f32 %v91, %v102
    %v105 = vmul.f32 %v92, %v102
    %v106 = vmul.f32 %v93, %v102
    %v107 = vmul.f32 %v94, %v102
    %v108 = vmul.f32 %v95, %v102
    %v109 = vmul.f32 %v96, %v102
    %v110 = vmul.f32 %v97, %v102
    %v111 = vmul.f32 %v98, %v102
    %v112 = vmax.f32 %v104, 0.0
    %v113 = vmax.f32 %v105, 0.0
    %v114 = vmax.f32 %v106, 0.0
    %v115 = vmax.f32 %v107, 0.0
    %v116 = vmax.f32 %v108, 0.0
    %v117 = vmax.f32 %v109, 0.0
    %v118 = vmax.f32 %v110, 0.0
    %v119 = vmax.f32 %v111, 0.0
    %v120 = vld [vmem:[#allocation8] sm:$0xff]
    %v121 = vld [vmem:[#allocation8 + $0x8] sm:$0xff]
    %v122 = vld [vmem:[#allocation8 + $0x10] sm:$0xff]
    %v123 = vld [vmem:[#allocation8 + $0x18] sm:$0xff]
    %v124 = vunpack.c.l.bf16 %v120
    %v125 = vunpack.c.h.bf16 %v120
    %v126 = vunpack.c.l.bf16 %v121
    %v127 = vunpack.c.h.bf16 %v121
    %v128 = vunpack.c.l.bf16 %v122
    %v129 = vunpack.c.h.bf16 %v122
    %v130 = vunpack.c.l.bf16 %v123
    %v131 = vunpack.c.h.bf16 %v123
    %v132 = vadd.f32 %v112, %v124
    %v133 = vadd.f32 %v113, %v125
    %v134 = vadd.f32 %v114, %v126
    %v135 = vadd.f32 %v115, %v127
    %v136 = vadd.f32 %v116, %v128
    %v137 = vadd.f32 %v117, %v129
    %v138 = vadd.f32 %v118, %v130
    %v139 = vadd.f32 %v119, %v131
    %v140 = vpack.c.bf16 %v132, %v132
    %v141 = vpack.c.bf16 %v133, %v133
    %v142 = vpack.c.bf16 %v134, %v134
    %v143 = vpack.c.bf16 %v135, %v135
    %v144 = vpack.c.bf16 %v136, %v136
    %v145 = vpack.c.bf16 %v137, %v137
    %v146 = vpack.c.bf16 %v138, %v138
    %v147 = vpack.c.bf16 %v139, %v139
    %v156 = vunpack.c.l.b16 %v140
    %v157 = vunpack.c.l.b16 %v141
    %v158 = vunpack.c.l.b16 %v142
    %v159 = vunpack.c.l.b16 %v143
    %v160 = vunpack.c.l.b16 %v144
    %v161 = vunpack.c.l.b16 %v145
    %v162 = vunpack.c.l.b16 %v146
    %v163 = vunpack.c.l.b16 %v147
    %v164 = vpack.c.b16 %v157, %v156
    %v165 = vpack.c.b16 %v159, %v158
    %v166 = vpack.c.b16 %v161, %v160
    %v167 = vpack.c.b16 %v163, %v162
    %172 = vst [vmem:[#allocation10] sm:$0xff] %v164
    %173 = vst [vmem:[#allocation10 + $0x8] sm:$0xff] %v165
    %174 = vst [vmem:[#allocation10 + $0x10] sm:$0xff] %v166
    %175 = vst [vmem:[#allocation10 + $0x18] sm:$0xff] %v167
    // Predicated region
    $region34: #{hdc_net_forward.168} parent=1 // pred_check
      _
    $region35: #{hdc_net_forward.168} parent=1 // pred_check_branch
      %177 = sbr.rel (0) target = $region37
    $region36: #{hdc_net_forward.168} parent=1 // pred_region
      %s179 = ssub.s32 512, 512
      %180 = vsyncadd [#allocation4], %s179
      %s182 = sshll.u32 [#allocation10], 4
      %s183 = int_to_ptr.vmem [resolvable:$true] %s182
      %185 = dma.vmem_to_hbm [thread:$0]  %s183, 512, %s4, [#allocation4]
    $region37: #{hdc_net_forward.168} parent=1 // pred_fallthru
      _
    // Predicated region
    $region38: #{hdc_net_forward.168} parent=1 // pred_check
      _
    $region39: #{hdc_net_forward.168} parent=1 // pred_check_branch
      %187 = sbr.rel (0) target = $region41
    $region40: #{hdc_net_forward.168} parent=1 // pred_region
      %188 = dma.done [#allocation4], 512
    $region41: #{hdc_net_forward.168} parent=1 // pred_fallthru
      _
    %189 = vsyncpa [#allocation3], 1
    %190 = vsyncpa [#allocation6], 1
    %191 = vsyncpa [#allocation9], 1
    %192 = vsyncpa [#allocation4], 1

// kernel: hdc_net_forward.169
$region0: #{hdc_net_forward.169}
  #allocation0 [shape = 'u32[]', space=smem, size = 0x4, offset = 0x4, fixed_abs, tag = 'smem constant byte address 0x4 - core index']
  #allocation1 [shape = 'u32[144,128]{1,0:T(1,128)}', space=vmem, size = 0x12000, scoped, tag = 'internal scratch']
  %s0 = inlined_call_operand.hbm [shape: bf16[216,128], index: 0, kind: input, shape index: {}]
  %s1 = inlined_call_operand.hbm [shape: bf16[8,216], index: 1, kind: input, shape index: {}]
  %s2 = inlined_call_operand.hbm [shape: bf16[8,128], index: 2, kind: output, shape index: {0}]
  %s3 = inlined_call_operand.hbm [shape: f32[1,8,1], index: 3, kind: output, shape index: {1}]
  %s4 = inlined_call_operand.hbm [shape: f32[1,8,1], index: 4, kind: output, shape index: {2}]
  %5 = xla_tuple %s2, %s3, %s4
  %s6 = sld [smem:[#allocation0]]
  $region42: #{hdc_net_forward.169} parent=0
    _
  %s8 = ssub.s32 1, %s6
  %s9 = scalar_select 0, %s8, %s6
  $region1: #{hdc_net_forward.169} parent=0
    #allocation2 [shape = 'u8[55296]{0}', space=vmem, size = 0xd800, scoped, tag = 'input window, operand 0, single buffered']
    #allocation3 [shape = 's32[1]{0}', space=sflag, size = 0x4, scoped, tag = 'scoped memory for hdc_net_forward.169']
    #allocation4 [shape = 's32[1]{0}', space=sflag, size = 0x4, scoped, tag = 'scoped memory for hdc_net_forward.169']
    #allocation5 [shape = 'u8[4096]{0}', space=vmem, size = 0x1000, scoped, tag = 'input window, operand 1, single buffered']
    #allocation6 [shape = 's32[1]{0}', space=sflag, size = 0x4, scoped, tag = 'scoped memory for hdc_net_forward.169']
    #allocation7 [shape = 'u8[2048]{0}', space=vmem, size = 0x800, scoped, tag = 'output window, operand 0, single buffered']
    #allocation8 [shape = 'u8[4096]{0}', space=vmem, size = 0x1000, scoped, tag = 'output window, operand 1, single buffered']
    #allocation9 [shape = 's32[1]{0}', space=sflag, size = 0x4, scoped, tag = 'scoped memory for hdc_net_forward.169']
    #allocation10 [shape = 'u8[4096]{0}', space=vmem, size = 0x1000, scoped, tag = 'output window, operand 2, single buffered']
    %10 = vsyncpa [#allocation3], 0
    %11 = vsyncpa [#allocation6], 0
    %12 = vsyncpa [#allocation4], 0
    %13 = vsyncpa [#allocation9], 0
    // Predicated region
    $region2: #{hdc_net_forward.169} parent=1 // pred_check
      _
    $region3: #{hdc_net_forward.169} parent=1 // pred_check_branch
      %15 = sbr.rel (0) target = $region5
    $region4: #{hdc_net_forward.169} parent=1 // pred_region
      %s17 = ssub.s32 1728, 1728
      %18 = vsyncadd [#allocation3], %s17
      %s19 = sshll.u32 [#allocation2], 4
      %s20 = int_to_ptr.vmem [resolvable:$true] %s19
      %25 = dma.hbm_to_vmem [thread:$0]  %s0, 1728, %s20, [#allocation3], 64, 64, 4
    $region5: #{hdc_net_forward.169} parent=1 // pred_fallthru
      _
    // Predicated region
    $region6: #{hdc_net_forward.169} parent=1 // pred_check
      _
    $region7: #{hdc_net_forward.169} parent=1 // pred_check_branch
      %27 = sbr.rel (0) target = $region9
    $region8: #{hdc_net_forward.169} parent=1 // pred_region
      %s29 = ssub.s32 128, 128
      %30 = vsyncadd [#allocation6], %s29
      %s32 = sshll.u32 [#allocation5], 4
      %s33 = int_to_ptr.vmem [resolvable:$true] %s32
      %35 = dma.hbm_to_vmem [thread:$0]  %s1, 128, %s33, [#allocation6]
    $region9: #{hdc_net_forward.169} parent=1 // pred_fallthru
      _
    // Predicated region
    $region10: #{hdc_net_forward.169} parent=1 // pred_check
      _
    $region11: #{hdc_net_forward.169} parent=1 // pred_check_branch
      %37 = sbr.rel (0) target = $region13
    $region12: #{hdc_net_forward.169} parent=1 // pred_region
      %38 = dma.done [#allocation3], 1728
    $region13: #{hdc_net_forward.169} parent=1 // pred_fallthru
      _
    // Predicated region
    $region14: #{hdc_net_forward.169} parent=1 // pred_check
      _
    $region15: #{hdc_net_forward.169} parent=1 // pred_check_branch
      %40 = sbr.rel (0) target = $region17
    $region16: #{hdc_net_forward.169} parent=1 // pred_region
      %41 = dma.done [#allocation6], 128
    $region17: #{hdc_net_forward.169} parent=1 // pred_fallthru
      _
    %v43 = vld [vmem:[#allocation5] sm:$0xff]
    %v44 = vld [vmem:[#allocation2] sm:$0xf]
    %v45 = vld [vmem:[#allocation2 + $0x4] sm:$0xf]
    %v46 = vld [vmem:[#allocation2 + $0x8] sm:$0xf]
    %v47 = vld [vmem:[#allocation2 + $0xc] sm:$0xf]
    %v48 = vld [vmem:[#allocation2 + $0x10] sm:$0xf]
    %v49 = vld [vmem:[#allocation2 + $0x14] sm:$0xf]
    %v50 = vld [vmem:[#allocation2 + $0x18] sm:$0xf]
    %v51 = vld [vmem:[#allocation2 + $0x1c] sm:$0xf]
    %v52 = vld [vmem:[#allocation2 + $0x20] sm:$0xf]
    %v53 = vld [vmem:[#allocation2 + $0x24] sm:$0xf]
    %v54 = vld [vmem:[#allocation2 + $0x28] sm:$0xf]
    %v55 = vld [vmem:[#allocation2 + $0x2c] sm:$0xf]
    %v56 = vld [vmem:[#allocation2 + $0x30] sm:$0xf]
    %v57 = vld [vmem:[#allocation2 + $0x34] sm:$0xf]
    %v58 = vld [vmem:[#allocation2 + $0x38] sm:$0xf]
    %v59 = vld [vmem:[#allocation2 + $0x3c] sm:$0xf]
    %v60 = vld [vmem:[#allocation2 + $0x40] sm:$0xf]
    %v61 = vld [vmem:[#allocation2 + $0x44] sm:$0xf]
    %v62 = vld [vmem:[#allocation2 + $0x48] sm:$0xf]
    %v63 = vld [vmem:[#allocation2 + $0x4c] sm:$0xf]
    %v64 = vld [vmem:[#allocation2 + $0x50] sm:$0xf]
    %v65 = vld [vmem:[#allocation2 + $0x54] sm:$0xf]
    %v66 = vld [vmem:[#allocation2 + $0x58] sm:$0xf]
    %v67 = vld [vmem:[#allocation2 + $0x5c] sm:$0xf]
    %v68 = vld [vmem:[#allocation2 + $0x60] sm:$0xf]
    %v69 = vld [vmem:[#allocation2 + $0x64] sm:$0xf]
    %v70 = vld [vmem:[#allocation2 + $0x68] sm:$0xf]
    %v72 = vunpack.c.l.b16 %v43
    %v73 = vunpack.c.h.b16 %v43
    %v74 = vpack.c.b16 %v72, %v72
    %v75 = vpack.c.b16 %v73, %v73
    %v104 = vunpack.c.l.b16 %v44
    %v105 = vunpack.c.l.b16 %v45
    %v106 = vunpack.c.l.b16 %v46
    %v107 = vunpack.c.l.b16 %v47
    %v108 = vunpack.c.l.b16 %v48
    %v109 = vunpack.c.l.b16 %v49
    %v110 = vunpack.c.l.b16 %v50
    %v111 = vunpack.c.l.b16 %v51
    %v112 = vunpack.c.l.b16 %v52
    %v113 = vunpack.c.l.b16 %v53
    %v114 = vunpack.c.l.b16 %v54
    %v115 = vunpack.c.l.b16 %v55
    %v116 = vunpack.c.l.b16 %v56
    %v117 = vunpack.c.l.b16 %v57
    %v118 = vunpack.c.l.b16 %v58
    %v119 = vunpack.c.l.b16 %v59
    %v120 = vunpack.c.l.b16 %v60
    %v121 = vunpack.c.l.b16 %v61
    %v122 = vunpack.c.l.b16 %v62
    %v123 = vunpack.c.l.b16 %v63
    %v124 = vunpack.c.l.b16 %v64
    %v125 = vunpack.c.l.b16 %v65
    %v126 = vunpack.c.l.b16 %v66
    %v127 = vunpack.c.l.b16 %v67
    %v128 = vunpack.c.l.b16 %v68
    %v129 = vunpack.c.l.b16 %v69
    %v130 = vunpack.c.l.b16 %v70
    %v131 = vpack.c.b16 %v105, %v104
    %v132 = vpack.c.b16 %v107, %v106
    %v133 = vpack.c.b16 %v109, %v108
    %v134 = vpack.c.b16 %v111, %v110
    %v135 = vpack.c.b16 %v113, %v112
    %v136 = vpack.c.b16 %v115, %v114
    %v137 = vpack.c.b16 %v117, %v116
    %v138 = vpack.c.b16 %v119, %v118
    %v139 = vpack.c.b16 %v121, %v120
    %v140 = vpack.c.b16 %v123, %v122
    %v141 = vpack.c.b16 %v125, %v124
    %v142 = vpack.c.b16 %v127, %v126
    %v143 = vpack.c.b16 %v129, %v128
    %v144 = vpack.c.b16 %v130, %v130
    %vm158 = vcmask 719872
    %v160 = vsel %vm158, %v75, 0
    %vm162 = vcmask 1043456
    %v164 = vsel %vm162, %v144, 0
    %166 = vmatprep.subr.bf16.mxu0 0
    %167 = vmatpush1.bf16.msra.mxu0 %v131
    %168 = vmatprep.subr.bf16.mxu0 0
    %169 = vmatpush1.bf16.msra.mxu0 %v132
    %170 = vmatprep.subr.bf16.mxu0 0
    %171 = vmatpush1.bf16.msra.mxu0 %v133
    %172 = vmatprep.subr.bf16.mxu0 0
    %173 = vmatpush1.bf16.msra.mxu0 %v134
    %174 = vmatprep.subr.bf16.mxu0 0
    %175 = vmatpush1.bf16.msra.mxu0 %v135
    %176 = vmatprep.subr.bf16.mxu0 0
    %177 = vmatpush1.bf16.msra.mxu0 %v136
    %178 = vmatprep.subr.bf16.mxu0 0
    %179 = vmatpush1.bf16.msra.mxu0 %v137
    %180 = vmatprep.subr.bf16.mxu0 0
    %181 = vmatpush1.bf16.msra.mxu0 %v138
    %182 = vmatprep.subr.bf16.mxu0 0
    %183 = vmatpush1.bf16.msra.mxu0 %v139
    %184 = vmatprep.subr.bf16.mxu0 0
    %185 = vmatpush1.bf16.msra.mxu0 %v140
    %186 = vmatprep.subr.bf16.mxu0 0
    %187 = vmatpush1.bf16.msra.mxu0 %v141
    %188 = vmatprep.subr.bf16.mxu0 0
    %189 = vmatpush1.bf16.msra.mxu0 %v142
    %190 = vmatprep.subr.bf16.mxu0 0
    %191 = vmatpush1.bf16.msra.mxu0 %v143
    %192 = vmatprep.subr.bf16.mxu0 0
    %193 = vmatpush1.bf16.msra.mxu0 %v164
    %194 = vmatprep.subr.bf16.mxu0 0
    %195 = vmatpush1.bf16.msra.mxu0 0
    %196 = vmatprep.subr.bf16.mxu0 0
    %197 = vmatpush1.bf16.msra.mxu0 0
    %198 = vmatprep.mubr.bf16.mxu0 %v160
    %199 = vmatmul.mubr.bf16.gmra.mrb[0].mxu0 %v74
    %v200 = vpop.f32.mrb[0].mxu0
    %v201 = vadd.f32 0.0, %v200
    %v202 = vpop.f32.mrb[0].mxu0
    %v203 = vpop.f32.mrb[0].mxu0
    %v204 = vpop.f32.mrb[0].mxu0
    %205 = vdwg.mxu0
    %v206 = vpack.c.bf16 %v201, %v201
    %207 = vst [vmem:[#allocation7] sm:$0xf] %v206
    %208 = vadd.xlane.f32.xlu0 %v201
    %v209 = vpop.xlane.xlu0 %208
    %vm210 = vcmask 7168
    %211 = vst.msk [vmem:[#allocation8] sm:$0xff] %vm210, %v209
    %v212 = vmul.f32 %v201, %v201
    %213 = vadd.xlane.f32.xlu0 %v212
    %v214 = vpop.xlane.xlu0 %213
    %215 = vst.msk [vmem:[#allocation10] sm:$0xff] %vm210, %v214
    // Predicated region
    $region18: #{hdc_net_forward.169} parent=1 // pred_check
      _
    $region19: #{hdc_net_forward.169} parent=1 // pred_check_branch
      %217 = sbr.rel (0) target = $region21
    $region20: #{hdc_net_forward.169} parent=1 // pred_region
      %s219 = ssub.s32 64, 64
      %220 = vsyncadd [#allocation4], %s219
      %s222 = sshll.u32 [#allocation7], 4
      %s223 = int_to_ptr.vmem [resolvable:$true] %s222
      %225 = dma.vmem_to_hbm [thread:$0]  %s223, 64, %s2, [#allocation4]
    $region21: #{hdc_net_forward.169} parent=1 // pred_fallthru
      _
    // Predicated region
    $region22: #{hdc_net_forward.169} parent=1 // pred_check
      _
    $region23: #{hdc_net_forward.169} parent=1 // pred_check_branch
      %227 = sbr.rel (0) target = $region25
    $region24: #{hdc_net_forward.169} parent=1 // pred_region
      %s229 = ssub.s32 128, 128
      %230 = vsyncadd [#allocation9], %s229
      %s232 = sshll.u32 [#allocation8], 4
      %s233 = int_to_ptr.vmem [resolvable:$true] %s232
      %235 = dma.vmem_to_hbm [thread:$0]  %s233, 128, %s3, [#allocation9]
    $region25: #{hdc_net_forward.169} parent=1 // pred_fallthru
      _
    // Predicated region
    $region26: #{hdc_net_forward.169} parent=1 // pred_check
      _
    $region27: #{hdc_net_forward.169} parent=1 // pred_check_branch
      %237 = sbr.rel (0) target = $region29
    $region28: #{hdc_net_forward.169} parent=1 // pred_region
      %s239 = ssub.s32 128, 128
      %240 = vsyncadd [#allocation9], %s239
      %s242 = sshll.u32 [#allocation10], 4
      %s243 = int_to_ptr.vmem [resolvable:$true] %s242
      %245 = dma.vmem_to_hbm [thread:$0]  %s243, 128, %s4, [#allocation9]
    $region29: #{hdc_net_forward.169} parent=1 // pred_fallthru
      _
    // Predicated region
    $region30: #{hdc_net_forward.169} parent=1 // pred_check
      _
    $region31: #{hdc_net_forward.169} parent=1 // pred_check_branch
      %247 = sbr.rel (0) target = $region33
    $region32: #{hdc_net_forward.169} parent=1 // pred_region
      %248 = dma.done [#allocation4], 64
    $region33: #{hdc_net_forward.169} parent=1 // pred_fallthru
      _
    // Predicated region
    $region34: #{hdc_net_forward.169} parent=1 // pred_check
      _
    $region35: #{hdc_net_forward.169} parent=1 // pred_check_branch
      %250 = sbr.rel (0) target = $region37
    $region36: #{hdc_net_forward.169} parent=1 // pred_region
      %251 = dma.done [#allocation9], 128
    $region37: #{hdc_net_forward.169} parent=1 // pred_fallthru
      _
    // Predicated region
    $region38: #{hdc_net_forward.169} parent=1 // pred_check
      _
    $region39: #{hdc_net_forward.169} parent=1 // pred_check_branch
      %253 = sbr.rel (0) target = $region41
    $region40: #{hdc_net_forward.169} parent=1 // pred_region
      %254 = dma.done [#allocation9], 128
    $region41: #{hdc_net_forward.169} parent=1 // pred_fallthru
      _
    %255 = vsyncpa [#allocation3], 1
    %256 = vsyncpa [#allocation6], 1
    %257 = vsyncpa [#allocation4], 1
    %258 = vsyncpa [#allocation9], 1

// kernel: hdc_net_forward.170
$region0: #{hdc_net_forward.170}
  #allocation0 [shape = 'u32[]', space=smem, size = 0x4, offset = 0x4, fixed_abs, tag = 'smem constant byte address 0x4 - core index']
  #allocation1 [shape = 'u32[144,128]{1,0:T(1,128)}', space=vmem, size = 0x12000, scoped, tag = 'internal scratch']
  %s0 = inlined_call_operand.hbm [shape: bf16[8,128], index: 0, kind: input, shape index: {}]
  %s1 = inlined_call_operand.hbm [shape: f32[8,1], index: 1, kind: input, shape index: {}]
  %s2 = inlined_call_operand.hbm [shape: f32[8,1], index: 2, kind: input, shape index: {}]
  %s3 = inlined_call_operand.hbm [shape: bf16[8,128], index: 3, kind: output, shape index: {}]
  %s4 = sld [smem:[#allocation0]]
  $region34: #{hdc_net_forward.170} parent=0
    _
  %s6 = ssub.s32 1, %s4
  %s7 = scalar_select 0, %s6, %s4
  $region1: #{hdc_net_forward.170} parent=0
    #allocation2 [shape = 'u8[2048]{0}', space=vmem, size = 0x800, scoped, tag = 'input window, operand 0, single buffered']
    #allocation3 [shape = 's32[1]{0}', space=sflag, size = 0x4, scoped, tag = 'scoped memory for hdc_net_forward.170']
    #allocation4 [shape = 's32[1]{0}', space=sflag, size = 0x4, scoped, tag = 'scoped memory for hdc_net_forward.170']
    #allocation5 [shape = 'u8[4096]{0}', space=vmem, size = 0x1000, scoped, tag = 'input window, operand 1, single buffered']
    #allocation6 [shape = 's32[1]{0}', space=sflag, size = 0x4, scoped, tag = 'scoped memory for hdc_net_forward.170']
    #allocation7 [shape = 'u8[4096]{0}', space=vmem, size = 0x1000, scoped, tag = 'input window, operand 2, single buffered']
    #allocation8 [shape = 'u8[2048]{0}', space=vmem, size = 0x800, scoped, tag = 'output window, operand 0, single buffered']
    %8 = vsyncpa [#allocation3], 0
    %9 = vsyncpa [#allocation6], 0
    %10 = vsyncpa [#allocation4], 0
    // Predicated region
    $region2: #{hdc_net_forward.170} parent=1 // pred_check
      _
    $region3: #{hdc_net_forward.170} parent=1 // pred_check_branch
      %12 = sbr.rel (0) target = $region5
    $region4: #{hdc_net_forward.170} parent=1 // pred_region
      %s14 = ssub.s32 64, 64
      %15 = vsyncadd [#allocation3], %s14
      %s17 = sshll.u32 [#allocation2], 4
      %s18 = int_to_ptr.vmem [resolvable:$true] %s17
      %20 = dma.hbm_to_vmem [thread:$0]  %s0, 64, %s18, [#allocation3]
    $region5: #{hdc_net_forward.170} parent=1 // pred_fallthru
      _
    // Predicated region
    $region6: #{hdc_net_forward.170} parent=1 // pred_check
      _
    $region7: #{hdc_net_forward.170} parent=1 // pred_check_branch
      %22 = sbr.rel (0) target = $region9
    $region8: #{hdc_net_forward.170} parent=1 // pred_region
      %s24 = ssub.s32 128, 128
      %25 = vsyncadd [#allocation6], %s24
      %s27 = sshll.u32 [#allocation5], 4
      %s28 = int_to_ptr.vmem [resolvable:$true] %s27
      %30 = dma.hbm_to_vmem [thread:$0]  %s1, 128, %s28, [#allocation6]
    $region9: #{hdc_net_forward.170} parent=1 // pred_fallthru
      _
    // Predicated region
    $region10: #{hdc_net_forward.170} parent=1 // pred_check
      _
    $region11: #{hdc_net_forward.170} parent=1 // pred_check_branch
      %32 = sbr.rel (0) target = $region13
    $region12: #{hdc_net_forward.170} parent=1 // pred_region
      %s34 = ssub.s32 128, 128
      %35 = vsyncadd [#allocation6], %s34
      %s37 = sshll.u32 [#allocation7], 4
      %s38 = int_to_ptr.vmem [resolvable:$true] %s37
      %40 = dma.hbm_to_vmem [thread:$0]  %s2, 128, %s38, [#allocation6]
    $region13: #{hdc_net_forward.170} parent=1 // pred_fallthru
      _
    // Predicated region
    $region14: #{hdc_net_forward.170} parent=1 // pred_check
      _
    $region15: #{hdc_net_forward.170} parent=1 // pred_check_branch
      %42 = sbr.rel (0) target = $region17
    $region16: #{hdc_net_forward.170} parent=1 // pred_region
      %43 = dma.done [#allocation3], 64
    $region17: #{hdc_net_forward.170} parent=1 // pred_fallthru
      _
    // Predicated region
    $region18: #{hdc_net_forward.170} parent=1 // pred_check
      _
    $region19: #{hdc_net_forward.170} parent=1 // pred_check_branch
      %45 = sbr.rel (0) target = $region21
    $region20: #{hdc_net_forward.170} parent=1 // pred_region
      %46 = dma.done [#allocation6], 128
    $region21: #{hdc_net_forward.170} parent=1 // pred_fallthru
      _
    // Predicated region
    $region22: #{hdc_net_forward.170} parent=1 // pred_check
      _
    $region23: #{hdc_net_forward.170} parent=1 // pred_check_branch
      %48 = sbr.rel (0) target = $region25
    $region24: #{hdc_net_forward.170} parent=1 // pred_region
      %49 = dma.done [#allocation6], 128
    $region25: #{hdc_net_forward.170} parent=1 // pred_fallthru
      _
    %v50 = vld [vmem:[#allocation5] sm:$0xff]
    %v51 = vmul.f32 %v50, 0.0078125
    %v52 = vld [vmem:[#allocation7] sm:$0xff]
    %v53 = vmul.f32 %v52, 0.0078125
    %v54 = vmul.f32 %v51, %v51
    %v55 = vsub.f32 %v53, %v54
    %v56 = vmax.f32 %v55, 0.0
    %v57 = vadd.f32 %v56, 1e-05
    %v58 = vrsqrt.pop %v57
    %v59 = vld [vmem:[#allocation2] sm:$0xf]
    %v60 = vunpack.c.l.bf16 %v59
    %62 = vset.pattern.permute.xlu0 0
    %63 = vperm.xlu0 %62, %v51
    %v64 = vpop.permute.xlu0 %63
    %v66 = vsub.f32 %v60, %v64
    %68 = vset.pattern.permute.xlu0 0
    %69 = vperm.xlu0 %68, %v58
    %v70 = vpop.permute.xlu0 %69
    %v72 = vmul.f32 %v66, %v70
    %v73 = vmax.f32 %v72, 0.0
    %v74 = vpack.c.bf16 %v73, %v73
    %75 = vst [vmem:[#allocation8] sm:$0xf] %v74
    // Predicated region
    $region26: #{hdc_net_forward.170} parent=1 // pred_check
      _
    $region27: #{hdc_net_forward.170} parent=1 // pred_check_branch
      %77 = sbr.rel (0) target = $region29
    $region28: #{hdc_net_forward.170} parent=1 // pred_region
      %s79 = ssub.s32 64, 64
      %80 = vsyncadd [#allocation4], %s79
      %s82 = sshll.u32 [#allocation8], 4
      %s83 = int_to_ptr.vmem [resolvable:$true] %s82
      %85 = dma.vmem_to_hbm [thread:$0]  %s83, 64, %s3, [#allocation4]
    $region29: #{hdc_net_forward.170} parent=1 // pred_fallthru
      _
    // Predicated region
    $region30: #{hdc_net_forward.170} parent=1 // pred_check
      _
    $region31: #{hdc_net_forward.170} parent=1 // pred_check_branch
      %87 = sbr.rel (0) target = $region33
    $region32: #{hdc_net_forward.170} parent=1 // pred_region
      %88 = dma.done [#allocation4], 64
    $region33: #{hdc_net_forward.170} parent=1 // pred_fallthru
      _
    %89 = vsyncpa [#allocation3], 1
    %90 = vsyncpa [#allocation6], 1
    %91 = vsyncpa [#allocation4], 1

// kernel: hdc_net_forward.171
$region0: #{hdc_net_forward.171}
  #allocation0 [shape = 'u32[]', space=smem, size = 0x4, offset = 0x4, fixed_abs, tag = 'smem constant byte address 0x4 - core index']
  #allocation1 [shape = 'u32[144,128]{1,0:T(1,128)}', space=vmem, size = 0x12000, scoped, tag = 'internal scratch']
  %s0 = inlined_call_operand.hbm [shape: bf16[8,128], index: 0, kind: input, shape index: {}]
  %s1 = inlined_call_operand.hbm [shape: bf16[8,8], index: 1, kind: input, shape index: {}]
  %s2 = inlined_call_operand.hbm [shape: bf16[8,128], index: 2, kind: output, shape index: {0}]
  %s3 = inlined_call_operand.hbm [shape: f32[1,8,1], index: 3, kind: output, shape index: {1}]
  %s4 = inlined_call_operand.hbm [shape: f32[1,8,1], index: 4, kind: output, shape index: {2}]
  %5 = xla_tuple %s2, %s3, %s4
  %s6 = sld [smem:[#allocation0]]
  $region42: #{hdc_net_forward.171} parent=0
    _
  %s8 = ssub.s32 1, %s6
  %s9 = scalar_select 0, %s8, %s6
  $region1: #{hdc_net_forward.171} parent=0
    #allocation2 [shape = 'u8[2048]{0}', space=vmem, size = 0x800, scoped, tag = 'input window, operand 0, single buffered']
    #allocation3 [shape = 's32[1]{0}', space=sflag, size = 0x4, scoped, tag = 'scoped memory for hdc_net_forward.171']
    #allocation4 [shape = 's32[1]{0}', space=sflag, size = 0x4, scoped, tag = 'scoped memory for hdc_net_forward.171']
    #allocation5 [shape = 'u8[2048]{0}', space=vmem, size = 0x800, scoped, tag = 'input window, operand 1, single buffered']
    #allocation6 [shape = 's32[1]{0}', space=sflag, size = 0x4, scoped, tag = 'scoped memory for hdc_net_forward.171']
    #allocation7 [shape = 'u8[2048]{0}', space=vmem, size = 0x800, scoped, tag = 'output window, operand 0, single buffered']
    #allocation8 [shape = 'u8[4096]{0}', space=vmem, size = 0x1000, scoped, tag = 'output window, operand 1, single buffered']
    #allocation9 [shape = 's32[1]{0}', space=sflag, size = 0x4, scoped, tag = 'scoped memory for hdc_net_forward.171']
    #allocation10 [shape = 'u8[4096]{0}', space=vmem, size = 0x1000, scoped, tag = 'output window, operand 2, single buffered']
    %10 = vsyncpa [#allocation3], 0
    %11 = vsyncpa [#allocation6], 0
    %12 = vsyncpa [#allocation4], 0
    %13 = vsyncpa [#allocation9], 0
    // Predicated region
    $region2: #{hdc_net_forward.171} parent=1 // pred_check
      _
    $region3: #{hdc_net_forward.171} parent=1 // pred_check_branch
      %15 = sbr.rel (0) target = $region5
    $region4: #{hdc_net_forward.171} parent=1 // pred_region
      %s17 = ssub.s32 64, 64
      %18 = vsyncadd [#allocation3], %s17
      %s20 = sshll.u32 [#allocation2], 4
      %s21 = int_to_ptr.vmem [resolvable:$true] %s20
      %23 = dma.hbm_to_vmem [thread:$0]  %s0, 64, %s21, [#allocation3]
    $region5: #{hdc_net_forward.171} parent=1 // pred_fallthru
      _
    // Predicated region
    $region6: #{hdc_net_forward.171} parent=1 // pred_check
      _
    $region7: #{hdc_net_forward.171} parent=1 // pred_check_branch
      %25 = sbr.rel (0) target = $region9
    $region8: #{hdc_net_forward.171} parent=1 // pred_region
      %s27 = ssub.s32 64, 64
      %28 = vsyncadd [#allocation6], %s27
      %s30 = sshll.u32 [#allocation5], 4
      %s31 = int_to_ptr.vmem [resolvable:$true] %s30
      %33 = dma.hbm_to_vmem [thread:$0]  %s1, 64, %s31, [#allocation6]
    $region9: #{hdc_net_forward.171} parent=1 // pred_fallthru
      _
    // Predicated region
    $region10: #{hdc_net_forward.171} parent=1 // pred_check
      _
    $region11: #{hdc_net_forward.171} parent=1 // pred_check_branch
      %35 = sbr.rel (0) target = $region13
    $region12: #{hdc_net_forward.171} parent=1 // pred_region
      %36 = dma.done [#allocation3], 64
    $region13: #{hdc_net_forward.171} parent=1 // pred_fallthru
      _
    // Predicated region
    $region14: #{hdc_net_forward.171} parent=1 // pred_check
      _
    $region15: #{hdc_net_forward.171} parent=1 // pred_check_branch
      %38 = sbr.rel (0) target = $region17
    $region16: #{hdc_net_forward.171} parent=1 // pred_region
      %39 = dma.done [#allocation6], 64
    $region17: #{hdc_net_forward.171} parent=1 // pred_fallthru
      _
    %v41 = vld [vmem:[#allocation5] sm:$0xf]
    %v42 = vld [vmem:[#allocation2] sm:$0xf]
    %vm43 = vcmask 64512
    %v45 = vsel %vm43, %v41, 0
    %vm47 = vcmask 1043456
    %v49 = vsel %vm47, %v42, 0
    %51 = vmatprep.subr.bf16.mxu0 0
    %52 = vmatpush1.bf16.msra.mxu0 %v49
    %53 = vmatprep.subr.bf16.mxu0 0
    %54 = vmatpush1.bf16.msra.mxu0 0
    %55 = vmatprep.subr.bf16.mxu0 0
    %56 = vmatpush1.bf16.msra.mxu0 0
    %57 = vmatprep.subr.bf16.mxu0 0
    %58 = vmatpush1.bf16.msra.mxu0 0
    %59 = vmatprep.subr.bf16.mxu0 0
    %60 = vmatpush1.bf16.msra.mxu0 0
    %61 = vmatprep.subr.bf16.mxu0 0
    %62 = vmatpush1.bf16.msra.mxu0 0
    %63 = vmatprep.subr.bf16.mxu0 0
    %64 = vmatpush1.bf16.msra.mxu0 0
    %65 = vmatprep.subr.bf16.mxu0 0
    %66 = vmatpush1.bf16.msra.mxu0 0
    %67 = vmatprep.subr.bf16.mxu0 0
    %68 = vmatpush1.bf16.msra.mxu0 0
    %69 = vmatprep.subr.bf16.mxu0 0
    %70 = vmatpush1.bf16.msra.mxu0 0
    %71 = vmatprep.subr.bf16.mxu0 0
    %72 = vmatpush1.bf16.msra.mxu0 0
    %73 = vmatprep.subr.bf16.mxu0 0
    %74 = vmatpush1.bf16.msra.mxu0 0
    %75 = vmatprep.subr.bf16.mxu0 0
    %76 = vmatpush1.bf16.msra.mxu0 0
    %77 = vmatprep.subr.bf16.mxu0 0
    %78 = vmatpush1.bf16.msra.mxu0 0
    %79 = vmatprep.subr.bf16.mxu0 0
    %80 = vmatpush1.bf16.msra.mxu0 0
    %81 = vmatprep.subr.bf16.mxu0 0
    %82 = vmatpush1.bf16.msra.mxu0 0
    %83 = vmatprep.mubr.bf16.mxu0 0
    %84 = vmatmul.mubr.bf16.gmra.mrb[0].mxu0 %v45
    %v85 = vpop.f32.mrb[0].mxu0
    %v86 = vadd.f32 0.0, %v85
    %v87 = vpop.f32.mrb[0].mxu0
    %v88 = vpop.f32.mrb[0].mxu0
    %v89 = vpop.f32.mrb[0].mxu0
    %90 = vdwg.mxu0
    %v91 = vpack.c.bf16 %v86, %v86
    %92 = vst [vmem:[#allocation7] sm:$0xf] %v91
    %93 = vadd.xlane.f32.xlu0 %v86
    %v94 = vpop.xlane.xlu0 %93
    %vm95 = vcmask 7168
    %96 = vst.msk [vmem:[#allocation8] sm:$0xff] %vm95, %v94
    %v97 = vmul.f32 %v86, %v86
    %98 = vadd.xlane.f32.xlu0 %v97
    %v99 = vpop.xlane.xlu0 %98
    %100 = vst.msk [vmem:[#allocation10] sm:$0xff] %vm95, %v99
    // Predicated region
    $region18: #{hdc_net_forward.171} parent=1 // pred_check
      _
    $region19: #{hdc_net_forward.171} parent=1 // pred_check_branch
      %102 = sbr.rel (0) target = $region21
    $region20: #{hdc_net_forward.171} parent=1 // pred_region
      %s104 = ssub.s32 64, 64
      %105 = vsyncadd [#allocation4], %s104
      %s107 = sshll.u32 [#allocation7], 4
      %s108 = int_to_ptr.vmem [resolvable:$true] %s107
      %110 = dma.vmem_to_hbm [thread:$0]  %s108, 64, %s2, [#allocation4]
    $region21: #{hdc_net_forward.171} parent=1 // pred_fallthru
      _
    // Predicated region
    $region22: #{hdc_net_forward.171} parent=1 // pred_check
      _
    $region23: #{hdc_net_forward.171} parent=1 // pred_check_branch
      %112 = sbr.rel (0) target = $region25
    $region24: #{hdc_net_forward.171} parent=1 // pred_region
      %s114 = ssub.s32 128, 128
      %115 = vsyncadd [#allocation9], %s114
      %s117 = sshll.u32 [#allocation8], 4
      %s118 = int_to_ptr.vmem [resolvable:$true] %s117
      %120 = dma.vmem_to_hbm [thread:$0]  %s118, 128, %s3, [#allocation9]
    $region25: #{hdc_net_forward.171} parent=1 // pred_fallthru
      _
    // Predicated region
    $region26: #{hdc_net_forward.171} parent=1 // pred_check
      _
    $region27: #{hdc_net_forward.171} parent=1 // pred_check_branch
      %122 = sbr.rel (0) target = $region29
    $region28: #{hdc_net_forward.171} parent=1 // pred_region
      %s124 = ssub.s32 128, 128
      %125 = vsyncadd [#allocation9], %s124
      %s127 = sshll.u32 [#allocation10], 4
      %s128 = int_to_ptr.vmem [resolvable:$true] %s127
      %130 = dma.vmem_to_hbm [thread:$0]  %s128, 128, %s4, [#allocation9]
    $region29: #{hdc_net_forward.171} parent=1 // pred_fallthru
      _
    // Predicated region
    $region30: #{hdc_net_forward.171} parent=1 // pred_check
      _
    $region31: #{hdc_net_forward.171} parent=1 // pred_check_branch
      %132 = sbr.rel (0) target = $region33
    $region32: #{hdc_net_forward.171} parent=1 // pred_region
      %133 = dma.done [#allocation4], 64
    $region33: #{hdc_net_forward.171} parent=1 // pred_fallthru
      _
    // Predicated region
    $region34: #{hdc_net_forward.171} parent=1 // pred_check
      _
    $region35: #{hdc_net_forward.171} parent=1 // pred_check_branch
      %135 = sbr.rel (0) target = $region37
    $region36: #{hdc_net_forward.171} parent=1 // pred_region
      %136 = dma.done [#allocation9], 128
    $region37: #{hdc_net_forward.171} parent=1 // pred_fallthru
      _
    // Predicated region
    $region38: #{hdc_net_forward.171} parent=1 // pred_check
      _
    $region39: #{hdc_net_forward.171} parent=1 // pred_check_branch
      %138 = sbr.rel (0) target = $region41
    $region40: #{hdc_net_forward.171} parent=1 // pred_region
      %139 = dma.done [#allocation9], 128
    $region41: #{hdc_net_forward.171} parent=1 // pred_fallthru
      _
    %140 = vsyncpa [#allocation3], 1
    %141 = vsyncpa [#allocation6], 1
    %142 = vsyncpa [#allocation4], 1
    %143 = vsyncpa [#allocation9], 1

// kernel: hdc_net_forward.174
$region0: #{hdc_net_forward.174}
  #allocation0 [shape = 'u32[]', space=smem, size = 0x4, offset = 0x4, fixed_abs, tag = 'smem constant byte address 0x4 - core index']
  #allocation1 [shape = 'u32[144,128]{1,0:T(1,128)}', space=vmem, size = 0x12000, scoped, tag = 'internal scratch']
  %s0 = inlined_call_operand.hbm [shape: bf16[2,128], index: 0, kind: input, shape index: {}]
  %s1 = inlined_call_operand.hbm [shape: f32[2,1], index: 1, kind: input, shape index: {}]
  %s2 = inlined_call_operand.hbm [shape: f32[2,1], index: 2, kind: input, shape index: {}]
  %s3 = inlined_call_operand.hbm [shape: bf16[2,128], index: 3, kind: output, shape index: {}]
  %s4 = sld [smem:[#allocation0]]
  $region34: #{hdc_net_forward.174} parent=0
    _
  %s6 = ssub.s32 1, %s4
  %s7 = scalar_select 0, %s6, %s4
  $region1: #{hdc_net_forward.174} parent=0
    #allocation2 [shape = 'u8[512]{0}', space=vmem, size = 0x400, scoped, tag = 'input window, operand 0, single buffered']
    #allocation3 [shape = 's32[1]{0}', space=sflag, size = 0x4, scoped, tag = 'scoped memory for hdc_net_forward.174']
    #allocation4 [shape = 's32[1]{0}', space=sflag, size = 0x4, scoped, tag = 'scoped memory for hdc_net_forward.174']
    #allocation5 [shape = 'u8[1024]{0}', space=vmem, size = 0x400, scoped, tag = 'input window, operand 1, single buffered']
    #allocation6 [shape = 's32[1]{0}', space=sflag, size = 0x4, scoped, tag = 'scoped memory for hdc_net_forward.174']
    #allocation7 [shape = 'u8[1024]{0}', space=vmem, size = 0x400, scoped, tag = 'input window, operand 2, single buffered']
    #allocation8 [shape = 'u8[512]{0}', space=vmem, size = 0x400, scoped, tag = 'output window, operand 0, single buffered']
    %8 = vsyncpa [#allocation3], 0
    %9 = vsyncpa [#allocation6], 0
    %10 = vsyncpa [#allocation4], 0
    // Predicated region
    $region2: #{hdc_net_forward.174} parent=1 // pred_check
      _
    $region3: #{hdc_net_forward.174} parent=1 // pred_check_branch
      %12 = sbr.rel (0) target = $region5
    $region4: #{hdc_net_forward.174} parent=1 // pred_region
      %s14 = ssub.s32 16, 16
      %15 = vsyncadd [#allocation3], %s14
      %s17 = sshll.u32 [#allocation2], 4
      %s18 = int_to_ptr.vmem [resolvable:$true] %s17
      %20 = dma.hbm_to_vmem [thread:$0]  %s0, 16, %s18, [#allocation3]
    $region5: #{hdc_net_forward.174} parent=1 // pred_fallthru
      _
    // Predicated region
    $region6: #{hdc_net_forward.174} parent=1 // pred_check
      _
    $region7: #{hdc_net_forward.174} parent=1 // pred_check_branch
      %22 = sbr.rel (0) target = $region9
    $region8: #{hdc_net_forward.174} parent=1 // pred_region
      %s24 = ssub.s32 32, 32
      %25 = vsyncadd [#allocation6], %s24
      %s27 = sshll.u32 [#allocation5], 4
      %s28 = int_to_ptr.vmem [resolvable:$true] %s27
      %30 = dma.hbm_to_vmem [thread:$0]  %s1, 32, %s28, [#allocation6]
    $region9: #{hdc_net_forward.174} parent=1 // pred_fallthru
      _
    // Predicated region
    $region10: #{hdc_net_forward.174} parent=1 // pred_check
      _
    $region11: #{hdc_net_forward.174} parent=1 // pred_check_branch
      %32 = sbr.rel (0) target = $region13
    $region12: #{hdc_net_forward.174} parent=1 // pred_region
      %s34 = ssub.s32 32, 32
      %35 = vsyncadd [#allocation6], %s34
      %s37 = sshll.u32 [#allocation7], 4
      %s38 = int_to_ptr.vmem [resolvable:$true] %s37
      %40 = dma.hbm_to_vmem [thread:$0]  %s2, 32, %s38, [#allocation6]
    $region13: #{hdc_net_forward.174} parent=1 // pred_fallthru
      _
    // Predicated region
    $region14: #{hdc_net_forward.174} parent=1 // pred_check
      _
    $region15: #{hdc_net_forward.174} parent=1 // pred_check_branch
      %42 = sbr.rel (0) target = $region17
    $region16: #{hdc_net_forward.174} parent=1 // pred_region
      %43 = dma.done [#allocation3], 16
    $region17: #{hdc_net_forward.174} parent=1 // pred_fallthru
      _
    // Predicated region
    $region18: #{hdc_net_forward.174} parent=1 // pred_check
      _
    $region19: #{hdc_net_forward.174} parent=1 // pred_check_branch
      %45 = sbr.rel (0) target = $region21
    $region20: #{hdc_net_forward.174} parent=1 // pred_region
      %46 = dma.done [#allocation6], 32
    $region21: #{hdc_net_forward.174} parent=1 // pred_fallthru
      _
    // Predicated region
    $region22: #{hdc_net_forward.174} parent=1 // pred_check
      _
    $region23: #{hdc_net_forward.174} parent=1 // pred_check_branch
      %48 = sbr.rel (0) target = $region25
    $region24: #{hdc_net_forward.174} parent=1 // pred_region
      %49 = dma.done [#allocation6], 32
    $region25: #{hdc_net_forward.174} parent=1 // pred_fallthru
      _
    %v50 = vld [vmem:[#allocation5] sm:$0x3]
    %v51 = vmul.f32 %v50, 0.0078125
    %v52 = vld [vmem:[#allocation7] sm:$0x3]
    %v53 = vmul.f32 %v52, 0.0078125
    %v54 = vmul.f32 %v51, %v51
    %v55 = vsub.f32 %v53, %v54
    %v56 = vmax.f32 %v55, 0.0
    %v57 = vadd.f32 %v56, 1e-05
    %v58 = vrsqrt.pop %v57
    %v59 = vld [vmem:[#allocation2] sm:$0x1]
    %v60 = vunpack.c.l.bf16 %v59
    %62 = vset.pattern.permute.xlu0 0
    %63 = vperm.xlu0 %62, %v51
    %v64 = vpop.permute.xlu0 %63
    %v66 = vsub.f32 %v60, %v64
    %68 = vset.pattern.permute.xlu0 0
    %69 = vperm.xlu0 %68, %v58
    %v70 = vpop.permute.xlu0 %69
    %v72 = vmul.f32 %v66, %v70
    %v73 = vmax.f32 %v72, 0.0
    %v74 = vpack.c.bf16 %v73, %v73
    %75 = vst [vmem:[#allocation8] sm:$0x1] %v74
    // Predicated region
    $region26: #{hdc_net_forward.174} parent=1 // pred_check
      _
    $region27: #{hdc_net_forward.174} parent=1 // pred_check_branch
      %77 = sbr.rel (0) target = $region29
    $region28: #{hdc_net_forward.174} parent=1 // pred_region
      %s79 = ssub.s32 16, 16
      %80 = vsyncadd [#allocation4], %s79
      %s82 = sshll.u32 [#allocation8], 4
      %s83 = int_to_ptr.vmem [resolvable:$true] %s82
      %85 = dma.vmem_to_hbm [thread:$0]  %s83, 16, %s3, [#allocation4]
    $region29: #{hdc_net_forward.174} parent=1 // pred_fallthru
      _
    // Predicated region
    $region30: #{hdc_net_forward.174} parent=1 // pred_check
      _
    $region31: #{hdc_net_forward.174} parent=1 // pred_check_branch
      %87 = sbr.rel (0) target = $region33
    $region32: #{hdc_net_forward.174} parent=1 // pred_region
      %88 = dma.done [#allocation4], 16
    $region33: #{hdc_net_forward.174} parent=1 // pred_fallthru
      _
    %89 = vsyncpa [#allocation3], 1
    %90 = vsyncpa [#allocation6], 1
    %91 = vsyncpa [#allocation4], 1

// kernel: hdc_net_forward.173
$region0: #{hdc_net_forward.173}
  #allocation0 [shape = 'u32[]', space=smem, size = 0x4, offset = 0x4, fixed_abs, tag = 'smem constant byte address 0x4 - core index']
  #allocation1 [shape = 'u32[144,128]{1,0:T(1,128)}', space=vmem, size = 0x12000, scoped, tag = 'internal scratch']
  %s0 = inlined_call_operand.hbm [shape: bf16[18,128], index: 0, kind: input, shape index: {}]
  %s1 = inlined_call_operand.hbm [shape: bf16[2,18], index: 1, kind: input, shape index: {}]
  %s2 = inlined_call_operand.hbm [shape: bf16[2,128], index: 2, kind: output, shape index: {0}]
  %s3 = inlined_call_operand.hbm [shape: f32[1,2,1], index: 3, kind: output, shape index: {1}]
  %s4 = inlined_call_operand.hbm [shape: f32[1,2,1], index: 4, kind: output, shape index: {2}]
  %5 = xla_tuple %s2, %s3, %s4
  %s6 = sld [smem:[#allocation0]]
  $region42: #{hdc_net_forward.173} parent=0
    _
  %s8 = ssub.s32 1, %s6
  %s9 = scalar_select 0, %s8, %s6
  $region1: #{hdc_net_forward.173} parent=0
    #allocation2 [shape = 'u8[6144]{0}', space=vmem, size = 0x1800, scoped, tag = 'input window, operand 0, single buffered']
    #allocation3 [shape = 's32[1]{0}', space=sflag, size = 0x4, scoped, tag = 'scoped memory for hdc_net_forward.173']
    #allocation4 [shape = 's32[1]{0}', space=sflag, size = 0x4, scoped, tag = 'scoped memory for hdc_net_forward.173']
    #allocation5 [shape = 'u8[512]{0}', space=vmem, size = 0x400, scoped, tag = 'input window, operand 1, single buffered']
    #allocation6 [shape = 's32[1]{0}', space=sflag, size = 0x4, scoped, tag = 'scoped memory for hdc_net_forward.173']
    #allocation7 [shape = 'u8[512]{0}', space=vmem, size = 0x400, scoped, tag = 'output window, operand 0, single buffered']
    #allocation8 [shape = 'u8[1024]{0}', space=vmem, size = 0x400, scoped, tag = 'output window, operand 1, single buffered']
    #allocation9 [shape = 's32[1]{0}', space=sflag, size = 0x4, scoped, tag = 'scoped memory for hdc_net_forward.173']
    #allocation10 [shape = 'u8[1024]{0}', space=vmem, size = 0x400, scoped, tag = 'output window, operand 2, single buffered']
    %10 = vsyncpa [#allocation3], 0
    %11 = vsyncpa [#allocation6], 0
    %12 = vsyncpa [#allocation4], 0
    %13 = vsyncpa [#allocation9], 0
    // Predicated region
    $region2: #{hdc_net_forward.173} parent=1 // pred_check
      _
    $region3: #{hdc_net_forward.173} parent=1 // pred_check_branch
      %15 = sbr.rel (0) target = $region5
    $region4: #{hdc_net_forward.173} parent=1 // pred_region
      %s17 = ssub.s32 192, 192
      %18 = vsyncadd [#allocation3], %s17
      %s19 = sshll.u32 [#allocation2], 4
      %s20 = int_to_ptr.vmem [resolvable:$true] %s19
      %25 = dma.hbm_to_vmem [thread:$0]  %s0, 192, %s20, [#allocation3], 64, 64, 4
    $region5: #{hdc_net_forward.173} parent=1 // pred_fallthru
      _
    // Predicated region
    $region6: #{hdc_net_forward.173} parent=1 // pred_check
      _
    $region7: #{hdc_net_forward.173} parent=1 // pred_check_branch
      %27 = sbr.rel (0) target = $region9
    $region8: #{hdc_net_forward.173} parent=1 // pred_region
      %s29 = ssub.s32 16, 16
      %30 = vsyncadd [#allocation6], %s29
      %s32 = sshll.u32 [#allocation5], 4
      %s33 = int_to_ptr.vmem [resolvable:$true] %s32
      %35 = dma.hbm_to_vmem [thread:$0]  %s1, 16, %s33, [#allocation6]
    $region9: #{hdc_net_forward.173} parent=1 // pred_fallthru
      _
    // Predicated region
    $region10: #{hdc_net_forward.173} parent=1 // pred_check
      _
    $region11: #{hdc_net_forward.173} parent=1 // pred_check_branch
      %37 = sbr.rel (0) target = $region13
    $region12: #{hdc_net_forward.173} parent=1 // pred_region
      %38 = dma.done [#allocation3], 192
    $region13: #{hdc_net_forward.173} parent=1 // pred_fallthru
      _
    // Predicated region
    $region14: #{hdc_net_forward.173} parent=1 // pred_check
      _
    $region15: #{hdc_net_forward.173} parent=1 // pred_check_branch
      %40 = sbr.rel (0) target = $region17
    $region16: #{hdc_net_forward.173} parent=1 // pred_region
      %41 = dma.done [#allocation6], 16
    $region17: #{hdc_net_forward.173} parent=1 // pred_fallthru
      _
    %v43 = vld [vmem:[#allocation5] sm:$0x1]
    %v44 = vld [vmem:[#allocation2] sm:$0xf]
    %v45 = vld [vmem:[#allocation2 + $0x4] sm:$0xf]
    %v46 = vld [vmem:[#allocation2 + $0x8] sm:$0x1]
    %v50 = vunpack.c.l.b16 %v44
    %v51 = vunpack.c.l.b16 %v45
    %v52 = vunpack.c.l.b16 %v46
    %v53 = vpack.c.b16 %v51, %v50
    %v54 = vpack.c.b16 %v52, %v52
    %vm56 = vcmask 146432
    %v58 = vsel %vm56, %v43, 0
    %vm60 = vcmask 1040384
    %v62 = vsel %vm60, %v54, 0
    %64 = vmatprep.subr.bf16.mxu0 0
    %65 = vmatpush1.bf16.msra.mxu0 %v53
    %66 = vmatprep.subr.bf16.mxu0 0
    %67 = vmatpush1.bf16.msra.mxu0 %v62
    %68 = vmatprep.subr.bf16.mxu0 0
    %69 = vmatpush1.bf16.msra.mxu0 0
    %70 = vmatprep.subr.bf16.mxu0 0
    %71 = vmatpush1.bf16.msra.mxu0 0
    %72 = vmatprep.subr.bf16.mxu0 0
    %73 = vmatpush1.bf16.msra.mxu0 0
    %74 = vmatprep.subr.bf16.mxu0 0
    %75 = vmatpush1.bf16.msra.mxu0 0
    %76 = vmatprep.subr.bf16.mxu0 0
    %77 = vmatpush1.bf16.msra.mxu0 0
    %78 = vmatprep.subr.bf16.mxu0 0
    %79 = vmatpush1.bf16.msra.mxu0 0
    %80 = vmatprep.subr.bf16.mxu0 0
    %81 = vmatpush1.bf16.msra.mxu0 0
    %82 = vmatprep.subr.bf16.mxu0 0
    %83 = vmatpush1.bf16.msra.mxu0 0
    %84 = vmatprep.subr.bf16.mxu0 0
    %85 = vmatpush1.bf16.msra.mxu0 0
    %86 = vmatprep.subr.bf16.mxu0 0
    %87 = vmatpush1.bf16.msra.mxu0 0
    %88 = vmatprep.subr.bf16.mxu0 0
    %89 = vmatpush1.bf16.msra.mxu0 0
    %90 = vmatprep.subr.bf16.mxu0 0
    %91 = vmatpush1.bf16.msra.mxu0 0
    %92 = vmatprep.subr.bf16.mxu0 0
    %93 = vmatpush1.bf16.msra.mxu0 0
    %94 = vmatprep.subr.bf16.mxu0 0
    %95 = vmatpush1.bf16.msra.mxu0 0
    %96 = vmatprep.mubr.bf16.mxu0 0
    %97 = vmatmul.mubr.bf16.gmra.mrb[0].mxu0 %v58
    %v98 = vpop.f32.mrb[0].mxu0
    %v99 = vadd.f32 0.0, %v98
    %v100 = vpop.f32.mrb[0].mxu0
    %v101 = vpop.f32.mrb[0].mxu0
    %v102 = vpop.f32.mrb[0].mxu0
    %103 = vdwg.mxu0
    %v104 = vpack.c.bf16 %v99, %v99
    %105 = vst [vmem:[#allocation7] sm:$0x1] %v104
    %vm106 = vcmask 1041408
    %v107 = vsel %vm106, %v99, 0.0
    %108 = vadd.xlane.f32.xlu0 %v107
    %v109 = vpop.xlane.xlu0 %108
    %vm110 = vcmask 1024
    %111 = vst.msk [vmem:[#allocation8] sm:$0x3] %vm110, %v109
    %v112 = vmul.f32 %v99, %v99
    %v113 = vsel %vm106, %v112, 0.0
    %114 = vadd.xlane.f32.xlu0 %v113
    %v115 = vpop.xlane.xlu0 %114
    %116 = vst.msk [vmem:[#allocation10] sm:$0x3] %vm110, %v115
    // Predicated region
    $region18: #{hdc_net_forward.173} parent=1 // pred_check
      _
    $region19: #{hdc_net_forward.173} parent=1 // pred_check_branch
      %118 = sbr.rel (0) target = $region21
    $region20: #{hdc_net_forward.173} parent=1 // pred_region
      %s120 = ssub.s32 16, 16
      %121 = vsyncadd [#allocation4], %s120
      %s123 = sshll.u32 [#allocation7], 4
      %s124 = int_to_ptr.vmem [resolvable:$true] %s123
      %126 = dma.vmem_to_hbm [thread:$0]  %s124, 16, %s2, [#allocation4]
    $region21: #{hdc_net_forward.173} parent=1 // pred_fallthru
      _
    // Predicated region
    $region22: #{hdc_net_forward.173} parent=1 // pred_check
      _
    $region23: #{hdc_net_forward.173} parent=1 // pred_check_branch
      %128 = sbr.rel (0) target = $region25
    $region24: #{hdc_net_forward.173} parent=1 // pred_region
      %s130 = ssub.s32 32, 32
      %131 = vsyncadd [#allocation9], %s130
      %s133 = sshll.u32 [#allocation8], 4
      %s134 = int_to_ptr.vmem [resolvable:$true] %s133
      %136 = dma.vmem_to_hbm [thread:$0]  %s134, 32, %s3, [#allocation9]
    $region25: #{hdc_net_forward.173} parent=1 // pred_fallthru
      _
    // Predicated region
    $region26: #{hdc_net_forward.173} parent=1 // pred_check
      _
    $region27: #{hdc_net_forward.173} parent=1 // pred_check_branch
      %138 = sbr.rel (0) target = $region29
    $region28: #{hdc_net_forward.173} parent=1 // pred_region
      %s140 = ssub.s32 32, 32
      %141 = vsyncadd [#allocation9], %s140
      %s143 = sshll.u32 [#allocation10], 4
      %s144 = int_to_ptr.vmem [resolvable:$true] %s143
      %146 = dma.vmem_to_hbm [thread:$0]  %s144, 32, %s4, [#allocation9]
    $region29: #{hdc_net_forward.173} parent=1 // pred_fallthru
      _
    // Predicated region
    $region30: #{hdc_net_forward.173} parent=1 // pred_check
      _
    $region31: #{hdc_net_forward.173} parent=1 // pred_check_branch
      %148 = sbr.rel (0) target = $region33
    $region32: #{hdc_net_forward.173} parent=1 // pred_region
      %149 = dma.done [#allocation4], 16
    $region33: #{hdc_net_forward.173} parent=1 // pred_fallthru
      _
    // Predicated region
    $region34: #{hdc_net_forward.173} parent=1 // pred_check
      _
    $region35: #{hdc_net_forward.173} parent=1 // pred_check_branch
      %151 = sbr.rel (0) target = $region37
    $region36: #{hdc_net_forward.173} parent=1 // pred_region
      %152 = dma.done [#allocation9], 32
    $region37: #{hdc_net_forward.173} parent=1 // pred_fallthru
      _
    // Predicated region
    $region38: #{hdc_net_forward.173} parent=1 // pred_check
      _
    $region39: #{hdc_net_forward.173} parent=1 // pred_check_branch
      %154 = sbr.rel (0) target = $region41
    $region40: #{hdc_net_forward.173} parent=1 // pred_region
      %155 = dma.done [#allocation9], 32
    $region41: #{hdc_net_forward.173} parent=1 // pred_fallthru
      _
    %156 = vsyncpa [#allocation3], 1
    %157 = vsyncpa [#allocation6], 1
    %158 = vsyncpa [#allocation4], 1
    %159 = vsyncpa [#allocation9], 1

// kernel: hdc_net_forward.188
$region0: #{hdc_net_forward.188}
  #allocation0 [shape = 'u32[]', space=smem, size = 0x4, offset = 0x4, fixed_abs, tag = 'smem constant byte address 0x4 - core index']
  #allocation1 [shape = 'u32[144,128]{1,0:T(1,128)}', space=vmem, size = 0x12000, scoped, tag = 'internal scratch']
  %s0 = inlined_call_operand.hbm [shape: bf16[8,128], index: 0, kind: input, shape index: {}]
  %s1 = inlined_call_operand.hbm [shape: f32[8,1], index: 1, kind: input, shape index: {}]
  %s2 = inlined_call_operand.hbm [shape: f32[8,1], index: 2, kind: input, shape index: {}]
  %s3 = inlined_call_operand.hbm [shape: bf16[8,128], index: 3, kind: input, shape index: {}]
  %s4 = inlined_call_operand.hbm [shape: bf16[8,128], index: 4, kind: output, shape index: {}]
  %s5 = sld [smem:[#allocation0]]
  $region42: #{hdc_net_forward.188} parent=0
    _
  %s7 = ssub.s32 1, %s5
  %s8 = scalar_select 0, %s7, %s5
  $region1: #{hdc_net_forward.188} parent=0
    #allocation2 [shape = 'u8[2048]{0}', space=vmem, size = 0x800, scoped, tag = 'input window, operand 0, single buffered']
    #allocation3 [shape = 's32[1]{0}', space=sflag, size = 0x4, scoped, tag = 'scoped memory for hdc_net_forward.188']
    #allocation4 [shape = 's32[1]{0}', space=sflag, size = 0x4, scoped, tag = 'scoped memory for hdc_net_forward.188']
    #allocation5 [shape = 'u8[4096]{0}', space=vmem, size = 0x1000, scoped, tag = 'input window, operand 1, single buffered']
    #allocation6 [shape = 's32[1]{0}', space=sflag, size = 0x4, scoped, tag = 'scoped memory for hdc_net_forward.188']
    #allocation7 [shape = 'u8[4096]{0}', space=vmem, size = 0x1000, scoped, tag = 'input window, operand 2, single buffered']
    #allocation8 [shape = 'u8[2048]{0}', space=vmem, size = 0x800, scoped, tag = 'input window, operand 3, single buffered']
    #allocation9 [shape = 's32[1]{0}', space=sflag, size = 0x4, scoped, tag = 'scoped memory for hdc_net_forward.188']
    #allocation10 [shape = 'u8[2048]{0}', space=vmem, size = 0x800, scoped, tag = 'output window, operand 0, single buffered']
    %9 = vsyncpa [#allocation3], 0
    %10 = vsyncpa [#allocation6], 0
    %11 = vsyncpa [#allocation9], 0
    %12 = vsyncpa [#allocation4], 0
    // Predicated region
    $region2: #{hdc_net_forward.188} parent=1 // pred_check
      _
    $region3: #{hdc_net_forward.188} parent=1 // pred_check_branch
      %14 = sbr.rel (0) target = $region5
    $region4: #{hdc_net_forward.188} parent=1 // pred_region
      %s16 = ssub.s32 64, 64
      %17 = vsyncadd [#allocation3], %s16
      %s19 = sshll.u32 [#allocation2], 4
      %s20 = int_to_ptr.vmem [resolvable:$true] %s19
      %22 = dma.hbm_to_vmem [thread:$0]  %s0, 64, %s20, [#allocation3]
    $region5: #{hdc_net_forward.188} parent=1 // pred_fallthru
      _
    // Predicated region
    $region6: #{hdc_net_forward.188} parent=1 // pred_check
      _
    $region7: #{hdc_net_forward.188} parent=1 // pred_check_branch
      %24 = sbr.rel (0) target = $region9
    $region8: #{hdc_net_forward.188} parent=1 // pred_region
      %s26 = ssub.s32 128, 128
      %27 = vsyncadd [#allocation6], %s26
      %s29 = sshll.u32 [#allocation5], 4
      %s30 = int_to_ptr.vmem [resolvable:$true] %s29
      %32 = dma.hbm_to_vmem [thread:$0]  %s1, 128, %s30, [#allocation6]
    $region9: #{hdc_net_forward.188} parent=1 // pred_fallthru
      _
    // Predicated region
    $region10: #{hdc_net_forward.188} parent=1 // pred_check
      _
    $region11: #{hdc_net_forward.188} parent=1 // pred_check_branch
      %34 = sbr.rel (0) target = $region13
    $region12: #{hdc_net_forward.188} parent=1 // pred_region
      %s36 = ssub.s32 128, 128
      %37 = vsyncadd [#allocation6], %s36
      %s39 = sshll.u32 [#allocation7], 4
      %s40 = int_to_ptr.vmem [resolvable:$true] %s39
      %42 = dma.hbm_to_vmem [thread:$0]  %s2, 128, %s40, [#allocation6]
    $region13: #{hdc_net_forward.188} parent=1 // pred_fallthru
      _
    // Predicated region
    $region14: #{hdc_net_forward.188} parent=1 // pred_check
      _
    $region15: #{hdc_net_forward.188} parent=1 // pred_check_branch
      %44 = sbr.rel (0) target = $region17
    $region16: #{hdc_net_forward.188} parent=1 // pred_region
      %s46 = ssub.s32 64, 64
      %47 = vsyncadd [#allocation9], %s46
      %s49 = sshll.u32 [#allocation8], 4
      %s50 = int_to_ptr.vmem [resolvable:$true] %s49
      %52 = dma.hbm_to_vmem [thread:$0]  %s3, 64, %s50, [#allocation9]
    $region17: #{hdc_net_forward.188} parent=1 // pred_fallthru
      _
    // Predicated region
    $region18: #{hdc_net_forward.188} parent=1 // pred_check
      _
    $region19: #{hdc_net_forward.188} parent=1 // pred_check_branch
      %54 = sbr.rel (0) target = $region21
    $region20: #{hdc_net_forward.188} parent=1 // pred_region
      %55 = dma.done [#allocation3], 64
    $region21: #{hdc_net_forward.188} parent=1 // pred_fallthru
      _
    // Predicated region
    $region22: #{hdc_net_forward.188} parent=1 // pred_check
      _
    $region23: #{hdc_net_forward.188} parent=1 // pred_check_branch
      %57 = sbr.rel (0) target = $region25
    $region24: #{hdc_net_forward.188} parent=1 // pred_region
      %58 = dma.done [#allocation6], 128
    $region25: #{hdc_net_forward.188} parent=1 // pred_fallthru
      _
    // Predicated region
    $region26: #{hdc_net_forward.188} parent=1 // pred_check
      _
    $region27: #{hdc_net_forward.188} parent=1 // pred_check_branch
      %60 = sbr.rel (0) target = $region29
    $region28: #{hdc_net_forward.188} parent=1 // pred_region
      %61 = dma.done [#allocation6], 128
    $region29: #{hdc_net_forward.188} parent=1 // pred_fallthru
      _
    // Predicated region
    $region30: #{hdc_net_forward.188} parent=1 // pred_check
      _
    $region31: #{hdc_net_forward.188} parent=1 // pred_check_branch
      %63 = sbr.rel (0) target = $region33
    $region32: #{hdc_net_forward.188} parent=1 // pred_region
      %64 = dma.done [#allocation9], 64
    $region33: #{hdc_net_forward.188} parent=1 // pred_fallthru
      _
    %v65 = vld [vmem:[#allocation5] sm:$0xff]
    %v66 = vmul.f32 %v65, 0.0078125
    %v67 = vld [vmem:[#allocation7] sm:$0xff]
    %v68 = vmul.f32 %v67, 0.0078125
    %v69 = vmul.f32 %v66, %v66
    %v70 = vsub.f32 %v68, %v69
    %v71 = vmax.f32 %v70, 0.0
    %v72 = vadd.f32 %v71, 1e-05
    %v73 = vrsqrt.pop %v72
    %v74 = vld [vmem:[#allocation2] sm:$0xf]
    %v75 = vunpack.c.l.bf16 %v74
    %77 = vset.pattern.permute.xlu0 0
    %78 = vperm.xlu0 %77, %v66
    %v79 = vpop.permute.xlu0 %78
    %v81 = vsub.f32 %v75, %v79
    %83 = vset.pattern.permute.xlu0 0
    %84 = vperm.xlu0 %83, %v73
    %v85 = vpop.permute.xlu0 %84
    %v87 = vmul.f32 %v81, %v85
    %v88 = vmax.f32 %v87, 0.0
    %v89 = vld [vmem:[#allocation8] sm:$0xf]
    %v90 = vunpack.c.l.bf16 %v89
    %v91 = vadd.f32 %v88, %v90
    %v92 = vpack.c.bf16 %v91, %v91
    %93 = vst [vmem:[#allocation10] sm:$0xf] %v92
    // Predicated region
    $region34: #{hdc_net_forward.188} parent=1 // pred_check
      _
    $region35: #{hdc_net_forward.188} parent=1 // pred_check_branch
      %95 = sbr.rel (0) target = $region37
    $region36: #{hdc_net_forward.188} parent=1 // pred_region
      %s97 = ssub.s32 64, 64
      %98 = vsyncadd [#allocation4], %s97
      %s100 = sshll.u32 [#allocation10], 4
      %s101 = int_to_ptr.vmem [resolvable:$true] %s100
      %103 = dma.vmem_to_hbm [thread:$0]  %s101, 64, %s4, [#allocation4]
    $region37: #{hdc_net_forward.188} parent=1 // pred_fallthru
      _
    // Predicated region
    $region38: #{hdc_net_forward.188} parent=1 // pred_check
      _
    $region39: #{hdc_net_forward.188} parent=1 // pred_check_branch
      %105 = sbr.rel (0) target = $region41
    $region40: #{hdc_net_forward.188} parent=1 // pred_region
      %106 = dma.done [#allocation4], 64
    $region41: #{hdc_net_forward.188} parent=1 // pred_fallthru
      _
    %107 = vsyncpa [#allocation3], 1
    %108 = vsyncpa [#allocation6], 1
    %109 = vsyncpa [#allocation9], 1
    %110 = vsyncpa [#allocation4], 1

// kernel: hdc_net_forward.190
$region0: #{hdc_net_forward.190}
  #allocation0 [shape = 'u32[]', space=smem, size = 0x4, offset = 0x4, fixed_abs, tag = 'smem constant byte address 0x4 - core index']
  #allocation1 [shape = 'u32[144,128]{1,0:T(1,128)}', space=vmem, size = 0x12000, scoped, tag = 'internal scratch']
  %s0 = inlined_call_operand.hbm [shape: bf16[8,128], index: 0, kind: input, shape index: {}]
  %s1 = inlined_call_operand.hbm [shape: f32[8,1], index: 1, kind: input, shape index: {}]
  %s2 = inlined_call_operand.hbm [shape: f32[8,1], index: 2, kind: input, shape index: {}]
  %s3 = inlined_call_operand.hbm [shape: bf16[8,128], index: 3, kind: output, shape index: {}]
  %s4 = sld [smem:[#allocation0]]
  $region34: #{hdc_net_forward.190} parent=0
    _
  %s6 = ssub.s32 1, %s4
  %s7 = scalar_select 0, %s6, %s4
  $region1: #{hdc_net_forward.190} parent=0
    #allocation2 [shape = 'u8[2048]{0}', space=vmem, size = 0x800, scoped, tag = 'input window, operand 0, single buffered']
    #allocation3 [shape = 's32[1]{0}', space=sflag, size = 0x4, scoped, tag = 'scoped memory for hdc_net_forward.190']
    #allocation4 [shape = 's32[1]{0}', space=sflag, size = 0x4, scoped, tag = 'scoped memory for hdc_net_forward.190']
    #allocation5 [shape = 'u8[4096]{0}', space=vmem, size = 0x1000, scoped, tag = 'input window, operand 1, single buffered']
    #allocation6 [shape = 's32[1]{0}', space=sflag, size = 0x4, scoped, tag = 'scoped memory for hdc_net_forward.190']
    #allocation7 [shape = 'u8[4096]{0}', space=vmem, size = 0x1000, scoped, tag = 'input window, operand 2, single buffered']
    #allocation8 [shape = 'u8[2048]{0}', space=vmem, size = 0x800, scoped, tag = 'output window, operand 0, single buffered']
    %8 = vsyncpa [#allocation3], 0
    %9 = vsyncpa [#allocation6], 0
    %10 = vsyncpa [#allocation4], 0
    // Predicated region
    $region2: #{hdc_net_forward.190} parent=1 // pred_check
      _
    $region3: #{hdc_net_forward.190} parent=1 // pred_check_branch
      %12 = sbr.rel (0) target = $region5
    $region4: #{hdc_net_forward.190} parent=1 // pred_region
      %s14 = ssub.s32 64, 64
      %15 = vsyncadd [#allocation3], %s14
      %s17 = sshll.u32 [#allocation2], 4
      %s18 = int_to_ptr.vmem [resolvable:$true] %s17
      %20 = dma.hbm_to_vmem [thread:$0]  %s0, 64, %s18, [#allocation3]
    $region5: #{hdc_net_forward.190} parent=1 // pred_fallthru
      _
    // Predicated region
    $region6: #{hdc_net_forward.190} parent=1 // pred_check
      _
    $region7: #{hdc_net_forward.190} parent=1 // pred_check_branch
      %22 = sbr.rel (0) target = $region9
    $region8: #{hdc_net_forward.190} parent=1 // pred_region
      %s24 = ssub.s32 128, 128
      %25 = vsyncadd [#allocation6], %s24
      %s27 = sshll.u32 [#allocation5], 4
      %s28 = int_to_ptr.vmem [resolvable:$true] %s27
      %30 = dma.hbm_to_vmem [thread:$0]  %s1, 128, %s28, [#allocation6]
    $region9: #{hdc_net_forward.190} parent=1 // pred_fallthru
      _
    // Predicated region
    $region10: #{hdc_net_forward.190} parent=1 // pred_check
      _
    $region11: #{hdc_net_forward.190} parent=1 // pred_check_branch
      %32 = sbr.rel (0) target = $region13
    $region12: #{hdc_net_forward.190} parent=1 // pred_region
      %s34 = ssub.s32 128, 128
      %35 = vsyncadd [#allocation6], %s34
      %s37 = sshll.u32 [#allocation7], 4
      %s38 = int_to_ptr.vmem [resolvable:$true] %s37
      %40 = dma.hbm_to_vmem [thread:$0]  %s2, 128, %s38, [#allocation6]
    $region13: #{hdc_net_forward.190} parent=1 // pred_fallthru
      _
    // Predicated region
    $region14: #{hdc_net_forward.190} parent=1 // pred_check
      _
    $region15: #{hdc_net_forward.190} parent=1 // pred_check_branch
      %42 = sbr.rel (0) target = $region17
    $region16: #{hdc_net_forward.190} parent=1 // pred_region
      %43 = dma.done [#allocation3], 64
    $region17: #{hdc_net_forward.190} parent=1 // pred_fallthru
      _
    // Predicated region
    $region18: #{hdc_net_forward.190} parent=1 // pred_check
      _
    $region19: #{hdc_net_forward.190} parent=1 // pred_check_branch
      %45 = sbr.rel (0) target = $region21
    $region20: #{hdc_net_forward.190} parent=1 // pred_region
      %46 = dma.done [#allocation6], 128
    $region21: #{hdc_net_forward.190} parent=1 // pred_fallthru
      _
    // Predicated region
    $region22: #{hdc_net_forward.190} parent=1 // pred_check
      _
    $region23: #{hdc_net_forward.190} parent=1 // pred_check_branch
      %48 = sbr.rel (0) target = $region25
    $region24: #{hdc_net_forward.190} parent=1 // pred_region
      %49 = dma.done [#allocation6], 128
    $region25: #{hdc_net_forward.190} parent=1 // pred_fallthru
      _
    %v50 = vld [vmem:[#allocation5] sm:$0xff]
    %v51 = vmul.f32 %v50, 0.0625
    %v52 = vld [vmem:[#allocation7] sm:$0xff]
    %v53 = vmul.f32 %v52, 0.0625
    %v54 = vmul.f32 %v51, %v51
    %v55 = vsub.f32 %v53, %v54
    %v56 = vmax.f32 %v55, 0.0
    %v57 = vadd.f32 %v56, 1e-05
    %v58 = vrsqrt.pop %v57
    %v59 = vld [vmem:[#allocation2] sm:$0xf]
    %v60 = vunpack.c.l.bf16 %v59
    %62 = vset.pattern.permute.xlu0 0
    %63 = vperm.xlu0 %62, %v51
    %v64 = vpop.permute.xlu0 %63
    %v66 = vsub.f32 %v60, %v64
    %68 = vset.pattern.permute.xlu0 0
    %69 = vperm.xlu0 %68, %v58
    %v70 = vpop.permute.xlu0 %69
    %v72 = vmul.f32 %v66, %v70
    %v73 = vmax.f32 %v72, 0.0
    %v74 = vpack.c.bf16 %v73, %v73
    %75 = vst [vmem:[#allocation8] sm:$0xf] %v74
    // Predicated region
    $region26: #{hdc_net_forward.190} parent=1 // pred_check
      _
    $region27: #{hdc_net_forward.190} parent=1 // pred_check_branch
      %77 = sbr.rel (0) target = $region29
    $region28: #{hdc_net_forward.190} parent=1 // pred_region
      %s79 = ssub.s32 64, 64
      %80 = vsyncadd [#allocation4], %s79
      %s82 = sshll.u32 [#allocation8], 4
      %s83 = int_to_ptr.vmem [resolvable:$true] %s82
      %85 = dma.vmem_to_hbm [thread:$0]  %s83, 64, %s3, [#allocation4]
    $region29: #{hdc_net_forward.190} parent=1 // pred_fallthru
      _
    // Predicated region
    $region30: #{hdc_net_forward.190} parent=1 // pred_check
      _
    $region31: #{hdc_net_forward.190} parent=1 // pred_check_branch
      %87 = sbr.rel (0) target = $region33
    $region32: #{hdc_net_forward.190} parent=1 // pred_region
      %88 = dma.done [#allocation4], 64
    $region33: #{hdc_net_forward.190} parent=1 // pred_fallthru
      _
    %89 = vsyncpa [#allocation3], 1
    %90 = vsyncpa [#allocation6], 1
    %91 = vsyncpa [#allocation4], 1

// kernel: hdc_net_forward.194
$region0: #{hdc_net_forward.194}
  #allocation0 [shape = 'u32[]', space=smem, size = 0x4, offset = 0x4, fixed_abs, tag = 'smem constant byte address 0x4 - core index']
  #allocation1 [shape = 'u32[144,128]{1,0:T(1,128)}', space=vmem, size = 0x12000, scoped, tag = 'internal scratch']
  %s0 = inlined_call_operand.hbm [shape: bf16[2,128], index: 0, kind: input, shape index: {}]
  %s1 = inlined_call_operand.hbm [shape: f32[2,1], index: 1, kind: input, shape index: {}]
  %s2 = inlined_call_operand.hbm [shape: f32[2,1], index: 2, kind: input, shape index: {}]
  %s3 = inlined_call_operand.hbm [shape: bf16[2,128], index: 3, kind: output, shape index: {}]
  %s4 = sld [smem:[#allocation0]]
  $region34: #{hdc_net_forward.194} parent=0
    _
  %s6 = ssub.s32 1, %s4
  %s7 = scalar_select 0, %s6, %s4
  $region1: #{hdc_net_forward.194} parent=0
    #allocation2 [shape = 'u8[512]{0}', space=vmem, size = 0x400, scoped, tag = 'input window, operand 0, single buffered']
    #allocation3 [shape = 's32[1]{0}', space=sflag, size = 0x4, scoped, tag = 'scoped memory for hdc_net_forward.194']
    #allocation4 [shape = 's32[1]{0}', space=sflag, size = 0x4, scoped, tag = 'scoped memory for hdc_net_forward.194']
    #allocation5 [shape = 'u8[1024]{0}', space=vmem, size = 0x400, scoped, tag = 'input window, operand 1, single buffered']
    #allocation6 [shape = 's32[1]{0}', space=sflag, size = 0x4, scoped, tag = 'scoped memory for hdc_net_forward.194']
    #allocation7 [shape = 'u8[1024]{0}', space=vmem, size = 0x400, scoped, tag = 'input window, operand 2, single buffered']
    #allocation8 [shape = 'u8[512]{0}', space=vmem, size = 0x400, scoped, tag = 'output window, operand 0, single buffered']
    %8 = vsyncpa [#allocation3], 0
    %9 = vsyncpa [#allocation6], 0
    %10 = vsyncpa [#allocation4], 0
    // Predicated region
    $region2: #{hdc_net_forward.194} parent=1 // pred_check
      _
    $region3: #{hdc_net_forward.194} parent=1 // pred_check_branch
      %12 = sbr.rel (0) target = $region5
    $region4: #{hdc_net_forward.194} parent=1 // pred_region
      %s14 = ssub.s32 16, 16
      %15 = vsyncadd [#allocation3], %s14
      %s17 = sshll.u32 [#allocation2], 4
      %s18 = int_to_ptr.vmem [resolvable:$true] %s17
      %20 = dma.hbm_to_vmem [thread:$0]  %s0, 16, %s18, [#allocation3]
    $region5: #{hdc_net_forward.194} parent=1 // pred_fallthru
      _
    // Predicated region
    $region6: #{hdc_net_forward.194} parent=1 // pred_check
      _
    $region7: #{hdc_net_forward.194} parent=1 // pred_check_branch
      %22 = sbr.rel (0) target = $region9
    $region8: #{hdc_net_forward.194} parent=1 // pred_region
      %s24 = ssub.s32 32, 32
      %25 = vsyncadd [#allocation6], %s24
      %s27 = sshll.u32 [#allocation5], 4
      %s28 = int_to_ptr.vmem [resolvable:$true] %s27
      %30 = dma.hbm_to_vmem [thread:$0]  %s1, 32, %s28, [#allocation6]
    $region9: #{hdc_net_forward.194} parent=1 // pred_fallthru
      _
    // Predicated region
    $region10: #{hdc_net_forward.194} parent=1 // pred_check
      _
    $region11: #{hdc_net_forward.194} parent=1 // pred_check_branch
      %32 = sbr.rel (0) target = $region13
    $region12: #{hdc_net_forward.194} parent=1 // pred_region
      %s34 = ssub.s32 32, 32
      %35 = vsyncadd [#allocation6], %s34
      %s37 = sshll.u32 [#allocation7], 4
      %s38 = int_to_ptr.vmem [resolvable:$true] %s37
      %40 = dma.hbm_to_vmem [thread:$0]  %s2, 32, %s38, [#allocation6]
    $region13: #{hdc_net_forward.194} parent=1 // pred_fallthru
      _
    // Predicated region
    $region14: #{hdc_net_forward.194} parent=1 // pred_check
      _
    $region15: #{hdc_net_forward.194} parent=1 // pred_check_branch
      %42 = sbr.rel (0) target = $region17
    $region16: #{hdc_net_forward.194} parent=1 // pred_region
      %43 = dma.done [#allocation3], 16
    $region17: #{hdc_net_forward.194} parent=1 // pred_fallthru
      _
    // Predicated region
    $region18: #{hdc_net_forward.194} parent=1 // pred_check
      _
    $region19: #{hdc_net_forward.194} parent=1 // pred_check_branch
      %45 = sbr.rel (0) target = $region21
    $region20: #{hdc_net_forward.194} parent=1 // pred_region
      %46 = dma.done [#allocation6], 32
    $region21: #{hdc_net_forward.194} parent=1 // pred_fallthru
      _
    // Predicated region
    $region22: #{hdc_net_forward.194} parent=1 // pred_check
      _
    $region23: #{hdc_net_forward.194} parent=1 // pred_check_branch
      %48 = sbr.rel (0) target = $region25
    $region24: #{hdc_net_forward.194} parent=1 // pred_region
      %49 = dma.done [#allocation6], 32
    $region25: #{hdc_net_forward.194} parent=1 // pred_fallthru
      _
    %v50 = vld [vmem:[#allocation5] sm:$0x3]
    %v51 = vmul.f32 %v50, 0.0625
    %v52 = vld [vmem:[#allocation7] sm:$0x3]
    %v53 = vmul.f32 %v52, 0.0625
    %v54 = vmul.f32 %v51, %v51
    %v55 = vsub.f32 %v53, %v54
    %v56 = vmax.f32 %v55, 0.0
    %v57 = vadd.f32 %v56, 1e-05
    %v58 = vrsqrt.pop %v57
    %v59 = vld [vmem:[#allocation2] sm:$0x1]
    %v60 = vunpack.c.l.bf16 %v59
    %62 = vset.pattern.permute.xlu0 0
    %63 = vperm.xlu0 %62, %v51
    %v64 = vpop.permute.xlu0 %63
    %v66 = vsub.f32 %v60, %v64
    %68 = vset.pattern.permute.xlu0 0
    %69 = vperm.xlu0 %68, %v58
    %v70 = vpop.permute.xlu0 %69
    %v72 = vmul.f32 %v66, %v70
    %v73 = vmax.f32 %v72, 0.0
    %v74 = vpack.c.bf16 %v73, %v73
    %75 = vst [vmem:[#allocation8] sm:$0x1] %v74
    // Predicated region
    $region26: #{hdc_net_forward.194} parent=1 // pred_check
      _
    $region27: #{hdc_net_forward.194} parent=1 // pred_check_branch
      %77 = sbr.rel (0) target = $region29
    $region28: #{hdc_net_forward.194} parent=1 // pred_region
      %s79 = ssub.s32 16, 16
      %80 = vsyncadd [#allocation4], %s79
      %s82 = sshll.u32 [#allocation8], 4
      %s83 = int_to_ptr.vmem [resolvable:$true] %s82
      %85 = dma.vmem_to_hbm [thread:$0]  %s83, 16, %s3, [#allocation4]
    $region29: #{hdc_net_forward.194} parent=1 // pred_fallthru
      _
    // Predicated region
    $region30: #{hdc_net_forward.194} parent=1 // pred_check
      _
    $region31: #{hdc_net_forward.194} parent=1 // pred_check_branch
      %87 = sbr.rel (0) target = $region33
    $region32: #{hdc_net_forward.194} parent=1 // pred_region
      %88 = dma.done [#allocation4], 16
    $region33: #{hdc_net_forward.194} parent=1 // pred_fallthru
      _
    %89 = vsyncpa [#allocation3], 1
    %90 = vsyncpa [#allocation6], 1
    %91 = vsyncpa [#allocation4], 1

// kernel: hdc_net_forward.208
$region0: #{hdc_net_forward.208}
  #allocation0 [shape = 'u32[]', space=smem, size = 0x4, offset = 0x4, fixed_abs, tag = 'smem constant byte address 0x4 - core index']
  #allocation1 [shape = 'u32[144,128]{1,0:T(1,128)}', space=vmem, size = 0x12000, scoped, tag = 'internal scratch']
  %s0 = inlined_call_operand.hbm [shape: bf16[8,128], index: 0, kind: input, shape index: {}]
  %s1 = inlined_call_operand.hbm [shape: f32[8,1], index: 1, kind: input, shape index: {}]
  %s2 = inlined_call_operand.hbm [shape: f32[8,1], index: 2, kind: input, shape index: {}]
  %s3 = inlined_call_operand.hbm [shape: bf16[8,128], index: 3, kind: input, shape index: {}]
  %s4 = inlined_call_operand.hbm [shape: bf16[8,128], index: 4, kind: output, shape index: {}]
  %s5 = sld [smem:[#allocation0]]
  $region42: #{hdc_net_forward.208} parent=0
    _
  %s7 = ssub.s32 1, %s5
  %s8 = scalar_select 0, %s7, %s5
  $region1: #{hdc_net_forward.208} parent=0
    #allocation2 [shape = 'u8[2048]{0}', space=vmem, size = 0x800, scoped, tag = 'input window, operand 0, single buffered']
    #allocation3 [shape = 's32[1]{0}', space=sflag, size = 0x4, scoped, tag = 'scoped memory for hdc_net_forward.208']
    #allocation4 [shape = 's32[1]{0}', space=sflag, size = 0x4, scoped, tag = 'scoped memory for hdc_net_forward.208']
    #allocation5 [shape = 'u8[4096]{0}', space=vmem, size = 0x1000, scoped, tag = 'input window, operand 1, single buffered']
    #allocation6 [shape = 's32[1]{0}', space=sflag, size = 0x4, scoped, tag = 'scoped memory for hdc_net_forward.208']
    #allocation7 [shape = 'u8[4096]{0}', space=vmem, size = 0x1000, scoped, tag = 'input window, operand 2, single buffered']
    #allocation8 [shape = 'u8[2048]{0}', space=vmem, size = 0x800, scoped, tag = 'input window, operand 3, single buffered']
    #allocation9 [shape = 's32[1]{0}', space=sflag, size = 0x4, scoped, tag = 'scoped memory for hdc_net_forward.208']
    #allocation10 [shape = 'u8[2048]{0}', space=vmem, size = 0x800, scoped, tag = 'output window, operand 0, single buffered']
    %9 = vsyncpa [#allocation3], 0
    %10 = vsyncpa [#allocation6], 0
    %11 = vsyncpa [#allocation9], 0
    %12 = vsyncpa [#allocation4], 0
    // Predicated region
    $region2: #{hdc_net_forward.208} parent=1 // pred_check
      _
    $region3: #{hdc_net_forward.208} parent=1 // pred_check_branch
      %14 = sbr.rel (0) target = $region5
    $region4: #{hdc_net_forward.208} parent=1 // pred_region
      %s16 = ssub.s32 64, 64
      %17 = vsyncadd [#allocation3], %s16
      %s19 = sshll.u32 [#allocation2], 4
      %s20 = int_to_ptr.vmem [resolvable:$true] %s19
      %22 = dma.hbm_to_vmem [thread:$0]  %s0, 64, %s20, [#allocation3]
    $region5: #{hdc_net_forward.208} parent=1 // pred_fallthru
      _
    // Predicated region
    $region6: #{hdc_net_forward.208} parent=1 // pred_check
      _
    $region7: #{hdc_net_forward.208} parent=1 // pred_check_branch
      %24 = sbr.rel (0) target = $region9
    $region8: #{hdc_net_forward.208} parent=1 // pred_region
      %s26 = ssub.s32 128, 128
      %27 = vsyncadd [#allocation6], %s26
      %s29 = sshll.u32 [#allocation5], 4
      %s30 = int_to_ptr.vmem [resolvable:$true] %s29
      %32 = dma.hbm_to_vmem [thread:$0]  %s1, 128, %s30, [#allocation6]
    $region9: #{hdc_net_forward.208} parent=1 // pred_fallthru
      _
    // Predicated region
    $region10: #{hdc_net_forward.208} parent=1 // pred_check
      _
    $region11: #{hdc_net_forward.208} parent=1 // pred_check_branch
      %34 = sbr.rel (0) target = $region13
    $region12: #{hdc_net_forward.208} parent=1 // pred_region
      %s36 = ssub.s32 128, 128
      %37 = vsyncadd [#allocation6], %s36
      %s39 = sshll.u32 [#allocation7], 4
      %s40 = int_to_ptr.vmem [resolvable:$true] %s39
      %42 = dma.hbm_to_vmem [thread:$0]  %s2, 128, %s40, [#allocation6]
    $region13: #{hdc_net_forward.208} parent=1 // pred_fallthru
      _
    // Predicated region
    $region14: #{hdc_net_forward.208} parent=1 // pred_check
      _
    $region15: #{hdc_net_forward.208} parent=1 // pred_check_branch
      %44 = sbr.rel (0) target = $region17
    $region16: #{hdc_net_forward.208} parent=1 // pred_region
      %s46 = ssub.s32 64, 64
      %47 = vsyncadd [#allocation9], %s46
      %s49 = sshll.u32 [#allocation8], 4
      %s50 = int_to_ptr.vmem [resolvable:$true] %s49
      %52 = dma.hbm_to_vmem [thread:$0]  %s3, 64, %s50, [#allocation9]
    $region17: #{hdc_net_forward.208} parent=1 // pred_fallthru
      _
    // Predicated region
    $region18: #{hdc_net_forward.208} parent=1 // pred_check
      _
    $region19: #{hdc_net_forward.208} parent=1 // pred_check_branch
      %54 = sbr.rel (0) target = $region21
    $region20: #{hdc_net_forward.208} parent=1 // pred_region
      %55 = dma.done [#allocation3], 64
    $region21: #{hdc_net_forward.208} parent=1 // pred_fallthru
      _
    // Predicated region
    $region22: #{hdc_net_forward.208} parent=1 // pred_check
      _
    $region23: #{hdc_net_forward.208} parent=1 // pred_check_branch
      %57 = sbr.rel (0) target = $region25
    $region24: #{hdc_net_forward.208} parent=1 // pred_region
      %58 = dma.done [#allocation6], 128
    $region25: #{hdc_net_forward.208} parent=1 // pred_fallthru
      _
    // Predicated region
    $region26: #{hdc_net_forward.208} parent=1 // pred_check
      _
    $region27: #{hdc_net_forward.208} parent=1 // pred_check_branch
      %60 = sbr.rel (0) target = $region29
    $region28: #{hdc_net_forward.208} parent=1 // pred_region
      %61 = dma.done [#allocation6], 128
    $region29: #{hdc_net_forward.208} parent=1 // pred_fallthru
      _
    // Predicated region
    $region30: #{hdc_net_forward.208} parent=1 // pred_check
      _
    $region31: #{hdc_net_forward.208} parent=1 // pred_check_branch
      %63 = sbr.rel (0) target = $region33
    $region32: #{hdc_net_forward.208} parent=1 // pred_region
      %64 = dma.done [#allocation9], 64
    $region33: #{hdc_net_forward.208} parent=1 // pred_fallthru
      _
    %v65 = vld [vmem:[#allocation5] sm:$0xff]
    %v66 = vmul.f32 %v65, 0.0625
    %v67 = vld [vmem:[#allocation7] sm:$0xff]
    %v68 = vmul.f32 %v67, 0.0625
    %v69 = vmul.f32 %v66, %v66
    %v70 = vsub.f32 %v68, %v69
    %v71 = vmax.f32 %v70, 0.0
    %v72 = vadd.f32 %v71, 1e-05
    %v73 = vrsqrt.pop %v72
    %v74 = vld [vmem:[#allocation2] sm:$0xf]
    %v75 = vunpack.c.l.bf16 %v74
    %77 = vset.pattern.permute.xlu0 0
    %78 = vperm.xlu0 %77, %v66
    %v79 = vpop.permute.xlu0 %78
    %v81 = vsub.f32 %v75, %v79
    %83 = vset.pattern.permute.xlu0 0
    %84 = vperm.xlu0 %83, %v73
    %v85 = vpop.permute.xlu0 %84
    %v87 = vmul.f32 %v81, %v85
    %v88 = vmax.f32 %v87, 0.0
    %v89 = vld [vmem:[#allocation8] sm:$0xf]
    %v90 = vunpack.c.l.bf16 %v89
    %v91 = vadd.f32 %v88, %v90
    %v92 = vpack.c.bf16 %v91, %v91
    %93 = vst [vmem:[#allocation10] sm:$0xf] %v92
    // Predicated region
    $region34: #{hdc_net_forward.208} parent=1 // pred_check
      _
    $region35: #{hdc_net_forward.208} parent=1 // pred_check_branch
      %95 = sbr.rel (0) target = $region37
    $region36: #{hdc_net_forward.208} parent=1 // pred_region
      %s97 = ssub.s32 64, 64
      %98 = vsyncadd [#allocation4], %s97
      %s100 = sshll.u32 [#allocation10], 4
      %s101 = int_to_ptr.vmem [resolvable:$true] %s100
      %103 = dma.vmem_to_hbm [thread:$0]  %s101, 64, %s4, [#allocation4]
    $region37: #{hdc_net_forward.208} parent=1 // pred_fallthru
      _
    // Predicated region
    $region38: #{hdc_net_forward.208} parent=1 // pred_check
      _
    $region39: #{hdc_net_forward.208} parent=1 // pred_check_branch
      %105 = sbr.rel (0) target = $region41
    $region40: #{hdc_net_forward.208} parent=1 // pred_region
      %106 = dma.done [#allocation4], 64
    $region41: #{hdc_net_forward.208} parent=1 // pred_fallthru
      _
    %107 = vsyncpa [#allocation3], 1
    %108 = vsyncpa [#allocation6], 1
    %109 = vsyncpa [#allocation9], 1
    %110 = vsyncpa [#allocation4], 1

// kernel: hdc_net_forward.210
$region0: #{hdc_net_forward.210}
  #allocation0 [shape = 'u32[]', space=smem, size = 0x4, offset = 0x4, fixed_abs, tag = 'smem constant byte address 0x4 - core index']
  #allocation1 [shape = 'u32[144,128]{1,0:T(1,128)}', space=vmem, size = 0x12000, scoped, tag = 'internal scratch']
  %s0 = inlined_call_operand.hbm [shape: bf16[8,128], index: 0, kind: input, shape index: {}]
  %s1 = inlined_call_operand.hbm [shape: f32[8,1], index: 1, kind: input, shape index: {}]
  %s2 = inlined_call_operand.hbm [shape: f32[8,1], index: 2, kind: input, shape index: {}]
  %s3 = inlined_call_operand.hbm [shape: bf16[8,128], index: 3, kind: output, shape index: {}]
  %s4 = sld [smem:[#allocation0]]
  $region34: #{hdc_net_forward.210} parent=0
    _
  %s6 = ssub.s32 1, %s4
  %s7 = scalar_select 0, %s6, %s4
  $region1: #{hdc_net_forward.210} parent=0
    #allocation2 [shape = 'u8[2048]{0}', space=vmem, size = 0x800, scoped, tag = 'input window, operand 0, single buffered']
    #allocation3 [shape = 's32[1]{0}', space=sflag, size = 0x4, scoped, tag = 'scoped memory for hdc_net_forward.210']
    #allocation4 [shape = 's32[1]{0}', space=sflag, size = 0x4, scoped, tag = 'scoped memory for hdc_net_forward.210']
    #allocation5 [shape = 'u8[4096]{0}', space=vmem, size = 0x1000, scoped, tag = 'input window, operand 1, single buffered']
    #allocation6 [shape = 's32[1]{0}', space=sflag, size = 0x4, scoped, tag = 'scoped memory for hdc_net_forward.210']
    #allocation7 [shape = 'u8[4096]{0}', space=vmem, size = 0x1000, scoped, tag = 'input window, operand 2, single buffered']
    #allocation8 [shape = 'u8[2048]{0}', space=vmem, size = 0x800, scoped, tag = 'output window, operand 0, single buffered']
    %8 = vsyncpa [#allocation3], 0
    %9 = vsyncpa [#allocation6], 0
    %10 = vsyncpa [#allocation4], 0
    // Predicated region
    $region2: #{hdc_net_forward.210} parent=1 // pred_check
      _
    $region3: #{hdc_net_forward.210} parent=1 // pred_check_branch
      %12 = sbr.rel (0) target = $region5
    $region4: #{hdc_net_forward.210} parent=1 // pred_region
      %s14 = ssub.s32 64, 64
      %15 = vsyncadd [#allocation3], %s14
      %s17 = sshll.u32 [#allocation2], 4
      %s18 = int_to_ptr.vmem [resolvable:$true] %s17
      %20 = dma.hbm_to_vmem [thread:$0]  %s0, 64, %s18, [#allocation3]
    $region5: #{hdc_net_forward.210} parent=1 // pred_fallthru
      _
    // Predicated region
    $region6: #{hdc_net_forward.210} parent=1 // pred_check
      _
    $region7: #{hdc_net_forward.210} parent=1 // pred_check_branch
      %22 = sbr.rel (0) target = $region9
    $region8: #{hdc_net_forward.210} parent=1 // pred_region
      %s24 = ssub.s32 128, 128
      %25 = vsyncadd [#allocation6], %s24
      %s27 = sshll.u32 [#allocation5], 4
      %s28 = int_to_ptr.vmem [resolvable:$true] %s27
      %30 = dma.hbm_to_vmem [thread:$0]  %s1, 128, %s28, [#allocation6]
    $region9: #{hdc_net_forward.210} parent=1 // pred_fallthru
      _
    // Predicated region
    $region10: #{hdc_net_forward.210} parent=1 // pred_check
      _
    $region11: #{hdc_net_forward.210} parent=1 // pred_check_branch
      %32 = sbr.rel (0) target = $region13
    $region12: #{hdc_net_forward.210} parent=1 // pred_region
      %s34 = ssub.s32 128, 128
      %35 = vsyncadd [#allocation6], %s34
      %s37 = sshll.u32 [#allocation7], 4
      %s38 = int_to_ptr.vmem [resolvable:$true] %s37
      %40 = dma.hbm_to_vmem [thread:$0]  %s2, 128, %s38, [#allocation6]
    $region13: #{hdc_net_forward.210} parent=1 // pred_fallthru
      _
    // Predicated region
    $region14: #{hdc_net_forward.210} parent=1 // pred_check
      _
    $region15: #{hdc_net_forward.210} parent=1 // pred_check_branch
      %42 = sbr.rel (0) target = $region17
    $region16: #{hdc_net_forward.210} parent=1 // pred_region
      %43 = dma.done [#allocation3], 64
    $region17: #{hdc_net_forward.210} parent=1 // pred_fallthru
      _
    // Predicated region
    $region18: #{hdc_net_forward.210} parent=1 // pred_check
      _
    $region19: #{hdc_net_forward.210} parent=1 // pred_check_branch
      %45 = sbr.rel (0) target = $region21
    $region20: #{hdc_net_forward.210} parent=1 // pred_region
      %46 = dma.done [#allocation6], 128
    $region21: #{hdc_net_forward.210} parent=1 // pred_fallthru
      _
    // Predicated region
    $region22: #{hdc_net_forward.210} parent=1 // pred_check
      _
    $region23: #{hdc_net_forward.210} parent=1 // pred_check_branch
      %48 = sbr.rel (0) target = $region25
    $region24: #{hdc_net_forward.210} parent=1 // pred_region
      %49 = dma.done [#allocation6], 128
    $region25: #{hdc_net_forward.210} parent=1 // pred_fallthru
      _
    %v50 = vld [vmem:[#allocation5] sm:$0xff]
    %v51 = vmul.f32 %v50, 0.5
    %v52 = vld [vmem:[#allocation7] sm:$0xff]
    %v53 = vmul.f32 %v52, 0.5
    %v54 = vmul.f32 %v51, %v51
    %v55 = vsub.f32 %v53, %v54
    %v56 = vmax.f32 %v55, 0.0
    %v57 = vadd.f32 %v56, 1e-05
    %v58 = vrsqrt.pop %v57
    %v59 = vld [vmem:[#allocation2] sm:$0xf]
    %v60 = vunpack.c.l.bf16 %v59
    %62 = vset.pattern.permute.xlu0 0
    %63 = vperm.xlu0 %62, %v51
    %v64 = vpop.permute.xlu0 %63
    %v66 = vsub.f32 %v60, %v64
    %68 = vset.pattern.permute.xlu0 0
    %69 = vperm.xlu0 %68, %v58
    %v70 = vpop.permute.xlu0 %69
    %v72 = vmul.f32 %v66, %v70
    %v73 = vmax.f32 %v72, 0.0
    %v74 = vpack.c.bf16 %v73, %v73
    %75 = vst [vmem:[#allocation8] sm:$0xf] %v74
    // Predicated region
    $region26: #{hdc_net_forward.210} parent=1 // pred_check
      _
    $region27: #{hdc_net_forward.210} parent=1 // pred_check_branch
      %77 = sbr.rel (0) target = $region29
    $region28: #{hdc_net_forward.210} parent=1 // pred_region
      %s79 = ssub.s32 64, 64
      %80 = vsyncadd [#allocation4], %s79
      %s82 = sshll.u32 [#allocation8], 4
      %s83 = int_to_ptr.vmem [resolvable:$true] %s82
      %85 = dma.vmem_to_hbm [thread:$0]  %s83, 64, %s3, [#allocation4]
    $region29: #{hdc_net_forward.210} parent=1 // pred_fallthru
      _
    // Predicated region
    $region30: #{hdc_net_forward.210} parent=1 // pred_check
      _
    $region31: #{hdc_net_forward.210} parent=1 // pred_check_branch
      %87 = sbr.rel (0) target = $region33
    $region32: #{hdc_net_forward.210} parent=1 // pred_region
      %88 = dma.done [#allocation4], 64
    $region33: #{hdc_net_forward.210} parent=1 // pred_fallthru
      _
    %89 = vsyncpa [#allocation3], 1
    %90 = vsyncpa [#allocation6], 1
    %91 = vsyncpa [#allocation4], 1

// kernel: hdc_net_forward.214
$region0: #{hdc_net_forward.214}
  #allocation0 [shape = 'u32[]', space=smem, size = 0x4, offset = 0x4, fixed_abs, tag = 'smem constant byte address 0x4 - core index']
  #allocation1 [shape = 'u32[144,128]{1,0:T(1,128)}', space=vmem, size = 0x12000, scoped, tag = 'internal scratch']
  %s0 = inlined_call_operand.hbm [shape: bf16[2,128], index: 0, kind: input, shape index: {}]
  %s1 = inlined_call_operand.hbm [shape: f32[2,1], index: 1, kind: input, shape index: {}]
  %s2 = inlined_call_operand.hbm [shape: f32[2,1], index: 2, kind: input, shape index: {}]
  %s3 = inlined_call_operand.hbm [shape: bf16[2,128], index: 3, kind: output, shape index: {}]
  %s4 = sld [smem:[#allocation0]]
  $region34: #{hdc_net_forward.214} parent=0
    _
  %s6 = ssub.s32 1, %s4
  %s7 = scalar_select 0, %s6, %s4
  $region1: #{hdc_net_forward.214} parent=0
    #allocation2 [shape = 'u8[512]{0}', space=vmem, size = 0x400, scoped, tag = 'input window, operand 0, single buffered']
    #allocation3 [shape = 's32[1]{0}', space=sflag, size = 0x4, scoped, tag = 'scoped memory for hdc_net_forward.214']
    #allocation4 [shape = 's32[1]{0}', space=sflag, size = 0x4, scoped, tag = 'scoped memory for hdc_net_forward.214']
    #allocation5 [shape = 'u8[1024]{0}', space=vmem, size = 0x400, scoped, tag = 'input window, operand 1, single buffered']
    #allocation6 [shape = 's32[1]{0}', space=sflag, size = 0x4, scoped, tag = 'scoped memory for hdc_net_forward.214']
    #allocation7 [shape = 'u8[1024]{0}', space=vmem, size = 0x400, scoped, tag = 'input window, operand 2, single buffered']
    #allocation8 [shape = 'u8[512]{0}', space=vmem, size = 0x400, scoped, tag = 'output window, operand 0, single buffered']
    %8 = vsyncpa [#allocation3], 0
    %9 = vsyncpa [#allocation6], 0
    %10 = vsyncpa [#allocation4], 0
    // Predicated region
    $region2: #{hdc_net_forward.214} parent=1 // pred_check
      _
    $region3: #{hdc_net_forward.214} parent=1 // pred_check_branch
      %12 = sbr.rel (0) target = $region5
    $region4: #{hdc_net_forward.214} parent=1 // pred_region
      %s14 = ssub.s32 16, 16
      %15 = vsyncadd [#allocation3], %s14
      %s17 = sshll.u32 [#allocation2], 4
      %s18 = int_to_ptr.vmem [resolvable:$true] %s17
      %20 = dma.hbm_to_vmem [thread:$0]  %s0, 16, %s18, [#allocation3]
    $region5: #{hdc_net_forward.214} parent=1 // pred_fallthru
      _
    // Predicated region
    $region6: #{hdc_net_forward.214} parent=1 // pred_check
      _
    $region7: #{hdc_net_forward.214} parent=1 // pred_check_branch
      %22 = sbr.rel (0) target = $region9
    $region8: #{hdc_net_forward.214} parent=1 // pred_region
      %s24 = ssub.s32 32, 32
      %25 = vsyncadd [#allocation6], %s24
      %s27 = sshll.u32 [#allocation5], 4
      %s28 = int_to_ptr.vmem [resolvable:$true] %s27
      %30 = dma.hbm_to_vmem [thread:$0]  %s1, 32, %s28, [#allocation6]
    $region9: #{hdc_net_forward.214} parent=1 // pred_fallthru
      _
    // Predicated region
    $region10: #{hdc_net_forward.214} parent=1 // pred_check
      _
    $region11: #{hdc_net_forward.214} parent=1 // pred_check_branch
      %32 = sbr.rel (0) target = $region13
    $region12: #{hdc_net_forward.214} parent=1 // pred_region
      %s34 = ssub.s32 32, 32
      %35 = vsyncadd [#allocation6], %s34
      %s37 = sshll.u32 [#allocation7], 4
      %s38 = int_to_ptr.vmem [resolvable:$true] %s37
      %40 = dma.hbm_to_vmem [thread:$0]  %s2, 32, %s38, [#allocation6]
    $region13: #{hdc_net_forward.214} parent=1 // pred_fallthru
      _
    // Predicated region
    $region14: #{hdc_net_forward.214} parent=1 // pred_check
      _
    $region15: #{hdc_net_forward.214} parent=1 // pred_check_branch
      %42 = sbr.rel (0) target = $region17
    $region16: #{hdc_net_forward.214} parent=1 // pred_region
      %43 = dma.done [#allocation3], 16
    $region17: #{hdc_net_forward.214} parent=1 // pred_fallthru
      _
    // Predicated region
    $region18: #{hdc_net_forward.214} parent=1 // pred_check
      _
    $region19: #{hdc_net_forward.214} parent=1 // pred_check_branch
      %45 = sbr.rel (0) target = $region21
    $region20: #{hdc_net_forward.214} parent=1 // pred_region
      %46 = dma.done [#allocation6], 32
    $region21: #{hdc_net_forward.214} parent=1 // pred_fallthru
      _
    // Predicated region
    $region22: #{hdc_net_forward.214} parent=1 // pred_check
      _
    $region23: #{hdc_net_forward.214} parent=1 // pred_check_branch
      %48 = sbr.rel (0) target = $region25
    $region24: #{hdc_net_forward.214} parent=1 // pred_region
      %49 = dma.done [#allocation6], 32
    $region25: #{hdc_net_forward.214} parent=1 // pred_fallthru
      _
    %v50 = vld [vmem:[#allocation5] sm:$0x3]
    %v51 = vmul.f32 %v50, 0.5
    %v52 = vld [vmem:[#allocation7] sm:$0x3]
    %v53 = vmul.f32 %v52, 0.5
    %v54 = vmul.f32 %v51, %v51
    %v55 = vsub.f32 %v53, %v54
    %v56 = vmax.f32 %v55, 0.0
    %v57 = vadd.f32 %v56, 1e-05
    %v58 = vrsqrt.pop %v57
    %v59 = vld [vmem:[#allocation2] sm:$0x1]
    %v60 = vunpack.c.l.bf16 %v59
    %62 = vset.pattern.permute.xlu0 0
    %63 = vperm.xlu0 %62, %v51
    %v64 = vpop.permute.xlu0 %63
    %v66 = vsub.f32 %v60, %v64
    %68 = vset.pattern.permute.xlu0 0
    %69 = vperm.xlu0 %68, %v58
    %v70 = vpop.permute.xlu0 %69
    %v72 = vmul.f32 %v66, %v70
    %v73 = vmax.f32 %v72, 0.0
    %v74 = vpack.c.bf16 %v73, %v73
    %75 = vst [vmem:[#allocation8] sm:$0x1] %v74
    // Predicated region
    $region26: #{hdc_net_forward.214} parent=1 // pred_check
      _
    $region27: #{hdc_net_forward.214} parent=1 // pred_check_branch
      %77 = sbr.rel (0) target = $region29
    $region28: #{hdc_net_forward.214} parent=1 // pred_region
      %s79 = ssub.s32 16, 16
      %80 = vsyncadd [#allocation4], %s79
      %s82 = sshll.u32 [#allocation8], 4
      %s83 = int_to_ptr.vmem [resolvable:$true] %s82
      %85 = dma.vmem_to_hbm [thread:$0]  %s83, 16, %s3, [#allocation4]
    $region29: #{hdc_net_forward.214} parent=1 // pred_fallthru
      _
    // Predicated region
    $region30: #{hdc_net_forward.214} parent=1 // pred_check
      _
    $region31: #{hdc_net_forward.214} parent=1 // pred_check_branch
      %87 = sbr.rel (0) target = $region33
    $region32: #{hdc_net_forward.214} parent=1 // pred_region
      %88 = dma.done [#allocation4], 16
    $region33: #{hdc_net_forward.214} parent=1 // pred_fallthru
      _
    %89 = vsyncpa [#allocation3], 1
    %90 = vsyncpa [#allocation6], 1
    %91 = vsyncpa [#allocation4], 1

// kernel: hdc_net_forward.228
$region0: #{hdc_net_forward.228}
  #allocation0 [shape = 'u32[]', space=smem, size = 0x4, offset = 0x4, fixed_abs, tag = 'smem constant byte address 0x4 - core index']
  #allocation1 [shape = 'u32[144,128]{1,0:T(1,128)}', space=vmem, size = 0x12000, scoped, tag = 'internal scratch']
  %s0 = inlined_call_operand.hbm [shape: bf16[8,128], index: 0, kind: input, shape index: {}]
  %s1 = inlined_call_operand.hbm [shape: f32[8,1], index: 1, kind: input, shape index: {}]
  %s2 = inlined_call_operand.hbm [shape: f32[8,1], index: 2, kind: input, shape index: {}]
  %s3 = inlined_call_operand.hbm [shape: bf16[8,128], index: 3, kind: input, shape index: {}]
  %s4 = inlined_call_operand.hbm [shape: bf16[8,128], index: 4, kind: output, shape index: {}]
  %s5 = sld [smem:[#allocation0]]
  $region42: #{hdc_net_forward.228} parent=0
    _
  %s7 = ssub.s32 1, %s5
  %s8 = scalar_select 0, %s7, %s5
  $region1: #{hdc_net_forward.228} parent=0
    #allocation2 [shape = 'u8[2048]{0}', space=vmem, size = 0x800, scoped, tag = 'input window, operand 0, single buffered']
    #allocation3 [shape = 's32[1]{0}', space=sflag, size = 0x4, scoped, tag = 'scoped memory for hdc_net_forward.228']
    #allocation4 [shape = 's32[1]{0}', space=sflag, size = 0x4, scoped, tag = 'scoped memory for hdc_net_forward.228']
    #allocation5 [shape = 'u8[4096]{0}', space=vmem, size = 0x1000, scoped, tag = 'input window, operand 1, single buffered']
    #allocation6 [shape = 's32[1]{0}', space=sflag, size = 0x4, scoped, tag = 'scoped memory for hdc_net_forward.228']
    #allocation7 [shape = 'u8[4096]{0}', space=vmem, size = 0x1000, scoped, tag = 'input window, operand 2, single buffered']
    #allocation8 [shape = 'u8[2048]{0}', space=vmem, size = 0x800, scoped, tag = 'input window, operand 3, single buffered']
    #allocation9 [shape = 's32[1]{0}', space=sflag, size = 0x4, scoped, tag = 'scoped memory for hdc_net_forward.228']
    #allocation10 [shape = 'u8[2048]{0}', space=vmem, size = 0x800, scoped, tag = 'output window, operand 0, single buffered']
    %9 = vsyncpa [#allocation3], 0
    %10 = vsyncpa [#allocation6], 0
    %11 = vsyncpa [#allocation9], 0
    %12 = vsyncpa [#allocation4], 0
    // Predicated region
    $region2: #{hdc_net_forward.228} parent=1 // pred_check
      _
    $region3: #{hdc_net_forward.228} parent=1 // pred_check_branch
      %14 = sbr.rel (0) target = $region5
    $region4: #{hdc_net_forward.228} parent=1 // pred_region
      %s16 = ssub.s32 64, 64
      %17 = vsyncadd [#allocation3], %s16
      %s19 = sshll.u32 [#allocation2], 4
      %s20 = int_to_ptr.vmem [resolvable:$true] %s19
      %22 = dma.hbm_to_vmem [thread:$0]  %s0, 64, %s20, [#allocation3]
    $region5: #{hdc_net_forward.228} parent=1 // pred_fallthru
      _
    // Predicated region
    $region6: #{hdc_net_forward.228} parent=1 // pred_check
      _
    $region7: #{hdc_net_forward.228} parent=1 // pred_check_branch
      %24 = sbr.rel (0) target = $region9
    $region8: #{hdc_net_forward.228} parent=1 // pred_region
      %s26 = ssub.s32 128, 128
      %27 = vsyncadd [#allocation6], %s26
      %s29 = sshll.u32 [#allocation5], 4
      %s30 = int_to_ptr.vmem [resolvable:$true] %s29
      %32 = dma.hbm_to_vmem [thread:$0]  %s1, 128, %s30, [#allocation6]
    $region9: #{hdc_net_forward.228} parent=1 // pred_fallthru
      _
    // Predicated region
    $region10: #{hdc_net_forward.228} parent=1 // pred_check
      _
    $region11: #{hdc_net_forward.228} parent=1 // pred_check_branch
      %34 = sbr.rel (0) target = $region13
    $region12: #{hdc_net_forward.228} parent=1 // pred_region
      %s36 = ssub.s32 128, 128
      %37 = vsyncadd [#allocation6], %s36
      %s39 = sshll.u32 [#allocation7], 4
      %s40 = int_to_ptr.vmem [resolvable:$true] %s39
      %42 = dma.hbm_to_vmem [thread:$0]  %s2, 128, %s40, [#allocation6]
    $region13: #{hdc_net_forward.228} parent=1 // pred_fallthru
      _
    // Predicated region
    $region14: #{hdc_net_forward.228} parent=1 // pred_check
      _
    $region15: #{hdc_net_forward.228} parent=1 // pred_check_branch
      %44 = sbr.rel (0) target = $region17
    $region16: #{hdc_net_forward.228} parent=1 // pred_region
      %s46 = ssub.s32 64, 64
      %47 = vsyncadd [#allocation9], %s46
      %s49 = sshll.u32 [#allocation8], 4
      %s50 = int_to_ptr.vmem [resolvable:$true] %s49
      %52 = dma.hbm_to_vmem [thread:$0]  %s3, 64, %s50, [#allocation9]
    $region17: #{hdc_net_forward.228} parent=1 // pred_fallthru
      _
    // Predicated region
    $region18: #{hdc_net_forward.228} parent=1 // pred_check
      _
    $region19: #{hdc_net_forward.228} parent=1 // pred_check_branch
      %54 = sbr.rel (0) target = $region21
    $region20: #{hdc_net_forward.228} parent=1 // pred_region
      %55 = dma.done [#allocation3], 64
    $region21: #{hdc_net_forward.228} parent=1 // pred_fallthru
      _
    // Predicated region
    $region22: #{hdc_net_forward.228} parent=1 // pred_check
      _
    $region23: #{hdc_net_forward.228} parent=1 // pred_check_branch
      %57 = sbr.rel (0) target = $region25
    $region24: #{hdc_net_forward.228} parent=1 // pred_region
      %58 = dma.done [#allocation6], 128
    $region25: #{hdc_net_forward.228} parent=1 // pred_fallthru
      _
    // Predicated region
    $region26: #{hdc_net_forward.228} parent=1 // pred_check
      _
    $region27: #{hdc_net_forward.228} parent=1 // pred_check_branch
      %60 = sbr.rel (0) target = $region29
    $region28: #{hdc_net_forward.228} parent=1 // pred_region
      %61 = dma.done [#allocation6], 128
    $region29: #{hdc_net_forward.228} parent=1 // pred_fallthru
      _
    // Predicated region
    $region30: #{hdc_net_forward.228} parent=1 // pred_check
      _
    $region31: #{hdc_net_forward.228} parent=1 // pred_check_branch
      %63 = sbr.rel (0) target = $region33
    $region32: #{hdc_net_forward.228} parent=1 // pred_region
      %64 = dma.done [#allocation9], 64
    $region33: #{hdc_net_forward.228} parent=1 // pred_fallthru
      _
    %v65 = vld [vmem:[#allocation5] sm:$0xff]
    %v66 = vmul.f32 %v65, 0.5
    %v67 = vld [vmem:[#allocation7] sm:$0xff]
    %v68 = vmul.f32 %v67, 0.5
    %v69 = vmul.f32 %v66, %v66
    %v70 = vsub.f32 %v68, %v69
    %v71 = vmax.f32 %v70, 0.0
    %v72 = vadd.f32 %v71, 1e-05
    %v73 = vrsqrt.pop %v72
    %v74 = vld [vmem:[#allocation2] sm:$0xf]
    %v75 = vunpack.c.l.bf16 %v74
    %77 = vset.pattern.permute.xlu0 0
    %78 = vperm.xlu0 %77, %v66
    %v79 = vpop.permute.xlu0 %78
    %v81 = vsub.f32 %v75, %v79
    %83 = vset.pattern.permute.xlu0 0
    %84 = vperm.xlu0 %83, %v73
    %v85 = vpop.permute.xlu0 %84
    %v87 = vmul.f32 %v81, %v85
    %v88 = vmax.f32 %v87, 0.0
    %v89 = vld [vmem:[#allocation8] sm:$0xf]
    %v90 = vunpack.c.l.bf16 %v89
    %v91 = vadd.f32 %v88, %v90
    %v92 = vpack.c.bf16 %v91, %v91
    %93 = vst [vmem:[#allocation10] sm:$0xf] %v92
    // Predicated region
    $region34: #{hdc_net_forward.228} parent=1 // pred_check
      _
    $region35: #{hdc_net_forward.228} parent=1 // pred_check_branch
      %95 = sbr.rel (0) target = $region37
    $region36: #{hdc_net_forward.228} parent=1 // pred_region
      %s97 = ssub.s32 64, 64
      %98 = vsyncadd [#allocation4], %s97
      %s100 = sshll.u32 [#allocation10], 4
      %s101 = int_to_ptr.vmem [resolvable:$true] %s100
      %103 = dma.vmem_to_hbm [thread:$0]  %s101, 64, %s4, [#allocation4]
    $region37: #{hdc_net_forward.228} parent=1 // pred_fallthru
      _
    // Predicated region
    $region38: #{hdc_net_forward.228} parent=1 // pred_check
      _
    $region39: #{hdc_net_forward.228} parent=1 // pred_check_branch
      %105 = sbr.rel (0) target = $region41
    $region40: #{hdc_net_forward.228} parent=1 // pred_region
      %106 = dma.done [#allocation4], 64
    $region41: #{hdc_net_forward.228} parent=1 // pred_fallthru
      _
    %107 = vsyncpa [#allocation3], 1
    %108 = vsyncpa [#allocation6], 1
    %109 = vsyncpa [#allocation9], 1
    %110 = vsyncpa [#allocation4], 1

// kernel: hdc_net_forward.229
$region0: #{hdc_net_forward.229}
  #allocation0 [shape = 'u32[]', space=smem, size = 0x4, offset = 0x4, fixed_abs, tag = 'smem constant byte address 0x4 - core index']
  #allocation1 [shape = 'u32[144,128]{1,0:T(1,128)}', space=vmem, size = 0x12000, scoped, tag = 'internal scratch']
  %s0 = inlined_call_operand.hbm [shape: bf16[64,128], index: 0, kind: input, shape index: {}]
  %s1 = inlined_call_operand.hbm [shape: bf16[64,64], index: 1, kind: input, shape index: {}]
  %s2 = inlined_call_operand.hbm [shape: bf16[64,128], index: 2, kind: output, shape index: {0}]
  %s3 = inlined_call_operand.hbm [shape: f32[1,64,1], index: 3, kind: output, shape index: {1}]
  %s4 = inlined_call_operand.hbm [shape: f32[1,64,1], index: 4, kind: output, shape index: {2}]
  %5 = xla_tuple %s2, %s3, %s4
  %s6 = sld [smem:[#allocation0]]
  $region42: #{hdc_net_forward.229} parent=0
    _
  %s8 = ssub.s32 1, %s6
  %s9 = scalar_select 0, %s8, %s6
  $region1: #{hdc_net_forward.229} parent=0
    #allocation2 [shape = 'u8[16384]{0}', space=vmem, size = 0x4000, scoped, tag = 'input window, operand 0, single buffered']
    #allocation3 [shape = 's32[1]{0}', space=sflag, size = 0x4, scoped, tag = 'scoped memory for hdc_net_forward.229']
    #allocation4 [shape = 's32[1]{0}', space=sflag, size = 0x4, scoped, tag = 'scoped memory for hdc_net_forward.229']
    #allocation5 [shape = 'u8[16384]{0}', space=vmem, size = 0x4000, scoped, tag = 'input window, operand 1, single buffered']
    #allocation6 [shape = 's32[1]{0}', space=sflag, size = 0x4, scoped, tag = 'scoped memory for hdc_net_forward.229']
    #allocation7 [shape = 'u8[16384]{0}', space=vmem, size = 0x4000, scoped, tag = 'output window, operand 0, single buffered']
    #allocation8 [shape = 'u8[32768]{0}', space=vmem, size = 0x8000, scoped, tag = 'output window, operand 1, single buffered']
    #allocation9 [shape = 's32[1]{0}', space=sflag, size = 0x4, scoped, tag = 'scoped memory for hdc_net_forward.229']
    #allocation10 [shape = 'u8[32768]{0}', space=vmem, size = 0x8000, scoped, tag = 'output window, operand 2, single buffered']
    %10 = vsyncpa [#allocation3], 0
    %11 = vsyncpa [#allocation6], 0
    %12 = vsyncpa [#allocation4], 0
    %13 = vsyncpa [#allocation9], 0
    // Predicated region
    $region2: #{hdc_net_forward.229} parent=1 // pred_check
      _
    $region3: #{hdc_net_forward.229} parent=1 // pred_check_branch
      %15 = sbr.rel (0) target = $region5
    $region4: #{hdc_net_forward.229} parent=1 // pred_region
      %s17 = ssub.s32 512, 512
      %18 = vsyncadd [#allocation3], %s17
      %s19 = sshll.u32 [#allocation2], 4
      %s20 = int_to_ptr.vmem [resolvable:$true] %s19
      %25 = dma.hbm_to_vmem [thread:$0]  %s0, 512, %s20, [#allocation3], 64, 64, 4
    $region5: #{hdc_net_forward.229} parent=1 // pred_fallthru
      _
    // Predicated region
    $region6: #{hdc_net_forward.229} parent=1 // pred_check
      _
    $region7: #{hdc_net_forward.229} parent=1 // pred_check_branch
      %27 = sbr.rel (0) target = $region9
    $region8: #{hdc_net_forward.229} parent=1 // pred_region
      %s29 = ssub.s32 512, 512
      %30 = vsyncadd [#allocation6], %s29
      %s31 = sshll.u32 [#allocation5], 4
      %s32 = int_to_ptr.vmem [resolvable:$true] %s31
      %37 = dma.hbm_to_vmem [thread:$0]  %s1, 512, %s32, [#allocation6], 64, 64, 4
    $region9: #{hdc_net_forward.229} parent=1 // pred_fallthru
      _
    // Predicated region
    $region10: #{hdc_net_forward.229} parent=1 // pred_check
      _
    $region11: #{hdc_net_forward.229} parent=1 // pred_check_branch
      %39 = sbr.rel (0) target = $region13
    $region12: #{hdc_net_forward.229} parent=1 // pred_region
      %40 = dma.done [#allocation3], 512
    $region13: #{hdc_net_forward.229} parent=1 // pred_fallthru
      _
    // Predicated region
    $region14: #{hdc_net_forward.229} parent=1 // pred_check
      _
    $region15: #{hdc_net_forward.229} parent=1 // pred_check_branch
      %42 = sbr.rel (0) target = $region17
    $region16: #{hdc_net_forward.229} parent=1 // pred_region
      %43 = dma.done [#allocation6], 512
    $region17: #{hdc_net_forward.229} parent=1 // pred_fallthru
      _
    %v45 = vld [vmem:[#allocation5] sm:$0xf]
    %v46 = vld [vmem:[#allocation5 + $0x4] sm:$0xf]
    %v47 = vld [vmem:[#allocation5 + $0x8] sm:$0xf]
    %v48 = vld [vmem:[#allocation5 + $0xc] sm:$0xf]
    %v49 = vld [vmem:[#allocation5 + $0x10] sm:$0xf]
    %v50 = vld [vmem:[#allocation5 + $0x14] sm:$0xf]
    %v51 = vld [vmem:[#allocation5 + $0x18] sm:$0xf]
    %v52 = vld [vmem:[#allocation5 + $0x1c] sm:$0xf]
    %v53 = vld [vmem:[#allocation2] sm:$0xf]
    %v54 = vld [vmem:[#allocation2 + $0x4] sm:$0xf]
    %v55 = vld [vmem:[#allocation2 + $0x8] sm:$0xf]
    %v56 = vld [vmem:[#allocation2 + $0xc] sm:$0xf]
    %v57 = vld [vmem:[#allocation2 + $0x10] sm:$0xf]
    %v58 = vld [vmem:[#allocation2 + $0x14] sm:$0xf]
    %v59 = vld [vmem:[#allocation2 + $0x18] sm:$0xf]
    %v60 = vld [vmem:[#allocation2 + $0x1c] sm:$0xf]
    %v69 = vunpack.c.l.b16 %v45
    %v70 = vunpack.c.l.b16 %v46
    %v71 = vunpack.c.l.b16 %v47
    %v72 = vunpack.c.l.b16 %v48
    %v73 = vunpack.c.l.b16 %v49
    %v74 = vunpack.c.l.b16 %v50
    %v75 = vunpack.c.l.b16 %v51
    %v76 = vunpack.c.l.b16 %v52
    %v77 = vpack.c.b16 %v70, %v69
    %v78 = vpack.c.b16 %v72, %v71
    %v79 = vpack.c.b16 %v74, %v73
    %v80 = vpack.c.b16 %v76, %v75
    %v89 = vunpack.c.l.b16 %v53
    %v90 = vunpack.c.l.b16 %v54
    %v91 = vunpack.c.l.b16 %v55
    %v92 = vunpack.c.l.b16 %v56
    %v93 = vunpack.c.l.b16 %v57
    %v94 = vunpack.c.l.b16 %v58
    %v95 = vunpack.c.l.b16 %v59
    %v96 = vunpack.c.l.b16 %v60
    %v97 = vpack.c.b16 %v90, %v89
    %v98 = vpack.c.b16 %v92, %v91
    %v99 = vpack.c.b16 %v94, %v93
    %v100 = vpack.c.b16 %v96, %v95
    %vm105 = vcmask 523264
    %v107 = vsel %vm105, %v77, 0
    %v110 = vsel %vm105, %v78, 0
    %v113 = vsel %vm105, %v79, 0
    %v116 = vsel %vm105, %v80, 0
    %118 = vmatprep.subr.bf16.mxu0 0
    %119 = vmatpush1.bf16.msra.mxu0 %v97
    %120 = vmatprep.subr.bf16.mxu0 0
    %121 = vmatpush1.bf16.msra.mxu0 %v98
    %122 = vmatprep.subr.bf16.mxu0 0
    %123 = vmatpush1.bf16.msra.mxu0 %v99
    %124 = vmatprep.subr.bf16.mxu0 0
    %125 = vmatpush1.bf16.msra.mxu0 %v100
    %126 = vmatprep.subr.bf16.mxu0 0
    %127 = vmatpush1.bf16.msra.mxu0 0
    %128 = vmatprep.subr.bf16.mxu0 0
    %129 = vmatpush1.bf16.msra.mxu0 0
    %130 = vmatprep.subr.bf16.mxu0 0
    %131 = vmatpush1.bf16.msra.mxu0 0
    %132 = vmatprep.subr.bf16.mxu0 0
    %133 = vmatpush1.bf16.msra.mxu0 0
    %134 = vmatprep.subr.bf16.mxu0 0
    %135 = vmatpush1.bf16.msra.mxu0 0
    %136 = vmatprep.subr.bf16.mxu0 0
    %137 = vmatpush1.bf16.msra.mxu0 0
    %138 = vmatprep.subr.bf16.mxu0 0
    %139 = vmatpush1.bf16.msra.mxu0 0
    %140 = vmatprep.subr.bf16.mxu0 0
    %141 = vmatpush1.bf16.msra.mxu0 0
    %142 = vmatprep.subr.bf16.mxu0 0
    %143 = vmatpush1.bf16.msra.mxu0 0
    %144 = vmatprep.subr.bf16.mxu0 0
    %145 = vmatpush1.bf16.msra.mxu0 0
    %146 = vmatprep.subr.bf16.mxu0 0
    %147 = vmatpush1.bf16.msra.mxu0 0
    %148 = vmatprep.subr.bf16.mxu0 0
    %149 = vmatpush1.bf16.msra.mxu0 0
    %150 = vmatprep.mubr.bf16.mxu0 0
    %151 = vmatmul.mubr.bf16.gmra.mrb[0].mxu0 %v107
    %v152 = vpop.f32.mrb[0].mxu0
    %v153 = vadd.f32 0.0, %v152
    %v154 = vpop.f32.mrb[0].mxu0
    %v155 = vpop.f32.mrb[0].mxu0
    %v156 = vadd.f32 0.0, %v155
    %v157 = vpop.f32.mrb[0].mxu0
    %158 = vmatprep.mubr.bf16.mxu0 0
    %159 = vmatmul.mubr.bf16.gmra.mrb[0].mxu0 %v110
    %v160 = vpop.f32.mrb[0].mxu0
    %v161 = vadd.f32 0.0, %v160
    %v162 = vpop.f32.mrb[0].mxu0
    %v163 = vpop.f32.mrb[0].mxu0
    %v164 = vadd.f32 0.0, %v163
    %v165 = vpop.f32.mrb[0].mxu0
    %166 = vmatprep.mubr.bf16.mxu0 0
    %167 = vmatmul.mubr.bf16.gmra.mrb[0].mxu0 %v113
    %v168 = vpop.f32.mrb[0].mxu0
    %v169 = vadd.f32 0.0, %v168
    %v170 = vpop.f32.mrb[0].mxu0
    %v171 = vpop.f32.mrb[0].mxu0
    %v172 = vadd.f32 0.0, %v171
    %v173 = vpop.f32.mrb[0].mxu0
    %174 = vmatprep.mubr.bf16.mxu0 0
    %175 = vmatmul.mubr.bf16.gmra.mrb[0].mxu0 %v116
    %v176 = vpop.f32.mrb[0].mxu0
    %v177 = vadd.f32 0.0, %v176
    %v178 = vpop.f32.mrb[0].mxu0
    %v179 = vpop.f32.mrb[0].mxu0
    %v180 = vadd.f32 0.0, %v179
    %v181 = vpop.f32.mrb[0].mxu0
    %182 = vdwg.mxu0
    %v183 = vpack.c.bf16 %v156, %v153
    %v184 = vpack.c.bf16 %v164, %v161
    %v185 = vpack.c.bf16 %v172, %v169
    %v186 = vpack.c.bf16 %v180, %v177
    %v191 = vunpack.c.l.b16 %v183
    %v192 = vunpack.c.h.b16 %v183
    %v193 = vunpack.c.l.b16 %v184
    %v194 = vunpack.c.h.b16 %v184
    %v195 = vunpack.c.l.b16 %v185
    %v196 = vunpack.c.h.b16 %v185
    %v197 = vunpack.c.l.b16 %v186
    %v198 = vunpack.c.h.b16 %v186
    %v199 = vpack.c.b16 %v191, %v191
    %v200 = vpack.c.b16 %v192, %v192
    %v201 = vpack.c.b16 %v193, %v193
    %v202 = vpack.c.b16 %v194, %v194
    %v203 = vpack.c.b16 %v195, %v195
    %v204 = vpack.c.b16 %v196, %v196
    %v205 = vpack.c.b16 %v197, %v197
    %v206 = vpack.c.b16 %v198, %v198
    %215 = vst [vmem:[#allocation7] sm:$0xf] %v199
    %216 = vst [vmem:[#allocation7 + $0x4] sm:$0xf] %v200
    %217 = vst [vmem:[#allocation7 + $0x8] sm:$0xf] %v201
    %218 = vst [vmem:[#allocation7 + $0xc] sm:$0xf] %v202
    %219 = vst [vmem:[#allocation7 + $0x10] sm:$0xf] %v203
    %220 = vst [vmem:[#allocation7 + $0x14] sm:$0xf] %v204
    %221 = vst [vmem:[#allocation7 + $0x18] sm:$0xf] %v205
    %222 = vst [vmem:[#allocation7 + $0x1c] sm:$0xf] %v206
    %223 = vadd.xlane.f32.xlu0 %v153
    %v224 = vpop.xlane.xlu0 %223
    %225 = vadd.xlane.f32.xlu0 %v156
    %v226 = vpop.xlane.xlu0 %225
    %227 = vadd.xlane.f32.xlu0 %v161
    %v228 = vpop.xlane.xlu0 %227
    %229 = vadd.xlane.f32.xlu0 %v164
    %v230 = vpop.xlane.xlu0 %229
    %231 = vadd.xlane.f32.xlu0 %v169
    %v232 = vpop.xlane.xlu0 %231
    %233 = vadd.xlane.f32.xlu0 %v172
    %v234 = vpop.xlane.xlu0 %233
    %235 = vadd.xlane.f32.xlu0 %v177
    %v236 = vpop.xlane.xlu0 %235
    %237 = vadd.xlane.f32.xlu0 %v180
    %v238 = vpop.xlane.xlu0 %237
    %vm239 = vcmask 7168
    %240 = vst.msk [vmem:[#allocation8] sm:$0xff] %vm239, %v224
    %241 = vst.msk [vmem:[#allocation8 + $0x8] sm:$0xff] %vm239, %v226
    %242 = vst.msk [vmem:[#allocation8 + $0x10] sm:$0xff] %vm239, %v228
    %243 = vst.msk [vmem:[#allocation8 + $0x18] sm:$0xff] %vm239, %v230
    %244 = vst.msk [vmem:[#allocation8 + $0x20] sm:$0xff] %vm239, %v232
    %245 = vst.msk [vmem:[#allocation8 + $0x28] sm:$0xff] %vm239, %v234
    %246 = vst.msk [vmem:[#allocation8 + $0x30] sm:$0xff] %vm239, %v236
    %247 = vst.msk [vmem:[#allocation8 + $0x38] sm:$0xff] %vm239, %v238
    %v248 = vmul.f32 %v153, %v153
    %v249 = vmul.f32 %v156, %v156
    %v250 = vmul.f32 %v161, %v161
    %v251 = vmul.f32 %v164, %v164
    %v252 = vmul.f32 %v169, %v169
    %v253 = vmul.f32 %v172, %v172
    %v254 = vmul.f32 %v177, %v177
    %v255 = vmul.f32 %v180, %v180
    %256 = vadd.xlane.f32.xlu0 %v248
    %v257 = vpop.xlane.xlu0 %256
    %258 = vadd.xlane.f32.xlu0 %v249
    %v259 = vpop.xlane.xlu0 %258
    %260 = vadd.xlane.f32.xlu0 %v250
    %v261 = vpop.xlane.xlu0 %260
    %262 = vadd.xlane.f32.xlu0 %v251
    %v263 = vpop.xlane.xlu0 %262
    %264 = vadd.xlane.f32.xlu0 %v252
    %v265 = vpop.xlane.xlu0 %264
    %266 = vadd.xlane.f32.xlu0 %v253
    %v267 = vpop.xlane.xlu0 %266
    %268 = vadd.xlane.f32.xlu0 %v254
    %v269 = vpop.xlane.xlu0 %268
    %270 = vadd.xlane.f32.xlu0 %v255
    %v271 = vpop.xlane.xlu0 %270
    %272 = vst.msk [vmem:[#allocation10] sm:$0xff] %vm239, %v257
    %273 = vst.msk [vmem:[#allocation10 + $0x8] sm:$0xff] %vm239, %v259
    %274 = vst.msk [vmem:[#allocation10 + $0x10] sm:$0xff] %vm239, %v261
    %275 = vst.msk [vmem:[#allocation10 + $0x18] sm:$0xff] %vm239, %v263
    %276 = vst.msk [vmem:[#allocation10 + $0x20] sm:$0xff] %vm239, %v265
    %277 = vst.msk [vmem:[#allocation10 + $0x28] sm:$0xff] %vm239, %v267
    %278 = vst.msk [vmem:[#allocation10 + $0x30] sm:$0xff] %vm239, %v269
    %279 = vst.msk [vmem:[#allocation10 + $0x38] sm:$0xff] %vm239, %v271
    // Predicated region
    $region18: #{hdc_net_forward.229} parent=1 // pred_check
      _
    $region19: #{hdc_net_forward.229} parent=1 // pred_check_branch
      %281 = sbr.rel (0) target = $region21
    $region20: #{hdc_net_forward.229} parent=1 // pred_region
      %s283 = ssub.s32 512, 512
      %284 = vsyncadd [#allocation4], %s283
      %s285 = sshll.u32 [#allocation7], 4
      %s286 = int_to_ptr.vmem [resolvable:$true] %s285
      %291 = dma.vmem_to_hbm [thread:$0]  %s286, 512, %s2, [#allocation4], 64, 64, 4
    $region21: #{hdc_net_forward.229} parent=1 // pred_fallthru
      _
    // Predicated region
    $region22: #{hdc_net_forward.229} parent=1 // pred_check
      _
    $region23: #{hdc_net_forward.229} parent=1 // pred_check_branch
      %293 = sbr.rel (0) target = $region25
    $region24: #{hdc_net_forward.229} parent=1 // pred_region
      %s295 = ssub.s32 1024, 1024
      %296 = vsyncadd [#allocation9], %s295
      %s297 = sshll.u32 [#allocation8], 4
      %s298 = int_to_ptr.vmem [resolvable:$true] %s297
      %303 = dma.vmem_to_hbm [thread:$0]  %s298, 1024, %s3, [#allocation9], 128, 128, 8
    $region25: #{hdc_net_forward.229} parent=1 // pred_fallthru
      _
    // Predicated region
    $region26: #{hdc_net_forward.229} parent=1 // pred_check
      _
    $region27: #{hdc_net_forward.229} parent=1 // pred_check_branch
      %305 = sbr.rel (0) target = $region29
    $region28: #{hdc_net_forward.229} parent=1 // pred_region
      %s307 = ssub.s32 1024, 1024
      %308 = vsyncadd [#allocation9], %s307
      %s309 = sshll.u32 [#allocation10], 4
      %s310 = int_to_ptr.vmem [resolvable:$true] %s309
      %315 = dma.vmem_to_hbm [thread:$0]  %s310, 1024, %s4, [#allocation9], 128, 128, 8
    $region29: #{hdc_net_forward.229} parent=1 // pred_fallthru
      _
    // Predicated region
    $region30: #{hdc_net_forward.229} parent=1 // pred_check
      _
    $region31: #{hdc_net_forward.229} parent=1 // pred_check_branch
      %317 = sbr.rel (0) target = $region33
    $region32: #{hdc_net_forward.229} parent=1 // pred_region
      %318 = dma.done [#allocation4], 512
    $region33: #{hdc_net_forward.229} parent=1 // pred_fallthru
      _
    // Predicated region
    $region34: #{hdc_net_forward.229} parent=1 // pred_check
      _
    $region35: #{hdc_net_forward.229} parent=1 // pred_check_branch
      %320 = sbr.rel (0) target = $region37
    $region36: #{hdc_net_forward.229} parent=1 // pred_region
      %321 = dma.done [#allocation9], 1024
    $region37: #{hdc_net_forward.229} parent=1 // pred_fallthru
      _
    // Predicated region
    $region38: #{hdc_net_forward.229} parent=1 // pred_check
      _
    $region39: #{hdc_net_forward.229} parent=1 // pred_check_branch
      %323 = sbr.rel (0) target = $region41
    $region40: #{hdc_net_forward.229} parent=1 // pred_region
      %324 = dma.done [#allocation9], 1024
    $region41: #{hdc_net_forward.229} parent=1 // pred_fallthru
      _
    %325 = vsyncpa [#allocation3], 1
    %326 = vsyncpa [#allocation6], 1
    %327 = vsyncpa [#allocation4], 1
    %328 = vsyncpa [#allocation9], 1

// kernel: hdc_net_forward.230
$region0: #{hdc_net_forward.230}
  #allocation0 [shape = 'u32[]', space=smem, size = 0x4, offset = 0x4, fixed_abs, tag = 'smem constant byte address 0x4 - core index']
  #allocation1 [shape = 'u32[144,128]{1,0:T(1,128)}', space=vmem, size = 0x12000, scoped, tag = 'internal scratch']
  %s0 = inlined_call_operand.hbm [shape: bf16[64,128], index: 0, kind: input, shape index: {}]
  %s1 = inlined_call_operand.hbm [shape: f32[64,1], index: 1, kind: input, shape index: {}]
  %s2 = inlined_call_operand.hbm [shape: f32[64,1], index: 2, kind: input, shape index: {}]
  %s3 = inlined_call_operand.hbm [shape: bf16[64,128], index: 3, kind: output, shape index: {}]
  %s4 = sld [smem:[#allocation0]]
  $region34: #{hdc_net_forward.230} parent=0
    _
  %s6 = ssub.s32 1, %s4
  %s7 = scalar_select 0, %s6, %s4
  $region1: #{hdc_net_forward.230} parent=0
    #allocation2 [shape = 'u8[16384]{0}', space=vmem, size = 0x4000, scoped, tag = 'input window, operand 0, single buffered']
    #allocation3 [shape = 's32[1]{0}', space=sflag, size = 0x4, scoped, tag = 'scoped memory for hdc_net_forward.230']
    #allocation4 [shape = 's32[1]{0}', space=sflag, size = 0x4, scoped, tag = 'scoped memory for hdc_net_forward.230']
    #allocation5 [shape = 'u8[32768]{0}', space=vmem, size = 0x8000, scoped, tag = 'input window, operand 1, single buffered']
    #allocation6 [shape = 's32[1]{0}', space=sflag, size = 0x4, scoped, tag = 'scoped memory for hdc_net_forward.230']
    #allocation7 [shape = 'u8[32768]{0}', space=vmem, size = 0x8000, scoped, tag = 'input window, operand 2, single buffered']
    #allocation8 [shape = 'u8[16384]{0}', space=vmem, size = 0x4000, scoped, tag = 'output window, operand 0, single buffered']
    %8 = vsyncpa [#allocation3], 0
    %9 = vsyncpa [#allocation6], 0
    %10 = vsyncpa [#allocation4], 0
    // Predicated region
    $region2: #{hdc_net_forward.230} parent=1 // pred_check
      _
    $region3: #{hdc_net_forward.230} parent=1 // pred_check_branch
      %12 = sbr.rel (0) target = $region5
    $region4: #{hdc_net_forward.230} parent=1 // pred_region
      %s14 = ssub.s32 512, 512
      %15 = vsyncadd [#allocation3], %s14
      %s16 = sshll.u32 [#allocation2], 4
      %s17 = int_to_ptr.vmem [resolvable:$true] %s16
      %22 = dma.hbm_to_vmem [thread:$0]  %s0, 512, %s17, [#allocation3], 64, 64, 4
    $region5: #{hdc_net_forward.230} parent=1 // pred_fallthru
      _
    // Predicated region
    $region6: #{hdc_net_forward.230} parent=1 // pred_check
      _
    $region7: #{hdc_net_forward.230} parent=1 // pred_check_branch
      %24 = sbr.rel (0) target = $region9
    $region8: #{hdc_net_forward.230} parent=1 // pred_region
      %s26 = ssub.s32 1024, 1024
      %27 = vsyncadd [#allocation6], %s26
      %s28 = sshll.u32 [#allocation5], 4
      %s29 = int_to_ptr.vmem [resolvable:$true] %s28
      %34 = dma.hbm_to_vmem [thread:$0]  %s1, 1024, %s29, [#allocation6], 128, 128, 8
    $region9: #{hdc_net_forward.230} parent=1 // pred_fallthru
      _
    // Predicated region
    $region10: #{hdc_net_forward.230} parent=1 // pred_check
      _
    $region11: #{hdc_net_forward.230} parent=1 // pred_check_branch
      %36 = sbr.rel (0) target = $region13
    $region12: #{hdc_net_forward.230} parent=1 // pred_region
      %s38 = ssub.s32 1024, 1024
      %39 = vsyncadd [#allocation6], %s38
      %s40 = sshll.u32 [#allocation7], 4
      %s41 = int_to_ptr.vmem [resolvable:$true] %s40
      %46 = dma.hbm_to_vmem [thread:$0]  %s2, 1024, %s41, [#allocation6], 128, 128, 8
    $region13: #{hdc_net_forward.230} parent=1 // pred_fallthru
      _
    // Predicated region
    $region14: #{hdc_net_forward.230} parent=1 // pred_check
      _
    $region15: #{hdc_net_forward.230} parent=1 // pred_check_branch
      %48 = sbr.rel (0) target = $region17
    $region16: #{hdc_net_forward.230} parent=1 // pred_region
      %49 = dma.done [#allocation3], 512
    $region17: #{hdc_net_forward.230} parent=1 // pred_fallthru
      _
    // Predicated region
    $region18: #{hdc_net_forward.230} parent=1 // pred_check
      _
    $region19: #{hdc_net_forward.230} parent=1 // pred_check_branch
      %51 = sbr.rel (0) target = $region21
    $region20: #{hdc_net_forward.230} parent=1 // pred_region
      %52 = dma.done [#allocation6], 1024
    $region21: #{hdc_net_forward.230} parent=1 // pred_fallthru
      _
    // Predicated region
    $region22: #{hdc_net_forward.230} parent=1 // pred_check
      _
    $region23: #{hdc_net_forward.230} parent=1 // pred_check_branch
      %54 = sbr.rel (0) target = $region25
    $region24: #{hdc_net_forward.230} parent=1 // pred_region
      %55 = dma.done [#allocation6], 1024
    $region25: #{hdc_net_forward.230} parent=1 // pred_fallthru
      _
    %v56 = vld [vmem:[#allocation5] sm:$0xff]
    %v57 = vld [vmem:[#allocation5 + $0x8] sm:$0xff]
    %v58 = vld [vmem:[#allocation5 + $0x10] sm:$0xff]
    %v59 = vld [vmem:[#allocation5 + $0x18] sm:$0xff]
    %v60 = vld [vmem:[#allocation5 + $0x20] sm:$0xff]
    %v61 = vld [vmem:[#allocation5 + $0x28] sm:$0xff]
    %v62 = vld [vmem:[#allocation5 + $0x30] sm:$0xff]
    %v63 = vld [vmem:[#allocation5 + $0x38] sm:$0xff]
    %v64 = vmul.f32 %v56, 0.0625
    %v65 = vmul.f32 %v57, 0.0625
    %v66 = vmul.f32 %v58, 0.0625
    %v67 = vmul.f32 %v59, 0.0625
    %v68 = vmul.f32 %v60, 0.0625
    %v69 = vmul.f32 %v61, 0.0625
    %v70 = vmul.f32 %v62, 0.0625
    %v71 = vmul.f32 %v63, 0.0625
    %v72 = vld [vmem:[#allocation7] sm:$0xff]
    %v73 = vld [vmem:[#allocation7 + $0x8] sm:$0xff]
    %v74 = vld [vmem:[#allocation7 + $0x10] sm:$0xff]
    %v75 = vld [vmem:[#allocation7 + $0x18] sm:$0xff]
    %v76 = vld [vmem:[#allocation7 + $0x20] sm:$0xff]
    %v77 = vld [vmem:[#allocation7 + $0x28] sm:$0xff]
    %v78 = vld [vmem:[#allocation7 + $0x30] sm:$0xff]
    %v79 = vld [vmem:[#allocation7 + $0x38] sm:$0xff]
    %v80 = vmul.f32 %v72, 0.0625
    %v81 = vmul.f32 %v73, 0.0625
    %v82 = vmul.f32 %v74, 0.0625
    %v83 = vmul.f32 %v75, 0.0625
    %v84 = vmul.f32 %v76, 0.0625
    %v85 = vmul.f32 %v77, 0.0625
    %v86 = vmul.f32 %v78, 0.0625
    %v87 = vmul.f32 %v79, 0.0625
    %v88 = vmul.f32 %v64, %v64
    %v89 = vmul.f32 %v65, %v65
    %v90 = vmul.f32 %v66, %v66
    %v91 = vmul.f32 %v67, %v67
    %v92 = vmul.f32 %v68, %v68
    %v93 = vmul.f32 %v69, %v69
    %v94 = vmul.f32 %v70, %v70
    %v95 = vmul.f32 %v71, %v71
    %v96 = vsub.f32 %v80, %v88
    %v97 = vsub.f32 %v81, %v89
    %v98 = vsub.f32 %v82, %v90
    %v99 = vsub.f32 %v83, %v91
    %v100 = vsub.f32 %v84, %v92
    %v101 = vsub.f32 %v85, %v93
    %v102 = vsub.f32 %v86, %v94
    %v103 = vsub.f32 %v87, %v95
    %v104 = vmax.f32 %v96, 0.0
    %v105 = vmax.f32 %v97, 0.0
    %v106 = vmax.f32 %v98, 0.0
    %v107 = vmax.f32 %v99, 0.0
    %v108 = vmax.f32 %v100, 0.0
    %v109 = vmax.f32 %v101, 0.0
    %v110 = vmax.f32 %v102, 0.0
    %v111 = vmax.f32 %v103, 0.0
    %v112 = vadd.f32 %v104, 1e-05
    %v113 = vadd.f32 %v105, 1e-05
    %v114 = vadd.f32 %v106, 1e-05
    %v115 = vadd.f32 %v107, 1e-05
    %v116 = vadd.f32 %v108, 1e-05
    %v117 = vadd.f32 %v109, 1e-05
    %v118 = vadd.f32 %v110, 1e-05
    %v119 = vadd.f32 %v111, 1e-05
    %v120 = vrsqrt.pop %v112
    %v121 = vrsqrt.pop %v113
    %v122 = vrsqrt.pop %v114
    %v123 = vrsqrt.pop %v115
    %v124 = vrsqrt.pop %v116
    %v125 = vrsqrt.pop %v117
    %v126 = vrsqrt.pop %v118
    %v127 = vrsqrt.pop %v119
    %v128 = vld [vmem:[#allocation2] sm:$0xf]
    %v129 = vld [vmem:[#allocation2 + $0x4] sm:$0xf]
    %v130 = vld [vmem:[#allocation2 + $0x8] sm:$0xf]
    %v131 = vld [vmem:[#allocation2 + $0xc] sm:$0xf]
    %v132 = vld [vmem:[#allocation2 + $0x10] sm:$0xf]
    %v133 = vld [vmem:[#allocation2 + $0x14] sm:$0xf]
    %v134 = vld [vmem:[#allocation2 + $0x18] sm:$0xf]
    %v135 = vld [vmem:[#allocation2 + $0x1c] sm:$0xf]
    %v136 = vunpack.c.l.bf16 %v128
    %v137 = vunpack.c.l.bf16 %v129
    %v138 = vunpack.c.l.bf16 %v130
    %v139 = vunpack.c.l.bf16 %v131
    %v140 = vunpack.c.l.bf16 %v132
    %v141 = vunpack.c.l.bf16 %v133
    %v142 = vunpack.c.l.bf16 %v134
    %v143 = vunpack.c.l.bf16 %v135
    %145 = vset.pattern.permute.xlu0 0
    %146 = vperm.xlu0 %145, %v64
    %v147 = vpop.permute.xlu0 %146
    %150 = vset.pattern.permute.xlu0 0
    %151 = vperm.xlu0 %150, %v65
    %v152 = vpop.permute.xlu0 %151
    %155 = vset.pattern.permute.xlu0 0
    %156 = vperm.xlu0 %155, %v66
    %v157 = vpop.permute.xlu0 %156
    %160 = vset.pattern.permute.xlu0 0
    %161 = vperm.xlu0 %160, %v67
    %v162 = vpop.permute.xlu0 %161
    %165 = vset.pattern.permute.xlu0 0
    %166 = vperm.xlu0 %165, %v68
    %v167 = vpop.permute.xlu0 %166
    %170 = vset.pattern.permute.xlu0 0
    %171 = vperm.xlu0 %170, %v69
    %v172 = vpop.permute.xlu0 %171
    %175 = vset.pattern.permute.xlu0 0
    %176 = vperm.xlu0 %175, %v70
    %v177 = vpop.permute.xlu0 %176
    %180 = vset.pattern.permute.xlu0 0
    %181 = vperm.xlu0 %180, %v71
    %v182 = vpop.permute.xlu0 %181
    %v184 = vsub.f32 %v136, %v147
    %v185 = vsub.f32 %v137, %v152
    %v186 = vsub.f32 %v138, %v157
    %v187 = vsub.f32 %v139, %v162
    %v188 = vsub.f32 %v140, %v167
    %v189 = vsub.f32 %v141, %v172
    %v190 = vsub.f32 %v142, %v177
    %v191 = vsub.f32 %v143, %v182
    %193 = vset.pattern.permute.xlu0 0
    %194 = vperm.xlu0 %193, %v120
    %v195 = vpop.permute.xlu0 %194
    %198 = vset.pattern.permute.xlu0 0
    %199 = vperm.xlu0 %198, %v121
    %v200 = vpop.permute.xlu0 %199
    %203 = vset.pattern.permute.xlu0 0
    %204 = vperm.xlu0 %203, %v122
    %v205 = vpop.permute.xlu0 %204
    %208 = vset.pattern.permute.xlu0 0
    %209 = vperm.xlu0 %208, %v123
    %v210 = vpop.permute.xlu0 %209
    %213 = vset.pattern.permute.xlu0 0
    %214 = vperm.xlu0 %213, %v124
    %v215 = vpop.permute.xlu0 %214
    %218 = vset.pattern.permute.xlu0 0
    %219 = vperm.xlu0 %218, %v125
    %v220 = vpop.permute.xlu0 %219
    %223 = vset.pattern.permute.xlu0 0
    %224 = vperm.xlu0 %223, %v126
    %v225 = vpop.permute.xlu0 %224
    %228 = vset.pattern.permute.xlu0 0
    %229 = vperm.xlu0 %228, %v127
    %v230 = vpop.permute.xlu0 %229
    %v232 = vmul.f32 %v184, %v195
    %v233 = vmul.f32 %v185, %v200
    %v234 = vmul.f32 %v186, %v205
    %v235 = vmul.f32 %v187, %v210
    %v236 = vmul.f32 %v188, %v215
    %v237 = vmul.f32 %v189, %v220
    %v238 = vmul.f32 %v190, %v225
    %v239 = vmul.f32 %v191, %v230
    %v240 = vmax.f32 %v232, 0.0
    %v241 = vmax.f32 %v233, 0.0
    %v242 = vmax.f32 %v234, 0.0
    %v243 = vmax.f32 %v235, 0.0
    %v244 = vmax.f32 %v236, 0.0
    %v245 = vmax.f32 %v237, 0.0
    %v246 = vmax.f32 %v238, 0.0
    %v247 = vmax.f32 %v239, 0.0
    %v248 = vpack.c.bf16 %v241, %v240
    %v249 = vpack.c.bf16 %v243, %v242
    %v250 = vpack.c.bf16 %v245, %v244
    %v251 = vpack.c.bf16 %v247, %v246
    %v256 = vunpack.c.l.b16 %v248
    %v257 = vunpack.c.h.b16 %v248
    %v258 = vunpack.c.l.b16 %v249
    %v259 = vunpack.c.h.b16 %v249
    %v260 = vunpack.c.l.b16 %v250
    %v261 = vunpack.c.h.b16 %v250
    %v262 = vunpack.c.l.b16 %v251
    %v263 = vunpack.c.h.b16 %v251
    %v264 = vpack.c.b16 %v256, %v256
    %v265 = vpack.c.b16 %v257, %v257
    %v266 = vpack.c.b16 %v258, %v258
    %v267 = vpack.c.b16 %v259, %v259
    %v268 = vpack.c.b16 %v260, %v260
    %v269 = vpack.c.b16 %v261, %v261
    %v270 = vpack.c.b16 %v262, %v262
    %v271 = vpack.c.b16 %v263, %v263
    %280 = vst [vmem:[#allocation8] sm:$0xf] %v264
    %281 = vst [vmem:[#allocation8 + $0x4] sm:$0xf] %v265
    %282 = vst [vmem:[#allocation8 + $0x8] sm:$0xf] %v266
    %283 = vst [vmem:[#allocation8 + $0xc] sm:$0xf] %v267
    %284 = vst [vmem:[#allocation8 + $0x10] sm:$0xf] %v268
    %285 = vst [vmem:[#allocation8 + $0x14] sm:$0xf] %v269
    %286 = vst [vmem:[#allocation8 + $0x18] sm:$0xf] %v270
    %287 = vst [vmem:[#allocation8 + $0x1c] sm:$0xf] %v271
    // Predicated region
    $region26: #{hdc_net_forward.230} parent=1 // pred_check
      _
    $region27: #{hdc_net_forward.230} parent=1 // pred_check_branch
      %289 = sbr.rel (0) target = $region29
    $region28: #{hdc_net_forward.230} parent=1 // pred_region
      %s291 = ssub.s32 512, 512
      %292 = vsyncadd [#allocation4], %s291
      %s293 = sshll.u32 [#allocation8], 4
      %s294 = int_to_ptr.vmem [resolvable:$true] %s293
      %299 = dma.vmem_to_hbm [thread:$0]  %s294, 512, %s3, [#allocation4], 64, 64, 4
    $region29: #{hdc_net_forward.230} parent=1 // pred_fallthru
      _
    // Predicated region
    $region30: #{hdc_net_forward.230} parent=1 // pred_check
      _
    $region31: #{hdc_net_forward.230} parent=1 // pred_check_branch
      %301 = sbr.rel (0) target = $region33
    $region32: #{hdc_net_forward.230} parent=1 // pred_region
      %302 = dma.done [#allocation4], 512
    $region33: #{hdc_net_forward.230} parent=1 // pred_fallthru
      _
    %303 = vsyncpa [#allocation3], 1
    %304 = vsyncpa [#allocation6], 1
    %305 = vsyncpa [#allocation4], 1

// kernel: hdc_net_forward.247
$region0: #{hdc_net_forward.247}
  #allocation0 [shape = 'u32[]', space=smem, size = 0x4, offset = 0x4, fixed_abs, tag = 'smem constant byte address 0x4 - core index']
  #allocation1 [shape = 'u32[144,128]{1,0:T(1,128)}', space=vmem, size = 0x12000, scoped, tag = 'internal scratch']
  %s0 = inlined_call_operand.hbm [shape: bf16[16,128], index: 0, kind: input, shape index: {}]
  %s1 = inlined_call_operand.hbm [shape: bf16[8,16], index: 1, kind: input, shape index: {}]
  %s2 = inlined_call_operand.hbm [shape: bf16[8,128], index: 2, kind: output, shape index: {0}]
  %s3 = inlined_call_operand.hbm [shape: f32[1,8,1], index: 3, kind: output, shape index: {1}]
  %s4 = inlined_call_operand.hbm [shape: f32[1,8,1], index: 4, kind: output, shape index: {2}]
  %5 = xla_tuple %s2, %s3, %s4
  %s6 = sld [smem:[#allocation0]]
  $region42: #{hdc_net_forward.247} parent=0
    _
  %s8 = ssub.s32 1, %s6
  %s9 = scalar_select 0, %s8, %s6
  $region1: #{hdc_net_forward.247} parent=0
    #allocation2 [shape = 'u8[4096]{0}', space=vmem, size = 0x1000, scoped, tag = 'input window, operand 0, single buffered']
    #allocation3 [shape = 's32[1]{0}', space=sflag, size = 0x4, scoped, tag = 'scoped memory for hdc_net_forward.247']
    #allocation4 [shape = 's32[1]{0}', space=sflag, size = 0x4, scoped, tag = 'scoped memory for hdc_net_forward.247']
    #allocation5 [shape = 'u8[2048]{0}', space=vmem, size = 0x800, scoped, tag = 'input window, operand 1, single buffered']
    #allocation6 [shape = 's32[1]{0}', space=sflag, size = 0x4, scoped, tag = 'scoped memory for hdc_net_forward.247']
    #allocation7 [shape = 'u8[2048]{0}', space=vmem, size = 0x800, scoped, tag = 'output window, operand 0, single buffered']
    #allocation8 [shape = 'u8[4096]{0}', space=vmem, size = 0x1000, scoped, tag = 'output window, operand 1, single buffered']
    #allocation9 [shape = 's32[1]{0}', space=sflag, size = 0x4, scoped, tag = 'scoped memory for hdc_net_forward.247']
    #allocation10 [shape = 'u8[4096]{0}', space=vmem, size = 0x1000, scoped, tag = 'output window, operand 2, single buffered']
    %10 = vsyncpa [#allocation3], 0
    %11 = vsyncpa [#allocation6], 0
    %12 = vsyncpa [#allocation4], 0
    %13 = vsyncpa [#allocation9], 0
    // Predicated region
    $region2: #{hdc_net_forward.247} parent=1 // pred_check
      _
    $region3: #{hdc_net_forward.247} parent=1 // pred_check_branch
      %15 = sbr.rel (0) target = $region5
    $region4: #{hdc_net_forward.247} parent=1 // pred_region
      %s17 = ssub.s32 128, 128
      %18 = vsyncadd [#allocation3], %s17
      %s19 = sshll.u32 [#allocation2], 4
      %s20 = int_to_ptr.vmem [resolvable:$true] %s19
      %25 = dma.hbm_to_vmem [thread:$0]  %s0, 128, %s20, [#allocation3], 64, 64, 4
    $region5: #{hdc_net_forward.247} parent=1 // pred_fallthru
      _
    // Predicated region
    $region6: #{hdc_net_forward.247} parent=1 // pred_check
      _
    $region7: #{hdc_net_forward.247} parent=1 // pred_check_branch
      %27 = sbr.rel (0) target = $region9
    $region8: #{hdc_net_forward.247} parent=1 // pred_region
      %s29 = ssub.s32 64, 64
      %30 = vsyncadd [#allocation6], %s29
      %s32 = sshll.u32 [#allocation5], 4
      %s33 = int_to_ptr.vmem [resolvable:$true] %s32
      %35 = dma.hbm_to_vmem [thread:$0]  %s1, 64, %s33, [#allocation6]
    $region9: #{hdc_net_forward.247} parent=1 // pred_fallthru
      _
    // Predicated region
    $region10: #{hdc_net_forward.247} parent=1 // pred_check
      _
    $region11: #{hdc_net_forward.247} parent=1 // pred_check_branch
      %37 = sbr.rel (0) target = $region13
    $region12: #{hdc_net_forward.247} parent=1 // pred_region
      %38 = dma.done [#allocation3], 128
    $region13: #{hdc_net_forward.247} parent=1 // pred_fallthru
      _
    // Predicated region
    $region14: #{hdc_net_forward.247} parent=1 // pred_check
      _
    $region15: #{hdc_net_forward.247} parent=1 // pred_check_branch
      %40 = sbr.rel (0) target = $region17
    $region16: #{hdc_net_forward.247} parent=1 // pred_region
      %41 = dma.done [#allocation6], 64
    $region17: #{hdc_net_forward.247} parent=1 // pred_fallthru
      _
    %v43 = vld [vmem:[#allocation5] sm:$0xf]
    %v44 = vld [vmem:[#allocation2] sm:$0xf]
    %v45 = vld [vmem:[#allocation2 + $0x4] sm:$0xf]
    %v48 = vunpack.c.l.b16 %v44
    %v49 = vunpack.c.l.b16 %v45
    %v50 = vpack.c.b16 %v49, %v48
    %vm52 = vcmask 130048
    %v54 = vsel %vm52, %v43, 0
    %56 = vmatprep.subr.bf16.mxu0 0
    %57 = vmatpush1.bf16.msra.mxu0 %v50
    %58 = vmatprep.subr.bf16.mxu0 0
    %59 = vmatpush1.bf16.msra.mxu0 0
    %60 = vmatprep.subr.bf16.mxu0 0
    %61 = vmatpush1.bf16.msra.mxu0 0
    %62 = vmatprep.subr.bf16.mxu0 0
    %63 = vmatpush1.bf16.msra.mxu0 0
    %64 = vmatprep.subr.bf16.mxu0 0
    %65 = vmatpush1.bf16.msra.mxu0 0
    %66 = vmatprep.subr.bf16.mxu0 0
    %67 = vmatpush1.bf16.msra.mxu0 0
    %68 = vmatprep.subr.bf16.mxu0 0
    %69 = vmatpush1.bf16.msra.mxu0 0
    %70 = vmatprep.subr.bf16.mxu0 0
    %71 = vmatpush1.bf16.msra.mxu0 0
    %72 = vmatprep.subr.bf16.mxu0 0
    %73 = vmatpush1.bf16.msra.mxu0 0
    %74 = vmatprep.subr.bf16.mxu0 0
    %75 = vmatpush1.bf16.msra.mxu0 0
    %76 = vmatprep.subr.bf16.mxu0 0
    %77 = vmatpush1.bf16.msra.mxu0 0
    %78 = vmatprep.subr.bf16.mxu0 0
    %79 = vmatpush1.bf16.msra.mxu0 0
    %80 = vmatprep.subr.bf16.mxu0 0
    %81 = vmatpush1.bf16.msra.mxu0 0
    %82 = vmatprep.subr.bf16.mxu0 0
    %83 = vmatpush1.bf16.msra.mxu0 0
    %84 = vmatprep.subr.bf16.mxu0 0
    %85 = vmatpush1.bf16.msra.mxu0 0
    %86 = vmatprep.subr.bf16.mxu0 0
    %87 = vmatpush1.bf16.msra.mxu0 0
    %88 = vmatprep.mubr.bf16.mxu0 0
    %89 = vmatmul.mubr.bf16.gmra.mrb[0].mxu0 %v54
    %v90 = vpop.f32.mrb[0].mxu0
    %v91 = vadd.f32 0.0, %v90
    %v92 = vpop.f32.mrb[0].mxu0
    %v93 = vpop.f32.mrb[0].mxu0
    %v94 = vpop.f32.mrb[0].mxu0
    %95 = vdwg.mxu0
    %v96 = vpack.c.bf16 %v91, %v91
    %97 = vst [vmem:[#allocation7] sm:$0xf] %v96
    %98 = vadd.xlane.f32.xlu0 %v91
    %v99 = vpop.xlane.xlu0 %98
    %vm100 = vcmask 7168
    %101 = vst.msk [vmem:[#allocation8] sm:$0xff] %vm100, %v99
    %v102 = vmul.f32 %v91, %v91
    %103 = vadd.xlane.f32.xlu0 %v102
    %v104 = vpop.xlane.xlu0 %103
    %105 = vst.msk [vmem:[#allocation10] sm:$0xff] %vm100, %v104
    // Predicated region
    $region18: #{hdc_net_forward.247} parent=1 // pred_check
      _
    $region19: #{hdc_net_forward.247} parent=1 // pred_check_branch
      %107 = sbr.rel (0) target = $region21
    $region20: #{hdc_net_forward.247} parent=1 // pred_region
      %s109 = ssub.s32 64, 64
      %110 = vsyncadd [#allocation4], %s109
      %s112 = sshll.u32 [#allocation7], 4
      %s113 = int_to_ptr.vmem [resolvable:$true] %s112
      %115 = dma.vmem_to_hbm [thread:$0]  %s113, 64, %s2, [#allocation4]
    $region21: #{hdc_net_forward.247} parent=1 // pred_fallthru
      _
    // Predicated region
    $region22: #{hdc_net_forward.247} parent=1 // pred_check
      _
    $region23: #{hdc_net_forward.247} parent=1 // pred_check_branch
      %117 = sbr.rel (0) target = $region25
    $region24: #{hdc_net_forward.247} parent=1 // pred_region
      %s119 = ssub.s32 128, 128
      %120 = vsyncadd [#allocation9], %s119
      %s122 = sshll.u32 [#allocation8], 4
      %s123 = int_to_ptr.vmem [resolvable:$true] %s122
      %125 = dma.vmem_to_hbm [thread:$0]  %s123, 128, %s3, [#allocation9]
    $region25: #{hdc_net_forward.247} parent=1 // pred_fallthru
      _
    // Predicated region
    $region26: #{hdc_net_forward.247} parent=1 // pred_check
      _
    $region27: #{hdc_net_forward.247} parent=1 // pred_check_branch
      %127 = sbr.rel (0) target = $region29
    $region28: #{hdc_net_forward.247} parent=1 // pred_region
      %s129 = ssub.s32 128, 128
      %130 = vsyncadd [#allocation9], %s129
      %s132 = sshll.u32 [#allocation10], 4
      %s133 = int_to_ptr.vmem [resolvable:$true] %s132
      %135 = dma.vmem_to_hbm [thread:$0]  %s133, 128, %s4, [#allocation9]
    $region29: #{hdc_net_forward.247} parent=1 // pred_fallthru
      _
    // Predicated region
    $region30: #{hdc_net_forward.247} parent=1 // pred_check
      _
    $region31: #{hdc_net_forward.247} parent=1 // pred_check_branch
      %137 = sbr.rel (0) target = $region33
    $region32: #{hdc_net_forward.247} parent=1 // pred_region
      %138 = dma.done [#allocation4], 64
    $region33: #{hdc_net_forward.247} parent=1 // pred_fallthru
      _
    // Predicated region
    $region34: #{hdc_net_forward.247} parent=1 // pred_check
      _
    $region35: #{hdc_net_forward.247} parent=1 // pred_check_branch
      %140 = sbr.rel (0) target = $region37
    $region36: #{hdc_net_forward.247} parent=1 // pred_region
      %141 = dma.done [#allocation9], 128
    $region37: #{hdc_net_forward.247} parent=1 // pred_fallthru
      _
    // Predicated region
    $region38: #{hdc_net_forward.247} parent=1 // pred_check
      _
    $region39: #{hdc_net_forward.247} parent=1 // pred_check_branch
      %143 = sbr.rel (0) target = $region41
    $region40: #{hdc_net_forward.247} parent=1 // pred_region
      %144 = dma.done [#allocation9], 128
    $region41: #{hdc_net_forward.247} parent=1 // pred_fallthru
      _
    %145 = vsyncpa [#allocation3], 1
    %146 = vsyncpa [#allocation6], 1
    %147 = vsyncpa [#allocation4], 1
    %148 = vsyncpa [#allocation9], 1

// kernel: hdc_net_forward.252
$region0: #{hdc_net_forward.252}
  #allocation0 [shape = 'u32[]', space=smem, size = 0x4, offset = 0x4, fixed_abs, tag = 'smem constant byte address 0x4 - core index']
  #allocation1 [shape = 'u32[144,128]{1,0:T(1,128)}', space=vmem, size = 0x12000, scoped, tag = 'internal scratch']
  %s0 = inlined_call_operand.hbm [shape: bf16[64,128], index: 0, kind: input, shape index: {}]
  %s1 = inlined_call_operand.hbm [shape: f32[64,1], index: 1, kind: input, shape index: {}]
  %s2 = inlined_call_operand.hbm [shape: f32[64,1], index: 2, kind: input, shape index: {}]
  %s3 = inlined_call_operand.hbm [shape: bf16[64,128], index: 3, kind: output, shape index: {}]
  %s4 = sld [smem:[#allocation0]]
  $region34: #{hdc_net_forward.252} parent=0
    _
  %s6 = ssub.s32 1, %s4
  %s7 = scalar_select 0, %s6, %s4
  $region1: #{hdc_net_forward.252} parent=0
    #allocation2 [shape = 'u8[16384]{0}', space=vmem, size = 0x4000, scoped, tag = 'input window, operand 0, single buffered']
    #allocation3 [shape = 's32[1]{0}', space=sflag, size = 0x4, scoped, tag = 'scoped memory for hdc_net_forward.252']
    #allocation4 [shape = 's32[1]{0}', space=sflag, size = 0x4, scoped, tag = 'scoped memory for hdc_net_forward.252']
    #allocation5 [shape = 'u8[32768]{0}', space=vmem, size = 0x8000, scoped, tag = 'input window, operand 1, single buffered']
    #allocation6 [shape = 's32[1]{0}', space=sflag, size = 0x4, scoped, tag = 'scoped memory for hdc_net_forward.252']
    #allocation7 [shape = 'u8[32768]{0}', space=vmem, size = 0x8000, scoped, tag = 'input window, operand 2, single buffered']
    #allocation8 [shape = 'u8[16384]{0}', space=vmem, size = 0x4000, scoped, tag = 'output window, operand 0, single buffered']
    %8 = vsyncpa [#allocation3], 0
    %9 = vsyncpa [#allocation6], 0
    %10 = vsyncpa [#allocation4], 0
    // Predicated region
    $region2: #{hdc_net_forward.252} parent=1 // pred_check
      _
    $region3: #{hdc_net_forward.252} parent=1 // pred_check_branch
      %12 = sbr.rel (0) target = $region5
    $region4: #{hdc_net_forward.252} parent=1 // pred_region
      %s14 = ssub.s32 512, 512
      %15 = vsyncadd [#allocation3], %s14
      %s16 = sshll.u32 [#allocation2], 4
      %s17 = int_to_ptr.vmem [resolvable:$true] %s16
      %22 = dma.hbm_to_vmem [thread:$0]  %s0, 512, %s17, [#allocation3], 64, 64, 4
    $region5: #{hdc_net_forward.252} parent=1 // pred_fallthru
      _
    // Predicated region
    $region6: #{hdc_net_forward.252} parent=1 // pred_check
      _
    $region7: #{hdc_net_forward.252} parent=1 // pred_check_branch
      %24 = sbr.rel (0) target = $region9
    $region8: #{hdc_net_forward.252} parent=1 // pred_region
      %s26 = ssub.s32 1024, 1024
      %27 = vsyncadd [#allocation6], %s26
      %s28 = sshll.u32 [#allocation5], 4
      %s29 = int_to_ptr.vmem [resolvable:$true] %s28
      %34 = dma.hbm_to_vmem [thread:$0]  %s1, 1024, %s29, [#allocation6], 128, 128, 8
    $region9: #{hdc_net_forward.252} parent=1 // pred_fallthru
      _
    // Predicated region
    $region10: #{hdc_net_forward.252} parent=1 // pred_check
      _
    $region11: #{hdc_net_forward.252} parent=1 // pred_check_branch
      %36 = sbr.rel (0) target = $region13
    $region12: #{hdc_net_forward.252} parent=1 // pred_region
      %s38 = ssub.s32 1024, 1024
      %39 = vsyncadd [#allocation6], %s38
      %s40 = sshll.u32 [#allocation7], 4
      %s41 = int_to_ptr.vmem [resolvable:$true] %s40
      %46 = dma.hbm_to_vmem [thread:$0]  %s2, 1024, %s41, [#allocation6], 128, 128, 8
    $region13: #{hdc_net_forward.252} parent=1 // pred_fallthru
      _
    // Predicated region
    $region14: #{hdc_net_forward.252} parent=1 // pred_check
      _
    $region15: #{hdc_net_forward.252} parent=1 // pred_check_branch
      %48 = sbr.rel (0) target = $region17
    $region16: #{hdc_net_forward.252} parent=1 // pred_region
      %49 = dma.done [#allocation3], 512
    $region17: #{hdc_net_forward.252} parent=1 // pred_fallthru
      _
    // Predicated region
    $region18: #{hdc_net_forward.252} parent=1 // pred_check
      _
    $region19: #{hdc_net_forward.252} parent=1 // pred_check_branch
      %51 = sbr.rel (0) target = $region21
    $region20: #{hdc_net_forward.252} parent=1 // pred_region
      %52 = dma.done [#allocation6], 1024
    $region21: #{hdc_net_forward.252} parent=1 // pred_fallthru
      _
    // Predicated region
    $region22: #{hdc_net_forward.252} parent=1 // pred_check
      _
    $region23: #{hdc_net_forward.252} parent=1 // pred_check_branch
      %54 = sbr.rel (0) target = $region25
    $region24: #{hdc_net_forward.252} parent=1 // pred_region
      %55 = dma.done [#allocation6], 1024
    $region25: #{hdc_net_forward.252} parent=1 // pred_fallthru
      _
    %v56 = vld [vmem:[#allocation5] sm:$0xff]
    %v57 = vld [vmem:[#allocation5 + $0x8] sm:$0xff]
    %v58 = vld [vmem:[#allocation5 + $0x10] sm:$0xff]
    %v59 = vld [vmem:[#allocation5 + $0x18] sm:$0xff]
    %v60 = vld [vmem:[#allocation5 + $0x20] sm:$0xff]
    %v61 = vld [vmem:[#allocation5 + $0x28] sm:$0xff]
    %v62 = vld [vmem:[#allocation5 + $0x30] sm:$0xff]
    %v63 = vld [vmem:[#allocation5 + $0x38] sm:$0xff]
    %v64 = vmul.f32 %v56, 0.0078125
    %v65 = vmul.f32 %v57, 0.0078125
    %v66 = vmul.f32 %v58, 0.0078125
    %v67 = vmul.f32 %v59, 0.0078125
    %v68 = vmul.f32 %v60, 0.0078125
    %v69 = vmul.f32 %v61, 0.0078125
    %v70 = vmul.f32 %v62, 0.0078125
    %v71 = vmul.f32 %v63, 0.0078125
    %v72 = vld [vmem:[#allocation7] sm:$0xff]
    %v73 = vld [vmem:[#allocation7 + $0x8] sm:$0xff]
    %v74 = vld [vmem:[#allocation7 + $0x10] sm:$0xff]
    %v75 = vld [vmem:[#allocation7 + $0x18] sm:$0xff]
    %v76 = vld [vmem:[#allocation7 + $0x20] sm:$0xff]
    %v77 = vld [vmem:[#allocation7 + $0x28] sm:$0xff]
    %v78 = vld [vmem:[#allocation7 + $0x30] sm:$0xff]
    %v79 = vld [vmem:[#allocation7 + $0x38] sm:$0xff]
    %v80 = vmul.f32 %v72, 0.0078125
    %v81 = vmul.f32 %v73, 0.0078125
    %v82 = vmul.f32 %v74, 0.0078125
    %v83 = vmul.f32 %v75, 0.0078125
    %v84 = vmul.f32 %v76, 0.0078125
    %v85 = vmul.f32 %v77, 0.0078125
    %v86 = vmul.f32 %v78, 0.0078125
    %v87 = vmul.f32 %v79, 0.0078125
    %v88 = vmul.f32 %v64, %v64
    %v89 = vmul.f32 %v65, %v65
    %v90 = vmul.f32 %v66, %v66
    %v91 = vmul.f32 %v67, %v67
    %v92 = vmul.f32 %v68, %v68
    %v93 = vmul.f32 %v69, %v69
    %v94 = vmul.f32 %v70, %v70
    %v95 = vmul.f32 %v71, %v71
    %v96 = vsub.f32 %v80, %v88
    %v97 = vsub.f32 %v81, %v89
    %v98 = vsub.f32 %v82, %v90
    %v99 = vsub.f32 %v83, %v91
    %v100 = vsub.f32 %v84, %v92
    %v101 = vsub.f32 %v85, %v93
    %v102 = vsub.f32 %v86, %v94
    %v103 = vsub.f32 %v87, %v95
    %v104 = vmax.f32 %v96, 0.0
    %v105 = vmax.f32 %v97, 0.0
    %v106 = vmax.f32 %v98, 0.0
    %v107 = vmax.f32 %v99, 0.0
    %v108 = vmax.f32 %v100, 0.0
    %v109 = vmax.f32 %v101, 0.0
    %v110 = vmax.f32 %v102, 0.0
    %v111 = vmax.f32 %v103, 0.0
    %v112 = vadd.f32 %v104, 1e-05
    %v113 = vadd.f32 %v105, 1e-05
    %v114 = vadd.f32 %v106, 1e-05
    %v115 = vadd.f32 %v107, 1e-05
    %v116 = vadd.f32 %v108, 1e-05
    %v117 = vadd.f32 %v109, 1e-05
    %v118 = vadd.f32 %v110, 1e-05
    %v119 = vadd.f32 %v111, 1e-05
    %v120 = vrsqrt.pop %v112
    %v121 = vrsqrt.pop %v113
    %v122 = vrsqrt.pop %v114
    %v123 = vrsqrt.pop %v115
    %v124 = vrsqrt.pop %v116
    %v125 = vrsqrt.pop %v117
    %v126 = vrsqrt.pop %v118
    %v127 = vrsqrt.pop %v119
    %v128 = vld [vmem:[#allocation2] sm:$0xf]
    %v129 = vld [vmem:[#allocation2 + $0x4] sm:$0xf]
    %v130 = vld [vmem:[#allocation2 + $0x8] sm:$0xf]
    %v131 = vld [vmem:[#allocation2 + $0xc] sm:$0xf]
    %v132 = vld [vmem:[#allocation2 + $0x10] sm:$0xf]
    %v133 = vld [vmem:[#allocation2 + $0x14] sm:$0xf]
    %v134 = vld [vmem:[#allocation2 + $0x18] sm:$0xf]
    %v135 = vld [vmem:[#allocation2 + $0x1c] sm:$0xf]
    %v136 = vunpack.c.l.bf16 %v128
    %v137 = vunpack.c.l.bf16 %v129
    %v138 = vunpack.c.l.bf16 %v130
    %v139 = vunpack.c.l.bf16 %v131
    %v140 = vunpack.c.l.bf16 %v132
    %v141 = vunpack.c.l.bf16 %v133
    %v142 = vunpack.c.l.bf16 %v134
    %v143 = vunpack.c.l.bf16 %v135
    %145 = vset.pattern.permute.xlu0 0
    %146 = vperm.xlu0 %145, %v64
    %v147 = vpop.permute.xlu0 %146
    %150 = vset.pattern.permute.xlu0 0
    %151 = vperm.xlu0 %150, %v65
    %v152 = vpop.permute.xlu0 %151
    %155 = vset.pattern.permute.xlu0 0
    %156 = vperm.xlu0 %155, %v66
    %v157 = vpop.permute.xlu0 %156
    %160 = vset.pattern.permute.xlu0 0
    %161 = vperm.xlu0 %160, %v67
    %v162 = vpop.permute.xlu0 %161
    %165 = vset.pattern.permute.xlu0 0
    %166 = vperm.xlu0 %165, %v68
    %v167 = vpop.permute.xlu0 %166
    %170 = vset.pattern.permute.xlu0 0
    %171 = vperm.xlu0 %170, %v69
    %v172 = vpop.permute.xlu0 %171
    %175 = vset.pattern.permute.xlu0 0
    %176 = vperm.xlu0 %175, %v70
    %v177 = vpop.permute.xlu0 %176
    %180 = vset.pattern.permute.xlu0 0
    %181 = vperm.xlu0 %180, %v71
    %v182 = vpop.permute.xlu0 %181
    %v184 = vsub.f32 %v136, %v147
    %v185 = vsub.f32 %v137, %v152
    %v186 = vsub.f32 %v138, %v157
    %v187 = vsub.f32 %v139, %v162
    %v188 = vsub.f32 %v140, %v167
    %v189 = vsub.f32 %v141, %v172
    %v190 = vsub.f32 %v142, %v177
    %v191 = vsub.f32 %v143, %v182
    %193 = vset.pattern.permute.xlu0 0
    %194 = vperm.xlu0 %193, %v120
    %v195 = vpop.permute.xlu0 %194
    %198 = vset.pattern.permute.xlu0 0
    %199 = vperm.xlu0 %198, %v121
    %v200 = vpop.permute.xlu0 %199
    %203 = vset.pattern.permute.xlu0 0
    %204 = vperm.xlu0 %203, %v122
    %v205 = vpop.permute.xlu0 %204
    %208 = vset.pattern.permute.xlu0 0
    %209 = vperm.xlu0 %208, %v123
    %v210 = vpop.permute.xlu0 %209
    %213 = vset.pattern.permute.xlu0 0
    %214 = vperm.xlu0 %213, %v124
    %v215 = vpop.permute.xlu0 %214
    %218 = vset.pattern.permute.xlu0 0
    %219 = vperm.xlu0 %218, %v125
    %v220 = vpop.permute.xlu0 %219
    %223 = vset.pattern.permute.xlu0 0
    %224 = vperm.xlu0 %223, %v126
    %v225 = vpop.permute.xlu0 %224
    %228 = vset.pattern.permute.xlu0 0
    %229 = vperm.xlu0 %228, %v127
    %v230 = vpop.permute.xlu0 %229
    %v232 = vmul.f32 %v184, %v195
    %v233 = vmul.f32 %v185, %v200
    %v234 = vmul.f32 %v186, %v205
    %v235 = vmul.f32 %v187, %v210
    %v236 = vmul.f32 %v188, %v215
    %v237 = vmul.f32 %v189, %v220
    %v238 = vmul.f32 %v190, %v225
    %v239 = vmul.f32 %v191, %v230
    %v240 = vmax.f32 %v232, 0.0
    %v241 = vmax.f32 %v233, 0.0
    %v242 = vmax.f32 %v234, 0.0
    %v243 = vmax.f32 %v235, 0.0
    %v244 = vmax.f32 %v236, 0.0
    %v245 = vmax.f32 %v237, 0.0
    %v246 = vmax.f32 %v238, 0.0
    %v247 = vmax.f32 %v239, 0.0
    %v248 = vpack.c.bf16 %v241, %v240
    %v249 = vpack.c.bf16 %v243, %v242
    %v250 = vpack.c.bf16 %v245, %v244
    %v251 = vpack.c.bf16 %v247, %v246
    %v256 = vunpack.c.l.b16 %v248
    %v257 = vunpack.c.h.b16 %v248
    %v258 = vunpack.c.l.b16 %v249
    %v259 = vunpack.c.h.b16 %v249
    %v260 = vunpack.c.l.b16 %v250
    %v261 = vunpack.c.h.b16 %v250
    %v262 = vunpack.c.l.b16 %v251
    %v263 = vunpack.c.h.b16 %v251
    %v264 = vpack.c.b16 %v256, %v256
    %v265 = vpack.c.b16 %v257, %v257
    %v266 = vpack.c.b16 %v258, %v258
    %v267 = vpack.c.b16 %v259, %v259
    %v268 = vpack.c.b16 %v260, %v260
    %v269 = vpack.c.b16 %v261, %v261
    %v270 = vpack.c.b16 %v262, %v262
    %v271 = vpack.c.b16 %v263, %v263
    %280 = vst [vmem:[#allocation8] sm:$0xf] %v264
    %281 = vst [vmem:[#allocation8 + $0x4] sm:$0xf] %v265
    %282 = vst [vmem:[#allocation8 + $0x8] sm:$0xf] %v266
    %283 = vst [vmem:[#allocation8 + $0xc] sm:$0xf] %v267
    %284 = vst [vmem:[#allocation8 + $0x10] sm:$0xf] %v268
    %285 = vst [vmem:[#allocation8 + $0x14] sm:$0xf] %v269
    %286 = vst [vmem:[#allocation8 + $0x18] sm:$0xf] %v270
    %287 = vst [vmem:[#allocation8 + $0x1c] sm:$0xf] %v271
    // Predicated region
    $region26: #{hdc_net_forward.252} parent=1 // pred_check
      _
    $region27: #{hdc_net_forward.252} parent=1 // pred_check_branch
      %289 = sbr.rel (0) target = $region29
    $region28: #{hdc_net_forward.252} parent=1 // pred_region
      %s291 = ssub.s32 512, 512
      %292 = vsyncadd [#allocation4], %s291
      %s293 = sshll.u32 [#allocation8], 4
      %s294 = int_to_ptr.vmem [resolvable:$true] %s293
      %299 = dma.vmem_to_hbm [thread:$0]  %s294, 512, %s3, [#allocation4], 64, 64, 4
    $region29: #{hdc_net_forward.252} parent=1 // pred_fallthru
      _
    // Predicated region
    $region30: #{hdc_net_forward.252} parent=1 // pred_check
      _
    $region31: #{hdc_net_forward.252} parent=1 // pred_check_branch
      %301 = sbr.rel (0) target = $region33
    $region32: #{hdc_net_forward.252} parent=1 // pred_region
      %302 = dma.done [#allocation4], 512
    $region33: #{hdc_net_forward.252} parent=1 // pred_fallthru
      _
    %303 = vsyncpa [#allocation3], 1
    %304 = vsyncpa [#allocation6], 1
    %305 = vsyncpa [#allocation4], 1

// kernel: hdc_net_forward.274
$region0: #{hdc_net_forward.274}
  #allocation0 [shape = 'u32[]', space=smem, size = 0x4, offset = 0x4, fixed_abs, tag = 'smem constant byte address 0x4 - core index']
  #allocation1 [shape = 'u32[144,128]{1,0:T(1,128)}', space=vmem, size = 0x12000, scoped, tag = 'internal scratch']
  %s0 = inlined_call_operand.hbm [shape: bf16[64,128], index: 0, kind: input, shape index: {}]
  %s1 = inlined_call_operand.hbm [shape: f32[64,1], index: 1, kind: input, shape index: {}]
  %s2 = inlined_call_operand.hbm [shape: f32[64,1], index: 2, kind: input, shape index: {}]
  %s3 = inlined_call_operand.hbm [shape: bf16[64,128], index: 3, kind: output, shape index: {}]
  %s4 = sld [smem:[#allocation0]]
  $region34: #{hdc_net_forward.274} parent=0
    _
  %s6 = ssub.s32 1, %s4
  %s7 = scalar_select 0, %s6, %s4
  $region1: #{hdc_net_forward.274} parent=0
    #allocation2 [shape = 'u8[16384]{0}', space=vmem, size = 0x4000, scoped, tag = 'input window, operand 0, single buffered']
    #allocation3 [shape = 's32[1]{0}', space=sflag, size = 0x4, scoped, tag = 'scoped memory for hdc_net_forward.274']
    #allocation4 [shape = 's32[1]{0}', space=sflag, size = 0x4, scoped, tag = 'scoped memory for hdc_net_forward.274']
    #allocation5 [shape = 'u8[32768]{0}', space=vmem, size = 0x8000, scoped, tag = 'input window, operand 1, single buffered']
    #allocation6 [shape = 's32[1]{0}', space=sflag, size = 0x4, scoped, tag = 'scoped memory for hdc_net_forward.274']
    #allocation7 [shape = 'u8[32768]{0}', space=vmem, size = 0x8000, scoped, tag = 'input window, operand 2, single buffered']
    #allocation8 [shape = 'u8[16384]{0}', space=vmem, size = 0x4000, scoped, tag = 'output window, operand 0, single buffered']
    %8 = vsyncpa [#allocation3], 0
    %9 = vsyncpa [#allocation6], 0
    %10 = vsyncpa [#allocation4], 0
    // Predicated region
    $region2: #{hdc_net_forward.274} parent=1 // pred_check
      _
    $region3: #{hdc_net_forward.274} parent=1 // pred_check_branch
      %12 = sbr.rel (0) target = $region5
    $region4: #{hdc_net_forward.274} parent=1 // pred_region
      %s14 = ssub.s32 512, 512
      %15 = vsyncadd [#allocation3], %s14
      %s16 = sshll.u32 [#allocation2], 4
      %s17 = int_to_ptr.vmem [resolvable:$true] %s16
      %22 = dma.hbm_to_vmem [thread:$0]  %s0, 512, %s17, [#allocation3], 64, 64, 4
    $region5: #{hdc_net_forward.274} parent=1 // pred_fallthru
      _
    // Predicated region
    $region6: #{hdc_net_forward.274} parent=1 // pred_check
      _
    $region7: #{hdc_net_forward.274} parent=1 // pred_check_branch
      %24 = sbr.rel (0) target = $region9
    $region8: #{hdc_net_forward.274} parent=1 // pred_region
      %s26 = ssub.s32 1024, 1024
      %27 = vsyncadd [#allocation6], %s26
      %s28 = sshll.u32 [#allocation5], 4
      %s29 = int_to_ptr.vmem [resolvable:$true] %s28
      %34 = dma.hbm_to_vmem [thread:$0]  %s1, 1024, %s29, [#allocation6], 128, 128, 8
    $region9: #{hdc_net_forward.274} parent=1 // pred_fallthru
      _
    // Predicated region
    $region10: #{hdc_net_forward.274} parent=1 // pred_check
      _
    $region11: #{hdc_net_forward.274} parent=1 // pred_check_branch
      %36 = sbr.rel (0) target = $region13
    $region12: #{hdc_net_forward.274} parent=1 // pred_region
      %s38 = ssub.s32 1024, 1024
      %39 = vsyncadd [#allocation6], %s38
      %s40 = sshll.u32 [#allocation7], 4
      %s41 = int_to_ptr.vmem [resolvable:$true] %s40
      %46 = dma.hbm_to_vmem [thread:$0]  %s2, 1024, %s41, [#allocation6], 128, 128, 8
    $region13: #{hdc_net_forward.274} parent=1 // pred_fallthru
      _
    // Predicated region
    $region14: #{hdc_net_forward.274} parent=1 // pred_check
      _
    $region15: #{hdc_net_forward.274} parent=1 // pred_check_branch
      %48 = sbr.rel (0) target = $region17
    $region16: #{hdc_net_forward.274} parent=1 // pred_region
      %49 = dma.done [#allocation3], 512
    $region17: #{hdc_net_forward.274} parent=1 // pred_fallthru
      _
    // Predicated region
    $region18: #{hdc_net_forward.274} parent=1 // pred_check
      _
    $region19: #{hdc_net_forward.274} parent=1 // pred_check_branch
      %51 = sbr.rel (0) target = $region21
    $region20: #{hdc_net_forward.274} parent=1 // pred_region
      %52 = dma.done [#allocation6], 1024
    $region21: #{hdc_net_forward.274} parent=1 // pred_fallthru
      _
    // Predicated region
    $region22: #{hdc_net_forward.274} parent=1 // pred_check
      _
    $region23: #{hdc_net_forward.274} parent=1 // pred_check_branch
      %54 = sbr.rel (0) target = $region25
    $region24: #{hdc_net_forward.274} parent=1 // pred_region
      %55 = dma.done [#allocation6], 1024
    $region25: #{hdc_net_forward.274} parent=1 // pred_fallthru
      _
    %v56 = vld [vmem:[#allocation5] sm:$0xff]
    %v57 = vld [vmem:[#allocation5 + $0x8] sm:$0xff]
    %v58 = vld [vmem:[#allocation5 + $0x10] sm:$0xff]
    %v59 = vld [vmem:[#allocation5 + $0x18] sm:$0xff]
    %v60 = vld [vmem:[#allocation5 + $0x20] sm:$0xff]
    %v61 = vld [vmem:[#allocation5 + $0x28] sm:$0xff]
    %v62 = vld [vmem:[#allocation5 + $0x30] sm:$0xff]
    %v63 = vld [vmem:[#allocation5 + $0x38] sm:$0xff]
    %v64 = vmul.f32 %v56, 0.0009765625
    %v65 = vmul.f32 %v57, 0.0009765625
    %v66 = vmul.f32 %v58, 0.0009765625
    %v67 = vmul.f32 %v59, 0.0009765625
    %v68 = vmul.f32 %v60, 0.0009765625
    %v69 = vmul.f32 %v61, 0.0009765625
    %v70 = vmul.f32 %v62, 0.0009765625
    %v71 = vmul.f32 %v63, 0.0009765625
    %v72 = vld [vmem:[#allocation7] sm:$0xff]
    %v73 = vld [vmem:[#allocation7 + $0x8] sm:$0xff]
    %v74 = vld [vmem:[#allocation7 + $0x10] sm:$0xff]
    %v75 = vld [vmem:[#allocation7 + $0x18] sm:$0xff]
    %v76 = vld [vmem:[#allocation7 + $0x20] sm:$0xff]
    %v77 = vld [vmem:[#allocation7 + $0x28] sm:$0xff]
    %v78 = vld [vmem:[#allocation7 + $0x30] sm:$0xff]
    %v79 = vld [vmem:[#allocation7 + $0x38] sm:$0xff]
    %v80 = vmul.f32 %v72, 0.0009765625
    %v81 = vmul.f32 %v73, 0.0009765625
    %v82 = vmul.f32 %v74, 0.0009765625
    %v83 = vmul.f32 %v75, 0.0009765625
    %v84 = vmul.f32 %v76, 0.0009765625
    %v85 = vmul.f32 %v77, 0.0009765625
    %v86 = vmul.f32 %v78, 0.0009765625
    %v87 = vmul.f32 %v79, 0.0009765625
    %v88 = vmul.f32 %v64, %v64
    %v89 = vmul.f32 %v65, %v65
    %v90 = vmul.f32 %v66, %v66
    %v91 = vmul.f32 %v67, %v67
    %v92 = vmul.f32 %v68, %v68
    %v93 = vmul.f32 %v69, %v69
    %v94 = vmul.f32 %v70, %v70
    %v95 = vmul.f32 %v71, %v71
    %v96 = vsub.f32 %v80, %v88
    %v97 = vsub.f32 %v81, %v89
    %v98 = vsub.f32 %v82, %v90
    %v99 = vsub.f32 %v83, %v91
    %v100 = vsub.f32 %v84, %v92
    %v101 = vsub.f32 %v85, %v93
    %v102 = vsub.f32 %v86, %v94
    %v103 = vsub.f32 %v87, %v95
    %v104 = vmax.f32 %v96, 0.0
    %v105 = vmax.f32 %v97, 0.0
    %v106 = vmax.f32 %v98, 0.0
    %v107 = vmax.f32 %v99, 0.0
    %v108 = vmax.f32 %v100, 0.0
    %v109 = vmax.f32 %v101, 0.0
    %v110 = vmax.f32 %v102, 0.0
    %v111 = vmax.f32 %v103, 0.0
    %v112 = vadd.f32 %v104, 1e-05
    %v113 = vadd.f32 %v105, 1e-05
    %v114 = vadd.f32 %v106, 1e-05
    %v115 = vadd.f32 %v107, 1e-05
    %v116 = vadd.f32 %v108, 1e-05
    %v117 = vadd.f32 %v109, 1e-05
    %v118 = vadd.f32 %v110, 1e-05
    %v119 = vadd.f32 %v111, 1e-05
    %v120 = vrsqrt.pop %v112
    %v121 = vrsqrt.pop %v113
    %v122 = vrsqrt.pop %v114
    %v123 = vrsqrt.pop %v115
    %v124 = vrsqrt.pop %v116
    %v125 = vrsqrt.pop %v117
    %v126 = vrsqrt.pop %v118
    %v127 = vrsqrt.pop %v119
    %v128 = vld [vmem:[#allocation2] sm:$0xf]
    %v129 = vld [vmem:[#allocation2 + $0x4] sm:$0xf]
    %v130 = vld [vmem:[#allocation2 + $0x8] sm:$0xf]
    %v131 = vld [vmem:[#allocation2 + $0xc] sm:$0xf]
    %v132 = vld [vmem:[#allocation2 + $0x10] sm:$0xf]
    %v133 = vld [vmem:[#allocation2 + $0x14] sm:$0xf]
    %v134 = vld [vmem:[#allocation2 + $0x18] sm:$0xf]
    %v135 = vld [vmem:[#allocation2 + $0x1c] sm:$0xf]
    %v136 = vunpack.c.l.bf16 %v128
    %v137 = vunpack.c.l.bf16 %v129
    %v138 = vunpack.c.l.bf16 %v130
    %v139 = vunpack.c.l.bf16 %v131
    %v140 = vunpack.c.l.bf16 %v132
    %v141 = vunpack.c.l.bf16 %v133
    %v142 = vunpack.c.l.bf16 %v134
    %v143 = vunpack.c.l.bf16 %v135
    %145 = vset.pattern.permute.xlu0 0
    %146 = vperm.xlu0 %145, %v64
    %v147 = vpop.permute.xlu0 %146
    %150 = vset.pattern.permute.xlu0 0
    %151 = vperm.xlu0 %150, %v65
    %v152 = vpop.permute.xlu0 %151
    %155 = vset.pattern.permute.xlu0 0
    %156 = vperm.xlu0 %155, %v66
    %v157 = vpop.permute.xlu0 %156
    %160 = vset.pattern.permute.xlu0 0
    %161 = vperm.xlu0 %160, %v67
    %v162 = vpop.permute.xlu0 %161
    %165 = vset.pattern.permute.xlu0 0
    %166 = vperm.xlu0 %165, %v68
    %v167 = vpop.permute.xlu0 %166
    %170 = vset.pattern.permute.xlu0 0
    %171 = vperm.xlu0 %170, %v69
    %v172 = vpop.permute.xlu0 %171
    %175 = vset.pattern.permute.xlu0 0
    %176 = vperm.xlu0 %175, %v70
    %v177 = vpop.permute.xlu0 %176
    %180 = vset.pattern.permute.xlu0 0
    %181 = vperm.xlu0 %180, %v71
    %v182 = vpop.permute.xlu0 %181
    %v184 = vsub.f32 %v136, %v147
    %v185 = vsub.f32 %v137, %v152
    %v186 = vsub.f32 %v138, %v157
    %v187 = vsub.f32 %v139, %v162
    %v188 = vsub.f32 %v140, %v167
    %v189 = vsub.f32 %v141, %v172
    %v190 = vsub.f32 %v142, %v177
    %v191 = vsub.f32 %v143, %v182
    %193 = vset.pattern.permute.xlu0 0
    %194 = vperm.xlu0 %193, %v120
    %v195 = vpop.permute.xlu0 %194
    %198 = vset.pattern.permute.xlu0 0
    %199 = vperm.xlu0 %198, %v121
    %v200 = vpop.permute.xlu0 %199
    %203 = vset.pattern.permute.xlu0 0
    %204 = vperm.xlu0 %203, %v122
    %v205 = vpop.permute.xlu0 %204
    %208 = vset.pattern.permute.xlu0 0
    %209 = vperm.xlu0 %208, %v123
    %v210 = vpop.permute.xlu0 %209
    %213 = vset.pattern.permute.xlu0 0
    %214 = vperm.xlu0 %213, %v124
    %v215 = vpop.permute.xlu0 %214
    %218 = vset.pattern.permute.xlu0 0
    %219 = vperm.xlu0 %218, %v125
    %v220 = vpop.permute.xlu0 %219
    %223 = vset.pattern.permute.xlu0 0
    %224 = vperm.xlu0 %223, %v126
    %v225 = vpop.permute.xlu0 %224
    %228 = vset.pattern.permute.xlu0 0
    %229 = vperm.xlu0 %228, %v127
    %v230 = vpop.permute.xlu0 %229
    %v232 = vmul.f32 %v184, %v195
    %v233 = vmul.f32 %v185, %v200
    %v234 = vmul.f32 %v186, %v205
    %v235 = vmul.f32 %v187, %v210
    %v236 = vmul.f32 %v188, %v215
    %v237 = vmul.f32 %v189, %v220
    %v238 = vmul.f32 %v190, %v225
    %v239 = vmul.f32 %v191, %v230
    %v240 = vmax.f32 %v232, 0.0
    %v241 = vmax.f32 %v233, 0.0
    %v242 = vmax.f32 %v234, 0.0
    %v243 = vmax.f32 %v235, 0.0
    %v244 = vmax.f32 %v236, 0.0
    %v245 = vmax.f32 %v237, 0.0
    %v246 = vmax.f32 %v238, 0.0
    %v247 = vmax.f32 %v239, 0.0
    %v248 = vpack.c.bf16 %v241, %v240
    %v249 = vpack.c.bf16 %v243, %v242
    %v250 = vpack.c.bf16 %v245, %v244
    %v251 = vpack.c.bf16 %v247, %v246
    %v256 = vunpack.c.l.b16 %v248
    %v257 = vunpack.c.h.b16 %v248
    %v258 = vunpack.c.l.b16 %v249
    %v259 = vunpack.c.h.b16 %v249
    %v260 = vunpack.c.l.b16 %v250
    %v261 = vunpack.c.h.b16 %v250
    %v262 = vunpack.c.l.b16 %v251
    %v263 = vunpack.c.h.b16 %v251
    %v264 = vpack.c.b16 %v256, %v256
    %v265 = vpack.c.b16 %v257, %v257
    %v266 = vpack.c.b16 %v258, %v258
    %v267 = vpack.c.b16 %v259, %v259
    %v268 = vpack.c.b16 %v260, %v260
    %v269 = vpack.c.b16 %v261, %v261
    %v270 = vpack.c.b16 %v262, %v262
    %v271 = vpack.c.b16 %v263, %v263
    %280 = vst [vmem:[#allocation8] sm:$0xf] %v264
    %281 = vst [vmem:[#allocation8 + $0x4] sm:$0xf] %v265
    %282 = vst [vmem:[#allocation8 + $0x8] sm:$0xf] %v266
    %283 = vst [vmem:[#allocation8 + $0xc] sm:$0xf] %v267
    %284 = vst [vmem:[#allocation8 + $0x10] sm:$0xf] %v268
    %285 = vst [vmem:[#allocation8 + $0x14] sm:$0xf] %v269
    %286 = vst [vmem:[#allocation8 + $0x18] sm:$0xf] %v270
    %287 = vst [vmem:[#allocation8 + $0x1c] sm:$0xf] %v271
    // Predicated region
    $region26: #{hdc_net_forward.274} parent=1 // pred_check
      _
    $region27: #{hdc_net_forward.274} parent=1 // pred_check_branch
      %289 = sbr.rel (0) target = $region29
    $region28: #{hdc_net_forward.274} parent=1 // pred_region
      %s291 = ssub.s32 512, 512
      %292 = vsyncadd [#allocation4], %s291
      %s293 = sshll.u32 [#allocation8], 4
      %s294 = int_to_ptr.vmem [resolvable:$true] %s293
      %299 = dma.vmem_to_hbm [thread:$0]  %s294, 512, %s3, [#allocation4], 64, 64, 4
    $region29: #{hdc_net_forward.274} parent=1 // pred_fallthru
      _
    // Predicated region
    $region30: #{hdc_net_forward.274} parent=1 // pred_check
      _
    $region31: #{hdc_net_forward.274} parent=1 // pred_check_branch
      %301 = sbr.rel (0) target = $region33
    $region32: #{hdc_net_forward.274} parent=1 // pred_region
      %302 = dma.done [#allocation4], 512
    $region33: #{hdc_net_forward.274} parent=1 // pred_fallthru
      _
    %303 = vsyncpa [#allocation3], 1
    %304 = vsyncpa [#allocation6], 1
    %305 = vsyncpa [#allocation4], 1

// kernel: hdc_net_forward.291
$region0: #{hdc_net_forward.291}
  #allocation0 [shape = 'u32[]', space=smem, size = 0x4, offset = 0x4, fixed_abs, tag = 'smem constant byte address 0x4 - core index']
  #allocation1 [shape = 'u32[144,128]{1,0:T(1,128)}', space=vmem, size = 0x12000, scoped, tag = 'internal scratch']
  %s0 = inlined_call_operand.hbm [shape: bf16[16,1024], index: 0, kind: input, shape index: {}]
  %s1 = inlined_call_operand.hbm [shape: bf16[8,16], index: 1, kind: input, shape index: {}]
  %s2 = inlined_call_operand.hbm [shape: bf16[8,1024], index: 2, kind: output, shape index: {0}]
  %s3 = inlined_call_operand.hbm [shape: f32[1,8,1], index: 3, kind: output, shape index: {1}]
  %s4 = inlined_call_operand.hbm [shape: f32[1,8,1], index: 4, kind: output, shape index: {2}]
  %5 = xla_tuple %s2, %s3, %s4
  %s6 = sld [smem:[#allocation0]]
  $region42: #{hdc_net_forward.291} parent=0
    _
  %s8 = ssub.s32 1, %s6
  %s9 = scalar_select 0, %s8, %s6
  $region1: #{hdc_net_forward.291} parent=0
    #allocation2 [shape = 'u8[32768]{0}', space=vmem, size = 0x8000, scoped, tag = 'input window, operand 0, single buffered']
    #allocation3 [shape = 's32[1]{0}', space=sflag, size = 0x4, scoped, tag = 'scoped memory for hdc_net_forward.291']
    #allocation4 [shape = 's32[1]{0}', space=sflag, size = 0x4, scoped, tag = 'scoped memory for hdc_net_forward.291']
    #allocation5 [shape = 'u8[2048]{0}', space=vmem, size = 0x800, scoped, tag = 'input window, operand 1, single buffered']
    #allocation6 [shape = 's32[1]{0}', space=sflag, size = 0x4, scoped, tag = 'scoped memory for hdc_net_forward.291']
    #allocation7 [shape = 'u8[16384]{0}', space=vmem, size = 0x4000, scoped, tag = 'output window, operand 0, single buffered']
    #allocation8 [shape = 'u8[4096]{0}', space=vmem, size = 0x1000, scoped, tag = 'output window, operand 1, single buffered']
    #allocation9 [shape = 's32[1]{0}', space=sflag, size = 0x4, scoped, tag = 'scoped memory for hdc_net_forward.291']
    #allocation10 [shape = 'u8[4096]{0}', space=vmem, size = 0x1000, scoped, tag = 'output window, operand 2, single buffered']
    %10 = vsyncpa [#allocation3], 0
    %11 = vsyncpa [#allocation6], 0
    %12 = vsyncpa [#allocation4], 0
    %13 = vsyncpa [#allocation9], 0
    // Predicated region
    $region2: #{hdc_net_forward.291} parent=1 // pred_check
      _
    $region3: #{hdc_net_forward.291} parent=1 // pred_check_branch
      %15 = sbr.rel (0) target = $region5
    $region4: #{hdc_net_forward.291} parent=1 // pred_region
      %s17 = ssub.s32 1024, 1024
      %18 = vsyncadd [#allocation3], %s17
      %s19 = sshll.u32 [#allocation2], 4
      %s20 = int_to_ptr.vmem [resolvable:$true] %s19
      %25 = dma.hbm_to_vmem [thread:$0]  %s0, 1024, %s20, [#allocation3], 512, 512, 32
    $region5: #{hdc_net_forward.291} parent=1 // pred_fallthru
      _
    // Predicated region
    $region6: #{hdc_net_forward.291} parent=1 // pred_check
      _
    $region7: #{hdc_net_forward.291} parent=1 // pred_check_branch
      %27 = sbr.rel (0) target = $region9
    $region8: #{hdc_net_forward.291} parent=1 // pred_region
      %s29 = ssub.s32 64, 64
      %30 = vsyncadd [#allocation6], %s29
      %s32 = sshll.u32 [#allocation5], 4
      %s33 = int_to_ptr.vmem [resolvable:$true] %s32
      %35 = dma.hbm_to_vmem [thread:$0]  %s1, 64, %s33, [#allocation6]
    $region9: #{hdc_net_forward.291} parent=1 // pred_fallthru
      _
    // Predicated region
    $region10: #{hdc_net_forward.291} parent=1 // pred_check
      _
    $region11: #{hdc_net_forward.291} parent=1 // pred_check_branch
      %37 = sbr.rel (0) target = $region13
    $region12: #{hdc_net_forward.291} parent=1 // pred_region
      %38 = dma.done [#allocation3], 1024
    $region13: #{hdc_net_forward.291} parent=1 // pred_fallthru
      _
    // Predicated region
    $region14: #{hdc_net_forward.291} parent=1 // pred_check
      _
    $region15: #{hdc_net_forward.291} parent=1 // pred_check_branch
      %40 = sbr.rel (0) target = $region17
    $region16: #{hdc_net_forward.291} parent=1 // pred_region
      %41 = dma.done [#allocation6], 64
    $region17: #{hdc_net_forward.291} parent=1 // pred_fallthru
      _
    %v43 = vld [vmem:[#allocation5] sm:$0xf]
    %v44 = vld [vmem:[#allocation2] sm:$0xff]
    %v45 = vld [vmem:[#allocation2 + $0x8] sm:$0xff]
    %v46 = vld [vmem:[#allocation2 + $0x10] sm:$0xff]
    %v47 = vld [vmem:[#allocation2 + $0x18] sm:$0xff]
    %v48 = vld [vmem:[#allocation2 + $0x20] sm:$0xff]
    %v49 = vld [vmem:[#allocation2 + $0x28] sm:$0xff]
    %v50 = vld [vmem:[#allocation2 + $0x30] sm:$0xff]
    %v51 = vld [vmem:[#allocation2 + $0x38] sm:$0xff]
    %v60 = vunpack.c.l.b16 %v44
    %v61 = vunpack.c.h.b16 %v44
    %v62 = vunpack.c.l.b16 %v45
    %v63 = vunpack.c.h.b16 %v45
    %v64 = vunpack.c.l.b16 %v46
    %v65 = vunpack.c.h.b16 %v46
    %v66 = vunpack.c.l.b16 %v47
    %v67 = vunpack.c.h.b16 %v47
    %v68 = vunpack.c.l.b16 %v48
    %v69 = vunpack.c.h.b16 %v48
    %v70 = vunpack.c.l.b16 %v49
    %v71 = vunpack.c.h.b16 %v49
    %v72 = vunpack.c.l.b16 %v50
    %v73 = vunpack.c.h.b16 %v50
    %v74 = vunpack.c.l.b16 %v51
    %v75 = vunpack.c.h.b16 %v51
    %v76 = vpack.c.b16 %v68, %v60
    %v77 = vpack.c.b16 %v69, %v61
    %v78 = vpack.c.b16 %v70, %v62
    %v79 = vpack.c.b16 %v71, %v63
    %v80 = vpack.c.b16 %v72, %v64
    %v81 = vpack.c.b16 %v73, %v65
    %v82 = vpack.c.b16 %v74, %v66
    %v83 = vpack.c.b16 %v75, %v67
    %vm92 = vcmask 130048
    %v94 = vsel %vm92, %v43, 0
    %96 = vmatprep.subr.bf16.mxu0 %v77
    %97 = vmatpush1.bf16.msra.mxu0 %v76
    %98 = vmatprep.subr.bf16.mxu0 0
    %99 = vmatpush1.bf16.msra.mxu0 0
    %100 = vmatprep.subr.bf16.mxu0 0
    %101 = vmatpush1.bf16.msra.mxu0 0
    %102 = vmatprep.subr.bf16.mxu0 0
    %103 = vmatpush1.bf16.msra.mxu0 0
    %104 = vmatprep.subr.bf16.mxu0 0
    %105 = vmatpush1.bf16.msra.mxu0 0
    %106 = vmatprep.subr.bf16.mxu0 0
    %107 = vmatpush1.bf16.msra.mxu0 0
    %108 = vmatprep.subr.bf16.mxu0 0
    %109 = vmatpush1.bf16.msra.mxu0 0
    %110 = vmatprep.subr.bf16.mxu0 0
    %111 = vmatpush1.bf16.msra.mxu0 0
    %112 = vmatprep.subr.bf16.mxu0 0
    %113 = vmatpush1.bf16.msra.mxu0 0
    %114 = vmatprep.subr.bf16.mxu0 0
    %115 = vmatpush1.bf16.msra.mxu0 0
    %116 = vmatprep.subr.bf16.mxu0 0
    %117 = vmatpush1.bf16.msra.mxu0 0
    %118 = vmatprep.subr.bf16.mxu0 0
    %119 = vmatpush1.bf16.msra.mxu0 0
    %120 = vmatprep.subr.bf16.mxu0 0
    %121 = vmatpush1.bf16.msra.mxu0 0
    %122 = vmatprep.subr.bf16.mxu0 0
    %123 = vmatpush1.bf16.msra.mxu0 0
    %124 = vmatprep.subr.bf16.mxu0 0
    %125 = vmatpush1.bf16.msra.mxu0 0
    %126 = vmatprep.subr.bf16.mxu0 0
    %127 = vmatpush1.bf16.msra.mxu0 0
    %128 = vmatprep.mubr.bf16.mxu0 0
    %129 = vmatmul.mubr.bf16.gmra.mrb[0].mxu0 %v94
    %v130 = vpop.f32.mrb[0].mxu0
    %v131 = vadd.f32 0.0, %v130
    %v132 = vpop.f32.mrb[0].mxu0
    %v133 = vadd.f32 0.0, %v132
    %v134 = vpop.f32.mrb[0].mxu0
    %v135 = vpop.f32.mrb[0].mxu0
    %136 = vdwg.mxu0
    %137 = vmatprep.subr.bf16.mxu0 %v79
    %138 = vmatpush1.bf16.msra.mxu0 %v78
    %139 = vmatprep.subr.bf16.mxu0 0
    %140 = vmatpush1.bf16.msra.mxu0 0
    %141 = vmatprep.subr.bf16.mxu0 0
    %142 = vmatpush1.bf16.msra.mxu0 0
    %143 = vmatprep.subr.bf16.mxu0 0
    %144 = vmatpush1.bf16.msra.mxu0 0
    %145 = vmatprep.subr.bf16.mxu0 0
    %146 = vmatpush1.bf16.msra.mxu0 0
    %147 = vmatprep.subr.bf16.mxu0 0
    %148 = vmatpush1.bf16.msra.mxu0 0
    %149 = vmatprep.subr.bf16.mxu0 0
    %150 = vmatpush1.bf16.msra.mxu0 0
    %151 = vmatprep.subr.bf16.mxu0 0
    %152 = vmatpush1.bf16.msra.mxu0 0
    %153 = vmatprep.subr.bf16.mxu0 0
    %154 = vmatpush1.bf16.msra.mxu0 0
    %155 = vmatprep.subr.bf16.mxu0 0
    %156 = vmatpush1.bf16.msra.mxu0 0
    %157 = vmatprep.subr.bf16.mxu0 0
    %158 = vmatpush1.bf16.msra.mxu0 0
    %159 = vmatprep.subr.bf16.mxu0 0
    %160 = vmatpush1.bf16.msra.mxu0 0
    %161 = vmatprep.subr.bf16.mxu0 0
    %162 = vmatpush1.bf16.msra.mxu0 0
    %163 = vmatprep.subr.bf16.mxu0 0
    %164 = vmatpush1.bf16.msra.mxu0 0
    %165 = vmatprep.subr.bf16.mxu0 0
    %166 = vmatpush1.bf16.msra.mxu0 0
    %167 = vmatprep.subr.bf16.mxu0 0
    %168 = vmatpush1.bf16.msra.mxu0 0
    %169 = vmatprep.mubr.bf16.mxu0 0
    %170 = vmatmul.mubr.bf16.gmra.mrb[0].mxu0 %v94
    %v171 = vpop.f32.mrb[0].mxu0
    %v172 = vadd.f32 0.0, %v171
    %v173 = vpop.f32.mrb[0].mxu0
    %v174 = vadd.f32 0.0, %v173
    %v175 = vpop.f32.mrb[0].mxu0
    %v176 = vpop.f32.mrb[0].mxu0
    %177 = vdwg.mxu0
    %178 = vmatprep.subr.bf16.mxu0 %v81
    %179 = vmatpush1.bf16.msra.mxu0 %v80
    %180 = vmatprep.subr.bf16.mxu0 0
    %181 = vmatpush1.bf16.msra.mxu0 0
    %182 = vmatprep.subr.bf16.mxu0 0
    %183 = vmatpush1.bf16.msra.mxu0 0
    %184 = vmatprep.subr.bf16.mxu0 0
    %185 = vmatpush1.bf16.msra.mxu0 0
    %186 = vmatprep.subr.bf16.mxu0 0
    %187 = vmatpush1.bf16.msra.mxu0 0
    %188 = vmatprep.subr.bf16.mxu0 0
    %189 = vmatpush1.bf16.msra.mxu0 0
    %190 = vmatprep.subr.bf16.mxu0 0
    %191 = vmatpush1.bf16.msra.mxu0 0
    %192 = vmatprep.subr.bf16.mxu0 0
    %193 = vmatpush1.bf16.msra.mxu0 0
    %194 = vmatprep.subr.bf16.mxu0 0
    %195 = vmatpush1.bf16.msra.mxu0 0
    %196 = vmatprep.subr.bf16.mxu0 0
    %197 = vmatpush1.bf16.msra.mxu0 0
    %198 = vmatprep.subr.bf16.mxu0 0
    %199 = vmatpush1.bf16.msra.mxu0 0
    %200 = vmatprep.subr.bf16.mxu0 0
    %201 = vmatpush1.bf16.msra.mxu0 0
    %202 = vmatprep.subr.bf16.mxu0 0
    %203 = vmatpush1.bf16.msra.mxu0 0
    %204 = vmatprep.subr.bf16.mxu0 0
    %205 = vmatpush1.bf16.msra.mxu0 0
    %206 = vmatprep.subr.bf16.mxu0 0
    %207 = vmatpush1.bf16.msra.mxu0 0
    %208 = vmatprep.subr.bf16.mxu0 0
    %209 = vmatpush1.bf16.msra.mxu0 0
    %210 = vmatprep.mubr.bf16.mxu0 0
    %211 = vmatmul.mubr.bf16.gmra.mrb[0].mxu0 %v94
    %v212 = vpop.f32.mrb[0].mxu0
    %v213 = vadd.f32 0.0, %v212
    %v214 = vpop.f32.mrb[0].mxu0
    %v215 = vadd.f32 0.0, %v214
    %v216 = vpop.f32.mrb[0].mxu0
    %v217 = vpop.f32.mrb[0].mxu0
    %218 = vdwg.mxu0
    %219 = vmatprep.subr.bf16.mxu0 %v83
    %220 = vmatpush1.bf16.msra.mxu0 %v82
    %221 = vmatprep.subr.bf16.mxu0 0
    %222 = vmatpush1.bf16.msra.mxu0 0
    %223 = vmatprep.subr.bf16.mxu0 0
    %224 = vmatpush1.bf16.msra.mxu0 0
    %225 = vmatprep.subr.bf16.mxu0 0
    %226 = vmatpush1.bf16.msra.mxu0 0
    %227 = vmatprep.subr.bf16.mxu0 0
    %228 = vmatpush1.bf16.msra.mxu0 0
    %229 = vmatprep.subr.bf16.mxu0 0
    %230 = vmatpush1.bf16.msra.mxu0 0
    %231 = vmatprep.subr.bf16.mxu0 0
    %232 = vmatpush1.bf16.msra.mxu0 0
    %233 = vmatprep.subr.bf16.mxu0 0
    %234 = vmatpush1.bf16.msra.mxu0 0
    %235 = vmatprep.subr.bf16.mxu0 0
    %236 = vmatpush1.bf16.msra.mxu0 0
    %237 = vmatprep.subr.bf16.mxu0 0
    %238 = vmatpush1.bf16.msra.mxu0 0
    %239 = vmatprep.subr.bf16.mxu0 0
    %240 = vmatpush1.bf16.msra.mxu0 0
    %241 = vmatprep.subr.bf16.mxu0 0
    %242 = vmatpush1.bf16.msra.mxu0 0
    %243 = vmatprep.subr.bf16.mxu0 0
    %244 = vmatpush1.bf16.msra.mxu0 0
    %245 = vmatprep.subr.bf16.mxu0 0
    %246 = vmatpush1.bf16.msra.mxu0 0
    %247 = vmatprep.subr.bf16.mxu0 0
    %248 = vmatpush1.bf16.msra.mxu0 0
    %249 = vmatprep.subr.bf16.mxu0 0
    %250 = vmatpush1.bf16.msra.mxu0 0
    %251 = vmatprep.mubr.bf16.mxu0 0
    %252 = vmatmul.mubr.bf16.gmra.mrb[0].mxu0 %v94
    %v253 = vpop.f32.mrb[0].mxu0
    %v254 = vadd.f32 0.0, %v253
    %v255 = vpop.f32.mrb[0].mxu0
    %v256 = vadd.f32 0.0, %v255
    %v257 = vpop.f32.mrb[0].mxu0
    %v258 = vpop.f32.mrb[0].mxu0
    %259 = vdwg.mxu0
    %v260 = vpack.c.bf16 %v131, %v131
    %v261 = vpack.c.bf16 %v133, %v133
    %v262 = vpack.c.bf16 %v172, %v172
    %v263 = vpack.c.bf16 %v174, %v174
    %v264 = vpack.c.bf16 %v213, %v213
    %v265 = vpack.c.bf16 %v215, %v215
    %v266 = vpack.c.bf16 %v254, %v254
    %v267 = vpack.c.bf16 %v256, %v256
    %v276 = vunpack.c.l.b16 %v260
    %v277 = vunpack.c.l.b16 %v261
    %v278 = vunpack.c.l.b16 %v262
    %v279 = vunpack.c.l.b16 %v263
    %v280 = vunpack.c.l.b16 %v264
    %v281 = vunpack.c.l.b16 %v265
    %v282 = vunpack.c.l.b16 %v266
    %v283 = vunpack.c.l.b16 %v267
    %v284 = vpack.c.b16 %v277, %v276
    %v285 = vpack.c.b16 %v279, %v278
    %v286 = vpack.c.b16 %v281, %v280
    %v287 = vpack.c.b16 %v283, %v282
    %292 = vst [vmem:[#allocation7] sm:$0xff] %v284
    %293 = vst [vmem:[#allocation7 + $0x8] sm:$0xff] %v285
    %294 = vst [vmem:[#allocation7 + $0x10] sm:$0xff] %v286
    %295 = vst [vmem:[#allocation7 + $0x18] sm:$0xff] %v287
    %v296 = vadd.f32 %v131, %v133
    %v297 = vadd.f32 %v296, %v172
    %v298 = vadd.f32 %v297, %v174
    %v299 = vadd.f32 %v298, %v213
    %v300 = vadd.f32 %v299, %v215
    %v301 = vadd.f32 %v300, %v254
    %v302 = vadd.f32 %v301, %v256
    %303 = vadd.xlane.f32.xlu0 %v302
    %v304 = vpop.xlane.xlu0 %303
    %vm305 = vcmask 7168
    %306 = vst.msk [vmem:[#allocation8] sm:$0xff] %vm305, %v304
    %v307 = vmul.f32 %v131, %v131
    %v308 = vmul.f32 %v133, %v133
    %v309 = vmul.f32 %v172, %v172
    %v310 = vmul.f32 %v174, %v174
    %v311 = vmul.f32 %v213, %v213
    %v312 = vmul.f32 %v215, %v215
    %v313 = vmul.f32 %v254, %v254
    %v314 = vmul.f32 %v256, %v256
    %v315 = vadd.f32 %v307, %v308
    %v316 = vadd.f32 %v315, %v309
    %v317 = vadd.f32 %v316, %v310
    %v318 = vadd.f32 %v317, %v311
    %v319 = vadd.f32 %v318, %v312
    %v320 = vadd.f32 %v319, %v313
    %v321 = vadd.f32 %v320, %v314
    %322 = vadd.xlane.f32.xlu0 %v321
    %v323 = vpop.xlane.xlu0 %322
    %324 = vst.msk [vmem:[#allocation10] sm:$0xff] %vm305, %v323
    // Predicated region
    $region18: #{hdc_net_forward.291} parent=1 // pred_check
      _
    $region19: #{hdc_net_forward.291} parent=1 // pred_check_branch
      %326 = sbr.rel (0) target = $region21
    $region20: #{hdc_net_forward.291} parent=1 // pred_region
      %s328 = ssub.s32 512, 512
      %329 = vsyncadd [#allocation4], %s328
      %s331 = sshll.u32 [#allocation7], 4
      %s332 = int_to_ptr.vmem [resolvable:$true] %s331
      %334 = dma.vmem_to_hbm [thread:$0]  %s332, 512, %s2, [#allocation4]
    $region21: #{hdc_net_forward.291} parent=1 // pred_fallthru
      _
    // Predicated region
    $region22: #{hdc_net_forward.291} parent=1 // pred_check
      _
    $region23: #{hdc_net_forward.291} parent=1 // pred_check_branch
      %336 = sbr.rel (0) target = $region25
    $region24: #{hdc_net_forward.291} parent=1 // pred_region
      %s338 = ssub.s32 128, 128
      %339 = vsyncadd [#allocation9], %s338
      %s341 = sshll.u32 [#allocation8], 4
      %s342 = int_to_ptr.vmem [resolvable:$true] %s341
      %344 = dma.vmem_to_hbm [thread:$0]  %s342, 128, %s3, [#allocation9]
    $region25: #{hdc_net_forward.291} parent=1 // pred_fallthru
      _
    // Predicated region
    $region26: #{hdc_net_forward.291} parent=1 // pred_check
      _
    $region27: #{hdc_net_forward.291} parent=1 // pred_check_branch
      %346 = sbr.rel (0) target = $region29
    $region28: #{hdc_net_forward.291} parent=1 // pred_region
      %s348 = ssub.s32 128, 128
      %349 = vsyncadd [#allocation9], %s348
      %s351 = sshll.u32 [#allocation10], 4
      %s352 = int_to_ptr.vmem [resolvable:$true] %s351
      %354 = dma.vmem_to_hbm [thread:$0]  %s352, 128, %s4, [#allocation9]
    $region29: #{hdc_net_forward.291} parent=1 // pred_fallthru
      _
    // Predicated region
    $region30: #{hdc_net_forward.291} parent=1 // pred_check
      _
    $region31: #{hdc_net_forward.291} parent=1 // pred_check_branch
      %356 = sbr.rel (0) target = $region33
    $region32: #{hdc_net_forward.291} parent=1 // pred_region
      %357 = dma.done [#allocation4], 512
    $region33: #{hdc_net_forward.291} parent=1 // pred_fallthru
      _
    // Predicated region
    $region34: #{hdc_net_forward.291} parent=1 // pred_check
      _
    $region35: #{hdc_net_forward.291} parent=1 // pred_check_branch
      %359 = sbr.rel (0) target = $region37
    $region36: #{hdc_net_forward.291} parent=1 // pred_region
      %360 = dma.done [#allocation9], 128
    $region37: #{hdc_net_forward.291} parent=1 // pred_fallthru
      _
    // Predicated region
    $region38: #{hdc_net_forward.291} parent=1 // pred_check
      _
    $region39: #{hdc_net_forward.291} parent=1 // pred_check_branch
      %362 = sbr.rel (0) target = $region41
    $region40: #{hdc_net_forward.291} parent=1 // pred_region
      %363 = dma.done [#allocation9], 128
    $region41: #{hdc_net_forward.291} parent=1 // pred_fallthru
      _
    %364 = vsyncpa [#allocation3], 1
    %365 = vsyncpa [#allocation6], 1
    %366 = vsyncpa [#allocation4], 1
    %367 = vsyncpa [#allocation9], 1

// kernel: hdc_net_forward.295
$region0: #{hdc_net_forward.295}
  #allocation0 [shape = 'u32[]', space=smem, size = 0x4, offset = 0x4, fixed_abs, tag = 'smem constant byte address 0x4 - core index']
  #allocation1 [shape = 'u32[144,128]{1,0:T(1,128)}', space=vmem, size = 0x12000, scoped, tag = 'internal scratch']
  %s0 = inlined_call_operand.hbm [shape: bf16[64,1024], index: 0, kind: input, shape index: {}]
  %s1 = inlined_call_operand.hbm [shape: bf16[64,64], index: 1, kind: input, shape index: {}]
  %s2 = inlined_call_operand.hbm [shape: bf16[64,1024], index: 2, kind: output, shape index: {0}]
  %s3 = inlined_call_operand.hbm [shape: f32[1,64,1], index: 3, kind: output, shape index: {1}]
  %s4 = inlined_call_operand.hbm [shape: f32[1,64,1], index: 4, kind: output, shape index: {2}]
  %5 = xla_tuple %s2, %s3, %s4
  %s6 = sld [smem:[#allocation0]]
  $region42: #{hdc_net_forward.295} parent=0
    _
  %s8 = ssub.s32 1, %s6
  %s9 = scalar_select 0, %s8, %s6
  $region1: #{hdc_net_forward.295} parent=0
    #allocation2 [shape = 'u8[131072]{0}', space=vmem, size = 0x20000, scoped, tag = 'input window, operand 0, single buffered']
    #allocation3 [shape = 's32[1]{0}', space=sflag, size = 0x4, scoped, tag = 'scoped memory for hdc_net_forward.295']
    #allocation4 [shape = 's32[1]{0}', space=sflag, size = 0x4, scoped, tag = 'scoped memory for hdc_net_forward.295']
    #allocation5 [shape = 'u8[16384]{0}', space=vmem, size = 0x4000, scoped, tag = 'input window, operand 1, single buffered']
    #allocation6 [shape = 's32[1]{0}', space=sflag, size = 0x4, scoped, tag = 'scoped memory for hdc_net_forward.295']
    #allocation7 [shape = 'u8[131072]{0}', space=vmem, size = 0x20000, scoped, tag = 'output window, operand 0, single buffered']
    #allocation8 [shape = 'u8[32768]{0}', space=vmem, size = 0x8000, scoped, tag = 'output window, operand 1, single buffered']
    #allocation9 [shape = 's32[1]{0}', space=sflag, size = 0x4, scoped, tag = 'scoped memory for hdc_net_forward.295']
    #allocation10 [shape = 'u8[32768]{0}', space=vmem, size = 0x8000, scoped, tag = 'output window, operand 2, single buffered']
    %10 = vsyncpa [#allocation3], 0
    %11 = vsyncpa [#allocation6], 0
    %12 = vsyncpa [#allocation4], 0
    %13 = vsyncpa [#allocation9], 0
    // Predicated region
    $region2: #{hdc_net_forward.295} parent=1 // pred_check
      _
    $region3: #{hdc_net_forward.295} parent=1 // pred_check_branch
      %15 = sbr.rel (0) target = $region5
    $region4: #{hdc_net_forward.295} parent=1 // pred_region
      %s17 = ssub.s32 4096, 4096
      %18 = vsyncadd [#allocation3], %s17
      %s19 = sshll.u32 [#allocation2], 4
      %s20 = int_to_ptr.vmem [resolvable:$true] %s19
      %25 = dma.hbm_to_vmem [thread:$0]  %s0, 4096, %s20, [#allocation3], 512, 512, 32
    $region5: #{hdc_net_forward.295} parent=1 // pred_fallthru
      _
    // Predicated region
    $region6: #{hdc_net_forward.295} parent=1 // pred_check
      _
    $region7: #{hdc_net_forward.295} parent=1 // pred_check_branch
      %27 = sbr.rel (0) target = $region9
    $region8: #{hdc_net_forward.295} parent=1 // pred_region
      %s29 = ssub.s32 512, 512
      %30 = vsyncadd [#allocation6], %s29
      %s31 = sshll.u32 [#allocation5], 4
      %s32 = int_to_ptr.vmem [resolvable:$true] %s31
      %37 = dma.hbm_to_vmem [thread:$0]  %s1, 512, %s32, [#allocation6], 64, 64, 4
    $region9: #{hdc_net_forward.295} parent=1 // pred_fallthru
      _
    // Predicated region
    $region10: #{hdc_net_forward.295} parent=1 // pred_check
      _
    $region11: #{hdc_net_forward.295} parent=1 // pred_check_branch
      %39 = sbr.rel (0) target = $region13
    $region12: #{hdc_net_forward.295} parent=1 // pred_region
      %40 = dma.done [#allocation3], 4096
    $region13: #{hdc_net_forward.295} parent=1 // pred_fallthru
      _
    // Predicated region
    $region14: #{hdc_net_forward.295} parent=1 // pred_check
      _
    $region15: #{hdc_net_forward.295} parent=1 // pred_check_branch
      %42 = sbr.rel (0) target = $region17
    $region16: #{hdc_net_forward.295} parent=1 // pred_region
      %43 = dma.done [#allocation6], 512
    $region17: #{hdc_net_forward.295} parent=1 // pred_fallthru
      _
    %v45 = vld [vmem:[#allocation5] sm:$0xf]
    %v46 = vld [vmem:[#allocation5 + $0x4] sm:$0xf]
    %v47 = vld [vmem:[#allocation5 + $0x8] sm:$0xf]
    %v48 = vld [vmem:[#allocation5 + $0xc] sm:$0xf]
    %v49 = vld [vmem:[#allocation5 + $0x10] sm:$0xf]
    %v50 = vld [vmem:[#allocation5 + $0x14] sm:$0xf]
    %v51 = vld [vmem:[#allocation5 + $0x18] sm:$0xf]
    %v52 = vld [vmem:[#allocation5 + $0x1c] sm:$0xf]
    %v53 = vld [vmem:[#allocation2] sm:$0xff]
    %v54 = vld [vmem:[#allocation2 + $0x8] sm:$0xff]
    %v55 = vld [vmem:[#allocation2 + $0x10] sm:$0xff]
    %v56 = vld [vmem:[#allocation2 + $0x18] sm:$0xff]
    %v57 = vld [vmem:[#allocation2 + $0x20] sm:$0xff]
    %v58 = vld [vmem:[#allocation2 + $0x28] sm:$0xff]
    %v59 = vld [vmem:[#allocation2 + $0x30] sm:$0xff]
    %v60 = vld [vmem:[#allocation2 + $0x38] sm:$0xff]
    %v61 = vld [vmem:[#allocation2 + $0x40] sm:$0xff]
    %v62 = vld [vmem:[#allocation2 + $0x48] sm:$0xff]
    %v63 = vld [vmem:[#allocation2 + $0x50] sm:$0xff]
    %v64 = vld [vmem:[#allocation2 + $0x58] sm:$0xff]
    %v65 = vld [vmem:[#allocation2 + $0x60] sm:$0xff]
    %v66 = vld [vmem:[#allocation2 + $0x68] sm:$0xff]
    %v67 = vld [vmem:[#allocation2 + $0x70] sm:$0xff]
    %v68 = vld [vmem:[#allocation2 + $0x78] sm:$0xff]
    %v69 = vld [vmem:[#allocation2 + $0x80] sm:$0xff]
    %v70 = vld [vmem:[#allocation2 + $0x88] sm:$0xff]
    %v71 = vld [vmem:[#allocation2 + $0x90] sm:$0xff]
    %v72 = vld [vmem:[#allocation2 + $0x98] sm:$0xff]
    %v73 = vld [vmem:[#allocation2 + $0xa0] sm:$0xff]
    %v74 = vld [vmem:[#allocation2 + $0xa8] sm:$0xff]
    %v75 = vld [vmem:[#allocation2 + $0xb0] sm:$0xff]
    %v76 = vld [vmem:[#allocation2 + $0xb8] sm:$0xff]
    %v77 = vld [vmem:[#allocation2 + $0xc0] sm:$0xff]
    %v78 = vld [vmem:[#allocation2 + $0xc8] sm:$0xff]
    %v79 = vld [vmem:[#allocation2 + $0xd0] sm:$0xff]
    %v80 = vld [vmem:[#allocation2 + $0xd8] sm:$0xff]
    %v81 = vld [vmem:[#allocation2 + $0xe0] sm:$0xff]
    %v82 = vld [vmem:[#allocation2 + $0xe8] sm:$0xff]
    %v83 = vld [vmem:[#allocation2 + $0xf0] sm:$0xff]
    %v84 = vld [vmem:[#allocation2 + $0xf8] sm:$0xff]
    %v93 = vunpack.c.l.b16 %v45
    %v94 = vunpack.c.l.b16 %v46
    %v95 = vunpack.c.l.b16 %v47
    %v96 = vunpack.c.l.b16 %v48
    %v97 = vunpack.c.l.b16 %v49
    %v98 = vunpack.c.l.b16 %v50
    %v99 = vunpack.c.l.b16 %v51
    %v100 = vunpack.c.l.b16 %v52
    %v101 = vpack.c.b16 %v94, %v93
    %v102 = vpack.c.b16 %v96, %v95
    %v103 = vpack.c.b16 %v98, %v97
    %v104 = vpack.c.b16 %v100, %v99
    %v137 = vunpack.c.l.b16 %v53
    %v138 = vunpack.c.h.b16 %v53
    %v139 = vunpack.c.l.b16 %v54
    %v140 = vunpack.c.h.b16 %v54
    %v141 = vunpack.c.l.b16 %v55
    %v142 = vunpack.c.h.b16 %v55
    %v143 = vunpack.c.l.b16 %v56
    %v144 = vunpack.c.h.b16 %v56
    %v145 = vunpack.c.l.b16 %v57
    %v146 = vunpack.c.h.b16 %v57
    %v147 = vunpack.c.l.b16 %v58
    %v148 = vunpack.c.h.b16 %v58
    %v149 = vunpack.c.l.b16 %v59
    %v150 = vunpack.c.h.b16 %v59
    %v151 = vunpack.c.l.b16 %v60
    %v152 = vunpack.c.h.b16 %v60
    %v153 = vunpack.c.l.b16 %v61
    %v154 = vunpack.c.h.b16 %v61
    %v155 = vunpack.c.l.b16 %v62
    %v156 = vunpack.c.h.b16 %v62
    %v157 = vunpack.c.l.b16 %v63
    %v158 = vunpack.c.h.b16 %v63
    %v159 = vunpack.c.l.b16 %v64
    %v160 = vunpack.c.h.b16 %v64
    %v161 = vunpack.c.l.b16 %v65
    %v162 = vunpack.c.h.b16 %v65
    %v163 = vunpack.c.l.b16 %v66
    %v164 = vunpack.c.h.b16 %v66
    %v165 = vunpack.c.l.b16 %v67
    %v166 = vunpack.c.h.b16 %v67
    %v167 = vunpack.c.l.b16 %v68
    %v168 = vunpack.c.h.b16 %v68
    %v169 = vunpack.c.l.b16 %v69
    %v170 = vunpack.c.h.b16 %v69
    %v171 = vunpack.c.l.b16 %v70
    %v172 = vunpack.c.h.b16 %v70
    %v173 = vunpack.c.l.b16 %v71
    %v174 = vunpack.c.h.b16 %v71
    %v175 = vunpack.c.l.b16 %v72
    %v176 = vunpack.c.h.b16 %v72
    %v177 = vunpack.c.l.b16 %v73
    %v178 = vunpack.c.h.b16 %v73
    %v179 = vunpack.c.l.b16 %v74
    %v180 = vunpack.c.h.b16 %v74
    %v181 = vunpack.c.l.b16 %v75
    %v182 = vunpack.c.h.b16 %v75
    %v183 = vunpack.c.l.b16 %v76
    %v184 = vunpack.c.h.b16 %v76
    %v185 = vunpack.c.l.b16 %v77
    %v186 = vunpack.c.h.b16 %v77
    %v187 = vunpack.c.l.b16 %v78
    %v188 = vunpack.c.h.b16 %v78
    %v189 = vunpack.c.l.b16 %v79
    %v190 = vunpack.c.h.b16 %v79
    %v191 = vunpack.c.l.b16 %v80
    %v192 = vunpack.c.h.b16 %v80
    %v193 = vunpack.c.l.b16 %v81
    %v194 = vunpack.c.h.b16 %v81
    %v195 = vunpack.c.l.b16 %v82
    %v196 = vunpack.c.h.b16 %v82
    %v197 = vunpack.c.l.b16 %v83
    %v198 = vunpack.c.h.b16 %v83
    %v199 = vunpack.c.l.b16 %v84
    %v200 = vunpack.c.h.b16 %v84
    %v201 = vpack.c.b16 %v145, %v137
    %v202 = vpack.c.b16 %v146, %v138
    %v203 = vpack.c.b16 %v147, %v139
    %v204 = vpack.c.b16 %v148, %v140
    %v205 = vpack.c.b16 %v149, %v141
    %v206 = vpack.c.b16 %v150, %v142
    %v207 = vpack.c.b16 %v151, %v143
    %v208 = vpack.c.b16 %v152, %v144
    %v209 = vpack.c.b16 %v161, %v153
    %v210 = vpack.c.b16 %v162, %v154
    %v211 = vpack.c.b16 %v163, %v155
    %v212 = vpack.c.b16 %v164, %v156
    %v213 = vpack.c.b16 %v165, %v157
    %v214 = vpack.c.b16 %v166, %v158
    %v215 = vpack.c.b16 %v167, %v159
    %v216 = vpack.c.b16 %v168, %v160
    %v217 = vpack.c.b16 %v177, %v169
    %v218 = vpack.c.b16 %v178, %v170
    %v219 = vpack.c.b16 %v179, %v171
    %v220 = vpack.c.b16 %v180, %v172
    %v221 = vpack.c.b16 %v181, %v173
    %v222 = vpack.c.b16 %v182, %v174
    %v223 = vpack.c.b16 %v183, %v175
    %v224 = vpack.c.b16 %v184, %v176
    %v225 = vpack.c.b16 %v193, %v185
    %v226 = vpack.c.b16 %v194, %v186
    %v227 = vpack.c.b16 %v195, %v187
    %v228 = vpack.c.b16 %v196, %v188
    %v229 = vpack.c.b16 %v197, %v189
    %v230 = vpack.c.b16 %v198, %v190
    %v231 = vpack.c.b16 %v199, %v191
    %v232 = vpack.c.b16 %v200, %v192
    %vm265 = vcmask 523264
    %v267 = vsel %vm265, %v101, 0
    %v270 = vsel %vm265, %v102, 0
    %v273 = vsel %vm265, %v103, 0
    %v276 = vsel %vm265, %v104, 0
    %278 = vmatprep.subr.bf16.mxu0 %v202
    %279 = vmatpush1.bf16.msra.mxu0 %v201
    %280 = vmatprep.subr.bf16.mxu0 %v210
    %281 = vmatpush1.bf16.msra.mxu0 %v209
    %282 = vmatprep.subr.bf16.mxu0 %v218
    %283 = vmatpush1.bf16.msra.mxu0 %v217
    %284 = vmatprep.subr.bf16.mxu0 %v226
    %285 = vmatpush1.bf16.msra.mxu0 %v225
    %286 = vmatprep.subr.bf16.mxu0 0
    %287 = vmatpush1.bf16.msra.mxu0 0
    %288 = vmatprep.subr.bf16.mxu0 0
    %289 = vmatpush1.bf16.msra.mxu0 0
    %290 = vmatprep.subr.bf16.mxu0 0
    %291 = vmatpush1.bf16.msra.mxu0 0
    %292 = vmatprep.subr.bf16.mxu0 0
    %293 = vmatpush1.bf16.msra.mxu0 0
    %294 = vmatprep.subr.bf16.mxu0 0
    %295 = vmatpush1.bf16.msra.mxu0 0
    %296 = vmatprep.subr.bf16.mxu0 0
    %297 = vmatpush1.bf16.msra.mxu0 0
    %298 = vmatprep.subr.bf16.mxu0 0
    %299 = vmatpush1.bf16.msra.mxu0 0
    %300 = vmatprep.subr.bf16.mxu0 0
    %301 = vmatpush1.bf16.msra.mxu0 0
    %302 = vmatprep.subr.bf16.mxu0 0
    %303 = vmatpush1.bf16.msra.mxu0 0
    %304 = vmatprep.subr.bf16.mxu0 0
    %305 = vmatpush1.bf16.msra.mxu0 0
    %306 = vmatprep.subr.bf16.mxu0 0
    %307 = vmatpush1.bf16.msra.mxu0 0
    %308 = vmatprep.subr.bf16.mxu0 0
    %309 = vmatpush1.bf16.msra.mxu0 0
    %310 = vmatprep.mubr.bf16.mxu0 0
    %311 = vmatmul.mubr.bf16.gmra.mrb[0].mxu0 %v267
    %v312 = vpop.f32.mrb[0].mxu0
    %v313 = vadd.f32 0.0, %v312
    %v314 = vpop.f32.mrb[0].mxu0
    %v315 = vadd.f32 0.0, %v314
    %v316 = vpop.f32.mrb[0].mxu0
    %v317 = vadd.f32 0.0, %v316
    %v318 = vpop.f32.mrb[0].mxu0
    %v319 = vadd.f32 0.0, %v318
    %320 = vmatprep.mubr.bf16.mxu0 0
    %321 = vmatmul.mubr.bf16.gmra.mrb[0].mxu0 %v270
    %v322 = vpop.f32.mrb[0].mxu0
    %v323 = vadd.f32 0.0, %v322
    %v324 = vpop.f32.mrb[0].mxu0
    %v325 = vadd.f32 0.0, %v324
    %v326 = vpop.f32.mrb[0].mxu0
    %v327 = vadd.f32 0.0, %v326
    %v328 = vpop.f32.mrb[0].mxu0
    %v329 = vadd.f32 0.0, %v328
    %330 = vmatprep.mubr.bf16.mxu0 0
    %331 = vmatmul.mubr.bf16.gmra.mrb[0].mxu0 %v273
    %v332 = vpop.f32.mrb[0].mxu0
    %v333 = vadd.f32 0.0, %v332
    %v334 = vpop.f32.mrb[0].mxu0
    %v335 = vadd.f32 0.0, %v334
    %v336 = vpop.f32.mrb[0].mxu0
    %v337 = vadd.f32 0.0, %v336
    %v338 = vpop.f32.mrb[0].mxu0
    %v339 = vadd.f32 0.0, %v338
    %340 = vmatprep.mubr.bf16.mxu0 0
    %341 = vmatmul.mubr.bf16.gmra.mrb[0].mxu0 %v276
    %v342 = vpop.f32.mrb[0].mxu0
    %v343 = vadd.f32 0.0, %v342
    %v344 = vpop.f32.mrb[0].mxu0
    %v345 = vadd.f32 0.0, %v344
    %v346 = vpop.f32.mrb[0].mxu0
    %v347 = vadd.f32 0.0, %v346
    %v348 = vpop.f32.mrb[0].mxu0
    %v349 = vadd.f32 0.0, %v348
    %350 = vdwg.mxu0
    %351 = vmatprep.subr.bf16.mxu0 %v204
    %352 = vmatpush1.bf16.msra.mxu0 %v203
    %353 = vmatprep.subr.bf16.mxu0 %v212
    %354 = vmatpush1.bf16.msra.mxu0 %v211
    %355 = vmatprep.subr.bf16.mxu0 %v220
    %356 = vmatpush1.bf16.msra.mxu0 %v219
    %357 = vmatprep.subr.bf16.mxu0 %v228
    %358 = vmatpush1.bf16.msra.mxu0 %v227
    %359 = vmatprep.subr.bf16.mxu0 0
    %360 = vmatpush1.bf16.msra.mxu0 0
    %361 = vmatprep.subr.bf16.mxu0 0
    %362 = vmatpush1.bf16.msra.mxu0 0
    %363 = vmatprep.subr.bf16.mxu0 0
    %364 = vmatpush1.bf16.msra.mxu0 0
    %365 = vmatprep.subr.bf16.mxu0 0
    %366 = vmatpush1.bf16.msra.mxu0 0
    %367 = vmatprep.subr.bf16.mxu0 0
    %368 = vmatpush1.bf16.msra.mxu0 0
    %369 = vmatprep.subr.bf16.mxu0 0
    %370 = vmatpush1.bf16.msra.mxu0 0
    %371 = vmatprep.subr.bf16.mxu0 0
    %372 = vmatpush1.bf16.msra.mxu0 0
    %373 = vmatprep.subr.bf16.mxu0 0
    %374 = vmatpush1.bf16.msra.mxu0 0
    %375 = vmatprep.subr.bf16.mxu0 0
    %376 = vmatpush1.bf16.msra.mxu0 0
    %377 = vmatprep.subr.bf16.mxu0 0
    %378 = vmatpush1.bf16.msra.mxu0 0
    %379 = vmatprep.subr.bf16.mxu0 0
    %380 = vmatpush1.bf16.msra.mxu0 0
    %381 = vmatprep.subr.bf16.mxu0 0
    %382 = vmatpush1.bf16.msra.mxu0 0
    %383 = vmatprep.mubr.bf16.mxu0 0
    %384 = vmatmul.mubr.bf16.gmra.mrb[0].mxu0 %v267
    %v385 = vpop.f32.mrb[0].mxu0
    %v386 = vadd.f32 0.0, %v385
    %v387 = vpop.f32.mrb[0].mxu0
    %v388 = vadd.f32 0.0, %v387
    %v389 = vpop.f32.mrb[0].mxu0
    %v390 = vadd.f32 0.0, %v389
    %v391 = vpop.f32.mrb[0].mxu0
    %v392 = vadd.f32 0.0, %v391
    %393 = vmatprep.mubr.bf16.mxu0 0
    %394 = vmatmul.mubr.bf16.gmra.mrb[0].mxu0 %v270
    %v395 = vpop.f32.mrb[0].mxu0
    %v396 = vadd.f32 0.0, %v395
    %v397 = vpop.f32.mrb[0].mxu0
    %v398 = vadd.f32 0.0, %v397
    %v399 = vpop.f32.mrb[0].mxu0
    %v400 = vadd.f32 0.0, %v399
    %v401 = vpop.f32.mrb[0].mxu0
    %v402 = vadd.f32 0.0, %v401
    %403 = vmatprep.mubr.bf16.mxu0 0
    %404 = vmatmul.mubr.bf16.gmra.mrb[0].mxu0 %v273
    %v405 = vpop.f32.mrb[0].mxu0
    %v406 = vadd.f32 0.0, %v405
    %v407 = vpop.f32.mrb[0].mxu0
    %v408 = vadd.f32 0.0, %v407
    %v409 = vpop.f32.mrb[0].mxu0
    %v410 = vadd.f32 0.0, %v409
    %v411 = vpop.f32.mrb[0].mxu0
    %v412 = vadd.f32 0.0, %v411
    %413 = vmatprep.mubr.bf16.mxu0 0
    %414 = vmatmul.mubr.bf16.gmra.mrb[0].mxu0 %v276
    %v415 = vpop.f32.mrb[0].mxu0
    %v416 = vadd.f32 0.0, %v415
    %v417 = vpop.f32.mrb[0].mxu0
    %v418 = vadd.f32 0.0, %v417
    %v419 = vpop.f32.mrb[0].mxu0
    %v420 = vadd.f32 0.0, %v419
    %v421 = vpop.f32.mrb[0].mxu0
    %v422 = vadd.f32 0.0, %v421
    %423 = vdwg.mxu0
    %424 = vmatprep.subr.bf16.mxu0 %v206
    %425 = vmatpush1.bf16.msra.mxu0 %v205
    %426 = vmatprep.subr.bf16.mxu0 %v214
    %427 = vmatpush1.bf16.msra.mxu0 %v213
    %428 = vmatprep.subr.bf16.mxu0 %v222
    %429 = vmatpush1.bf16.msra.mxu0 %v221
    %430 = vmatprep.subr.bf16.mxu0 %v230
    %431 = vmatpush1.bf16.msra.mxu0 %v229
    %432 = vmatprep.subr.bf16.mxu0 0
    %433 = vmatpush1.bf16.msra.mxu0 0
    %434 = vmatprep.subr.bf16.mxu0 0
    %435 = vmatpush1.bf16.msra.mxu0 0
    %436 = vmatprep.subr.bf16.mxu0 0
    %437 = vmatpush1.bf16.msra.mxu0 0
    %438 = vmatprep.subr.bf16.mxu0 0
    %439 = vmatpush1.bf16.msra.mxu0 0
    %440 = vmatprep.subr.bf16.mxu0 0
    %441 = vmatpush1.bf16.msra.mxu0 0
    %442 = vmatprep.subr.bf16.mxu0 0
    %443 = vmatpush1.bf16.msra.mxu0 0
    %444 = vmatprep.subr.bf16.mxu0 0
    %445 = vmatpush1.bf16.msra.mxu0 0
    %446 = vmatprep.subr.bf16.mxu0 0
    %447 = vmatpush1.bf16.msra.mxu0 0
    %448 = vmatprep.subr.bf16.mxu0 0
    %449 = vmatpush1.bf16.msra.mxu0 0
    %450 = vmatprep.subr.bf16.mxu0 0
    %451 = vmatpush1.bf16.msra.mxu0 0
    %452 = vmatprep.subr.bf16.mxu0 0
    %453 = vmatpush1.bf16.msra.mxu0 0
    %454 = vmatprep.subr.bf16.mxu0 0
    %455 = vmatpush1.bf16.msra.mxu0 0
    %456 = vmatprep.mubr.bf16.mxu0 0
    %457 = vmatmul.mubr.bf16.gmra.mrb[0].mxu0 %v267
    %v458 = vpop.f32.mrb[0].mxu0
    %v459 = vadd.f32 0.0, %v458
    %v460 = vpop.f32.mrb[0].mxu0
    %v461 = vadd.f32 0.0, %v460
    %v462 = vpop.f32.mrb[0].mxu0
    %v463 = vadd.f32 0.0, %v462
    %v464 = vpop.f32.mrb[0].mxu0
    %v465 = vadd.f32 0.0, %v464
    %466 = vmatprep.mubr.bf16.mxu0 0
    %467 = vmatmul.mubr.bf16.gmra.mrb[0].mxu0 %v270
    %v468 = vpop.f32.mrb[0].mxu0
    %v469 = vadd.f32 0.0, %v468
    %v470 = vpop.f32.mrb[0].mxu0
    %v471 = vadd.f32 0.0, %v470
    %v472 = vpop.f32.mrb[0].mxu0
    %v473 = vadd.f32 0.0, %v472
    %v474 = vpop.f32.mrb[0].mxu0
    %v475 = vadd.f32 0.0, %v474
    %476 = vmatprep.mubr.bf16.mxu0 0
    %477 = vmatmul.mubr.bf16.gmra.mrb[0].mxu0 %v273
    %v478 = vpop.f32.mrb[0].mxu0
    %v479 = vadd.f32 0.0, %v478
    %v480 = vpop.f32.mrb[0].mxu0
    %v481 = vadd.f32 0.0, %v480
    %v482 = vpop.f32.mrb[0].mxu0
    %v483 = vadd.f32 0.0, %v482
    %v484 = vpop.f32.mrb[0].mxu0
    %v485 = vadd.f32 0.0, %v484
    %486 = vmatprep.mubr.bf16.mxu0 0
    %487 = vmatmul.mubr.bf16.gmra.mrb[0].mxu0 %v276
    %v488 = vpop.f32.mrb[0].mxu0
    %v489 = vadd.f32 0.0, %v488
    %v490 = vpop.f32.mrb[0].mxu0
    %v491 = vadd.f32 0.0, %v490
    %v492 = vpop.f32.mrb[0].mxu0
    %v493 = vadd.f32 0.0, %v492
    %v494 = vpop.f32.mrb[0].mxu0
    %v495 = vadd.f32 0.0, %v494
    %496 = vdwg.mxu0
    %497 = vmatprep.subr.bf16.mxu0 %v208
    %498 = vmatpush1.bf16.msra.mxu0 %v207
    %499 = vmatprep.subr.bf16.mxu0 %v216
    %500 = vmatpush1.bf16.msra.mxu0 %v215
    %501 = vmatprep.subr.bf16.mxu0 %v224
    %502 = vmatpush1.bf16.msra.mxu0 %v223
    %503 = vmatprep.subr.bf16.mxu0 %v232
    %504 = vmatpush1.bf16.msra.mxu0 %v231
    %505 = vmatprep.subr.bf16.mxu0 0
    %506 = vmatpush1.bf16.msra.mxu0 0
    %507 = vmatprep.subr.bf16.mxu0 0
    %508 = vmatpush1.bf16.msra.mxu0 0
    %509 = vmatprep.subr.bf16.mxu0 0
    %510 = vmatpush1.bf16.msra.mxu0 0
    %511 = vmatprep.subr.bf16.mxu0 0
    %512 = vmatpush1.bf16.msra.mxu0 0
    %513 = vmatprep.subr.bf16.mxu0 0
    %514 = vmatpush1.bf16.msra.mxu0 0
    %515 = vmatprep.subr.bf16.mxu0 0
    %516 = vmatpush1.bf16.msra.mxu0 0
    %517 = vmatprep.subr.bf16.mxu0 0
    %518 = vmatpush1.bf16.msra.mxu0 0
    %519 = vmatprep.subr.bf16.mxu0 0
    %520 = vmatpush1.bf16.msra.mxu0 0
    %521 = vmatprep.subr.bf16.mxu0 0
    %522 = vmatpush1.bf16.msra.mxu0 0
    %523 = vmatprep.subr.bf16.mxu0 0
    %524 = vmatpush1.bf16.msra.mxu0 0
    %525 = vmatprep.subr.bf16.mxu0 0
    %526 = vmatpush1.bf16.msra.mxu0 0
    %527 = vmatprep.subr.bf16.mxu0 0
    %528 = vmatpush1.bf16.msra.mxu0 0
    %529 = vmatprep.mubr.bf16.mxu0 0
    %530 = vmatmul.mubr.bf16.gmra.mrb[0].mxu0 %v267
    %v531 = vpop.f32.mrb[0].mxu0
    %v532 = vadd.f32 0.0, %v531
    %v533 = vpop.f32.mrb[0].mxu0
    %v534 = vadd.f32 0.0, %v533
    %v535 = vpop.f32.mrb[0].mxu0
    %v536 = vadd.f32 0.0, %v535
    %v537 = vpop.f32.mrb[0].mxu0
    %v538 = vadd.f32 0.0, %v537
    %539 = vmatprep.mubr.bf16.mxu0 0
    %540 = vmatmul.mubr.bf16.gmra.mrb[0].mxu0 %v270
    %v541 = vpop.f32.mrb[0].mxu0
    %v542 = vadd.f32 0.0, %v541
    %v543 = vpop.f32.mrb[0].mxu0
    %v544 = vadd.f32 0.0, %v543
    %v545 = vpop.f32.mrb[0].mxu0
    %v546 = vadd.f32 0.0, %v545
    %v547 = vpop.f32.mrb[0].mxu0
    %v548 = vadd.f32 0.0, %v547
    %549 = vmatprep.mubr.bf16.mxu0 0
    %550 = vmatmul.mubr.bf16.gmra.mrb[0].mxu0 %v273
    %v551 = vpop.f32.mrb[0].mxu0
    %v552 = vadd.f32 0.0, %v551
    %v553 = vpop.f32.mrb[0].mxu0
    %v554 = vadd.f32 0.0, %v553
    %v555 = vpop.f32.mrb[0].mxu0
    %v556 = vadd.f32 0.0, %v555
    %v557 = vpop.f32.mrb[0].mxu0
    %v558 = vadd.f32 0.0, %v557
    %559 = vmatprep.mubr.bf16.mxu0 0
    %560 = vmatmul.mubr.bf16.gmra.mrb[0].mxu0 %v276
    %v561 = vpop.f32.mrb[0].mxu0
    %v562 = vadd.f32 0.0, %v561
    %v563 = vpop.f32.mrb[0].mxu0
    %v564 = vadd.f32 0.0, %v563
    %v565 = vpop.f32.mrb[0].mxu0
    %v566 = vadd.f32 0.0, %v565
    %v567 = vpop.f32.mrb[0].mxu0
    %v568 = vadd.f32 0.0, %v567
    %569 = vdwg.mxu0
    %v570 = vpack.c.bf16 %v317, %v313
    %v571 = vpack.c.bf16 %v319, %v315
    %v572 = vpack.c.bf16 %v390, %v386
    %v573 = vpack.c.bf16 %v392, %v388
    %v574 = vpack.c.bf16 %v463, %v459
    %v575 = vpack.c.bf16 %v465, %v461
    %v576 = vpack.c.bf16 %v536, %v532
    %v577 = vpack.c.bf16 %v538, %v534
    %v578 = vpack.c.bf16 %v327, %v323
    %v579 = vpack.c.bf16 %v329, %v325
    %v580 = vpack.c.bf16 %v400, %v396
    %v581 = vpack.c.bf16 %v402, %v398
    %v582 = vpack.c.bf16 %v473, %v469
    %v583 = vpack.c.bf16 %v475, %v471
    %v584 = vpack.c.bf16 %v546, %v542
    %v585 = vpack.c.bf16 %v548, %v544
    %v586 = vpack.c.bf16 %v337, %v333
    %v587 = vpack.c.bf16 %v339, %v335
    %v588 = vpack.c.bf16 %v410, %v406
    %v589 = vpack.c.bf16 %v412, %v408
    %v590 = vpack.c.bf16 %v483, %v479
    %v591 = vpack.c.bf16 %v485, %v481
    %v592 = vpack.c.bf16 %v556, %v552
    %v593 = vpack.c.bf16 %v558, %v554
    %v594 = vpack.c.bf16 %v347, %v343
    %v595 = vpack.c.bf16 %v349, %v345
    %v596 = vpack.c.bf16 %v420, %v416
    %v597 = vpack.c.bf16 %v422, %v418
    %v598 = vpack.c.bf16 %v493, %v489
    %v599 = vpack.c.bf16 %v495, %v491
    %v600 = vpack.c.bf16 %v566, %v562
    %v601 = vpack.c.bf16 %v568, %v564
    %v634 = vunpack.c.l.b16 %v570
    %v635 = vunpack.c.l.b16 %v571
    %v636 = vunpack.c.l.b16 %v572
    %v637 = vunpack.c.l.b16 %v573
    %v638 = vunpack.c.l.b16 %v574
    %v639 = vunpack.c.l.b16 %v575
    %v640 = vunpack.c.l.b16 %v576
    %v641 = vunpack.c.l.b16 %v577
    %v642 = vunpack.c.h.b16 %v570
    %v643 = vunpack.c.h.b16 %v571
    %v644 = vunpack.c.h.b16 %v572
    %v645 = vunpack.c.h.b16 %v573
    %v646 = vunpack.c.h.b16 %v574
    %v647 = vunpack.c.h.b16 %v575
    %v648 = vunpack.c.h.b16 %v576
    %v649 = vunpack.c.h.b16 %v577
    %v650 = vunpack.c.l.b16 %v578
    %v651 = vunpack.c.l.b16 %v579
    %v652 = vunpack.c.l.b16 %v580
    %v653 = vunpack.c.l.b16 %v581
    %v654 = vunpack.c.l.b16 %v582
    %v655 = vunpack.c.l.b16 %v583
    %v656 = vunpack.c.l.b16 %v584
    %v657 = vunpack.c.l.b16 %v585
    %v658 = vunpack.c.h.b16 %v578
    %v659 = vunpack.c.h.b16 %v579
    %v660 = vunpack.c.h.b16 %v580
    %v661 = vunpack.c.h.b16 %v581
    %v662 = vunpack.c.h.b16 %v582
    %v663 = vunpack.c.h.b16 %v583
    %v664 = vunpack.c.h.b16 %v584
    %v665 = vunpack.c.h.b16 %v585
    %v666 = vunpack.c.l.b16 %v586
    %v667 = vunpack.c.l.b16 %v587
    %v668 = vunpack.c.l.b16 %v588
    %v669 = vunpack.c.l.b16 %v589
    %v670 = vunpack.c.l.b16 %v590
    %v671 = vunpack.c.l.b16 %v591
    %v672 = vunpack.c.l.b16 %v592
    %v673 = vunpack.c.l.b16 %v593
    %v674 = vunpack.c.h.b16 %v586
    %v675 = vunpack.c.h.b16 %v587
    %v676 = vunpack.c.h.b16 %v588
    %v677 = vunpack.c.h.b16 %v589
    %v678 = vunpack.c.h.b16 %v590
    %v679 = vunpack.c.h.b16 %v591
    %v680 = vunpack.c.h.b16 %v592
    %v681 = vunpack.c.h.b16 %v593
    %v682 = vunpack.c.l.b16 %v594
    %v683 = vunpack.c.l.b16 %v595
    %v684 = vunpack.c.l.b16 %v596
    %v685 = vunpack.c.l.b16 %v597
    %v686 = vunpack.c.l.b16 %v598
    %v687 = vunpack.c.l.b16 %v599
    %v688 = vunpack.c.l.b16 %v600
    %v689 = vunpack.c.l.b16 %v601
    %v690 = vunpack.c.h.b16 %v594
    %v691 = vunpack.c.h.b16 %v595
    %v692 = vunpack.c.h.b16 %v596
    %v693 = vunpack.c.h.b16 %v597
    %v694 = vunpack.c.h.b16 %v598
    %v695 = vunpack.c.h.b16 %v599
    %v696 = vunpack.c.h.b16 %v600
    %v697 = vunpack.c.h.b16 %v601
    %v698 = vpack.c.b16 %v635, %v634
    %v699 = vpack.c.b16 %v637, %v636
    %v700 = vpack.c.b16 %v639, %v638
    %v701 = vpack.c.b16 %v641, %v640
    %v702 = vpack.c.b16 %v643, %v642
    %v703 = vpack.c.b16 %v645, %v644
    %v704 = vpack.c.b16 %v647, %v646
    %v705 = vpack.c.b16 %v649, %v648
    %v706 = vpack.c.b16 %v651, %v650
    %v707 = vpack.c.b16 %v653, %v652
    %v708 = vpack.c.b16 %v655, %v654
    %v709 = vpack.c.b16 %v657, %v656
    %v710 = vpack.c.b16 %v659, %v658
    %v711 = vpack.c.b16 %v661, %v660
    %v712 = vpack.c.b16 %v663, %v662
    %v713 = vpack.c.b16 %v665, %v664
    %v714 = vpack.c.b16 %v667, %v666
    %v715 = vpack.c.b16 %v669, %v668
    %v716 = vpack.c.b16 %v671, %v670
    %v717 = vpack.c.b16 %v673, %v672
    %v718 = vpack.c.b16 %v675, %v674
    %v719 = vpack.c.b16 %v677, %v676
    %v720 = vpack.c.b16 %v679, %v678
    %v721 = vpack.c.b16 %v681, %v680
    %v722 = vpack.c.b16 %v683, %v682
    %v723 = vpack.c.b16 %v685, %v684
    %v724 = vpack.c.b16 %v687, %v686
    %v725 = vpack.c.b16 %v689, %v688
    %v726 = vpack.c.b16 %v691, %v690
    %v727 = vpack.c.b16 %v693, %v692
    %v728 = vpack.c.b16 %v695, %v694
    %v729 = vpack.c.b16 %v697, %v696
    %762 = vst [vmem:[#allocation7] sm:$0xff] %v698
    %763 = vst [vmem:[#allocation7 + $0x8] sm:$0xff] %v699
    %764 = vst [vmem:[#allocation7 + $0x10] sm:$0xff] %v700
    %765 = vst [vmem:[#allocation7 + $0x18] sm:$0xff] %v701
    %766 = vst [vmem:[#allocation7 + $0x20] sm:$0xff] %v702
    %767 = vst [vmem:[#allocation7 + $0x28] sm:$0xff] %v703
    %768 = vst [vmem:[#allocation7 + $0x30] sm:$0xff] %v704
    %769 = vst [vmem:[#allocation7 + $0x38] sm:$0xff] %v705
    %770 = vst [vmem:[#allocation7 + $0x40] sm:$0xff] %v706
    %771 = vst [vmem:[#allocation7 + $0x48] sm:$0xff] %v707
    %772 = vst [vmem:[#allocation7 + $0x50] sm:$0xff] %v708
    %773 = vst [vmem:[#allocation7 + $0x58] sm:$0xff] %v709
    %774 = vst [vmem:[#allocation7 + $0x60] sm:$0xff] %v710
    %775 = vst [vmem:[#allocation7 + $0x68] sm:$0xff] %v711
    %776 = vst [vmem:[#allocation7 + $0x70] sm:$0xff] %v712
    %777 = vst [vmem:[#allocation7 + $0x78] sm:$0xff] %v713
    %778 = vst [vmem:[#allocation7 + $0x80] sm:$0xff] %v714
    %779 = vst [vmem:[#allocation7 + $0x88] sm:$0xff] %v715
    %780 = vst [vmem:[#allocation7 + $0x90] sm:$0xff] %v716
    %781 = vst [vmem:[#allocation7 + $0x98] sm:$0xff] %v717
    %782 = vst [vmem:[#allocation7 + $0xa0] sm:$0xff] %v718
    %783 = vst [vmem:[#allocation7 + $0xa8] sm:$0xff] %v719
    %784 = vst [vmem:[#allocation7 + $0xb0] sm:$0xff] %v720
    %785 = vst [vmem:[#allocation7 + $0xb8] sm:$0xff] %v721
    %786 = vst [vmem:[#allocation7 + $0xc0] sm:$0xff] %v722
    %787 = vst [vmem:[#allocation7 + $0xc8] sm:$0xff] %v723
    %788 = vst [vmem:[#allocation7 + $0xd0] sm:$0xff] %v724
    %789 = vst [vmem:[#allocation7 + $0xd8] sm:$0xff] %v725
    %790 = vst [vmem:[#allocation7 + $0xe0] sm:$0xff] %v726
    %791 = vst [vmem:[#allocation7 + $0xe8] sm:$0xff] %v727
    %792 = vst [vmem:[#allocation7 + $0xf0] sm:$0xff] %v728
    %793 = vst [vmem:[#allocation7 + $0xf8] sm:$0xff] %v729
    %v794 = vadd.f32 %v313, %v315
    %v795 = vadd.f32 %v794, %v386
    %v796 = vadd.f32 %v795, %v388
    %v797 = vadd.f32 %v796, %v459
    %v798 = vadd.f32 %v797, %v461
    %v799 = vadd.f32 %v798, %v532
    %v800 = vadd.f32 %v799, %v534
    %801 = vadd.xlane.f32.xlu0 %v800
    %v802 = vpop.xlane.xlu0 %801
    %v803 = vadd.f32 %v317, %v319
    %v804 = vadd.f32 %v803, %v390
    %v805 = vadd.f32 %v804, %v392
    %v806 = vadd.f32 %v805, %v463
    %v807 = vadd.f32 %v806, %v465
    %v808 = vadd.f32 %v807, %v536
    %v809 = vadd.f32 %v808, %v538
    %810 = vadd.xlane.f32.xlu0 %v809
    %v811 = vpop.xlane.xlu0 %810
    %v812 = vadd.f32 %v323, %v325
    %v813 = vadd.f32 %v812, %v396
    %v814 = vadd.f32 %v813, %v398
    %v815 = vadd.f32 %v814, %v469
    %v816 = vadd.f32 %v815, %v471
    %v817 = vadd.f32 %v816, %v542
    %v818 = vadd.f32 %v817, %v544
    %819 = vadd.xlane.f32.xlu0 %v818
    %v820 = vpop.xlane.xlu0 %819
    %v821 = vadd.f32 %v327, %v329
    %v822 = vadd.f32 %v821, %v400
    %v823 = vadd.f32 %v822, %v402
    %v824 = vadd.f32 %v823, %v473
    %v825 = vadd.f32 %v824, %v475
    %v826 = vadd.f32 %v825, %v546
    %v827 = vadd.f32 %v826, %v548
    %828 = vadd.xlane.f32.xlu0 %v827
    %v829 = vpop.xlane.xlu0 %828
    %v830 = vadd.f32 %v333, %v335
    %v831 = vadd.f32 %v830, %v406
    %v832 = vadd.f32 %v831, %v408
    %v833 = vadd.f32 %v832, %v479
    %v834 = vadd.f32 %v833, %v481
    %v835 = vadd.f32 %v834, %v552
    %v836 = vadd.f32 %v835, %v554
    %837 = vadd.xlane.f32.xlu0 %v836
    %v838 = vpop.xlane.xlu0 %837
    %v839 = vadd.f32 %v337, %v339
    %v840 = vadd.f32 %v839, %v410
    %v841 = vadd.f32 %v840, %v412
    %v842 = vadd.f32 %v841, %v483
    %v843 = vadd.f32 %v842, %v485
    %v844 = vadd.f32 %v843, %v556
    %v845 = vadd.f32 %v844, %v558
    %846 = vadd.xlane.f32.xlu0 %v845
    %v847 = vpop.xlane.xlu0 %846
    %v848 = vadd.f32 %v343, %v345
    %v849 = vadd.f32 %v848, %v416
    %v850 = vadd.f32 %v849, %v418
    %v851 = vadd.f32 %v850, %v489
    %v852 = vadd.f32 %v851, %v491
    %v853 = vadd.f32 %v852, %v562
    %v854 = vadd.f32 %v853, %v564
    %855 = vadd.xlane.f32.xlu0 %v854
    %v856 = vpop.xlane.xlu0 %855
    %v857 = vadd.f32 %v347, %v349
    %v858 = vadd.f32 %v857, %v420
    %v859 = vadd.f32 %v858, %v422
    %v860 = vadd.f32 %v859, %v493
    %v861 = vadd.f32 %v860, %v495
    %v862 = vadd.f32 %v861, %v566
    %v863 = vadd.f32 %v862, %v568
    %864 = vadd.xlane.f32.xlu0 %v863
    %v865 = vpop.xlane.xlu0 %864
    %vm866 = vcmask 7168
    %867 = vst.msk [vmem:[#allocation8] sm:$0xff] %vm866, %v802
    %868 = vst.msk [vmem:[#allocation8 + $0x8] sm:$0xff] %vm866, %v811
    %869 = vst.msk [vmem:[#allocation8 + $0x10] sm:$0xff] %vm866, %v820
    %870 = vst.msk [vmem:[#allocation8 + $0x18] sm:$0xff] %vm866, %v829
    %871 = vst.msk [vmem:[#allocation8 + $0x20] sm:$0xff] %vm866, %v838
    %872 = vst.msk [vmem:[#allocation8 + $0x28] sm:$0xff] %vm866, %v847
    %873 = vst.msk [vmem:[#allocation8 + $0x30] sm:$0xff] %vm866, %v856
    %874 = vst.msk [vmem:[#allocation8 + $0x38] sm:$0xff] %vm866, %v865
    %v875 = vmul.f32 %v313, %v313
    %v876 = vmul.f32 %v315, %v315
    %v877 = vmul.f32 %v386, %v386
    %v878 = vmul.f32 %v388, %v388
    %v879 = vmul.f32 %v459, %v459
    %v880 = vmul.f32 %v461, %v461
    %v881 = vmul.f32 %v532, %v532
    %v882 = vmul.f32 %v534, %v534
    %v883 = vmul.f32 %v317, %v317
    %v884 = vmul.f32 %v319, %v319
    %v885 = vmul.f32 %v390, %v390
    %v886 = vmul.f32 %v392, %v392
    %v887 = vmul.f32 %v463, %v463
    %v888 = vmul.f32 %v465, %v465
    %v889 = vmul.f32 %v536, %v536
    %v890 = vmul.f32 %v538, %v538
    %v891 = vmul.f32 %v323, %v323
    %v892 = vmul.f32 %v325, %v325
    %v893 = vmul.f32 %v396, %v396
    %v894 = vmul.f32 %v398, %v398
    %v895 = vmul.f32 %v469, %v469
    %v896 = vmul.f32 %v471, %v471
    %v897 = vmul.f32 %v542, %v542
    %v898 = vmul.f32 %v544, %v544
    %v899 = vmul.f32 %v327, %v327
    %v900 = vmul.f32 %v329, %v329
    %v901 = vmul.f32 %v400, %v400
    %v902 = vmul.f32 %v402, %v402
    %v903 = vmul.f32 %v473, %v473
    %v904 = vmul.f32 %v475, %v475
    %v905 = vmul.f32 %v546, %v546
    %v906 = vmul.f32 %v548, %v548
    %v907 = vmul.f32 %v333, %v333
    %v908 = vmul.f32 %v335, %v335
    %v909 = vmul.f32 %v406, %v406
    %v910 = vmul.f32 %v408, %v408
    %v911 = vmul.f32 %v479, %v479
    %v912 = vmul.f32 %v481, %v481
    %v913 = vmul.f32 %v552, %v552
    %v914 = vmul.f32 %v554, %v554
    %v915 = vmul.f32 %v337, %v337
    %v916 = vmul.f32 %v339, %v339
    %v917 = vmul.f32 %v410, %v410
    %v918 = vmul.f32 %v412, %v412
    %v919 = vmul.f32 %v483, %v483
    %v920 = vmul.f32 %v485, %v485
    %v921 = vmul.f32 %v556, %v556
    %v922 = vmul.f32 %v558, %v558
    %v923 = vmul.f32 %v343, %v343
    %v924 = vmul.f32 %v345, %v345
    %v925 = vmul.f32 %v416, %v416
    %v926 = vmul.f32 %v418, %v418
    %v927 = vmul.f32 %v489, %v489
    %v928 = vmul.f32 %v491, %v491
    %v929 = vmul.f32 %v562, %v562
    %v930 = vmul.f32 %v564, %v564
    %v931 = vmul.f32 %v347, %v347
    %v932 = vmul.f32 %v349, %v349
    %v933 = vmul.f32 %v420, %v420
    %v934 = vmul.f32 %v422, %v422
    %v935 = vmul.f32 %v493, %v493
    %v936 = vmul.f32 %v495, %v495
    %v937 = vmul.f32 %v566, %v566
    %v938 = vmul.f32 %v568, %v568
    %v939 = vadd.f32 %v875, %v876
    %v940 = vadd.f32 %v939, %v877
    %v941 = vadd.f32 %v940, %v878
    %v942 = vadd.f32 %v941, %v879
    %v943 = vadd.f32 %v942, %v880
    %v944 = vadd.f32 %v943, %v881
    %v945 = vadd.f32 %v944, %v882
    %946 = vadd.xlane.f32.xlu0 %v945
    %v947 = vpop.xlane.xlu0 %946
    %v948 = vadd.f32 %v883, %v884
    %v949 = vadd.f32 %v948, %v885
    %v950 = vadd.f32 %v949, %v886
    %v951 = vadd.f32 %v950, %v887
    %v952 = vadd.f32 %v951, %v888
    %v953 = vadd.f32 %v952, %v889
    %v954 = vadd.f32 %v953, %v890
    %955 = vadd.xlane.f32.xlu0 %v954
    %v956 = vpop.xlane.xlu0 %955
    %v957 = vadd.f32 %v891, %v892
    %v958 = vadd.f32 %v957, %v893
    %v959 = vadd.f32 %v958, %v894
    %v960 = vadd.f32 %v959, %v895
    %v961 = vadd.f32 %v960, %v896
    %v962 = vadd.f32 %v961, %v897
    %v963 = vadd.f32 %v962, %v898
    %964 = vadd.xlane.f32.xlu0 %v963
    %v965 = vpop.xlane.xlu0 %964
    %v966 = vadd.f32 %v899, %v900
    %v967 = vadd.f32 %v966, %v901
    %v968 = vadd.f32 %v967, %v902
    %v969 = vadd.f32 %v968, %v903
    %v970 = vadd.f32 %v969, %v904
    %v971 = vadd.f32 %v970, %v905
    %v972 = vadd.f32 %v971, %v906
    %973 = vadd.xlane.f32.xlu0 %v972
    %v974 = vpop.xlane.xlu0 %973
    %v975 = vadd.f32 %v907, %v908
    %v976 = vadd.f32 %v975, %v909
    %v977 = vadd.f32 %v976, %v910
    %v978 = vadd.f32 %v977, %v911
    %v979 = vadd.f32 %v978, %v912
    %v980 = vadd.f32 %v979, %v913
    %v981 = vadd.f32 %v980, %v914
    %982 = vadd.xlane.f32.xlu0 %v981
    %v983 = vpop.xlane.xlu0 %982
    %v984 = vadd.f32 %v915, %v916
    %v985 = vadd.f32 %v984, %v917
    %v986 = vadd.f32 %v985, %v918
    %v987 = vadd.f32 %v986, %v919
    %v988 = vadd.f32 %v987, %v920
    %v989 = vadd.f32 %v988, %v921
    %v990 = vadd.f32 %v989, %v922
    %991 = vadd.xlane.f32.xlu0 %v990
    %v992 = vpop.xlane.xlu0 %991
    %v993 = vadd.f32 %v923, %v924
    %v994 = vadd.f32 %v993, %v925
    %v995 = vadd.f32 %v994, %v926
    %v996 = vadd.f32 %v995, %v927
    %v997 = vadd.f32 %v996, %v928
    %v998 = vadd.f32 %v997, %v929
    %v999 = vadd.f32 %v998, %v930
    %1000 = vadd.xlane.f32.xlu0 %v999
    %v1001 = vpop.xlane.xlu0 %1000
    %v1002 = vadd.f32 %v931, %v932
    %v1003 = vadd.f32 %v1002, %v933
    %v1004 = vadd.f32 %v1003, %v934
    %v1005 = vadd.f32 %v1004, %v935
    %v1006 = vadd.f32 %v1005, %v936
    %v1007 = vadd.f32 %v1006, %v937
    %v1008 = vadd.f32 %v1007, %v938
    %1009 = vadd.xlane.f32.xlu0 %v1008
    %v1010 = vpop.xlane.xlu0 %1009
    %1011 = vst.msk [vmem:[#allocation10] sm:$0xff] %vm866, %v947
    %1012 = vst.msk [vmem:[#allocation10 + $0x8] sm:$0xff] %vm866, %v956
    %1013 = vst.msk [vmem:[#allocation10 + $0x10] sm:$0xff] %vm866, %v965
    %1014 = vst.msk [vmem:[#allocation10 + $0x18] sm:$0xff] %vm866, %v974
    %1015 = vst.msk [vmem:[#allocation10 + $0x20] sm:$0xff] %vm866, %v983
    %1016 = vst.msk [vmem:[#allocation10 + $0x28] sm:$0xff] %vm866, %v992
    %1017 = vst.msk [vmem:[#allocation10 + $0x30] sm:$0xff] %vm866, %v1001
    %1018 = vst.msk [vmem:[#allocation10 + $0x38] sm:$0xff] %vm866, %v1010
    // Predicated region
    $region18: #{hdc_net_forward.295} parent=1 // pred_check
      _
    $region19: #{hdc_net_forward.295} parent=1 // pred_check_branch
      %1020 = sbr.rel (0) target = $region21
    $region20: #{hdc_net_forward.295} parent=1 // pred_region
      %s1022 = ssub.s32 4096, 4096
      %1023 = vsyncadd [#allocation4], %s1022
      %s1024 = sshll.u32 [#allocation7], 4
      %s1025 = int_to_ptr.vmem [resolvable:$true] %s1024
      %1030 = dma.vmem_to_hbm [thread:$0]  %s1025, 4096, %s2, [#allocation4], 512, 512, 32
    $region21: #{hdc_net_forward.295} parent=1 // pred_fallthru
      _
    // Predicated region
    $region22: #{hdc_net_forward.295} parent=1 // pred_check
      _
    $region23: #{hdc_net_forward.295} parent=1 // pred_check_branch
      %1032 = sbr.rel (0) target = $region25
    $region24: #{hdc_net_forward.295} parent=1 // pred_region
      %s1034 = ssub.s32 1024, 1024
      %1035 = vsyncadd [#allocation9], %s1034
      %s1036 = sshll.u32 [#allocation8], 4
      %s1037 = int_to_ptr.vmem [resolvable:$true] %s1036
      %1042 = dma.vmem_to_hbm [thread:$0]  %s1037, 1024, %s3, [#allocation9], 128, 128, 8
    $region25: #{hdc_net_forward.295} parent=1 // pred_fallthru
      _
    // Predicated region
    $region26: #{hdc_net_forward.295} parent=1 // pred_check
      _
    $region27: #{hdc_net_forward.295} parent=1 // pred_check_branch
      %1044 = sbr.rel (0) target = $region29
    $region28: #{hdc_net_forward.295} parent=1 // pred_region
      %s1046 = ssub.s32 1024, 1024
      %1047 = vsyncadd [#allocation9], %s1046
      %s1048 = sshll.u32 [#allocation10], 4
      %s1049 = int_to_ptr.vmem [resolvable:$true] %s1048
      %1054 = dma.vmem_to_hbm [thread:$0]  %s1049, 1024, %s4, [#allocation9], 128, 128, 8
    $region29: #{hdc_net_forward.295} parent=1 // pred_fallthru
      _
    // Predicated region
    $region30: #{hdc_net_forward.295} parent=1 // pred_check
      _
    $region31: #{hdc_net_forward.295} parent=1 // pred_check_branch
      %1056 = sbr.rel (0) target = $region33
    $region32: #{hdc_net_forward.295} parent=1 // pred_region
      %1057 = dma.done [#allocation4], 4096
    $region33: #{hdc_net_forward.295} parent=1 // pred_fallthru
      _
    // Predicated region
    $region34: #{hdc_net_forward.295} parent=1 // pred_check
      _
    $region35: #{hdc_net_forward.295} parent=1 // pred_check_branch
      %1059 = sbr.rel (0) target = $region37
    $region36: #{hdc_net_forward.295} parent=1 // pred_region
      %1060 = dma.done [#allocation9], 1024
    $region37: #{hdc_net_forward.295} parent=1 // pred_fallthru
      _
    // Predicated region
    $region38: #{hdc_net_forward.295} parent=1 // pred_check
      _
    $region39: #{hdc_net_forward.295} parent=1 // pred_check_branch
      %1062 = sbr.rel (0) target = $region41
    $region40: #{hdc_net_forward.295} parent=1 // pred_region
      %1063 = dma.done [#allocation9], 1024
    $region41: #{hdc_net_forward.295} parent=1 // pred_fallthru
      _
    %1064 = vsyncpa [#allocation3], 1
    %1065 = vsyncpa [#allocation6], 1
    %1066 = vsyncpa [#allocation4], 1
    %1067 = vsyncpa [#allocation9], 1

// kernel: hdc_net_forward.296
$region0: #{hdc_net_forward.296}
  #allocation0 [shape = 'u32[]', space=smem, size = 0x4, offset = 0x4, fixed_abs, tag = 'smem constant byte address 0x4 - core index']
  #allocation1 [shape = 'u32[144,128]{1,0:T(1,128)}', space=vmem, size = 0x12000, scoped, tag = 'internal scratch']
  %s0 = inlined_call_operand.hbm [shape: bf16[64,1024], index: 0, kind: input, shape index: {}]
  %s1 = inlined_call_operand.hbm [shape: f32[64,1], index: 1, kind: input, shape index: {}]
  %s2 = inlined_call_operand.hbm [shape: f32[64,1], index: 2, kind: input, shape index: {}]
  %s3 = inlined_call_operand.hbm [shape: bf16[64,1024], index: 3, kind: output, shape index: {}]
  %s4 = sld [smem:[#allocation0]]
  $region34: #{hdc_net_forward.296} parent=0
    _
  %s6 = ssub.s32 1, %s4
  %s7 = scalar_select 0, %s6, %s4
  $region1: #{hdc_net_forward.296} parent=0
    #allocation2 [shape = 'u8[131072]{0}', space=vmem, size = 0x20000, scoped, tag = 'input window, operand 0, single buffered']
    #allocation3 [shape = 's32[1]{0}', space=sflag, size = 0x4, scoped, tag = 'scoped memory for hdc_net_forward.296']
    #allocation4 [shape = 's32[1]{0}', space=sflag, size = 0x4, scoped, tag = 'scoped memory for hdc_net_forward.296']
    #allocation5 [shape = 'u8[32768]{0}', space=vmem, size = 0x8000, scoped, tag = 'input window, operand 1, single buffered']
    #allocation6 [shape = 's32[1]{0}', space=sflag, size = 0x4, scoped, tag = 'scoped memory for hdc_net_forward.296']
    #allocation7 [shape = 'u8[32768]{0}', space=vmem, size = 0x8000, scoped, tag = 'input window, operand 2, single buffered']
    #allocation8 [shape = 'u8[131072]{0}', space=vmem, size = 0x20000, scoped, tag = 'output window, operand 0, single buffered']
    %8 = vsyncpa [#allocation3], 0
    %9 = vsyncpa [#allocation6], 0
    %10 = vsyncpa [#allocation4], 0
    // Predicated region
    $region2: #{hdc_net_forward.296} parent=1 // pred_check
      _
    $region3: #{hdc_net_forward.296} parent=1 // pred_check_branch
      %12 = sbr.rel (0) target = $region5
    $region4: #{hdc_net_forward.296} parent=1 // pred_region
      %s14 = ssub.s32 4096, 4096
      %15 = vsyncadd [#allocation3], %s14
      %s16 = sshll.u32 [#allocation2], 4
      %s17 = int_to_ptr.vmem [resolvable:$true] %s16
      %22 = dma.hbm_to_vmem [thread:$0]  %s0, 4096, %s17, [#allocation3], 512, 512, 32
    $region5: #{hdc_net_forward.296} parent=1 // pred_fallthru
      _
    // Predicated region
    $region6: #{hdc_net_forward.296} parent=1 // pred_check
      _
    $region7: #{hdc_net_forward.296} parent=1 // pred_check_branch
      %24 = sbr.rel (0) target = $region9
    $region8: #{hdc_net_forward.296} parent=1 // pred_region
      %s26 = ssub.s32 1024, 1024
      %27 = vsyncadd [#allocation6], %s26
      %s28 = sshll.u32 [#allocation5], 4
      %s29 = int_to_ptr.vmem [resolvable:$true] %s28
      %34 = dma.hbm_to_vmem [thread:$0]  %s1, 1024, %s29, [#allocation6], 128, 128, 8
    $region9: #{hdc_net_forward.296} parent=1 // pred_fallthru
      _
    // Predicated region
    $region10: #{hdc_net_forward.296} parent=1 // pred_check
      _
    $region11: #{hdc_net_forward.296} parent=1 // pred_check_branch
      %36 = sbr.rel (0) target = $region13
    $region12: #{hdc_net_forward.296} parent=1 // pred_region
      %s38 = ssub.s32 1024, 1024
      %39 = vsyncadd [#allocation6], %s38
      %s40 = sshll.u32 [#allocation7], 4
      %s41 = int_to_ptr.vmem [resolvable:$true] %s40
      %46 = dma.hbm_to_vmem [thread:$0]  %s2, 1024, %s41, [#allocation6], 128, 128, 8
    $region13: #{hdc_net_forward.296} parent=1 // pred_fallthru
      _
    // Predicated region
    $region14: #{hdc_net_forward.296} parent=1 // pred_check
      _
    $region15: #{hdc_net_forward.296} parent=1 // pred_check_branch
      %48 = sbr.rel (0) target = $region17
    $region16: #{hdc_net_forward.296} parent=1 // pred_region
      %49 = dma.done [#allocation3], 4096
    $region17: #{hdc_net_forward.296} parent=1 // pred_fallthru
      _
    // Predicated region
    $region18: #{hdc_net_forward.296} parent=1 // pred_check
      _
    $region19: #{hdc_net_forward.296} parent=1 // pred_check_branch
      %51 = sbr.rel (0) target = $region21
    $region20: #{hdc_net_forward.296} parent=1 // pred_region
      %52 = dma.done [#allocation6], 1024
    $region21: #{hdc_net_forward.296} parent=1 // pred_fallthru
      _
    // Predicated region
    $region22: #{hdc_net_forward.296} parent=1 // pred_check
      _
    $region23: #{hdc_net_forward.296} parent=1 // pred_check_branch
      %54 = sbr.rel (0) target = $region25
    $region24: #{hdc_net_forward.296} parent=1 // pred_region
      %55 = dma.done [#allocation6], 1024
    $region25: #{hdc_net_forward.296} parent=1 // pred_fallthru
      _
    %v56 = vld [vmem:[#allocation5] sm:$0xff]
    %v57 = vld [vmem:[#allocation5 + $0x8] sm:$0xff]
    %v58 = vld [vmem:[#allocation5 + $0x10] sm:$0xff]
    %v59 = vld [vmem:[#allocation5 + $0x18] sm:$0xff]
    %v60 = vld [vmem:[#allocation5 + $0x20] sm:$0xff]
    %v61 = vld [vmem:[#allocation5 + $0x28] sm:$0xff]
    %v62 = vld [vmem:[#allocation5 + $0x30] sm:$0xff]
    %v63 = vld [vmem:[#allocation5 + $0x38] sm:$0xff]
    %v64 = vmul.f32 %v56, 0.00012207031
    %v65 = vmul.f32 %v57, 0.00012207031
    %v66 = vmul.f32 %v58, 0.00012207031
    %v67 = vmul.f32 %v59, 0.00012207031
    %v68 = vmul.f32 %v60, 0.00012207031
    %v69 = vmul.f32 %v61, 0.00012207031
    %v70 = vmul.f32 %v62, 0.00012207031
    %v71 = vmul.f32 %v63, 0.00012207031
    %v72 = vld [vmem:[#allocation7] sm:$0xff]
    %v73 = vld [vmem:[#allocation7 + $0x8] sm:$0xff]
    %v74 = vld [vmem:[#allocation7 + $0x10] sm:$0xff]
    %v75 = vld [vmem:[#allocation7 + $0x18] sm:$0xff]
    %v76 = vld [vmem:[#allocation7 + $0x20] sm:$0xff]
    %v77 = vld [vmem:[#allocation7 + $0x28] sm:$0xff]
    %v78 = vld [vmem:[#allocation7 + $0x30] sm:$0xff]
    %v79 = vld [vmem:[#allocation7 + $0x38] sm:$0xff]
    %v80 = vmul.f32 %v72, 0.00012207031
    %v81 = vmul.f32 %v73, 0.00012207031
    %v82 = vmul.f32 %v74, 0.00012207031
    %v83 = vmul.f32 %v75, 0.00012207031
    %v84 = vmul.f32 %v76, 0.00012207031
    %v85 = vmul.f32 %v77, 0.00012207031
    %v86 = vmul.f32 %v78, 0.00012207031
    %v87 = vmul.f32 %v79, 0.00012207031
    %v88 = vmul.f32 %v64, %v64
    %v89 = vmul.f32 %v65, %v65
    %v90 = vmul.f32 %v66, %v66
    %v91 = vmul.f32 %v67, %v67
    %v92 = vmul.f32 %v68, %v68
    %v93 = vmul.f32 %v69, %v69
    %v94 = vmul.f32 %v70, %v70
    %v95 = vmul.f32 %v71, %v71
    %v96 = vsub.f32 %v80, %v88
    %v97 = vsub.f32 %v81, %v89
    %v98 = vsub.f32 %v82, %v90
    %v99 = vsub.f32 %v83, %v91
    %v100 = vsub.f32 %v84, %v92
    %v101 = vsub.f32 %v85, %v93
    %v102 = vsub.f32 %v86, %v94
    %v103 = vsub.f32 %v87, %v95
    %v104 = vmax.f32 %v96, 0.0
    %v105 = vmax.f32 %v97, 0.0
    %v106 = vmax.f32 %v98, 0.0
    %v107 = vmax.f32 %v99, 0.0
    %v108 = vmax.f32 %v100, 0.0
    %v109 = vmax.f32 %v101, 0.0
    %v110 = vmax.f32 %v102, 0.0
    %v111 = vmax.f32 %v103, 0.0
    %v112 = vadd.f32 %v104, 1e-05
    %v113 = vadd.f32 %v105, 1e-05
    %v114 = vadd.f32 %v106, 1e-05
    %v115 = vadd.f32 %v107, 1e-05
    %v116 = vadd.f32 %v108, 1e-05
    %v117 = vadd.f32 %v109, 1e-05
    %v118 = vadd.f32 %v110, 1e-05
    %v119 = vadd.f32 %v111, 1e-05
    %v120 = vrsqrt.pop %v112
    %v121 = vrsqrt.pop %v113
    %v122 = vrsqrt.pop %v114
    %v123 = vrsqrt.pop %v115
    %v124 = vrsqrt.pop %v116
    %v125 = vrsqrt.pop %v117
    %v126 = vrsqrt.pop %v118
    %v127 = vrsqrt.pop %v119
    %v128 = vld [vmem:[#allocation2] sm:$0xff]
    %v129 = vld [vmem:[#allocation2 + $0x8] sm:$0xff]
    %v130 = vld [vmem:[#allocation2 + $0x10] sm:$0xff]
    %v131 = vld [vmem:[#allocation2 + $0x18] sm:$0xff]
    %v132 = vld [vmem:[#allocation2 + $0x20] sm:$0xff]
    %v133 = vld [vmem:[#allocation2 + $0x28] sm:$0xff]
    %v134 = vld [vmem:[#allocation2 + $0x30] sm:$0xff]
    %v135 = vld [vmem:[#allocation2 + $0x38] sm:$0xff]
    %v136 = vld [vmem:[#allocation2 + $0x40] sm:$0xff]
    %v137 = vld [vmem:[#allocation2 + $0x48] sm:$0xff]
    %v138 = vld [vmem:[#allocation2 + $0x50] sm:$0xff]
    %v139 = vld [vmem:[#allocation2 + $0x58] sm:$0xff]
    %v140 = vld [vmem:[#allocation2 + $0x60] sm:$0xff]
    %v141 = vld [vmem:[#allocation2 + $0x68] sm:$0xff]
    %v142 = vld [vmem:[#allocation2 + $0x70] sm:$0xff]
    %v143 = vld [vmem:[#allocation2 + $0x78] sm:$0xff]
    %v144 = vld [vmem:[#allocation2 + $0x80] sm:$0xff]
    %v145 = vld [vmem:[#allocation2 + $0x88] sm:$0xff]
    %v146 = vld [vmem:[#allocation2 + $0x90] sm:$0xff]
    %v147 = vld [vmem:[#allocation2 + $0x98] sm:$0xff]
    %v148 = vld [vmem:[#allocation2 + $0xa0] sm:$0xff]
    %v149 = vld [vmem:[#allocation2 + $0xa8] sm:$0xff]
    %v150 = vld [vmem:[#allocation2 + $0xb0] sm:$0xff]
    %v151 = vld [vmem:[#allocation2 + $0xb8] sm:$0xff]
    %v152 = vld [vmem:[#allocation2 + $0xc0] sm:$0xff]
    %v153 = vld [vmem:[#allocation2 + $0xc8] sm:$0xff]
    %v154 = vld [vmem:[#allocation2 + $0xd0] sm:$0xff]
    %v155 = vld [vmem:[#allocation2 + $0xd8] sm:$0xff]
    %v156 = vld [vmem:[#allocation2 + $0xe0] sm:$0xff]
    %v157 = vld [vmem:[#allocation2 + $0xe8] sm:$0xff]
    %v158 = vld [vmem:[#allocation2 + $0xf0] sm:$0xff]
    %v159 = vld [vmem:[#allocation2 + $0xf8] sm:$0xff]
    %v160 = vunpack.c.l.bf16 %v128
    %v161 = vunpack.c.h.bf16 %v128
    %v162 = vunpack.c.l.bf16 %v129
    %v163 = vunpack.c.h.bf16 %v129
    %v164 = vunpack.c.l.bf16 %v130
    %v165 = vunpack.c.h.bf16 %v130
    %v166 = vunpack.c.l.bf16 %v131
    %v167 = vunpack.c.h.bf16 %v131
    %v168 = vunpack.c.l.bf16 %v132
    %v169 = vunpack.c.h.bf16 %v132
    %v170 = vunpack.c.l.bf16 %v133
    %v171 = vunpack.c.h.bf16 %v133
    %v172 = vunpack.c.l.bf16 %v134
    %v173 = vunpack.c.h.bf16 %v134
    %v174 = vunpack.c.l.bf16 %v135
    %v175 = vunpack.c.h.bf16 %v135
    %v176 = vunpack.c.l.bf16 %v136
    %v177 = vunpack.c.h.bf16 %v136
    %v178 = vunpack.c.l.bf16 %v137
    %v179 = vunpack.c.h.bf16 %v137
    %v180 = vunpack.c.l.bf16 %v138
    %v181 = vunpack.c.h.bf16 %v138
    %v182 = vunpack.c.l.bf16 %v139
    %v183 = vunpack.c.h.bf16 %v139
    %v184 = vunpack.c.l.bf16 %v140
    %v185 = vunpack.c.h.bf16 %v140
    %v186 = vunpack.c.l.bf16 %v141
    %v187 = vunpack.c.h.bf16 %v141
    %v188 = vunpack.c.l.bf16 %v142
    %v189 = vunpack.c.h.bf16 %v142
    %v190 = vunpack.c.l.bf16 %v143
    %v191 = vunpack.c.h.bf16 %v143
    %v192 = vunpack.c.l.bf16 %v144
    %v193 = vunpack.c.h.bf16 %v144
    %v194 = vunpack.c.l.bf16 %v145
    %v195 = vunpack.c.h.bf16 %v145
    %v196 = vunpack.c.l.bf16 %v146
    %v197 = vunpack.c.h.bf16 %v146
    %v198 = vunpack.c.l.bf16 %v147
    %v199 = vunpack.c.h.bf16 %v147
    %v200 = vunpack.c.l.bf16 %v148
    %v201 = vunpack.c.h.bf16 %v148
    %v202 = vunpack.c.l.bf16 %v149
    %v203 = vunpack.c.h.bf16 %v149
    %v204 = vunpack.c.l.bf16 %v150
    %v205 = vunpack.c.h.bf16 %v150
    %v206 = vunpack.c.l.bf16 %v151
    %v207 = vunpack.c.h.bf16 %v151
    %v208 = vunpack.c.l.bf16 %v152
    %v209 = vunpack.c.h.bf16 %v152
    %v210 = vunpack.c.l.bf16 %v153
    %v211 = vunpack.c.h.bf16 %v153
    %v212 = vunpack.c.l.bf16 %v154
    %v213 = vunpack.c.h.bf16 %v154
    %v214 = vunpack.c.l.bf16 %v155
    %v215 = vunpack.c.h.bf16 %v155
    %v216 = vunpack.c.l.bf16 %v156
    %v217 = vunpack.c.h.bf16 %v156
    %v218 = vunpack.c.l.bf16 %v157
    %v219 = vunpack.c.h.bf16 %v157
    %v220 = vunpack.c.l.bf16 %v158
    %v221 = vunpack.c.h.bf16 %v158
    %v222 = vunpack.c.l.bf16 %v159
    %v223 = vunpack.c.h.bf16 %v159
    %225 = vset.pattern.permute.xlu0 0
    %226 = vperm.xlu0 %225, %v64
    %v227 = vpop.permute.xlu0 %226
    %230 = vset.pattern.permute.xlu0 0
    %231 = vperm.xlu0 %230, %v65
    %v232 = vpop.permute.xlu0 %231
    %235 = vset.pattern.permute.xlu0 0
    %236 = vperm.xlu0 %235, %v66
    %v237 = vpop.permute.xlu0 %236
    %240 = vset.pattern.permute.xlu0 0
    %241 = vperm.xlu0 %240, %v67
    %v242 = vpop.permute.xlu0 %241
    %245 = vset.pattern.permute.xlu0 0
    %246 = vperm.xlu0 %245, %v68
    %v247 = vpop.permute.xlu0 %246
    %250 = vset.pattern.permute.xlu0 0
    %251 = vperm.xlu0 %250, %v69
    %v252 = vpop.permute.xlu0 %251
    %255 = vset.pattern.permute.xlu0 0
    %256 = vperm.xlu0 %255, %v70
    %v257 = vpop.permute.xlu0 %256
    %260 = vset.pattern.permute.xlu0 0
    %261 = vperm.xlu0 %260, %v71
    %v262 = vpop.permute.xlu0 %261
    %v264 = vsub.f32 %v160, %v227
    %v265 = vsub.f32 %v161, %v227
    %v266 = vsub.f32 %v162, %v227
    %v267 = vsub.f32 %v163, %v227
    %v268 = vsub.f32 %v164, %v227
    %v269 = vsub.f32 %v165, %v227
    %v270 = vsub.f32 %v166, %v227
    %v271 = vsub.f32 %v167, %v227
    %v272 = vsub.f32 %v168, %v232
    %v273 = vsub.f32 %v169, %v232
    %v274 = vsub.f32 %v170, %v232
    %v275 = vsub.f32 %v171, %v232
    %v276 = vsub.f32 %v172, %v232
    %v277 = vsub.f32 %v173, %v232
    %v278 = vsub.f32 %v174, %v232
    %v279 = vsub.f32 %v175, %v232
    %v280 = vsub.f32 %v176, %v237
    %v281 = vsub.f32 %v177, %v237
    %v282 = vsub.f32 %v178, %v237
    %v283 = vsub.f32 %v179, %v237
    %v284 = vsub.f32 %v180, %v237
    %v285 = vsub.f32 %v181, %v237
    %v286 = vsub.f32 %v182, %v237
    %v287 = vsub.f32 %v183, %v237
    %v288 = vsub.f32 %v184, %v242
    %v289 = vsub.f32 %v185, %v242
    %v290 = vsub.f32 %v186, %v242
    %v291 = vsub.f32 %v187, %v242
    %v292 = vsub.f32 %v188, %v242
    %v293 = vsub.f32 %v189, %v242
    %v294 = vsub.f32 %v190, %v242
    %v295 = vsub.f32 %v191, %v242
    %v296 = vsub.f32 %v192, %v247
    %v297 = vsub.f32 %v193, %v247
    %v298 = vsub.f32 %v194, %v247
    %v299 = vsub.f32 %v195, %v247
    %v300 = vsub.f32 %v196, %v247
    %v301 = vsub.f32 %v197, %v247
    %v302 = vsub.f32 %v198, %v247
    %v303 = vsub.f32 %v199, %v247
    %v304 = vsub.f32 %v200, %v252
    %v305 = vsub.f32 %v201, %v252
    %v306 = vsub.f32 %v202, %v252
    %v307 = vsub.f32 %v203, %v252
    %v308 = vsub.f32 %v204, %v252
    %v309 = vsub.f32 %v205, %v252
    %v310 = vsub.f32 %v206, %v252
    %v311 = vsub.f32 %v207, %v252
    %v312 = vsub.f32 %v208, %v257
    %v313 = vsub.f32 %v209, %v257
    %v314 = vsub.f32 %v210, %v257
    %v315 = vsub.f32 %v211, %v257
    %v316 = vsub.f32 %v212, %v257
    %v317 = vsub.f32 %v213, %v257
    %v318 = vsub.f32 %v214, %v257
    %v319 = vsub.f32 %v215, %v257
    %v320 = vsub.f32 %v216, %v262
    %v321 = vsub.f32 %v217, %v262
    %v322 = vsub.f32 %v218, %v262
    %v323 = vsub.f32 %v219, %v262
    %v324 = vsub.f32 %v220, %v262
    %v325 = vsub.f32 %v221, %v262
    %v326 = vsub.f32 %v222, %v262
    %v327 = vsub.f32 %v223, %v262
    %329 = vset.pattern.permute.xlu0 0
    %330 = vperm.xlu0 %329, %v120
    %v331 = vpop.permute.xlu0 %330
    %334 = vset.pattern.permute.xlu0 0
    %335 = vperm.xlu0 %334, %v121
    %v336 = vpop.permute.xlu0 %335
    %339 = vset.pattern.permute.xlu0 0
    %340 = vperm.xlu0 %339, %v122
    %v341 = vpop.permute.xlu0 %340
    %344 = vset.pattern.permute.xlu0 0
    %345 = vperm.xlu0 %344, %v123
    %v346 = vpop.permute.xlu0 %345
    %349 = vset.pattern.permute.xlu0 0
    %350 = vperm.xlu0 %349, %v124
    %v351 = vpop.permute.xlu0 %350
    %354 = vset.pattern.permute.xlu0 0
    %355 = vperm.xlu0 %354, %v125
    %v356 = vpop.permute.xlu0 %355
    %359 = vset.pattern.permute.xlu0 0
    %360 = vperm.xlu0 %359, %v126
    %v361 = vpop.permute.xlu0 %360
    %364 = vset.pattern.permute.xlu0 0
    %365 = vperm.xlu0 %364, %v127
    %v366 = vpop.permute.xlu0 %365
    %v368 = vmul.f32 %v264, %v331
    %v369 = vmul.f32 %v265, %v331
    %v370 = vmul.f32 %v266, %v331
    %v371 = vmul.f32 %v267, %v331
    %v372 = vmul.f32 %v268, %v331
    %v373 = vmul.f32 %v269, %v331
    %v374 = vmul.f32 %v270, %v331
    %v375 = vmul.f32 %v271, %v331
    %v376 = vmul.f32 %v272, %v336
    %v377 = vmul.f32 %v273, %v336
    %v378 = vmul.f32 %v274, %v336
    %v379 = vmul.f32 %v275, %v336
    %v380 = vmul.f32 %v276, %v336
    %v381 = vmul.f32 %v277, %v336
    %v382 = vmul.f32 %v278, %v336
    %v383 = vmul.f32 %v279, %v336
    %v384 = vmul.f32 %v280, %v341
    %v385 = vmul.f32 %v281, %v341
    %v386 = vmul.f32 %v282, %v341
    %v387 = vmul.f32 %v283, %v341
    %v388 = vmul.f32 %v284, %v341
    %v389 = vmul.f32 %v285, %v341
    %v390 = vmul.f32 %v286, %v341
    %v391 = vmul.f32 %v287, %v341
    %v392 = vmul.f32 %v288, %v346
    %v393 = vmul.f32 %v289, %v346
    %v394 = vmul.f32 %v290, %v346
    %v395 = vmul.f32 %v291, %v346
    %v396 = vmul.f32 %v292, %v346
    %v397 = vmul.f32 %v293, %v346
    %v398 = vmul.f32 %v294, %v346
    %v399 = vmul.f32 %v295, %v346
    %v400 = vmul.f32 %v296, %v351
    %v401 = vmul.f32 %v297, %v351
    %v402 = vmul.f32 %v298, %v351
    %v403 = vmul.f32 %v299, %v351
    %v404 = vmul.f32 %v300, %v351
    %v405 = vmul.f32 %v301, %v351
    %v406 = vmul.f32 %v302, %v351
    %v407 = vmul.f32 %v303, %v351
    %v408 = vmul.f32 %v304, %v356
    %v409 = vmul.f32 %v305, %v356
    %v410 = vmul.f32 %v306, %v356
    %v411 = vmul.f32 %v307, %v356
    %v412 = vmul.f32 %v308, %v356
    %v413 = vmul.f32 %v309, %v356
    %v414 = vmul.f32 %v310, %v356
    %v415 = vmul.f32 %v311, %v356
    %v416 = vmul.f32 %v312, %v361
    %v417 = vmul.f32 %v313, %v361
    %v418 = vmul.f32 %v314, %v361
    %v419 = vmul.f32 %v315, %v361
    %v420 = vmul.f32 %v316, %v361
    %v421 = vmul.f32 %v317, %v361
    %v422 = vmul.f32 %v318, %v361
    %v423 = vmul.f32 %v319, %v361
    %v424 = vmul.f32 %v320, %v366
    %v425 = vmul.f32 %v321, %v366
    %v426 = vmul.f32 %v322, %v366
    %v427 = vmul.f32 %v323, %v366
    %v428 = vmul.f32 %v324, %v366
    %v429 = vmul.f32 %v325, %v366
    %v430 = vmul.f32 %v326, %v366
    %v431 = vmul.f32 %v327, %v366
    %v432 = vmax.f32 %v368, 0.0
    %v433 = vmax.f32 %v369, 0.0
    %v434 = vmax.f32 %v370, 0.0
    %v435 = vmax.f32 %v371, 0.0
    %v436 = vmax.f32 %v372, 0.0
    %v437 = vmax.f32 %v373, 0.0
    %v438 = vmax.f32 %v374, 0.0
    %v439 = vmax.f32 %v375, 0.0
    %v440 = vmax.f32 %v376, 0.0
    %v441 = vmax.f32 %v377, 0.0
    %v442 = vmax.f32 %v378, 0.0
    %v443 = vmax.f32 %v379, 0.0
    %v444 = vmax.f32 %v380, 0.0
    %v445 = vmax.f32 %v381, 0.0
    %v446 = vmax.f32 %v382, 0.0
    %v447 = vmax.f32 %v383, 0.0
    %v448 = vmax.f32 %v384, 0.0
    %v449 = vmax.f32 %v385, 0.0
    %v450 = vmax.f32 %v386, 0.0
    %v451 = vmax.f32 %v387, 0.0
    %v452 = vmax.f32 %v388, 0.0
    %v453 = vmax.f32 %v389, 0.0
    %v454 = vmax.f32 %v390, 0.0
    %v455 = vmax.f32 %v391, 0.0
    %v456 = vmax.f32 %v392, 0.0
    %v457 = vmax.f32 %v393, 0.0
    %v458 = vmax.f32 %v394, 0.0
    %v459 = vmax.f32 %v395, 0.0
    %v460 = vmax.f32 %v396, 0.0
    %v461 = vmax.f32 %v397, 0.0
    %v462 = vmax.f32 %v398, 0.0
    %v463 = vmax.f32 %v399, 0.0
    %v464 = vmax.f32 %v400, 0.0
    %v465 = vmax.f32 %v401, 0.0
    %v466 = vmax.f32 %v402, 0.0
    %v467 = vmax.f32 %v403, 0.0
    %v468 = vmax.f32 %v404, 0.0
    %v469 = vmax.f32 %v405, 0.0
    %v470 = vmax.f32 %v406, 0.0
    %v471 = vmax.f32 %v407, 0.0
    %v472 = vmax.f32 %v408, 0.0
    %v473 = vmax.f32 %v409, 0.0
    %v474 = vmax.f32 %v410, 0.0
    %v475 = vmax.f32 %v411, 0.0
    %v476 = vmax.f32 %v412, 0.0
    %v477 = vmax.f32 %v413, 0.0
    %v478 = vmax.f32 %v414, 0.0
    %v479 = vmax.f32 %v415, 0.0
    %v480 = vmax.f32 %v416, 0.0
    %v481 = vmax.f32 %v417, 0.0
    %v482 = vmax.f32 %v418, 0.0
    %v483 = vmax.f32 %v419, 0.0
    %v484 = vmax.f32 %v420, 0.0
    %v485 = vmax.f32 %v421, 0.0
    %v486 = vmax.f32 %v422, 0.0
    %v487 = vmax.f32 %v423, 0.0
    %v488 = vmax.f32 %v424, 0.0
    %v489 = vmax.f32 %v425, 0.0
    %v490 = vmax.f32 %v426, 0.0
    %v491 = vmax.f32 %v427, 0.0
    %v492 = vmax.f32 %v428, 0.0
    %v493 = vmax.f32 %v429, 0.0
    %v494 = vmax.f32 %v430, 0.0
    %v495 = vmax.f32 %v431, 0.0
    %v496 = vpack.c.bf16 %v440, %v432
    %v497 = vpack.c.bf16 %v441, %v433
    %v498 = vpack.c.bf16 %v442, %v434
    %v499 = vpack.c.bf16 %v443, %v435
    %v500 = vpack.c.bf16 %v444, %v436
    %v501 = vpack.c.bf16 %v445, %v437
    %v502 = vpack.c.bf16 %v446, %v438
    %v503 = vpack.c.bf16 %v447, %v439
    %v504 = vpack.c.bf16 %v456, %v448
    %v505 = vpack.c.bf16 %v457, %v449
    %v506 = vpack.c.bf16 %v458, %v450
    %v507 = vpack.c.bf16 %v459, %v451
    %v508 = vpack.c.bf16 %v460, %v452
    %v509 = vpack.c.bf16 %v461, %v453
    %v510 = vpack.c.bf16 %v462, %v454
    %v511 = vpack.c.bf16 %v463, %v455
    %v512 = vpack.c.bf16 %v472, %v464
    %v513 = vpack.c.bf16 %v473, %v465
    %v514 = vpack.c.bf16 %v474, %v466
    %v515 = vpack.c.bf16 %v475, %v467
    %v516 = vpack.c.bf16 %v476, %v468
    %v517 = vpack.c.bf16 %v477, %v469
    %v518 = vpack.c.bf16 %v478, %v470
    %v519 = vpack.c.bf16 %v479, %v471
    %v520 = vpack.c.bf16 %v488, %v480
    %v521 = vpack.c.bf16 %v489, %v481
    %v522 = vpack.c.bf16 %v490, %v482
    %v523 = vpack.c.bf16 %v491, %v483
    %v524 = vpack.c.bf16 %v492, %v484
    %v525 = vpack.c.bf16 %v493, %v485
    %v526 = vpack.c.bf16 %v494, %v486
    %v527 = vpack.c.bf16 %v495, %v487
    %v560 = vunpack.c.l.b16 %v496
    %v561 = vunpack.c.l.b16 %v497
    %v562 = vunpack.c.l.b16 %v498
    %v563 = vunpack.c.l.b16 %v499
    %v564 = vunpack.c.l.b16 %v500
    %v565 = vunpack.c.l.b16 %v501
    %v566 = vunpack.c.l.b16 %v502
    %v567 = vunpack.c.l.b16 %v503
    %v568 = vunpack.c.h.b16 %v496
    %v569 = vunpack.c.h.b16 %v497
    %v570 = vunpack.c.h.b16 %v498
    %v571 = vunpack.c.h.b16 %v499
    %v572 = vunpack.c.h.b16 %v500
    %v573 = vunpack.c.h.b16 %v501
    %v574 = vunpack.c.h.b16 %v502
    %v575 = vunpack.c.h.b16 %v503
    %v576 = vunpack.c.l.b16 %v504
    %v577 = vunpack.c.l.b16 %v505
    %v578 = vunpack.c.l.b16 %v506
    %v579 = vunpack.c.l.b16 %v507
    %v580 = vunpack.c.l.b16 %v508
    %v581 = vunpack.c.l.b16 %v509
    %v582 = vunpack.c.l.b16 %v510
    %v583 = vunpack.c.l.b16 %v511
    %v584 = vunpack.c.h.b16 %v504
    %v585 = vunpack.c.h.b16 %v505
    %v586 = vunpack.c.h.b16 %v506
    %v587 = vunpack.c.h.b16 %v507
    %v588 = vunpack.c.h.b16 %v508
    %v589 = vunpack.c.h.b16 %v509
    %v590 = vunpack.c.h.b16 %v510
    %v591 = vunpack.c.h.b16 %v511
    %v592 = vunpack.c.l.b16 %v512
    %v593 = vunpack.c.l.b16 %v513
    %v594 = vunpack.c.l.b16 %v514
    %v595 = vunpack.c.l.b16 %v515
    %v596 = vunpack.c.l.b16 %v516
    %v597 = vunpack.c.l.b16 %v517
    %v598 = vunpack.c.l.b16 %v518
    %v599 = vunpack.c.l.b16 %v519
    %v600 = vunpack.c.h.b16 %v512
    %v601 = vunpack.c.h.b16 %v513
    %v602 = vunpack.c.h.b16 %v514
    %v603 = vunpack.c.h.b16 %v515
    %v604 = vunpack.c.h.b16 %v516
    %v605 = vunpack.c.h.b16 %v517
    %v606 = vunpack.c.h.b16 %v518
    %v607 = vunpack.c.h.b16 %v519
    %v608 = vunpack.c.l.b16 %v520
    %v609 = vunpack.c.l.b16 %v521
    %v610 = vunpack.c.l.b16 %v522
    %v611 = vunpack.c.l.b16 %v523
    %v612 = vunpack.c.l.b16 %v524
    %v613 = vunpack.c.l.b16 %v525
    %v614 = vunpack.c.l.b16 %v526
    %v615 = vunpack.c.l.b16 %v527
    %v616 = vunpack.c.h.b16 %v520
    %v617 = vunpack.c.h.b16 %v521
    %v618 = vunpack.c.h.b16 %v522
    %v619 = vunpack.c.h.b16 %v523
    %v620 = vunpack.c.h.b16 %v524
    %v621 = vunpack.c.h.b16 %v525
    %v622 = vunpack.c.h.b16 %v526
    %v623 = vunpack.c.h.b16 %v527
    %v624 = vpack.c.b16 %v561, %v560
    %v625 = vpack.c.b16 %v563, %v562
    %v626 = vpack.c.b16 %v565, %v564
    %v627 = vpack.c.b16 %v567, %v566
    %v628 = vpack.c.b16 %v569, %v568
    %v629 = vpack.c.b16 %v571, %v570
    %v630 = vpack.c.b16 %v573, %v572
    %v631 = vpack.c.b16 %v575, %v574
    %v632 = vpack.c.b16 %v577, %v576
    %v633 = vpack.c.b16 %v579, %v578
    %v634 = vpack.c.b16 %v581, %v580
    %v635 = vpack.c.b16 %v583, %v582
    %v636 = vpack.c.b16 %v585, %v584
    %v637 = vpack.c.b16 %v587, %v586
    %v638 = vpack.c.b16 %v589, %v588
    %v639 = vpack.c.b16 %v591, %v590
    %v640 = vpack.c.b16 %v593, %v592
    %v641 = vpack.c.b16 %v595, %v594
    %v642 = vpack.c.b16 %v597, %v596
    %v643 = vpack.c.b16 %v599, %v598
    %v644 = vpack.c.b16 %v601, %v600
    %v645 = vpack.c.b16 %v603, %v602
    %v646 = vpack.c.b16 %v605, %v604
    %v647 = vpack.c.b16 %v607, %v606
    %v648 = vpack.c.b16 %v609, %v608
    %v649 = vpack.c.b16 %v611, %v610
    %v650 = vpack.c.b16 %v613, %v612
    %v651 = vpack.c.b16 %v615, %v614
    %v652 = vpack.c.b16 %v617, %v616
    %v653 = vpack.c.b16 %v619, %v618
    %v654 = vpack.c.b16 %v621, %v620
    %v655 = vpack.c.b16 %v623, %v622
    %688 = vst [vmem:[#allocation8] sm:$0xff] %v624
    %689 = vst [vmem:[#allocation8 + $0x8] sm:$0xff] %v625
    %690 = vst [vmem:[#allocation8 + $0x10] sm:$0xff] %v626
    %691 = vst [vmem:[#allocation8 + $0x18] sm:$0xff] %v627
    %692 = vst [vmem:[#allocation8 + $0x20] sm:$0xff] %v628
    %693 = vst [vmem:[#allocation8 + $0x28] sm:$0xff] %v629
    %694 = vst [vmem:[#allocation8 + $0x30] sm:$0xff] %v630
    %695 = vst [vmem:[#allocation8 + $0x38] sm:$0xff] %v631
    %696 = vst [vmem:[#allocation8 + $0x40] sm:$0xff] %v632
    %697 = vst [vmem:[#allocation8 + $0x48] sm:$0xff] %v633
    %698 = vst [vmem:[#allocation8 + $0x50] sm:$0xff] %v634
    %699 = vst [vmem:[#allocation8 + $0x58] sm:$0xff] %v635
    %700 = vst [vmem:[#allocation8 + $0x60] sm:$0xff] %v636
    %701 = vst [vmem:[#allocation8 + $0x68] sm:$0xff] %v637
    %702 = vst [vmem:[#allocation8 + $0x70] sm:$0xff] %v638
    %703 = vst [vmem:[#allocation8 + $0x78] sm:$0xff] %v639
    %704 = vst [vmem:[#allocation8 + $0x80] sm:$0xff] %v640
    %705 = vst [vmem:[#allocation8 + $0x88] sm:$0xff] %v641
    %706 = vst [vmem:[#allocation8 + $0x90] sm:$0xff] %v642
    %707 = vst [vmem:[#allocation8 + $0x98] sm:$0xff] %v643
    %708 = vst [vmem:[#allocation8 + $0xa0] sm:$0xff] %v644
    %709 = vst [vmem:[#allocation8 + $0xa8] sm:$0xff] %v645
    %710 = vst [vmem:[#allocation8 + $0xb0] sm:$0xff] %v646
    %711 = vst [vmem:[#allocation8 + $0xb8] sm:$0xff] %v647
    %712 = vst [vmem:[#allocation8 + $0xc0] sm:$0xff] %v648
    %713 = vst [vmem:[#allocation8 + $0xc8] sm:$0xff] %v649
    %714 = vst [vmem:[#allocation8 + $0xd0] sm:$0xff] %v650
    %715 = vst [vmem:[#allocation8 + $0xd8] sm:$0xff] %v651
    %716 = vst [vmem:[#allocation8 + $0xe0] sm:$0xff] %v652
    %717 = vst [vmem:[#allocation8 + $0xe8] sm:$0xff] %v653
    %718 = vst [vmem:[#allocation8 + $0xf0] sm:$0xff] %v654
    %719 = vst [vmem:[#allocation8 + $0xf8] sm:$0xff] %v655
    // Predicated region
    $region26: #{hdc_net_forward.296} parent=1 // pred_check
      _
    $region27: #{hdc_net_forward.296} parent=1 // pred_check_branch
      %721 = sbr.rel (0) target = $region29
    $region28: #{hdc_net_forward.296} parent=1 // pred_region
      %s723 = ssub.s32 4096, 4096
      %724 = vsyncadd [#allocation4], %s723
      %s725 = sshll.u32 [#allocation8], 4
      %s726 = int_to_ptr.vmem [resolvable:$true] %s725
      %731 = dma.vmem_to_hbm [thread:$0]  %s726, 4096, %s3, [#allocation4], 512, 512, 32
    $region29: #{hdc_net_forward.296} parent=1 // pred_fallthru
      _
    // Predicated region
    $region30: #{hdc_net_forward.296} parent=1 // pred_check
      _
    $region31: #{hdc_net_forward.296} parent=1 // pred_check_branch
      %733 = sbr.rel (0) target = $region33
    $region32: #{hdc_net_forward.296} parent=1 // pred_region
      %734 = dma.done [#allocation4], 4096
    $region33: #{hdc_net_forward.296} parent=1 // pred_fallthru
      _
    %735 = vsyncpa [#allocation3], 1
    %736 = vsyncpa [#allocation6], 1
    %737 = vsyncpa [#allocation4], 1

// kernel: hdc_net_forward.297
$region0: #{hdc_net_forward.297}
  #allocation0 [shape = 'u32[]', space=smem, size = 0x4, offset = 0x4, fixed_abs, tag = 'smem constant byte address 0x4 - core index']
  #allocation1 [shape = 'u32[144,128]{1,0:T(1,128)}', space=vmem, size = 0x12000, scoped, tag = 'internal scratch']
  %s0 = inlined_call_operand.hbm [shape: bf16[8,8192], index: 0, kind: input, shape index: {}]
  %s1 = inlined_call_operand.hbm [shape: bf16[4,8], index: 1, kind: input, shape index: {}]
  %s2 = inlined_call_operand.hbm [shape: f32[4,1], index: 2, kind: input, shape index: {}]
  %s3 = inlined_call_operand.hbm [shape: f32[4,8192], index: 3, kind: output, shape index: {}]
  %s4 = sld [smem:[#allocation0]]
  $region57: #{hdc_net_forward.297} parent=0
    _
  %s6 = ssub.s32 1, %s4
  %s7 = scalar_select 0, %s6, %s4
  $region1: #{hdc_net_forward.297} parent=0
    #allocation2 [shape = 'u8[32768]{0}', space=vmem, size = 0x8000, scoped, tag = 'input window, operand 0']
    #allocation3 [shape = 's32[2]{0}', space=sflag, size = 0x8, scoped, tag = 'scoped memory for hdc_net_forward.297']
    #allocation4 [shape = 's32[2]{0}', space=sflag, size = 0x8, scoped, tag = 'scoped memory for hdc_net_forward.297']
    #allocation5 [shape = 'u8[1024]{0}', space=vmem, size = 0x400, scoped, tag = 'input window, operand 1, single buffered']
    #allocation6 [shape = 's32[1]{0}', space=sflag, size = 0x4, scoped, tag = 'scoped memory for hdc_net_forward.297']
    #allocation7 [shape = 'u8[2048]{0}', space=vmem, size = 0x800, scoped, tag = 'input window, operand 2, single buffered']
    #allocation8 [shape = 'u8[32768]{0}', space=vmem, size = 0x8000, scoped, tag = 'output window, operand 0']
    %8 = vsyncpa [#allocation3], 0
    %s9 = scalar_lea.sflag [#allocation3], 1
    %10 = vsyncpa %s9, 0
    %11 = vsyncpa [#allocation6], 0
    %12 = vsyncpa [#allocation4], 0
    %s13 = scalar_lea.sflag [#allocation4], 1
    %14 = vsyncpa %s13, 0
    loop: start=0, step=1, limit=10
    $region2: #{hdc_net_forward.297} parent=1 // loop_pre_header
      _
    $region3: #{hdc_net_forward.297} parent=1 // loop_header
      %s16 = sphi 0, %s20
      %p17 = scmp.ge.s32.totalorder %s16, 10
      %s26 = sphi 0, %s28
      %s29 = sphi 0, %s26
      %s30 = sphi 0, %s29
      %s46 = sphi 0, %s30
      %s50 = sphi 0, %s50
      %s52 = sphi 0, %s50
      %s53 = sphi 0, %s52
      %s67 = sphi 0, %s53
      %s71 = sphi 0, %s71
      %s73 = sphi 0, %s71
      %s74 = sphi 0, %s73
      %s88 = sphi 0, %s74
      %s94 = sphi 0, %s96
      %s97 = sphi 0, %s94
      %s98 = sphi 0, %s97
      %s114 = sphi 0, %s98
    $region4: #{hdc_net_forward.297} parent=1 // loop_header_branch
      %19 = sbr.rel (%p17) target = $region8
    $region5: #{hdc_net_forward.297} parent=1 // loop_body
      %s21 = ssub.s32 %s16, 1
      %s22 = ssub.s32 %s16, 2
      %s23 = sadd.s32 %s16, 1
      %s24 = ssub.s32 %s16, %s23
      %p25 = scmp.eq.s32.totalorder %s24, 0
      %s27 = sadd.s32 %s26, 1
      %s28 = scalar_select %p25, %s26, %s27
      %p31 = pneg %p25
      %p32 = scmp.eq.s32.totalorder %s16, 7
      %p33 = por %p31, %p32
      %p34 = scmp.ne.s32.totalorder %s26, %s29
      %p35 = scmp.eq.s32.totalorder %s16, 0
      %p36 = por %p34, %p35
      %p37 = scmp.ne.s32.totalorder %s26, %s29
      %p38 = scmp.eq.s32.totalorder %s21, 7
      %p39 = por %p37, %p38
      %p40 = scmp.ne.s32.totalorder %s29, %s30
      %p41 = scmp.eq.s32.totalorder %s21, 0
      %p42 = por %p40, %p41
      %p43 = scmp.ne.s32.totalorder %s29, %s30
      %p44 = scmp.eq.s32.totalorder %s22, 7
      %p45 = por %p43, %p44
      %p47 = scmp.ne.s32.totalorder %s30, %s46
      %p48 = scmp.eq.s32.totalorder %s22, 0
      %p49 = por %p47, %p48
      %s51 = sadd.s32 %s50, 1
      %p54 = scmp.eq.s32.totalorder %s16, 7
      %p55 = scmp.ne.s32.totalorder %s50, %s52
      %p56 = scmp.eq.s32.totalorder %s16, 0
      %p57 = por %p55, %p56
      %p58 = scmp.ne.s32.totalorder %s50, %s52
      %p59 = scmp.eq.s32.totalorder %s21, 7
      %p60 = por %p58, %p59
      %p61 = scmp.ne.s32.totalorder %s52, %s53
      %p62 = scmp.eq.s32.totalorder %s21, 0
      %p63 = por %p61, %p62
      %p64 = scmp.ne.s32.totalorder %s52, %s53
      %p65 = scmp.eq.s32.totalorder %s22, 7
      %p66 = por %p64, %p65
      %p68 = scmp.ne.s32.totalorder %s53, %s67
      %p69 = scmp.eq.s32.totalorder %s22, 0
      %p70 = por %p68, %p69
      %s72 = sadd.s32 %s71, 1
      %p75 = scmp.eq.s32.totalorder %s16, 7
      %p76 = scmp.ne.s32.totalorder %s71, %s73
      %p77 = scmp.eq.s32.totalorder %s16, 0
      %p78 = por %p76, %p77
      %p79 = scmp.ne.s32.totalorder %s71, %s73
      %p80 = scmp.eq.s32.totalorder %s21, 7
      %p81 = por %p79, %p80
      %p82 = scmp.ne.s32.totalorder %s73, %s74
      %p83 = scmp.eq.s32.totalorder %s21, 0
      %p84 = por %p82, %p83
      %p85 = scmp.ne.s32.totalorder %s73, %s74
      %p86 = scmp.eq.s32.totalorder %s22, 7
      %p87 = por %p85, %p86
      %p89 = scmp.ne.s32.totalorder %s74, %s88
      %p90 = scmp.eq.s32.totalorder %s22, 0
      %p91 = por %p89, %p90
      %s92 = ssub.s32 %s16, %s23
      %p93 = scmp.eq.s32.totalorder %s92, 0
      %s95 = sadd.s32 %s94, 1
      %s96 = scalar_select %p93, %s94, %s95
      %p99 = pneg %p93
      %p100 = scmp.eq.s32.totalorder %s16, 7
      %p101 = por %p99, %p100
      %p102 = scmp.ne.s32.totalorder %s94, %s97
      %p103 = scmp.eq.s32.totalorder %s16, 0
      %p104 = por %p102, %p103
      %p105 = scmp.ne.s32.totalorder %s94, %s97
      %p106 = scmp.eq.s32.totalorder %s21, 7
      %p107 = por %p105, %p106
      %p108 = scmp.ne.s32.totalorder %s97, %s98
      %p109 = scmp.eq.s32.totalorder %s21, 0
      %p110 = por %p108, %p109
      %p111 = scmp.ne.s32.totalorder %s97, %s98
      %p112 = scmp.eq.s32.totalorder %s22, 7
      %p113 = por %p111, %p112
      %p115 = scmp.ne.s32.totalorder %s98, %s114
      %p116 = scmp.eq.s32.totalorder %s22, 0
      %p117 = por %p115, %p116
      %p118 = scmp.le.s32.totalorder 1, %s16
      %p119 = scmp.lt.s32.totalorder %s16, 9
      %p120 = pnand %p118, %p119
      %p121 = pneg %p120
      // Predicated region
      $region9: #{hdc_net_forward.297} parent=5 // pred_check
        _
      $region10: #{hdc_net_forward.297} parent=5 // pred_check_branch
        %123 = sbr.rel (%p120) target = $region12
      $region11: #{hdc_net_forward.297} parent=5 // pred_region
        %s124 = ssub.s32 %s16, 1
        // Predicated region
        $region13: #{hdc_net_forward.297} parent=11 // pred_check
          %p125 = pneg %p63
        $region14: #{hdc_net_forward.297} parent=11 // pred_check_branch
          %127 = sbr.rel (%p125) target = $region16
        $region15: #{hdc_net_forward.297} parent=11 // pred_region
          %s129 = ssub.s32 32, 32
          %130 = vsyncadd [#allocation6], %s129
          %s132 = sshll.u32 [#allocation5], 4
          %s133 = int_to_ptr.vmem [resolvable:$true] %s132
          %135 = dma.hbm_to_vmem [thread:$0]  %s1, 32, %s133, [#allocation6]
        $region16: #{hdc_net_forward.297} parent=11 // pred_fallthru
          _
        // Predicated region
        $region17: #{hdc_net_forward.297} parent=11 // pred_check
          %p136 = pneg %p84
        $region18: #{hdc_net_forward.297} parent=11 // pred_check_branch
          %138 = sbr.rel (%p136) target = $region20
        $region19: #{hdc_net_forward.297} parent=11 // pred_region
          %s140 = ssub.s32 64, 64
          %141 = vsyncadd [#allocation6], %s140
          %s143 = sshll.u32 [#allocation7], 4
          %s144 = int_to_ptr.vmem [resolvable:$true] %s143
          %146 = dma.hbm_to_vmem [thread:$0]  %s2, 64, %s144, [#allocation6]
        $region20: #{hdc_net_forward.297} parent=11 // pred_fallthru
          _
      $region12: #{hdc_net_forward.297} parent=5 // pred_fallthru
        _
      %p147 = scmp.lt.s32.totalorder %s16, 8
      // Predicated region
      $region21: #{hdc_net_forward.297} parent=5 // pred_check
        %p148 = pneg %p147
      $region22: #{hdc_net_forward.297} parent=5 // pred_check_branch
        %150 = sbr.rel (%p148) target = $region24
      $region23: #{hdc_net_forward.297} parent=5 // pred_region
        // Predicated region
        $region25: #{hdc_net_forward.297} parent=23 // pred_check
          %p151 = pneg %p36
        $region26: #{hdc_net_forward.297} parent=23 // pred_check_branch
          %153 = sbr.rel (%p151) target = $region28
        $region27: #{hdc_net_forward.297} parent=23 // pred_region
          %s154 = sand.u32 %s26, 1
          %s155 = scalar_lea.sflag [#allocation3], %s154
          %s156 = sand.u32 %s26, 1
          %s157 = smul.addr %s156, 32
          %s158 = scalar_lea.vmem [#allocation2], %s157
          %s159 = smul.u32 8, %s16
          %s161 = ssub.s32 512, 512
          %162 = vsyncadd %s155, %s161
          %s163 = smul.addr %s159, 64
          %s164 = scalar_lea.hbm %s0, %s163
          %s166 = sshll.u32 %s158, 4
          %s167 = int_to_ptr.vmem [resolvable:$true] %s166
          %169 = dma.hbm_to_vmem [thread:$0]  %s164, 512, %s167, %s155
        $region28: #{hdc_net_forward.297} parent=23 // pred_fallthru
          _
      $region24: #{hdc_net_forward.297} parent=5 // pred_fallthru
        _
      %p170 = scmp.le.s32.totalorder 1, %s16
      %p171 = scmp.lt.s32.totalorder %s16, 9
      %p172 = pnand %p170, %p171
      %p173 = pneg %p172
      // Predicated region
      $region29: #{hdc_net_forward.297} parent=5 // pred_check
        _
      $region30: #{hdc_net_forward.297} parent=5 // pred_check_branch
        %175 = sbr.rel (%p172) target = $region32
      $region31: #{hdc_net_forward.297} parent=5 // pred_region
        %s176 = ssub.s32 %s16, 1
        %s177 = sand.u32 %s29, 1
        %s178 = scalar_lea.sflag [#allocation3], %s177
        %s179 = sand.u32 %s29, 1
        %s180 = smul.addr %s179, 32
        %s181 = scalar_lea.vmem [#allocation2], %s180
        // Predicated region
        $region33: #{hdc_net_forward.297} parent=31 // pred_check
          %p182 = pneg %p42
        $region34: #{hdc_net_forward.297} parent=31 // pred_check_branch
          %184 = sbr.rel (%p182) target = $region36
        $region35: #{hdc_net_forward.297} parent=31 // pred_region
          %185 = dma.done %s178, 512
        $region36: #{hdc_net_forward.297} parent=31 // pred_fallthru
          _
        // Predicated region
        $region37: #{hdc_net_forward.297} parent=31 // pred_check
          %p186 = pneg %p63
        $region38: #{hdc_net_forward.297} parent=31 // pred_check_branch
          %188 = sbr.rel (%p186) target = $region40
        $region39: #{hdc_net_forward.297} parent=31 // pred_region
          %189 = dma.done [#allocation6], 32
        $region40: #{hdc_net_forward.297} parent=31 // pred_fallthru
          _
        // Predicated region
        $region41: #{hdc_net_forward.297} parent=31 // pred_check
          %p190 = pneg %p84
        $region42: #{hdc_net_forward.297} parent=31 // pred_check_branch
          %192 = sbr.rel (%p190) target = $region44
        $region43: #{hdc_net_forward.297} parent=31 // pred_region
          %193 = dma.done [#allocation6], 64
        $region44: #{hdc_net_forward.297} parent=31 // pred_fallthru
          _
        %s194 = sand.u32 %s29, 1
        %s195 = scalar_lea.sflag [#allocation3], %s194
        %s196 = sand.u32 %s29, 1
        %s197 = smul.addr %s196, 32
        %s198 = scalar_lea.vmem [#allocation2], %s197
        %p199 = pneg %p42
        %p200 = pneg %p39
        %p201 = pneg %p63
        %p202 = pneg %p60
        %p203 = pneg %p84
        %p204 = pneg %p81
        %p205 = pneg %p110
        %p206 = pneg %p107
        %s207 = sand.u32 %s97, 1
        %s208 = scalar_lea.sflag [#allocation4], %s207
        %s209 = sand.u32 %s97, 1
        %s210 = smul.addr %s209, 32
        %s211 = scalar_lea.vmem [#allocation8], %s210
        %s212 = smul.u32 8, %s21
        %s213 = smul.u32 8, %s21
        %v215 = vld [vmem:[#allocation5] sm:$0x3]
        %v216 = vld [vmem:[%s181] sm:$0xff]
        %v217 = vld [vmem:[%s181 + $0x8] sm:$0xff]
        %v218 = vld [vmem:[%s181 + $0x10] sm:$0xff]
        %v219 = vld [vmem:[%s181 + $0x18] sm:$0xff]
        %v220 = vld [vmem:[#allocation7] sm:$0xf]
        %222 = vset.pattern.permute.xlu0 0
        %223 = vperm.xlu0 %222, %v220
        %v224 = vpop.permute.xlu0 %223
        %v230 = vunpack.c.l.b16 %v216
        %v231 = vunpack.c.h.b16 %v216
        %v232 = vunpack.c.l.b16 %v217
        %v233 = vunpack.c.h.b16 %v217
        %v234 = vunpack.c.l.b16 %v218
        %v235 = vunpack.c.h.b16 %v218
        %v236 = vunpack.c.l.b16 %v219
        %v237 = vunpack.c.h.b16 %v219
        %v238 = vpack.c.b16 %v230, %v230
        %v239 = vpack.c.b16 %v231, %v231
        %v240 = vpack.c.b16 %v232, %v232
        %v241 = vpack.c.b16 %v233, %v233
        %v242 = vpack.c.b16 %v234, %v234
        %v243 = vpack.c.b16 %v235, %v235
        %v244 = vpack.c.b16 %v236, %v236
        %v245 = vpack.c.b16 %v237, %v237
        %vm246 = vcmask 64512
        %v248 = vsel %vm246, %v215, 0
        %vm250 = vcmask 1043456
        %v252 = vsel %vm250, %v238, 0
        %v255 = vsel %vm250, %v239, 0
        %v258 = vsel %vm250, %v240, 0
        %v261 = vsel %vm250, %v241, 0
        %v264 = vsel %vm250, %v242, 0
        %v267 = vsel %vm250, %v243, 0
        %v270 = vsel %vm250, %v244, 0
        %v273 = vsel %vm250, %v245, 0
        %275 = vmatprep.subr.bf16.mxu0 %v255
        %276 = vmatpush1.bf16.msra.mxu0 %v252
        %277 = vmatprep.subr.bf16.mxu0 0
        %278 = vmatpush1.bf16.msra.mxu0 0
        %279 = vmatprep.subr.bf16.mxu0 0
        %280 = vmatpush1.bf16.msra.mxu0 0
        %281 = vmatprep.subr.bf16.mxu0 0
        %282 = vmatpush1.bf16.msra.mxu0 0
        %283 = vmatprep.subr.bf16.mxu0 0
        %284 = vmatpush1.bf16.msra.mxu0 0
        %285 = vmatprep.subr.bf16.mxu0 0
        %286 = vmatpush1.bf16.msra.mxu0 0
        %287 = vmatprep.subr.bf16.mxu0 0
        %288 = vmatpush1.bf16.msra.mxu0 0
        %289 = vmatprep.subr.bf16.mxu0 0
        %290 = vmatpush1.bf16.msra.mxu0 0
        %291 = vmatprep.subr.bf16.mxu0 0
        %292 = vmatpush1.bf16.msra.mxu0 0
        %293 = vmatprep.subr.bf16.mxu0 0
        %294 = vmatpush1.bf16.msra.mxu0 0
        %295 = vmatprep.subr.bf16.mxu0 0
        %296 = vmatpush1.bf16.msra.mxu0 0
        %297 = vmatprep.subr.bf16.mxu0 0
        %298 = vmatpush1.bf16.msra.mxu0 0
        %299 = vmatprep.subr.bf16.mxu0 0
        %300 = vmatpush1.bf16.msra.mxu0 0
        %301 = vmatprep.subr.bf16.mxu0 0
        %302 = vmatpush1.bf16.msra.mxu0 0
        %303 = vmatprep.subr.bf16.mxu0 0
        %304 = vmatpush1.bf16.msra.mxu0 0
        %305 = vmatprep.subr.bf16.mxu0 0
        %306 = vmatpush1.bf16.msra.mxu0 0
        %307 = vmatprep.mubr.bf16.mxu0 0
        %308 = vmatmul.mubr.bf16.gmra.mrb[0].mxu0 %v248
        %v309 = vpop.f32.mrb[0].mxu0
        %v310 = vadd.f32 %v224, %v309
        %v311 = vpop.f32.mrb[0].mxu0
        %v312 = vadd.f32 %v224, %v311
        %v313 = vpop.f32.mrb[0].mxu0
        %v314 = vpop.f32.mrb[0].mxu0
        %315 = vdwg.mxu0
        %316 = vmatprep.subr.bf16.mxu0 %v261
        %317 = vmatpush1.bf16.msra.mxu0 %v258
        %318 = vmatprep.subr.bf16.mxu0 0
        %319 = vmatpush1.bf16.msra.mxu0 0
        %320 = vmatprep.subr.bf16.mxu0 0
        %321 = vmatpush1.bf16.msra.mxu0 0
        %322 = vmatprep.subr.bf16.mxu0 0
        %323 = vmatpush1.bf16.msra.mxu0 0
        %324 = vmatprep.subr.bf16.mxu0 0
        %325 = vmatpush1.bf16.msra.mxu0 0
        %326 = vmatprep.subr.bf16.mxu0 0
        %327 = vmatpush1.bf16.msra.mxu0 0
        %328 = vmatprep.subr.bf16.mxu0 0
        %329 = vmatpush1.bf16.msra.mxu0 0
        %330 = vmatprep.subr.bf16.mxu0 0
        %331 = vmatpush1.bf16.msra.mxu0 0
        %332 = vmatprep.subr.bf16.mxu0 0
        %333 = vmatpush1.bf16.msra.mxu0 0
        %334 = vmatprep.subr.bf16.mxu0 0
        %335 = vmatpush1.bf16.msra.mxu0 0
        %336 = vmatprep.subr.bf16.mxu0 0
        %337 = vmatpush1.bf16.msra.mxu0 0
        %338 = vmatprep.subr.bf16.mxu0 0
        %339 = vmatpush1.bf16.msra.mxu0 0
        %340 = vmatprep.subr.bf16.mxu0 0
        %341 = vmatpush1.bf16.msra.mxu0 0
        %342 = vmatprep.subr.bf16.mxu0 0
        %343 = vmatpush1.bf16.msra.mxu0 0
        %344 = vmatprep.subr.bf16.mxu0 0
        %345 = vmatpush1.bf16.msra.mxu0 0
        %346 = vmatprep.subr.bf16.mxu0 0
        %347 = vmatpush1.bf16.msra.mxu0 0
        %348 = vmatprep.mubr.bf16.mxu0 0
        %349 = vmatmul.mubr.bf16.gmra.mrb[0].mxu0 %v248
        %v350 = vpop.f32.mrb[0].mxu0
        %v351 = vadd.f32 %v224, %v350
        %v352 = vpop.f32.mrb[0].mxu0
        %v353 = vadd.f32 %v224, %v352
        %v354 = vpop.f32.mrb[0].mxu0
        %v355 = vpop.f32.mrb[0].mxu0
        %356 = vdwg.mxu0
        %357 = vmatprep.subr.bf16.mxu0 %v267
        %358 = vmatpush1.bf16.msra.mxu0 %v264
        %359 = vmatprep.subr.bf16.mxu0 0
        %360 = vmatpush1.bf16.msra.mxu0 0
        %361 = vmatprep.subr.bf16.mxu0 0
        %362 = vmatpush1.bf16.msra.mxu0 0
        %363 = vmatprep.subr.bf16.mxu0 0
        %364 = vmatpush1.bf16.msra.mxu0 0
        %365 = vmatprep.subr.bf16.mxu0 0
        %366 = vmatpush1.bf16.msra.mxu0 0
        %367 = vmatprep.subr.bf16.mxu0 0
        %368 = vmatpush1.bf16.msra.mxu0 0
        %369 = vmatprep.subr.bf16.mxu0 0
        %370 = vmatpush1.bf16.msra.mxu0 0
        %371 = vmatprep.subr.bf16.mxu0 0
        %372 = vmatpush1.bf16.msra.mxu0 0
        %373 = vmatprep.subr.bf16.mxu0 0
        %374 = vmatpush1.bf16.msra.mxu0 0
        %375 = vmatprep.subr.bf16.mxu0 0
        %376 = vmatpush1.bf16.msra.mxu0 0
        %377 = vmatprep.subr.bf16.mxu0 0
        %378 = vmatpush1.bf16.msra.mxu0 0
        %379 = vmatprep.subr.bf16.mxu0 0
        %380 = vmatpush1.bf16.msra.mxu0 0
        %381 = vmatprep.subr.bf16.mxu0 0
        %382 = vmatpush1.bf16.msra.mxu0 0
        %383 = vmatprep.subr.bf16.mxu0 0
        %384 = vmatpush1.bf16.msra.mxu0 0
        %385 = vmatprep.subr.bf16.mxu0 0
        %386 = vmatpush1.bf16.msra.mxu0 0
        %387 = vmatprep.subr.bf16.mxu0 0
        %388 = vmatpush1.bf16.msra.mxu0 0
        %389 = vmatprep.mubr.bf16.mxu0 0
        %390 = vmatmul.mubr.bf16.gmra.mrb[0].mxu0 %v248
        %v391 = vpop.f32.mrb[0].mxu0
        %v392 = vadd.f32 %v224, %v391
        %v393 = vpop.f32.mrb[0].mxu0
        %v394 = vadd.f32 %v224, %v393
        %v395 = vpop.f32.mrb[0].mxu0
        %v396 = vpop.f32.mrb[0].mxu0
        %397 = vdwg.mxu0
        %398 = vmatprep.subr.bf16.mxu0 %v273
        %399 = vmatpush1.bf16.msra.mxu0 %v270
        %400 = vmatprep.subr.bf16.mxu0 0
        %401 = vmatpush1.bf16.msra.mxu0 0
        %402 = vmatprep.subr.bf16.mxu0 0
        %403 = vmatpush1.bf16.msra.mxu0 0
        %404 = vmatprep.subr.bf16.mxu0 0
        %405 = vmatpush1.bf16.msra.mxu0 0
        %406 = vmatprep.subr.bf16.mxu0 0
        %407 = vmatpush1.bf16.msra.mxu0 0
        %408 = vmatprep.subr.bf16.mxu0 0
        %409 = vmatpush1.bf16.msra.mxu0 0
        %410 = vmatprep.subr.bf16.mxu0 0
        %411 = vmatpush1.bf16.msra.mxu0 0
        %412 = vmatprep.subr.bf16.mxu0 0
        %413 = vmatpush1.bf16.msra.mxu0 0
        %414 = vmatprep.subr.bf16.mxu0 0
        %415 = vmatpush1.bf16.msra.mxu0 0
        %416 = vmatprep.subr.bf16.mxu0 0
        %417 = vmatpush1.bf16.msra.mxu0 0
        %418 = vmatprep.subr.bf16.mxu0 0
        %419 = vmatpush1.bf16.msra.mxu0 0
        %420 = vmatprep.subr.bf16.mxu0 0
        %421 = vmatpush1.bf16.msra.mxu0 0
        %422 = vmatprep.subr.bf16.mxu0 0
        %423 = vmatpush1.bf16.msra.mxu0 0
        %424 = vmatprep.subr.bf16.mxu0 0
        %425 = vmatpush1.bf16.msra.mxu0 0
        %426 = vmatprep.subr.bf16.mxu0 0
        %427 = vmatpush1.bf16.msra.mxu0 0
        %428 = vmatprep.subr.bf16.mxu0 0
        %429 = vmatpush1.bf16.msra.mxu0 0
        %430 = vmatprep.mubr.bf16.mxu0 0
        %431 = vmatmul.mubr.bf16.gmra.mrb[0].mxu0 %v248
        %v432 = vpop.f32.mrb[0].mxu0
        %v433 = vadd.f32 %v224, %v432
        %v434 = vpop.f32.mrb[0].mxu0
        %v435 = vadd.f32 %v224, %v434
        %v436 = vpop.f32.mrb[0].mxu0
        %v437 = vpop.f32.mrb[0].mxu0
        %438 = vdwg.mxu0
        %v439 = vsel %vm250, %v310, -inf
        %v440 = vrot.slane %v439, 4
        %v441 = vmax.f32 %v439, %v440
        %v442 = vrot.slane %v441, 2
        %v443 = vmax.f32 %v441, %v442
        %v444 = vrot.slane %v443, 1
        %v445 = vmax.f32 %v443, %v444
        %v446 = vsel %vm250, %v312, -inf
        %v447 = vrot.slane %v446, 4
        %v448 = vmax.f32 %v446, %v447
        %v449 = vrot.slane %v448, 2
        %v450 = vmax.f32 %v448, %v449
        %v451 = vrot.slane %v450, 1
        %v452 = vmax.f32 %v450, %v451
        %v453 = vsel %vm250, %v351, -inf
        %v454 = vrot.slane %v453, 4
        %v455 = vmax.f32 %v453, %v454
        %v456 = vrot.slane %v455, 2
        %v457 = vmax.f32 %v455, %v456
        %v458 = vrot.slane %v457, 1
        %v459 = vmax.f32 %v457, %v458
        %v460 = vsel %vm250, %v353, -inf
        %v461 = vrot.slane %v460, 4
        %v462 = vmax.f32 %v460, %v461
        %v463 = vrot.slane %v462, 2
        %v464 = vmax.f32 %v462, %v463
        %v465 = vrot.slane %v464, 1
        %v466 = vmax.f32 %v464, %v465
        %v467 = vsel %vm250, %v392, -inf
        %v468 = vrot.slane %v467, 4
        %v469 = vmax.f32 %v467, %v468
        %v470 = vrot.slane %v469, 2
        %v471 = vmax.f32 %v469, %v470
        %v472 = vrot.slane %v471, 1
        %v473 = vmax.f32 %v471, %v472
        %v474 = vsel %vm250, %v394, -inf
        %v475 = vrot.slane %v474, 4
        %v476 = vmax.f32 %v474, %v475
        %v477 = vrot.slane %v476, 2
        %v478 = vmax.f32 %v476, %v477
        %v479 = vrot.slane %v478, 1
        %v480 = vmax.f32 %v478, %v479
        %v481 = vsel %vm250, %v433, -inf
        %v482 = vrot.slane %v481, 4
        %v483 = vmax.f32 %v481, %v482
        %v484 = vrot.slane %v483, 2
        %v485 = vmax.f32 %v483, %v484
        %v486 = vrot.slane %v485, 1
        %v487 = vmax.f32 %v485, %v486
        %v488 = vsel %vm250, %v435, -inf
        %v489 = vrot.slane %v488, 4
        %v490 = vmax.f32 %v488, %v489
        %v491 = vrot.slane %v490, 2
        %v492 = vmax.f32 %v490, %v491
        %v493 = vrot.slane %v492, 1
        %v494 = vmax.f32 %v492, %v493
        %v495 = vsub.f32 %v310, %v445
        %v496 = vsub.f32 %v312, %v452
        %v497 = vsub.f32 %v351, %v459
        %v498 = vsub.f32 %v353, %v466
        %v499 = vsub.f32 %v392, %v473
        %v500 = vsub.f32 %v394, %v480
        %v501 = vsub.f32 %v433, %v487
        %v502 = vsub.f32 %v435, %v494
        %v503 = vmul.f32 %v495, 1.442695
        %v504 = vpow.pop %v503
        %v505 = vmul.f32 %v496, 1.442695
        %v506 = vpow.pop %v505
        %v507 = vmul.f32 %v497, 1.442695
        %v508 = vpow.pop %v507
        %v509 = vmul.f32 %v498, 1.442695
        %v510 = vpow.pop %v509
        %v511 = vmul.f32 %v499, 1.442695
        %v512 = vpow.pop %v511
        %v513 = vmul.f32 %v500, 1.442695
        %v514 = vpow.pop %v513
        %v515 = vmul.f32 %v501, 1.442695
        %v516 = vpow.pop %v515
        %v517 = vmul.f32 %v502, 1.442695
        %v518 = vpow.pop %v517
        %v519 = vsel %vm250, %v504, 0.0
        %v520 = vrot.slane %v519, 4
        %v521 = vadd.f32 %v519, %v520
        %v522 = vrot.slane %v521, 2
        %v523 = vadd.f32 %v521, %v522
        %v524 = vrot.slane %v523, 1
        %v525 = vadd.f32 %v523, %v524
        %v526 = vsel %vm250, %v506, 0.0
        %v527 = vrot.slane %v526, 4
        %v528 = vadd.f32 %v526, %v527
        %v529 = vrot.slane %v528, 2
        %v530 = vadd.f32 %v528, %v529
        %v531 = vrot.slane %v530, 1
        %v532 = vadd.f32 %v530, %v531
        %v533 = vsel %vm250, %v508, 0.0
        %v534 = vrot.slane %v533, 4
        %v535 = vadd.f32 %v533, %v534
        %v536 = vrot.slane %v535, 2
        %v537 = vadd.f32 %v535, %v536
        %v538 = vrot.slane %v537, 1
        %v539 = vadd.f32 %v537, %v538
        %v540 = vsel %vm250, %v510, 0.0
        %v541 = vrot.slane %v540, 4
        %v542 = vadd.f32 %v540, %v541
        %v543 = vrot.slane %v542, 2
        %v544 = vadd.f32 %v542, %v543
        %v545 = vrot.slane %v544, 1
        %v546 = vadd.f32 %v544, %v545
        %v547 = vsel %vm250, %v512, 0.0
        %v548 = vrot.slane %v547, 4
        %v549 = vadd.f32 %v547, %v548
        %v550 = vrot.slane %v549, 2
        %v551 = vadd.f32 %v549, %v550
        %v552 = vrot.slane %v551, 1
        %v553 = vadd.f32 %v551, %v552
        %v554 = vsel %vm250, %v514, 0.0
        %v555 = vrot.slane %v554, 4
        %v556 = vadd.f32 %v554, %v555
        %v557 = vrot.slane %v556, 2
        %v558 = vadd.f32 %v556, %v557
        %v559 = vrot.slane %v558, 1
        %v560 = vadd.f32 %v558, %v559
        %v561 = vsel %vm250, %v516, 0.0
        %v562 = vrot.slane %v561, 4
        %v563 = vadd.f32 %v561, %v562
        %v564 = vrot.slane %v563, 2
        %v565 = vadd.f32 %v563, %v564
        %v566 = vrot.slane %v565, 1
        %v567 = vadd.f32 %v565, %v566
        %v568 = vsel %vm250, %v518, 0.0
        %v569 = vrot.slane %v568, 4
        %v570 = vadd.f32 %v568, %v569
        %v571 = vrot.slane %v570, 2
        %v572 = vadd.f32 %v570, %v571
        %v573 = vrot.slane %v572, 1
        %v574 = vadd.f32 %v572, %v573
        %v575 = vrcp.pop %v525
        %v576 = vmul.f32 %v504, %v575
        %v577 = vrcp.pop %v532
        %v578 = vmul.f32 %v506, %v577
        %v579 = vrcp.pop %v539
        %v580 = vmul.f32 %v508, %v579
        %v581 = vrcp.pop %v546
        %v582 = vmul.f32 %v510, %v581
        %v583 = vrcp.pop %v553
        %v584 = vmul.f32 %v512, %v583
        %v585 = vrcp.pop %v560
        %v586 = vmul.f32 %v514, %v585
        %v587 = vrcp.pop %v567
        %v588 = vmul.f32 %v516, %v587
        %v589 = vrcp.pop %v574
        %v590 = vmul.f32 %v518, %v589
        %v599 = vcombine.low %v576, %v578
        %v600 = vcombine.low %v580, %v582
        %v601 = vcombine.low %v584, %v586
        %v602 = vcombine.low %v588, %v590
        %607 = vst [vmem:[%s211] sm:$0xff] %v599
        %608 = vst [vmem:[%s211 + $0x8] sm:$0xff] %v600
        %609 = vst [vmem:[%s211 + $0x10] sm:$0xff] %v601
        %610 = vst [vmem:[%s211 + $0x18] sm:$0xff] %v602
        %s611 = sand.u32 %s97, 1
        %s612 = scalar_lea.sflag [#allocation4], %s611
        %s613 = sand.u32 %s97, 1
        %s614 = smul.addr %s613, 32
        %s615 = scalar_lea.vmem [#allocation8], %s614
        // Predicated region
        $region45: #{hdc_net_forward.297} parent=31 // pred_check
          %p616 = pneg %p107
        $region46: #{hdc_net_forward.297} parent=31 // pred_check_branch
          %618 = sbr.rel (%p616) target = $region48
        $region47: #{hdc_net_forward.297} parent=31 // pred_region
          %s619 = smul.u32 8, %s21
          %s621 = ssub.s32 512, 512
          %622 = vsyncadd %s612, %s621
          %s623 = smul.addr %s619, 64
          %s624 = scalar_lea.hbm %s3, %s623
          %s626 = sshll.u32 %s615, 4
          %s627 = int_to_ptr.vmem [resolvable:$true] %s626
          %629 = dma.vmem_to_hbm [thread:$0]  %s627, 512, %s624, %s612
        $region48: #{hdc_net_forward.297} parent=31 // pred_fallthru
          _
      $region32: #{hdc_net_forward.297} parent=5 // pred_fallthru
        _
      %p630 = scmp.le.s32.totalorder 2, %s16
      // Predicated region
      $region49: #{hdc_net_forward.297} parent=5 // pred_check
        %p631 = pneg %p630
      $region50: #{hdc_net_forward.297} parent=5 // pred_check_branch
        %633 = sbr.rel (%p631) target = $region52
      $region51: #{hdc_net_forward.297} parent=5 // pred_region
        %s634 = ssub.s32 %s16, 2
        // Predicated region
        $region53: #{hdc_net_forward.297} parent=51 // pred_check
          %p635 = pneg %p113
        $region54: #{hdc_net_forward.297} parent=51 // pred_check_branch
          %637 = sbr.rel (%p635) target = $region56
        $region55: #{hdc_net_forward.297} parent=51 // pred_region
          %s638 = sand.u32 %s98, 1
          %s639 = scalar_lea.sflag [#allocation4], %s638
          %s640 = sand.u32 %s98, 1
          %s641 = smul.addr %s640, 32
          %s642 = scalar_lea.vmem [#allocation8], %s641
          %643 = dma.done %s639, 512
        $region56: #{hdc_net_forward.297} parent=51 // pred_fallthru
          _
      $region52: #{hdc_net_forward.297} parent=5 // pred_fallthru
        _
    $region6: #{hdc_net_forward.297} parent=1 // loop_footer
      %s20 = sadd.s32 1, %s16
    $region7: #{hdc_net_forward.297} parent=1 // loop_footer_branch
      %15 = sbr.rel target = $region3
    $region8: #{hdc_net_forward.297} parent=1 // loop_exit
      _
    %644 = vsyncpa [#allocation3], 1
    %s645 = scalar_lea.sflag [#allocation3], 1
    %646 = vsyncpa %s645, 1
    %647 = vsyncpa [#allocation6], 1
    %648 = vsyncpa [#allocation4], 1
    %s649 = scalar_lea.sflag [#allocation4], 1
    %650 = vsyncpa %s649, 1

</llo_original>
